<compile_context>
chip_gen: v5e
topology: v5e:2x2
jax: 0.10.0
libtpu: 0.0.40
codegen_flags: <defaults>
</compile_context>

<pallas_src>
import functools
import math

import jax
import jax.numpy as jnp
from jax import lax
from jax.experimental import pallas as pl
from jax.experimental.pallas import tpu as pltpu


def _round_up(x, m):
    return (x + m - 1) // m * m


def _gru_encoder_kernel(x_ref, len_ref, wih_ref, whh_ref, bih_ref, bhh_ref,
                        out_ref, hid_ref, seq_scr, gi_scr,
                        *, num_layers, hidden_pad, seq_len, unroll):
    """Multi-layer GRU recurrence for one batch block, entirely in VMEM.

    x_ref   : (T, Bb, Hp)    layer-0 input, features zero-padded I -> Hp
    len_ref : (Bb, 1) int32  per-row sequence lengths
    wih_ref : (L, Hp, 3*Hp)  input->hidden weights (transposed, gate-padded)
    whh_ref : (L, Hp, 3*Hp)  hidden->hidden weights (transposed, gate-padded)
    bih_ref : (L, 1, 3*Hp)   input biases (gate-padded)
    bhh_ref : (L, 1, 3*Hp)   hidden biases (gate-padded)
    out_ref : (T, Bb, Hp)    padded output sequence of the last layer
    hid_ref : (L, Bb, Hp)    final hidden state per layer
    seq_scr : (T, Bb, Hp)    single ping buffer for inter-layer activations
    gi_scr  : (T, Bb, 3*Hp)  hoisted input-projection scratch
    """
    T = seq_len
    B = x_ref.shape[1]
    Hp = hidden_pad
    L = num_layers

    len_col = len_ref[...]                                   # (Bb, 1) int32

    for layer in range(L):                                   # static unroll
        # Ping-pong between the single scratch buffer and out_ref, arranged so
        # the LAST layer writes directly into out_ref (works for any L).
        if layer == 0:
            in_buf = x_ref
        else:
            in_buf = out_ref if (L - layer) % 2 == 0 else seq_scr
        out_buf = out_ref if (L - 1 - layer) % 2 == 0 else seq_scr

        wih = wih_ref[layer]                                 # (Hp, 3*Hp)
        whh = whh_ref[layer]                                 # (Hp, 3*Hp)
        bih = bih_ref[layer]                                 # (1, 3*Hp)
        bhh = bhh_ref[layer]                                 # (1, 3*Hp)

        # ---- Hoisted input projection: one big MXU matmul per layer. ----
        x_all = in_buf[...].reshape(T * B, Hp)               # (T*Bb, Hp)
        gi_scr[...] = (
            jnp.dot(x_all, wih, preferred_element_type=jnp.float32) + bih
        ).reshape(T, B, 3 * Hp)

        # ---- Serial recurrence: only the h-dependent matmul remains. ----
        def step(t, h, out_buf=out_buf, whh=whh, bhh=bhh):
            gi = gi_scr[t]                                   # (Bb, 3*Hp)
            gh = jnp.dot(h, whh, preferred_element_type=jnp.float32) + bhh

            # PyTorch gate order: r, z, n (each in its own 128-lane slot).
            i_r, i_z, i_n = gi[:, 0:Hp], gi[:, Hp:2 * Hp], gi[:, 2 * Hp:3 * Hp]
            h_r, h_z, h_n = gh[:, 0:Hp], gh[:, Hp:2 * Hp], gh[:, 2 * Hp:3 * Hp]

            r = jax.nn.sigmoid(i_r + h_r)
            z = jax.nn.sigmoid(i_z + h_z)
            n = jnp.tanh(i_n + r * h_n)
            h_new = (1.0 - z) * n + z * h

            m_t = t < len_col                                # (Bb, 1) bool
            out_buf[t] = jnp.where(m_t, h_new, 0.0)          # zeros past length
            return jnp.where(m_t, h_new, h)                  # freeze past length

        h0 = jnp.zeros((B, Hp), jnp.float32)
        h_final = lax.fori_loop(0, T, step, h0, unroll=unroll)
        hid_ref[layer] = h_final


def init_gru_params(key, input_size, hidden_size, num_layers):
    """Deterministic PyTorch-style GRU init: U(-1/sqrt(H), 1/sqrt(H)).

    Weights are transposed for `x @ W` and zero-padded so that the hidden dim
    is Hp = 128 lanes and each gate (r, z, n) occupies its own Hp-wide slot.
    The padding is mathematically inert because the padded state lanes stay
    exactly zero (zero weights + zero initial state).  Raw (unpadded) weights
    are kept for the pure-JAX reference check.
    """
    H = hidden_size
    Hp = max(128, _round_up(H, 128))
    bound = 1.0 / math.sqrt(H)
    wih, whh, bih, bhh = [], [], [], []
    raw = dict(w_ih=[], w_hh=[], b_ih=[], b_hh=[])
    for layer in range(num_layers):
        in_dim = input_size if layer == 0 else H
        key, k1, k2, k3, k4 = jax.random.split(key, 5)
        w_ih = jax.random.uniform(k1, (3 * H, in_dim), jnp.float32, -bound, bound)
        w_hh = jax.random.uniform(k2, (3 * H, H), jnp.float32, -bound, bound)
        b_ih = jax.random.uniform(k3, (3 * H,), jnp.float32, -bound, bound)
        b_hh = jax.random.uniform(k4, (3 * H,), jnp.float32, -bound, bound)
        raw["w_ih"].append(w_ih)
        raw["w_hh"].append(w_hh)
        raw["b_ih"].append(b_ih)
        raw["b_hh"].append(b_hh)

        wih_p = jnp.zeros((Hp, 3 * Hp), jnp.float32)
        whh_p = jnp.zeros((Hp, 3 * Hp), jnp.float32)
        bih_p = jnp.zeros((1, 3 * Hp), jnp.float32)
        bhh_p = jnp.zeros((1, 3 * Hp), jnp.float32)
        for g in range(3):                                   # gate order r, z, n
            wih_p = wih_p.at[:in_dim, g * Hp:g * Hp + H].set(
                w_ih[g * H:(g + 1) * H, :].T)
            whh_p = whh_p.at[:H, g * Hp:g * Hp + H].set(
                w_hh[g * H:(g + 1) * H, :].T)
            bih_p = bih_p.at[0, g * Hp:g * Hp + H].set(b_ih[g * H:(g + 1) * H])
            bhh_p = bhh_p.at[0, g * Hp:g * Hp + H].set(b_hh[g * H:(g + 1) * H])
        wih.append(wih_p)
        whh.append(whh_p)
        bih.append(bih_p)
        bhh.append(bhh_p)
    return dict(
        wih=jnp.stack(wih),      # (L, Hp, 3*Hp)
        whh=jnp.stack(whh),      # (L, Hp, 3*Hp)
        bih=jnp.stack(bih),      # (L, 1, 3*Hp)
        bhh=jnp.stack(bhh),      # (L, 1, 3*Hp)
        raw=raw,
        hidden_size=H,
        hidden_pad=Hp,
        num_layers=num_layers,
        input_size=input_size,
    )


def encoder_forward(x, lengths, params):
    """Equivalent of Encoder.forward(x, lengths) (eval mode).

    x       : (B, T, I) float32, batch_first like the PyTorch module
    lengths : list/array of ints, one per batch element (need not be sorted);
              must be concrete Python ints here (pad_packed_sequence trims the
              output to max(lengths), which fixes the output shape).
    returns : (output, hidden) with output (B, max(lengths), H),
              hidden (num_layers, B, H)
    """
    B, T, I = x.shape
    H = params["hidden_size"]
    Hp = params["hidden_pad"]
    L = params["num_layers"]

    # Sublane-aligned batch block; keep it small for long sequences so the
    # (T, Bb, 3*Hp) scratch stays comfortably inside VMEM.
    if T > 64:
        B_blk = 8
    else:
        B_blk = min(64, _round_up(max(B, 1), 8))
    B_pad = _round_up(max(B, B_blk), B_blk)

    # Glue: time-major, zero-pad features I -> Hp and batch B -> B_pad.
    x_tm = jnp.transpose(x, (1, 0, 2))                                   # (T, B, I)
    x_tm = jnp.pad(x_tm, ((0, 0), (0, B_pad - B), (0, Hp - I)))          # (T, Bp, Hp)

    lengths_list = [int(l) for l in lengths]
    len_col = jnp.asarray(lengths_list, jnp.int32).reshape(B, 1)
    len_col = jnp.pad(len_col, ((0, B_pad - B), (0, 0)))                 # (Bp, 1)

    kernel = functools.partial(
        _gru_encoder_kernel,
        num_layers=L, hidden_pad=Hp, seq_len=T,
        unroll=True if T <= 32 else 8,
    )

    grid = (B_pad // B_blk,)
    out_tm, hidden = pl.pallas_call(
        kernel,
        out_shape=(
            jax.ShapeDtypeStruct((T, B_pad, Hp), jnp.float32),   # padded outputs
            jax.ShapeDtypeStruct((L, B_pad, Hp), jnp.float32),   # final hidden
        ),
        grid=grid,
        in_specs=[
            pl.BlockSpec((T, B_blk, Hp), lambda b: (0, b, 0)),       # x block
            pl.BlockSpec((B_blk, 1), lambda b: (b, 0)),              # lengths
            pl.BlockSpec((L, Hp, 3 * Hp), lambda b: (0, 0, 0)),      # W_ih
            pl.BlockSpec((L, Hp, 3 * Hp), lambda b: (0, 0, 0)),      # W_hh
            pl.BlockSpec((L, 1, 3 * Hp), lambda b: (0, 0, 0)),       # b_ih
            pl.BlockSpec((L, 1, 3 * Hp), lambda b: (0, 0, 0)),       # b_hh
        ],
        out_specs=(
            pl.BlockSpec((T, B_blk, Hp), lambda b: (0, b, 0)),
            pl.BlockSpec((L, B_blk, Hp), lambda b: (0, b, 0)),
        ),
        scratch_shapes=[
            pltpu.VMEM((T, B_blk, Hp), jnp.float32),        # inter-layer ping
            pltpu.VMEM((T, B_blk, 3 * Hp), jnp.float32),    # hoisted GI
        ],
        compiler_params=pltpu.CompilerParams(
            dimension_semantics=("parallel",)),
    )(x_tm, len_col, params["wih"], params["whh"],
      params["bih"], params["bhh"])

    # Trim padding and go back to batch_first; pad_packed_sequence trims T.
    t_max = max(lengths_list)
    output = jnp.transpose(out_tm[:, :B, :H], (1, 0, 2))[:, :t_max, :]   # (B, t_max, H)
    hidden = hidden[:, :B, :H]                                           # (L, B, H)
    return output, hidden


def encoder_reference(x, lengths, params):
    """Pure-JAX reference of the packed multi-layer GRU (eval mode)."""
    B, T, _ = x.shape
    H = params["hidden_size"]
    L = params["num_layers"]
    raw = params["raw"]
    lengths_arr = jnp.asarray([int(l) for l in lengths], jnp.int32)
    inp = x
    hiddens = []
    for layer in range(L):
        w_ih, w_hh = raw["w_ih"][layer], raw["w_hh"][layer]
        b_ih, b_hh = raw["b_ih"][layer], raw["b_hh"][layer]
        h = jnp.zeros((B, H), jnp.float32)
        outs = []
        for t in range(T):
            xt = inp[:, t, :]
            gi = xt @ w_ih.T + b_ih
            gh = h @ w_hh.T + b_hh
            i_r, i_z, i_n = jnp.split(gi, 3, axis=1)
            h_r, h_z, h_n = jnp.split(gh, 3, axis=1)
            r = jax.nn.sigmoid(i_r + h_r)
            z = jax.nn.sigmoid(i_z + h_z)
            n = jnp.tanh(i_n + r * h_n)
            h_new = (1.0 - z) * n + z * h
            valid = (t < lengths_arr)[:, None]
            h = jnp.where(valid, h_new, h)
            outs.append(jnp.where(valid, h_new, 0.0))
        inp = jnp.stack(outs, axis=1)
        hiddens.append(h)
    t_max = int(max(int(l) for l in lengths))
    return inp[:, :t_max, :], jnp.stack(hiddens)


if __name__ == "__main__":
    # Small deterministic example consistent with the module defaults:
    # batch=4, seq=8, input_size=3, hidden_size=64, num_layers=4.
    B, T, I = 4, 8, 3
    H, L = 64, 4

    key = jax.random.PRNGKey(0)
    key, pkey, xkey = jax.random.split(key, 3)

    params = init_gru_params(pkey, input_size=I, hidden_size=H, num_layers=L)

    x = jax.random.normal(xkey, (B, T, I), jnp.float32)
    lengths = [5, 8, 3, 6]   # unsorted, like enforce_sorted=False allows

    output, hidden = encoder_forward(x, lengths, params)
    output = jax.block_until_ready(output)
    hidden = jax.block_until_ready(hidden)

    assert output.shape == (B, max(lengths), H)
    assert hidden.shape == (L, B, H)

    # Lightweight correctness check against a pure-JAX reference.
    ref_out, ref_hid = encoder_reference(x, lengths, params)
    err_out = float(jnp.max(jnp.abs(output - ref_out)))
    err_hid = float(jnp.max(jnp.abs(hidden - ref_hid)))
    assert err_out < 1e-3 and err_hid < 1e-3, (err_out, err_hid)

    print("KERNEL_OK")
</pallas_src>

<mosaic_0001>
module attributes {stable_mosaic.version = 11 : i64} {
  func.func @_gru_encoder_kernel(%arg0: i32, %arg1: memref<8x8x128xf32, #tpu.memory_space<vmem>>, %arg2: memref<8x1xi32, #tpu.memory_space<vmem>>, %arg3: memref<4x128x384xf32, #tpu.memory_space<vmem>>, %arg4: memref<4x128x384xf32, #tpu.memory_space<vmem>>, %arg5: memref<4x1x384xf32, #tpu.memory_space<vmem>>, %arg6: memref<4x1x384xf32, #tpu.memory_space<vmem>>, %arg7: memref<8x8x128xf32, #tpu.memory_space<vmem>>, %arg8: memref<4x8x128xf32, #tpu.memory_space<vmem>>, %arg9: memref<8x8x128xf32, #tpu.memory_space<vmem>>, %arg10: memref<8x8x384xf32, #tpu.memory_space<vmem>>) attributes {dimension_semantics = [#tpu.dimension_semantics<parallel>], iteration_bounds = array<i64: 1>, scalar_prefetch = 0 : i64, scratch_operands = 2 : i64, tpu.core_type = #tpu.core_type<tc>, window_params = [{transform_indices = @transform_0, window_bounds = array<i64: 8, 8, 128>}, {transform_indices = @transform_1, window_bounds = array<i64: 8, 1>}, {pipeline_mode = #tpu.pipeline_mode<synchronous>, transform_indices = @transform_2, window_bounds = array<i64: 4, 128, 384>}, {pipeline_mode = #tpu.pipeline_mode<synchronous>, transform_indices = @transform_3, window_bounds = array<i64: 4, 128, 384>}, {pipeline_mode = #tpu.pipeline_mode<synchronous>, transform_indices = @transform_4, window_bounds = array<i64: 4, 1, 384>}, {pipeline_mode = #tpu.pipeline_mode<synchronous>, transform_indices = @transform_5, window_bounds = array<i64: 4, 1, 384>}, {transform_indices = @transform_6, window_bounds = array<i64: 8, 8, 128>}, {transform_indices = @transform_7, window_bounds = array<i64: 4, 8, 128>}]} {
    %c0 = arith.constant 0 : index
    %c0_0 = arith.constant 0 : index
    %0 = vector.load %arg2[%c0, %c0_0] : memref<8x1xi32, #tpu.memory_space<vmem>>, vector<8x1xi32>
    %c0_1 = arith.constant 0 : index
    %c0_2 = arith.constant 0 : index
    %c0_3 = arith.constant 0 : index
    %1 = vector.load %arg3[%c0_1, %c0_2, %c0_3] : memref<4x128x384xf32, #tpu.memory_space<vmem>>, vector<1x128x384xf32>
    %2 = vector.shape_cast %1 : vector<1x128x384xf32> to vector<128x384xf32>
    %c0_4 = arith.constant 0 : index
    %c0_5 = arith.constant 0 : index
    %c0_6 = arith.constant 0 : index
    %3 = vector.load %arg4[%c0_4, %c0_5, %c0_6] : memref<4x128x384xf32, #tpu.memory_space<vmem>>, vector<1x128x384xf32>
    %4 = vector.shape_cast %3 : vector<1x128x384xf32> to vector<128x384xf32>
    %c0_7 = arith.constant 0 : index
    %c0_8 = arith.constant 0 : index
    %c0_9 = arith.constant 0 : index
    %5 = vector.load %arg5[%c0_7, %c0_8, %c0_9] : memref<4x1x384xf32, #tpu.memory_space<vmem>>, vector<1x1x384xf32>
    %6 = vector.shape_cast %5 : vector<1x1x384xf32> to vector<1x384xf32>
    %c0_10 = arith.constant 0 : index
    %c0_11 = arith.constant 0 : index
    %c0_12 = arith.constant 0 : index
    %7 = vector.load %arg6[%c0_10, %c0_11, %c0_12] : memref<4x1x384xf32, #tpu.memory_space<vmem>>, vector<1x1x384xf32>
    %8 = vector.shape_cast %7 : vector<1x1x384xf32> to vector<1x384xf32>
    %c0_13 = arith.constant 0 : index
    %c0_14 = arith.constant 0 : index
    %c0_15 = arith.constant 0 : index
    %9 = vector.load %arg1[%c0_13, %c0_14, %c0_15] : memref<8x8x128xf32, #tpu.memory_space<vmem>>, vector<8x8x128xf32>
    %10 = vector.shape_cast %9 : vector<8x8x128xf32> to vector<64x128xf32>
    %cst = arith.constant dense<0.000000e+00> : vector<64x384xf32>
    %11 = tpu.matmul %10, %2, %cst {dimension_numbers = #tpu.dot_dimension_numbers<[1], [0], [0], [1], [0, 0, 1, 1], [], []>} : vector<64x128xf32>, vector<128x384xf32>, vector<64x384xf32> -> vector<64x384xf32>
    %12 = vector.broadcast %6 : vector<1x384xf32> to vector<64x384xf32>
    %13 = arith.addf %11, %12 : vector<64x384xf32>
    %14 = vector.shape_cast %13 : vector<64x384xf32> to vector<8x8x384xf32>
    %c0_16 = arith.constant 0 : index
    %c0_17 = arith.constant 0 : index
    %c0_18 = arith.constant 0 : index
    %15 = vector.load %arg10[%c0_16, %c0_17, %c0_18] : memref<8x8x384xf32, #tpu.memory_space<vmem>>, vector<8x8x384xf32>
    tpu.vector_store %arg10[%c0_16, %c0_17, %c0_18], %14 {strides = array<i32>} : memref<8x8x384xf32, #tpu.memory_space<vmem>>, vector<8x8x384xf32>,
    %cst_19 = arith.constant 0.000000e+00 : f32
    %16 = vector.broadcast %cst_19 : f32 to vector<8x128xf32>
    %c0_i32 = arith.constant 0 : i32
    %17 = arith.index_cast %c0_i32 : i32 to index
    %c0_20 = arith.constant 0 : index
    %c0_21 = arith.constant 0 : index
    %18 = vector.load %arg10[%17, %c0_20, %c0_21] : memref<8x8x384xf32, #tpu.memory_space<vmem>>, vector<1x8x384xf32>
    %19 = vector.shape_cast %18 : vector<1x8x384xf32> to vector<8x384xf32>
    %cst_22 = arith.constant dense<0.000000e+00> : vector<8x384xf32>
    %20 = tpu.matmul %16, %4, %cst_22 {dimension_numbers = #tpu.dot_dimension_numbers<[1], [0], [0], [1], [0, 0, 1, 1], [], []>} : vector<8x128xf32>, vector<128x384xf32>, vector<8x384xf32> -> vector<8x384xf32>
    %21 = vector.broadcast %8 : vector<1x384xf32> to vector<8x384xf32>
    %22 = arith.addf %20, %21 : vector<8x384xf32>
    %23 = vector.extract_strided_slice %19 {offsets = [0, 0], sizes = [8, 128], strides = [1, 1]} : vector<8x384xf32> to vector<8x128xf32>
    %24 = vector.extract_strided_slice %19 {offsets = [0, 128], sizes = [8, 128], strides = [1, 1]} : vector<8x384xf32> to vector<8x128xf32>
    %25 = vector.extract_strided_slice %19 {offsets = [0, 256], sizes = [8, 128], strides = [1, 1]} : vector<8x384xf32> to vector<8x128xf32>
    %26 = vector.extract_strided_slice %22 {offsets = [0, 0], sizes = [8, 128], strides = [1, 1]} : vector<8x384xf32> to vector<8x128xf32>
    %27 = vector.extract_strided_slice %22 {offsets = [0, 128], sizes = [8, 128], strides = [1, 1]} : vector<8x384xf32> to vector<8x128xf32>
    %28 = vector.extract_strided_slice %22 {offsets = [0, 256], sizes = [8, 128], strides = [1, 1]} : vector<8x384xf32> to vector<8x128xf32>
    %29 = arith.addf %23, %26 : vector<8x128xf32>
    %30 = arith.negf %29 : vector<8x128xf32>
    %31 = math.exp %30 : vector<8x128xf32>
    %cst_23 = arith.constant 1.000000e+00 : f32
    %32 = vector.broadcast %cst_23 : f32 to vector<8x128xf32>
    %33 = arith.addf %32, %31 : vector<8x128xf32>
    %34 = arith.divf %32, %33 : vector<8x128xf32>
    %35 = arith.addf %24, %27 : vector<8x128xf32>
    %36 = arith.negf %35 : vector<8x128xf32>
    %37 = math.exp %36 : vector<8x128xf32>
    %cst_24 = arith.constant 1.000000e+00 : f32
    %38 = vector.broadcast %cst_24 : f32 to vector<8x128xf32>
    %39 = arith.addf %38, %37 : vector<8x128xf32>
    %40 = arith.divf %38, %39 : vector<8x128xf32>
    %41 = arith.mulf %34, %28 : vector<8x128xf32>
    %42 = arith.addf %25, %41 : vector<8x128xf32>
    %43 = math.tanh %42 : vector<8x128xf32>
    %cst_25 = arith.constant 1.000000e+00 : f32
    %44 = vector.broadcast %cst_25 : f32 to vector<8x128xf32>
    %45 = arith.subf %44, %40 : vector<8x128xf32>
    %46 = arith.mulf %45, %43 : vector<8x128xf32>
    %47 = arith.mulf %40, %16 : vector<8x128xf32>
    %48 = arith.addf %46, %47 : vector<8x128xf32>
    %49 = vector.broadcast %c0_i32 : i32 to vector<8x1xi32>
    %50 = arith.cmpi slt, %49, %0 : vector<8x1xi32>
    %cst_26 = arith.constant 0.000000e+00 : f32
    %51 = vector.shape_cast %50 : vector<8x1xi1> to vector<8x1xi1>
    %52 = vector.broadcast %51 : vector<8x1xi1> to vector<8x128xi1>
    %53 = vector.broadcast %cst_26 : f32 to vector<8x128xf32>
    %54 = arith.select %52, %48, %53 : vector<8x128xi1>, vector<8x128xf32>
    %55 = arith.index_cast %c0_i32 : i32 to index
    %c0_27 = arith.constant 0 : index
    %c0_28 = arith.constant 0 : index
    %56 = vector.load %arg9[%55, %c0_27, %c0_28] : memref<8x8x128xf32, #tpu.memory_space<vmem>>, vector<1x8x128xf32>
    %57 = vector.shape_cast %56 : vector<1x8x128xf32> to vector<8x128xf32>
    %58 = vector.shape_cast %54 : vector<8x128xf32> to vector<1x8x128xf32>
    tpu.vector_store %arg9[%55, %c0_27, %c0_28], %58 {strides = array<i32>} : memref<8x8x128xf32, #tpu.memory_space<vmem>>, vector<1x8x128xf32>,
    %59 = vector.shape_cast %50 : vector<8x1xi1> to vector<8x1xi1>
    %60 = vector.broadcast %59 : vector<8x1xi1> to vector<8x128xi1>
    %61 = arith.select %60, %48, %16 : vector<8x128xi1>, vector<8x128xf32>
    %c1_i32 = arith.constant 1 : i32
    %62 = arith.index_cast %c1_i32 : i32 to index
    %c0_29 = arith.constant 0 : index
    %c0_30 = arith.constant 0 : index
    %63 = vector.load %arg10[%62, %c0_29, %c0_30] : memref<8x8x384xf32, #tpu.memory_space<vmem>>, vector<1x8x384xf32>
    %64 = vector.shape_cast %63 : vector<1x8x384xf32> to vector<8x384xf32>
    %cst_31 = arith.constant dense<0.000000e+00> : vector<8x384xf32>
    %65 = tpu.matmul %61, %4, %cst_31 {dimension_numbers = #tpu.dot_dimension_numbers<[1], [0], [0], [1], [0, 0, 1, 1], [], []>} : vector<8x128xf32>, vector<128x384xf32>, vector<8x384xf32> -> vector<8x384xf32>
    %66 = vector.broadcast %8 : vector<1x384xf32> to vector<8x384xf32>
    %67 = arith.addf %65, %66 : vector<8x384xf32>
    %68 = vector.extract_strided_slice %64 {offsets = [0, 0], sizes = [8, 128], strides = [1, 1]} : vector<8x384xf32> to vector<8x128xf32>
    %69 = vector.extract_strided_slice %64 {offsets = [0, 128], sizes = [8, 128], strides = [1, 1]} : vector<8x384xf32> to vector<8x128xf32>
    %70 = vector.extract_strided_slice %64 {offsets = [0, 256], sizes = [8, 128], strides = [1, 1]} : vector<8x384xf32> to vector<8x128xf32>
    %71 = vector.extract_strided_slice %67 {offsets = [0, 0], sizes = [8, 128], strides = [1, 1]} : vector<8x384xf32> to vector<8x128xf32>
    %72 = vector.extract_strided_slice %67 {offsets = [0, 128], sizes = [8, 128], strides = [1, 1]} : vector<8x384xf32> to vector<8x128xf32>
    %73 = vector.extract_strided_slice %67 {offsets = [0, 256], sizes = [8, 128], strides = [1, 1]} : vector<8x384xf32> to vector<8x128xf32>
    %74 = arith.addf %68, %71 : vector<8x128xf32>
    %75 = arith.negf %74 : vector<8x128xf32>
    %76 = math.exp %75 : vector<8x128xf32>
    %cst_32 = arith.constant 1.000000e+00 : f32
    %77 = vector.broadcast %cst_32 : f32 to vector<8x128xf32>
    %78 = arith.addf %77, %76 : vector<8x128xf32>
    %79 = arith.divf %77, %78 : vector<8x128xf32>
    %80 = arith.addf %69, %72 : vector<8x128xf32>
    %81 = arith.negf %80 : vector<8x128xf32>
    %82 = math.exp %81 : vector<8x128xf32>
    %cst_33 = arith.constant 1.000000e+00 : f32
    %83 = vector.broadcast %cst_33 : f32 to vector<8x128xf32>
    %84 = arith.addf %83, %82 : vector<8x128xf32>
    %85 = arith.divf %83, %84 : vector<8x128xf32>
    %86 = arith.mulf %79, %73 : vector<8x128xf32>
    %87 = arith.addf %70, %86 : vector<8x128xf32>
    %88 = math.tanh %87 : vector<8x128xf32>
    %cst_34 = arith.constant 1.000000e+00 : f32
    %89 = vector.broadcast %cst_34 : f32 to vector<8x128xf32>
    %90 = arith.subf %89, %85 : vector<8x128xf32>
    %91 = arith.mulf %90, %88 : vector<8x128xf32>
    %92 = arith.mulf %85, %61 : vector<8x128xf32>
    %93 = arith.addf %91, %92 : vector<8x128xf32>
    %94 = vector.broadcast %c1_i32 : i32 to vector<8x1xi32>
    %95 = arith.cmpi slt, %94, %0 : vector<8x1xi32>
    %cst_35 = arith.constant 0.000000e+00 : f32
    %96 = vector.shape_cast %95 : vector<8x1xi1> to vector<8x1xi1>
    %97 = vector.broadcast %96 : vector<8x1xi1> to vector<8x128xi1>
    %98 = vector.broadcast %cst_35 : f32 to vector<8x128xf32>
    %99 = arith.select %97, %93, %98 : vector<8x128xi1>, vector<8x128xf32>
    %100 = arith.index_cast %c1_i32 : i32 to index
    %c0_36 = arith.constant 0 : index
    %c0_37 = arith.constant 0 : index
    %101 = vector.load %arg9[%100, %c0_36, %c0_37] : memref<8x8x128xf32, #tpu.memory_space<vmem>>, vector<1x8x128xf32>
    %102 = vector.shape_cast %101 : vector<1x8x128xf32> to vector<8x128xf32>
    %103 = vector.shape_cast %99 : vector<8x128xf32> to vector<1x8x128xf32>
    tpu.vector_store %arg9[%100, %c0_36, %c0_37], %103 {strides = array<i32>} : memref<8x8x128xf32, #tpu.memory_space<vmem>>, vector<1x8x128xf32>,
    %104 = vector.shape_cast %95 : vector<8x1xi1> to vector<8x1xi1>
    %105 = vector.broadcast %104 : vector<8x1xi1> to vector<8x128xi1>
    %106 = arith.select %105, %93, %61 : vector<8x128xi1>, vector<8x128xf32>
    %c2_i32 = arith.constant 2 : i32
    %107 = arith.index_cast %c2_i32 : i32 to index
    %c0_38 = arith.constant 0 : index
    %c0_39 = arith.constant 0 : index
    %108 = vector.load %arg10[%107, %c0_38, %c0_39] : memref<8x8x384xf32, #tpu.memory_space<vmem>>, vector<1x8x384xf32>
    %109 = vector.shape_cast %108 : vector<1x8x384xf32> to vector<8x384xf32>
    %cst_40 = arith.constant dense<0.000000e+00> : vector<8x384xf32>
    %110 = tpu.matmul %106, %4, %cst_40 {dimension_numbers = #tpu.dot_dimension_numbers<[1], [0], [0], [1], [0, 0, 1, 1], [], []>} : vector<8x128xf32>, vector<128x384xf32>, vector<8x384xf32> -> vector<8x384xf32>
    %111 = vector.broadcast %8 : vector<1x384xf32> to vector<8x384xf32>
    %112 = arith.addf %110, %111 : vector<8x384xf32>
    %113 = vector.extract_strided_slice %109 {offsets = [0, 0], sizes = [8, 128], strides = [1, 1]} : vector<8x384xf32> to vector<8x128xf32>
    %114 = vector.extract_strided_slice %109 {offsets = [0, 128], sizes = [8, 128], strides = [1, 1]} : vector<8x384xf32> to vector<8x128xf32>
    %115 = vector.extract_strided_slice %109 {offsets = [0, 256], sizes = [8, 128], strides = [1, 1]} : vector<8x384xf32> to vector<8x128xf32>
    %116 = vector.extract_strided_slice %112 {offsets = [0, 0], sizes = [8, 128], strides = [1, 1]} : vector<8x384xf32> to vector<8x128xf32>
    %117 = vector.extract_strided_slice %112 {offsets = [0, 128], sizes = [8, 128], strides = [1, 1]} : vector<8x384xf32> to vector<8x128xf32>
    %118 = vector.extract_strided_slice %112 {offsets = [0, 256], sizes = [8, 128], strides = [1, 1]} : vector<8x384xf32> to vector<8x128xf32>
    %119 = arith.addf %113, %116 : vector<8x128xf32>
    %120 = arith.negf %119 : vector<8x128xf32>
    %121 = math.exp %120 : vector<8x128xf32>
    %cst_41 = arith.constant 1.000000e+00 : f32
    %122 = vector.broadcast %cst_41 : f32 to vector<8x128xf32>
    %123 = arith.addf %122, %121 : vector<8x128xf32>
    %124 = arith.divf %122, %123 : vector<8x128xf32>
    %125 = arith.addf %114, %117 : vector<8x128xf32>
    %126 = arith.negf %125 : vector<8x128xf32>
    %127 = math.exp %126 : vector<8x128xf32>
    %cst_42 = arith.constant 1.000000e+00 : f32
    %128 = vector.broadcast %cst_42 : f32 to vector<8x128xf32>
    %129 = arith.addf %128, %127 : vector<8x128xf32>
    %130 = arith.divf %128, %129 : vector<8x128xf32>
    %131 = arith.mulf %124, %118 : vector<8x128xf32>
    %132 = arith.addf %115, %131 : vector<8x128xf32>
    %133 = math.tanh %132 : vector<8x128xf32>
    %cst_43 = arith.constant 1.000000e+00 : f32
    %134 = vector.broadcast %cst_43 : f32 to vector<8x128xf32>
    %135 = arith.subf %134, %130 : vector<8x128xf32>
    %136 = arith.mulf %135, %133 : vector<8x128xf32>
    %137 = arith.mulf %130, %106 : vector<8x128xf32>
    %138 = arith.addf %136, %137 : vector<8x128xf32>
    %139 = vector.broadcast %c2_i32 : i32 to vector<8x1xi32>
    %140 = arith.cmpi slt, %139, %0 : vector<8x1xi32>
    %cst_44 = arith.constant 0.000000e+00 : f32
    %141 = vector.shape_cast %140 : vector<8x1xi1> to vector<8x1xi1>
    %142 = vector.broadcast %141 : vector<8x1xi1> to vector<8x128xi1>
    %143 = vector.broadcast %cst_44 : f32 to vector<8x128xf32>
    %144 = arith.select %142, %138, %143 : vector<8x128xi1>, vector<8x128xf32>
    %145 = arith.index_cast %c2_i32 : i32 to index
    %c0_45 = arith.constant 0 : index
    %c0_46 = arith.constant 0 : index
    %146 = vector.load %arg9[%145, %c0_45, %c0_46] : memref<8x8x128xf32, #tpu.memory_space<vmem>>, vector<1x8x128xf32>
    %147 = vector.shape_cast %146 : vector<1x8x128xf32> to vector<8x128xf32>
    %148 = vector.shape_cast %144 : vector<8x128xf32> to vector<1x8x128xf32>
    tpu.vector_store %arg9[%145, %c0_45, %c0_46], %148 {strides = array<i32>} : memref<8x8x128xf32, #tpu.memory_space<vmem>>, vector<1x8x128xf32>,
    %149 = vector.shape_cast %140 : vector<8x1xi1> to vector<8x1xi1>
    %150 = vector.broadcast %149 : vector<8x1xi1> to vector<8x128xi1>
    %151 = arith.select %150, %138, %106 : vector<8x128xi1>, vector<8x128xf32>
    %c3_i32 = arith.constant 3 : i32
    %152 = arith.index_cast %c3_i32 : i32 to index
    %c0_47 = arith.constant 0 : index
    %c0_48 = arith.constant 0 : index
    %153 = vector.load %arg10[%152, %c0_47, %c0_48] : memref<8x8x384xf32, #tpu.memory_space<vmem>>, vector<1x8x384xf32>
    %154 = vector.shape_cast %153 : vector<1x8x384xf32> to vector<8x384xf32>
    %cst_49 = arith.constant dense<0.000000e+00> : vector<8x384xf32>
    %155 = tpu.matmul %151, %4, %cst_49 {dimension_numbers = #tpu.dot_dimension_numbers<[1], [0], [0], [1], [0, 0, 1, 1], [], []>} : vector<8x128xf32>, vector<128x384xf32>, vector<8x384xf32> -> vector<8x384xf32>
    %156 = vector.broadcast %8 : vector<1x384xf32> to vector<8x384xf32>
    %157 = arith.addf %155, %156 : vector<8x384xf32>
    %158 = vector.extract_strided_slice %154 {offsets = [0, 0], sizes = [8, 128], strides = [1, 1]} : vector<8x384xf32> to vector<8x128xf32>
    %159 = vector.extract_strided_slice %154 {offsets = [0, 128], sizes = [8, 128], strides = [1, 1]} : vector<8x384xf32> to vector<8x128xf32>
    %160 = vector.extract_strided_slice %154 {offsets = [0, 256], sizes = [8, 128], strides = [1, 1]} : vector<8x384xf32> to vector<8x128xf32>
    %161 = vector.extract_strided_slice %157 {offsets = [0, 0], sizes = [8, 128], strides = [1, 1]} : vector<8x384xf32> to vector<8x128xf32>
    %162 = vector.extract_strided_slice %157 {offsets = [0, 128], sizes = [8, 128], strides = [1, 1]} : vector<8x384xf32> to vector<8x128xf32>
    %163 = vector.extract_strided_slice %157 {offsets = [0, 256], sizes = [8, 128], strides = [1, 1]} : vector<8x384xf32> to vector<8x128xf32>
    %164 = arith.addf %158, %161 : vector<8x128xf32>
    %165 = arith.negf %164 : vector<8x128xf32>
    %166 = math.exp %165 : vector<8x128xf32>
    %cst_50 = arith.constant 1.000000e+00 : f32
    %167 = vector.broadcast %cst_50 : f32 to vector<8x128xf32>
    %168 = arith.addf %167, %166 : vector<8x128xf32>
    %169 = arith.divf %167, %168 : vector<8x128xf32>
    %170 = arith.addf %159, %162 : vector<8x128xf32>
    %171 = arith.negf %170 : vector<8x128xf32>
    %172 = math.exp %171 : vector<8x128xf32>
    %cst_51 = arith.constant 1.000000e+00 : f32
    %173 = vector.broadcast %cst_51 : f32 to vector<8x128xf32>
    %174 = arith.addf %173, %172 : vector<8x128xf32>
    %175 = arith.divf %173, %174 : vector<8x128xf32>
    %176 = arith.mulf %169, %163 : vector<8x128xf32>
    %177 = arith.addf %160, %176 : vector<8x128xf32>
    %178 = math.tanh %177 : vector<8x128xf32>
    %cst_52 = arith.constant 1.000000e+00 : f32
    %179 = vector.broadcast %cst_52 : f32 to vector<8x128xf32>
    %180 = arith.subf %179, %175 : vector<8x128xf32>
    %181 = arith.mulf %180, %178 : vector<8x128xf32>
    %182 = arith.mulf %175, %151 : vector<8x128xf32>
    %183 = arith.addf %181, %182 : vector<8x128xf32>
    %184 = vector.broadcast %c3_i32 : i32 to vector<8x1xi32>
    %185 = arith.cmpi slt, %184, %0 : vector<8x1xi32>
    %cst_53 = arith.constant 0.000000e+00 : f32
    %186 = vector.shape_cast %185 : vector<8x1xi1> to vector<8x1xi1>
    %187 = vector.broadcast %186 : vector<8x1xi1> to vector<8x128xi1>
    %188 = vector.broadcast %cst_53 : f32 to vector<8x128xf32>
    %189 = arith.select %187, %183, %188 : vector<8x128xi1>, vector<8x128xf32>
    %190 = arith.index_cast %c3_i32 : i32 to index
    %c0_54 = arith.constant 0 : index
    %c0_55 = arith.constant 0 : index
    %191 = vector.load %arg9[%190, %c0_54, %c0_55] : memref<8x8x128xf32, #tpu.memory_space<vmem>>, vector<1x8x128xf32>
    %192 = vector.shape_cast %191 : vector<1x8x128xf32> to vector<8x128xf32>
    %193 = vector.shape_cast %189 : vector<8x128xf32> to vector<1x8x128xf32>
    tpu.vector_store %arg9[%190, %c0_54, %c0_55], %193 {strides = array<i32>} : memref<8x8x128xf32, #tpu.memory_space<vmem>>, vector<1x8x128xf32>,
    %194 = vector.shape_cast %185 : vector<8x1xi1> to vector<8x1xi1>
    %195 = vector.broadcast %194 : vector<8x1xi1> to vector<8x128xi1>
    %196 = arith.select %195, %183, %151 : vector<8x128xi1>, vector<8x128xf32>
    %c4_i32 = arith.constant 4 : i32
    %197 = arith.index_cast %c4_i32 : i32 to index
    %c0_56 = arith.constant 0 : index
    %c0_57 = arith.constant 0 : index
    %198 = vector.load %arg10[%197, %c0_56, %c0_57] : memref<8x8x384xf32, #tpu.memory_space<vmem>>, vector<1x8x384xf32>
    %199 = vector.shape_cast %198 : vector<1x8x384xf32> to vector<8x384xf32>
    %cst_58 = arith.constant dense<0.000000e+00> : vector<8x384xf32>
    %200 = tpu.matmul %196, %4, %cst_58 {dimension_numbers = #tpu.dot_dimension_numbers<[1], [0], [0], [1], [0, 0, 1, 1], [], []>} : vector<8x128xf32>, vector<128x384xf32>, vector<8x384xf32> -> vector<8x384xf32>
    %201 = vector.broadcast %8 : vector<1x384xf32> to vector<8x384xf32>
    %202 = arith.addf %200, %201 : vector<8x384xf32>
    %203 = vector.extract_strided_slice %199 {offsets = [0, 0], sizes = [8, 128], strides = [1, 1]} : vector<8x384xf32> to vector<8x128xf32>
    %204 = vector.extract_strided_slice %199 {offsets = [0, 128], sizes = [8, 128], strides = [1, 1]} : vector<8x384xf32> to vector<8x128xf32>
    %205 = vector.extract_strided_slice %199 {offsets = [0, 256], sizes = [8, 128], strides = [1, 1]} : vector<8x384xf32> to vector<8x128xf32>
    %206 = vector.extract_strided_slice %202 {offsets = [0, 0], sizes = [8, 128], strides = [1, 1]} : vector<8x384xf32> to vector<8x128xf32>
    %207 = vector.extract_strided_slice %202 {offsets = [0, 128], sizes = [8, 128], strides = [1, 1]} : vector<8x384xf32> to vector<8x128xf32>
    %208 = vector.extract_strided_slice %202 {offsets = [0, 256], sizes = [8, 128], strides = [1, 1]} : vector<8x384xf32> to vector<8x128xf32>
    %209 = arith.addf %203, %206 : vector<8x128xf32>
    %210 = arith.negf %209 : vector<8x128xf32>
    %211 = math.exp %210 : vector<8x128xf32>
    %cst_59 = arith.constant 1.000000e+00 : f32
    %212 = vector.broadcast %cst_59 : f32 to vector<8x128xf32>
    %213 = arith.addf %212, %211 : vector<8x128xf32>
    %214 = arith.divf %212, %213 : vector<8x128xf32>
    %215 = arith.addf %204, %207 : vector<8x128xf32>
    %216 = arith.negf %215 : vector<8x128xf32>
    %217 = math.exp %216 : vector<8x128xf32>
    %cst_60 = arith.constant 1.000000e+00 : f32
    %218 = vector.broadcast %cst_60 : f32 to vector<8x128xf32>
    %219 = arith.addf %218, %217 : vector<8x128xf32>
    %220 = arith.divf %218, %219 : vector<8x128xf32>
    %221 = arith.mulf %214, %208 : vector<8x128xf32>
    %222 = arith.addf %205, %221 : vector<8x128xf32>
    %223 = math.tanh %222 : vector<8x128xf32>
    %cst_61 = arith.constant 1.000000e+00 : f32
    %224 = vector.broadcast %cst_61 : f32 to vector<8x128xf32>
    %225 = arith.subf %224, %220 : vector<8x128xf32>
    %226 = arith.mulf %225, %223 : vector<8x128xf32>
    %227 = arith.mulf %220, %196 : vector<8x128xf32>
    %228 = arith.addf %226, %227 : vector<8x128xf32>
    %229 = vector.broadcast %c4_i32 : i32 to vector<8x1xi32>
    %230 = arith.cmpi slt, %229, %0 : vector<8x1xi32>
    %cst_62 = arith.constant 0.000000e+00 : f32
    %231 = vector.shape_cast %230 : vector<8x1xi1> to vector<8x1xi1>
    %232 = vector.broadcast %231 : vector<8x1xi1> to vector<8x128xi1>
    %233 = vector.broadcast %cst_62 : f32 to vector<8x128xf32>
    %234 = arith.select %232, %228, %233 : vector<8x128xi1>, vector<8x128xf32>
    %235 = arith.index_cast %c4_i32 : i32 to index
    %c0_63 = arith.constant 0 : index
    %c0_64 = arith.constant 0 : index
    %236 = vector.load %arg9[%235, %c0_63, %c0_64] : memref<8x8x128xf32, #tpu.memory_space<vmem>>, vector<1x8x128xf32>
    %237 = vector.shape_cast %236 : vector<1x8x128xf32> to vector<8x128xf32>
    %238 = vector.shape_cast %234 : vector<8x128xf32> to vector<1x8x128xf32>
    tpu.vector_store %arg9[%235, %c0_63, %c0_64], %238 {strides = array<i32>} : memref<8x8x128xf32, #tpu.memory_space<vmem>>, vector<1x8x128xf32>,
    %239 = vector.shape_cast %230 : vector<8x1xi1> to vector<8x1xi1>
    %240 = vector.broadcast %239 : vector<8x1xi1> to vector<8x128xi1>
    %241 = arith.select %240, %228, %196 : vector<8x128xi1>, vector<8x128xf32>
    %c5_i32 = arith.constant 5 : i32
    %242 = arith.index_cast %c5_i32 : i32 to index
    %c0_65 = arith.constant 0 : index
    %c0_66 = arith.constant 0 : index
    %243 = vector.load %arg10[%242, %c0_65, %c0_66] : memref<8x8x384xf32, #tpu.memory_space<vmem>>, vector<1x8x384xf32>
    %244 = vector.shape_cast %243 : vector<1x8x384xf32> to vector<8x384xf32>
    %cst_67 = arith.constant dense<0.000000e+00> : vector<8x384xf32>
    %245 = tpu.matmul %241, %4, %cst_67 {dimension_numbers = #tpu.dot_dimension_numbers<[1], [0], [0], [1], [0, 0, 1, 1], [], []>} : vector<8x128xf32>, vector<128x384xf32>, vector<8x384xf32> -> vector<8x384xf32>
    %246 = vector.broadcast %8 : vector<1x384xf32> to vector<8x384xf32>
    %247 = arith.addf %245, %246 : vector<8x384xf32>
    %248 = vector.extract_strided_slice %244 {offsets = [0, 0], sizes = [8, 128], strides = [1, 1]} : vector<8x384xf32> to vector<8x128xf32>
    %249 = vector.extract_strided_slice %244 {offsets = [0, 128], sizes = [8, 128], strides = [1, 1]} : vector<8x384xf32> to vector<8x128xf32>
    %250 = vector.extract_strided_slice %244 {offsets = [0, 256], sizes = [8, 128], strides = [1, 1]} : vector<8x384xf32> to vector<8x128xf32>
    %251 = vector.extract_strided_slice %247 {offsets = [0, 0], sizes = [8, 128], strides = [1, 1]} : vector<8x384xf32> to vector<8x128xf32>
    %252 = vector.extract_strided_slice %247 {offsets = [0, 128], sizes = [8, 128], strides = [1, 1]} : vector<8x384xf32> to vector<8x128xf32>
    %253 = vector.extract_strided_slice %247 {offsets = [0, 256], sizes = [8, 128], strides = [1, 1]} : vector<8x384xf32> to vector<8x128xf32>
    %254 = arith.addf %248, %251 : vector<8x128xf32>
    %255 = arith.negf %254 : vector<8x128xf32>
    %256 = math.exp %255 : vector<8x128xf32>
    %cst_68 = arith.constant 1.000000e+00 : f32
    %257 = vector.broadcast %cst_68 : f32 to vector<8x128xf32>
    %258 = arith.addf %257, %256 : vector<8x128xf32>
    %259 = arith.divf %257, %258 : vector<8x128xf32>
    %260 = arith.addf %249, %252 : vector<8x128xf32>
    %261 = arith.negf %260 : vector<8x128xf32>
    %262 = math.exp %261 : vector<8x128xf32>
    %cst_69 = arith.constant 1.000000e+00 : f32
    %263 = vector.broadcast %cst_69 : f32 to vector<8x128xf32>
    %264 = arith.addf %263, %262 : vector<8x128xf32>
    %265 = arith.divf %263, %264 : vector<8x128xf32>
    %266 = arith.mulf %259, %253 : vector<8x128xf32>
    %267 = arith.addf %250, %266 : vector<8x128xf32>
    %268 = math.tanh %267 : vector<8x128xf32>
    %cst_70 = arith.constant 1.000000e+00 : f32
    %269 = vector.broadcast %cst_70 : f32 to vector<8x128xf32>
    %270 = arith.subf %269, %265 : vector<8x128xf32>
    %271 = arith.mulf %270, %268 : vector<8x128xf32>
    %272 = arith.mulf %265, %241 : vector<8x128xf32>
    %273 = arith.addf %271, %272 : vector<8x128xf32>
    %274 = vector.broadcast %c5_i32 : i32 to vector<8x1xi32>
    %275 = arith.cmpi slt, %274, %0 : vector<8x1xi32>
    %cst_71 = arith.constant 0.000000e+00 : f32
    %276 = vector.shape_cast %275 : vector<8x1xi1> to vector<8x1xi1>
    %277 = vector.broadcast %276 : vector<8x1xi1> to vector<8x128xi1>
    %278 = vector.broadcast %cst_71 : f32 to vector<8x128xf32>
    %279 = arith.select %277, %273, %278 : vector<8x128xi1>, vector<8x128xf32>
    %280 = arith.index_cast %c5_i32 : i32 to index
    %c0_72 = arith.constant 0 : index
    %c0_73 = arith.constant 0 : index
    %281 = vector.load %arg9[%280, %c0_72, %c0_73] : memref<8x8x128xf32, #tpu.memory_space<vmem>>, vector<1x8x128xf32>
    %282 = vector.shape_cast %281 : vector<1x8x128xf32> to vector<8x128xf32>
    %283 = vector.shape_cast %279 : vector<8x128xf32> to vector<1x8x128xf32>
    tpu.vector_store %arg9[%280, %c0_72, %c0_73], %283 {strides = array<i32>} : memref<8x8x128xf32, #tpu.memory_space<vmem>>, vector<1x8x128xf32>,
    %284 = vector.shape_cast %275 : vector<8x1xi1> to vector<8x1xi1>
    %285 = vector.broadcast %284 : vector<8x1xi1> to vector<8x128xi1>
    %286 = arith.select %285, %273, %241 : vector<8x128xi1>, vector<8x128xf32>
    %c6_i32 = arith.constant 6 : i32
    %287 = arith.index_cast %c6_i32 : i32 to index
    %c0_74 = arith.constant 0 : index
    %c0_75 = arith.constant 0 : index
    %288 = vector.load %arg10[%287, %c0_74, %c0_75] : memref<8x8x384xf32, #tpu.memory_space<vmem>>, vector<1x8x384xf32>
    %289 = vector.shape_cast %288 : vector<1x8x384xf32> to vector<8x384xf32>
    %cst_76 = arith.constant dense<0.000000e+00> : vector<8x384xf32>
    %290 = tpu.matmul %286, %4, %cst_76 {dimension_numbers = #tpu.dot_dimension_numbers<[1], [0], [0], [1], [0, 0, 1, 1], [], []>} : vector<8x128xf32>, vector<128x384xf32>, vector<8x384xf32> -> vector<8x384xf32>
    %291 = vector.broadcast %8 : vector<1x384xf32> to vector<8x384xf32>
    %292 = arith.addf %290, %291 : vector<8x384xf32>
    %293 = vector.extract_strided_slice %289 {offsets = [0, 0], sizes = [8, 128], strides = [1, 1]} : vector<8x384xf32> to vector<8x128xf32>
    %294 = vector.extract_strided_slice %289 {offsets = [0, 128], sizes = [8, 128], strides = [1, 1]} : vector<8x384xf32> to vector<8x128xf32>
    %295 = vector.extract_strided_slice %289 {offsets = [0, 256], sizes = [8, 128], strides = [1, 1]} : vector<8x384xf32> to vector<8x128xf32>
    %296 = vector.extract_strided_slice %292 {offsets = [0, 0], sizes = [8, 128], strides = [1, 1]} : vector<8x384xf32> to vector<8x128xf32>
    %297 = vector.extract_strided_slice %292 {offsets = [0, 128], sizes = [8, 128], strides = [1, 1]} : vector<8x384xf32> to vector<8x128xf32>
    %298 = vector.extract_strided_slice %292 {offsets = [0, 256], sizes = [8, 128], strides = [1, 1]} : vector<8x384xf32> to vector<8x128xf32>
    %299 = arith.addf %293, %296 : vector<8x128xf32>
    %300 = arith.negf %299 : vector<8x128xf32>
    %301 = math.exp %300 : vector<8x128xf32>
    %cst_77 = arith.constant 1.000000e+00 : f32
    %302 = vector.broadcast %cst_77 : f32 to vector<8x128xf32>
    %303 = arith.addf %302, %301 : vector<8x128xf32>
    %304 = arith.divf %302, %303 : vector<8x128xf32>
    %305 = arith.addf %294, %297 : vector<8x128xf32>
    %306 = arith.negf %305 : vector<8x128xf32>
    %307 = math.exp %306 : vector<8x128xf32>
    %cst_78 = arith.constant 1.000000e+00 : f32
    %308 = vector.broadcast %cst_78 : f32 to vector<8x128xf32>
    %309 = arith.addf %308, %307 : vector<8x128xf32>
    %310 = arith.divf %308, %309 : vector<8x128xf32>
    %311 = arith.mulf %304, %298 : vector<8x128xf32>
    %312 = arith.addf %295, %311 : vector<8x128xf32>
    %313 = math.tanh %312 : vector<8x128xf32>
    %cst_79 = arith.constant 1.000000e+00 : f32
    %314 = vector.broadcast %cst_79 : f32 to vector<8x128xf32>
    %315 = arith.subf %314, %310 : vector<8x128xf32>
    %316 = arith.mulf %315, %313 : vector<8x128xf32>
    %317 = arith.mulf %310, %286 : vector<8x128xf32>
    %318 = arith.addf %316, %317 : vector<8x128xf32>
    %319 = vector.broadcast %c6_i32 : i32 to vector<8x1xi32>
    %320 = arith.cmpi slt, %319, %0 : vector<8x1xi32>
    %cst_80 = arith.constant 0.000000e+00 : f32
    %321 = vector.shape_cast %320 : vector<8x1xi1> to vector<8x1xi1>
    %322 = vector.broadcast %321 : vector<8x1xi1> to vector<8x128xi1>
    %323 = vector.broadcast %cst_80 : f32 to vector<8x128xf32>
    %324 = arith.select %322, %318, %323 : vector<8x128xi1>, vector<8x128xf32>
    %325 = arith.index_cast %c6_i32 : i32 to index
    %c0_81 = arith.constant 0 : index
    %c0_82 = arith.constant 0 : index
    %326 = vector.load %arg9[%325, %c0_81, %c0_82] : memref<8x8x128xf32, #tpu.memory_space<vmem>>, vector<1x8x128xf32>
    %327 = vector.shape_cast %326 : vector<1x8x128xf32> to vector<8x128xf32>
    %328 = vector.shape_cast %324 : vector<8x128xf32> to vector<1x8x128xf32>
    tpu.vector_store %arg9[%325, %c0_81, %c0_82], %328 {strides = array<i32>} : memref<8x8x128xf32, #tpu.memory_space<vmem>>, vector<1x8x128xf32>,
    %329 = vector.shape_cast %320 : vector<8x1xi1> to vector<8x1xi1>
    %330 = vector.broadcast %329 : vector<8x1xi1> to vector<8x128xi1>
    %331 = arith.select %330, %318, %286 : vector<8x128xi1>, vector<8x128xf32>
    %c7_i32 = arith.constant 7 : i32
    %332 = arith.index_cast %c7_i32 : i32 to index
    %c0_83 = arith.constant 0 : index
    %c0_84 = arith.constant 0 : index
    %333 = vector.load %arg10[%332, %c0_83, %c0_84] : memref<8x8x384xf32, #tpu.memory_space<vmem>>, vector<1x8x384xf32>
    %334 = vector.shape_cast %333 : vector<1x8x384xf32> to vector<8x384xf32>
    %cst_85 = arith.constant dense<0.000000e+00> : vector<8x384xf32>
    %335 = tpu.matmul %331, %4, %cst_85 {dimension_numbers = #tpu.dot_dimension_numbers<[1], [0], [0], [1], [0, 0, 1, 1], [], []>} : vector<8x128xf32>, vector<128x384xf32>, vector<8x384xf32> -> vector<8x384xf32>
    %336 = vector.broadcast %8 : vector<1x384xf32> to vector<8x384xf32>
    %337 = arith.addf %335, %336 : vector<8x384xf32>
    %338 = vector.extract_strided_slice %334 {offsets = [0, 0], sizes = [8, 128], strides = [1, 1]} : vector<8x384xf32> to vector<8x128xf32>
    %339 = vector.extract_strided_slice %334 {offsets = [0, 128], sizes = [8, 128], strides = [1, 1]} : vector<8x384xf32> to vector<8x128xf32>
    %340 = vector.extract_strided_slice %334 {offsets = [0, 256], sizes = [8, 128], strides = [1, 1]} : vector<8x384xf32> to vector<8x128xf32>
    %341 = vector.extract_strided_slice %337 {offsets = [0, 0], sizes = [8, 128], strides = [1, 1]} : vector<8x384xf32> to vector<8x128xf32>
    %342 = vector.extract_strided_slice %337 {offsets = [0, 128], sizes = [8, 128], strides = [1, 1]} : vector<8x384xf32> to vector<8x128xf32>
    %343 = vector.extract_strided_slice %337 {offsets = [0, 256], sizes = [8, 128], strides = [1, 1]} : vector<8x384xf32> to vector<8x128xf32>
    %344 = arith.addf %338, %341 : vector<8x128xf32>
    %345 = arith.negf %344 : vector<8x128xf32>
    %346 = math.exp %345 : vector<8x128xf32>
    %cst_86 = arith.constant 1.000000e+00 : f32
    %347 = vector.broadcast %cst_86 : f32 to vector<8x128xf32>
    %348 = arith.addf %347, %346 : vector<8x128xf32>
    %349 = arith.divf %347, %348 : vector<8x128xf32>
    %350 = arith.addf %339, %342 : vector<8x128xf32>
    %351 = arith.negf %350 : vector<8x128xf32>
    %352 = math.exp %351 : vector<8x128xf32>
    %cst_87 = arith.constant 1.000000e+00 : f32
    %353 = vector.broadcast %cst_87 : f32 to vector<8x128xf32>
    %354 = arith.addf %353, %352 : vector<8x128xf32>
    %355 = arith.divf %353, %354 : vector<8x128xf32>
    %356 = arith.mulf %349, %343 : vector<8x128xf32>
    %357 = arith.addf %340, %356 : vector<8x128xf32>
    %358 = math.tanh %357 : vector<8x128xf32>
    %cst_88 = arith.constant 1.000000e+00 : f32
    %359 = vector.broadcast %cst_88 : f32 to vector<8x128xf32>
    %360 = arith.subf %359, %355 : vector<8x128xf32>
    %361 = arith.mulf %360, %358 : vector<8x128xf32>
    %362 = arith.mulf %355, %331 : vector<8x128xf32>
    %363 = arith.addf %361, %362 : vector<8x128xf32>
    %364 = vector.broadcast %c7_i32 : i32 to vector<8x1xi32>
    %365 = arith.cmpi slt, %364, %0 : vector<8x1xi32>
    %cst_89 = arith.constant 0.000000e+00 : f32
    %366 = vector.shape_cast %365 : vector<8x1xi1> to vector<8x1xi1>
    %367 = vector.broadcast %366 : vector<8x1xi1> to vector<8x128xi1>
    %368 = vector.broadcast %cst_89 : f32 to vector<8x128xf32>
    %369 = arith.select %367, %363, %368 : vector<8x128xi1>, vector<8x128xf32>
    %370 = arith.index_cast %c7_i32 : i32 to index
    %c0_90 = arith.constant 0 : index
    %c0_91 = arith.constant 0 : index
    %371 = vector.load %arg9[%370, %c0_90, %c0_91] : memref<8x8x128xf32, #tpu.memory_space<vmem>>, vector<1x8x128xf32>
    %372 = vector.shape_cast %371 : vector<1x8x128xf32> to vector<8x128xf32>
    %373 = vector.shape_cast %369 : vector<8x128xf32> to vector<1x8x128xf32>
    tpu.vector_store %arg9[%370, %c0_90, %c0_91], %373 {strides = array<i32>} : memref<8x8x128xf32, #tpu.memory_space<vmem>>, vector<1x8x128xf32>,
    %374 = vector.shape_cast %365 : vector<8x1xi1> to vector<8x1xi1>
    %375 = vector.broadcast %374 : vector<8x1xi1> to vector<8x128xi1>
    %376 = arith.select %375, %363, %331 : vector<8x128xi1>, vector<8x128xf32>
    %c8_i32 = arith.constant 8 : i32
    %c0_92 = arith.constant 0 : index
    %c0_93 = arith.constant 0 : index
    %c0_94 = arith.constant 0 : index
    %377 = vector.load %arg8[%c0_92, %c0_93, %c0_94] : memref<4x8x128xf32, #tpu.memory_space<vmem>>, vector<1x8x128xf32>
    %378 = vector.shape_cast %377 : vector<1x8x128xf32> to vector<8x128xf32>
    %379 = vector.shape_cast %376 : vector<8x128xf32> to vector<1x8x128xf32>
    tpu.vector_store %arg8[%c0_92, %c0_93, %c0_94], %379 {strides = array<i32>} : memref<4x8x128xf32, #tpu.memory_space<vmem>>, vector<1x8x128xf32>,
    %c1 = arith.constant 1 : index
    %c0_95 = arith.constant 0 : index
    %c0_96 = arith.constant 0 : index
    %380 = vector.load %arg3[%c1, %c0_95, %c0_96] : memref<4x128x384xf32, #tpu.memory_space<vmem>>, vector<1x128x384xf32>
    %381 = vector.shape_cast %380 : vector<1x128x384xf32> to vector<128x384xf32>
    %c1_97 = arith.constant 1 : index
    %c0_98 = arith.constant 0 : index
    %c0_99 = arith.constant 0 : index
    %382 = vector.load %arg4[%c1_97, %c0_98, %c0_99] : memref<4x128x384xf32, #tpu.memory_space<vmem>>, vector<1x128x384xf32>
    %383 = vector.shape_cast %382 : vector<1x128x384xf32> to vector<128x384xf32>
    %c1_100 = arith.constant 1 : index
    %c0_101 = arith.constant 0 : index
    %c0_102 = arith.constant 0 : index
    %384 = vector.load %arg5[%c1_100, %c0_101, %c0_102] : memref<4x1x384xf32, #tpu.memory_space<vmem>>, vector<1x1x384xf32>
    %385 = vector.shape_cast %384 : vector<1x1x384xf32> to vector<1x384xf32>
    %c1_103 = arith.constant 1 : index
    %c0_104 = arith.constant 0 : index
    %c0_105 = arith.constant 0 : index
    %386 = vector.load %arg6[%c1_103, %c0_104, %c0_105] : memref<4x1x384xf32, #tpu.memory_space<vmem>>, vector<1x1x384xf32>
    %387 = vector.shape_cast %386 : vector<1x1x384xf32> to vector<1x384xf32>
    %c0_106 = arith.constant 0 : index
    %c0_107 = arith.constant 0 : index
    %c0_108 = arith.constant 0 : index
    %388 = vector.load %arg9[%c0_106, %c0_107, %c0_108] : memref<8x8x128xf32, #tpu.memory_space<vmem>>, vector<8x8x128xf32>
    %389 = vector.shape_cast %388 : vector<8x8x128xf32> to vector<64x128xf32>
    %cst_109 = arith.constant dense<0.000000e+00> : vector<64x384xf32>
    %390 = tpu.matmul %389, %381, %cst_109 {dimension_numbers = #tpu.dot_dimension_numbers<[1], [0], [0], [1], [0, 0, 1, 1], [], []>} : vector<64x128xf32>, vector<128x384xf32>, vector<64x384xf32> -> vector<64x384xf32>
    %391 = vector.broadcast %385 : vector<1x384xf32> to vector<64x384xf32>
    %392 = arith.addf %390, %391 : vector<64x384xf32>
    %393 = vector.shape_cast %392 : vector<64x384xf32> to vector<8x8x384xf32>
    %c0_110 = arith.constant 0 : index
    %c0_111 = arith.constant 0 : index
    %c0_112 = arith.constant 0 : index
    %394 = vector.load %arg10[%c0_110, %c0_111, %c0_112] : memref<8x8x384xf32, #tpu.memory_space<vmem>>, vector<8x8x384xf32>
    tpu.vector_store %arg10[%c0_110, %c0_111, %c0_112], %393 {strides = array<i32>} : memref<8x8x384xf32, #tpu.memory_space<vmem>>, vector<8x8x384xf32>,
    %cst_113 = arith.constant 0.000000e+00 : f32
    %395 = vector.broadcast %cst_113 : f32 to vector<8x128xf32>
    %c0_i32_114 = arith.constant 0 : i32
    %396 = arith.index_cast %c0_i32_114 : i32 to index
    %c0_115 = arith.constant 0 : index
    %c0_116 = arith.constant 0 : index
    %397 = vector.load %arg10[%396, %c0_115, %c0_116] : memref<8x8x384xf32, #tpu.memory_space<vmem>>, vector<1x8x384xf32>
    %398 = vector.shape_cast %397 : vector<1x8x384xf32> to vector<8x384xf32>
    %cst_117 = arith.constant dense<0.000000e+00> : vector<8x384xf32>
    %399 = tpu.matmul %395, %383, %cst_117 {dimension_numbers = #tpu.dot_dimension_numbers<[1], [0], [0], [1], [0, 0, 1, 1], [], []>} : vector<8x128xf32>, vector<128x384xf32>, vector<8x384xf32> -> vector<8x384xf32>
    %400 = vector.broadcast %387 : vector<1x384xf32> to vector<8x384xf32>
    %401 = arith.addf %399, %400 : vector<8x384xf32>
    %402 = vector.extract_strided_slice %398 {offsets = [0, 0], sizes = [8, 128], strides = [1, 1]} : vector<8x384xf32> to vector<8x128xf32>
    %403 = vector.extract_strided_slice %398 {offsets = [0, 128], sizes = [8, 128], strides = [1, 1]} : vector<8x384xf32> to vector<8x128xf32>
    %404 = vector.extract_strided_slice %398 {offsets = [0, 256], sizes = [8, 128], strides = [1, 1]} : vector<8x384xf32> to vector<8x128xf32>
    %405 = vector.extract_strided_slice %401 {offsets = [0, 0], sizes = [8, 128], strides = [1, 1]} : vector<8x384xf32> to vector<8x128xf32>
    %406 = vector.extract_strided_slice %401 {offsets = [0, 128], sizes = [8, 128], strides = [1, 1]} : vector<8x384xf32> to vector<8x128xf32>
    %407 = vector.extract_strided_slice %401 {offsets = [0, 256], sizes = [8, 128], strides = [1, 1]} : vector<8x384xf32> to vector<8x128xf32>
    %408 = arith.addf %402, %405 : vector<8x128xf32>
    %409 = arith.negf %408 : vector<8x128xf32>
    %410 = math.exp %409 : vector<8x128xf32>
    %cst_118 = arith.constant 1.000000e+00 : f32
    %411 = vector.broadcast %cst_118 : f32 to vector<8x128xf32>
    %412 = arith.addf %411, %410 : vector<8x128xf32>
    %413 = arith.divf %411, %412 : vector<8x128xf32>
    %414 = arith.addf %403, %406 : vector<8x128xf32>
    %415 = arith.negf %414 : vector<8x128xf32>
    %416 = math.exp %415 : vector<8x128xf32>
    %cst_119 = arith.constant 1.000000e+00 : f32
    %417 = vector.broadcast %cst_119 : f32 to vector<8x128xf32>
    %418 = arith.addf %417, %416 : vector<8x128xf32>
    %419 = arith.divf %417, %418 : vector<8x128xf32>
    %420 = arith.mulf %413, %407 : vector<8x128xf32>
    %421 = arith.addf %404, %420 : vector<8x128xf32>
    %422 = math.tanh %421 : vector<8x128xf32>
    %cst_120 = arith.constant 1.000000e+00 : f32
    %423 = vector.broadcast %cst_120 : f32 to vector<8x128xf32>
    %424 = arith.subf %423, %419 : vector<8x128xf32>
    %425 = arith.mulf %424, %422 : vector<8x128xf32>
    %426 = arith.mulf %419, %395 : vector<8x128xf32>
    %427 = arith.addf %425, %426 : vector<8x128xf32>
    %428 = vector.broadcast %c0_i32_114 : i32 to vector<8x1xi32>
    %429 = arith.cmpi slt, %428, %0 : vector<8x1xi32>
    %cst_121 = arith.constant 0.000000e+00 : f32
    %430 = vector.shape_cast %429 : vector<8x1xi1> to vector<8x1xi1>
    %431 = vector.broadcast %430 : vector<8x1xi1> to vector<8x128xi1>
    %432 = vector.broadcast %cst_121 : f32 to vector<8x128xf32>
    %433 = arith.select %431, %427, %432 : vector<8x128xi1>, vector<8x128xf32>
    %434 = arith.index_cast %c0_i32_114 : i32 to index
    %c0_122 = arith.constant 0 : index
    %c0_123 = arith.constant 0 : index
    %435 = vector.load %arg7[%434, %c0_122, %c0_123] : memref<8x8x128xf32, #tpu.memory_space<vmem>>, vector<1x8x128xf32>
    %436 = vector.shape_cast %435 : vector<1x8x128xf32> to vector<8x128xf32>
    %437 = vector.shape_cast %433 : vector<8x128xf32> to vector<1x8x128xf32>
    tpu.vector_store %arg7[%434, %c0_122, %c0_123], %437 {strides = array<i32>} : memref<8x8x128xf32, #tpu.memory_space<vmem>>, vector<1x8x128xf32>,
    %438 = vector.shape_cast %429 : vector<8x1xi1> to vector<8x1xi1>
    %439 = vector.broadcast %438 : vector<8x1xi1> to vector<8x128xi1>
    %440 = arith.select %439, %427, %395 : vector<8x128xi1>, vector<8x128xf32>
    %c1_i32_124 = arith.constant 1 : i32
    %441 = arith.index_cast %c1_i32_124 : i32 to index
    %c0_125 = arith.constant 0 : index
    %c0_126 = arith.constant 0 : index
    %442 = vector.load %arg10[%441, %c0_125, %c0_126] : memref<8x8x384xf32, #tpu.memory_space<vmem>>, vector<1x8x384xf32>
    %443 = vector.shape_cast %442 : vector<1x8x384xf32> to vector<8x384xf32>
    %cst_127 = arith.constant dense<0.000000e+00> : vector<8x384xf32>
    %444 = tpu.matmul %440, %383, %cst_127 {dimension_numbers = #tpu.dot_dimension_numbers<[1], [0], [0], [1], [0, 0, 1, 1], [], []>} : vector<8x128xf32>, vector<128x384xf32>, vector<8x384xf32> -> vector<8x384xf32>
    %445 = vector.broadcast %387 : vector<1x384xf32> to vector<8x384xf32>
    %446 = arith.addf %444, %445 : vector<8x384xf32>
    %447 = vector.extract_strided_slice %443 {offsets = [0, 0], sizes = [8, 128], strides = [1, 1]} : vector<8x384xf32> to vector<8x128xf32>
    %448 = vector.extract_strided_slice %443 {offsets = [0, 128], sizes = [8, 128], strides = [1, 1]} : vector<8x384xf32> to vector<8x128xf32>
    %449 = vector.extract_strided_slice %443 {offsets = [0, 256], sizes = [8, 128], strides = [1, 1]} : vector<8x384xf32> to vector<8x128xf32>
    %450 = vector.extract_strided_slice %446 {offsets = [0, 0], sizes = [8, 128], strides = [1, 1]} : vector<8x384xf32> to vector<8x128xf32>
    %451 = vector.extract_strided_slice %446 {offsets = [0, 128], sizes = [8, 128], strides = [1, 1]} : vector<8x384xf32> to vector<8x128xf32>
    %452 = vector.extract_strided_slice %446 {offsets = [0, 256], sizes = [8, 128], strides = [1, 1]} : vector<8x384xf32> to vector<8x128xf32>
    %453 = arith.addf %447, %450 : vector<8x128xf32>
    %454 = arith.negf %453 : vector<8x128xf32>
    %455 = math.exp %454 : vector<8x128xf32>
    %cst_128 = arith.constant 1.000000e+00 : f32
    %456 = vector.broadcast %cst_128 : f32 to vector<8x128xf32>
    %457 = arith.addf %456, %455 : vector<8x128xf32>
    %458 = arith.divf %456, %457 : vector<8x128xf32>
    %459 = arith.addf %448, %451 : vector<8x128xf32>
    %460 = arith.negf %459 : vector<8x128xf32>
    %461 = math.exp %460 : vector<8x128xf32>
    %cst_129 = arith.constant 1.000000e+00 : f32
    %462 = vector.broadcast %cst_129 : f32 to vector<8x128xf32>
    %463 = arith.addf %462, %461 : vector<8x128xf32>
    %464 = arith.divf %462, %463 : vector<8x128xf32>
    %465 = arith.mulf %458, %452 : vector<8x128xf32>
    %466 = arith.addf %449, %465 : vector<8x128xf32>
    %467 = math.tanh %466 : vector<8x128xf32>
    %cst_130 = arith.constant 1.000000e+00 : f32
    %468 = vector.broadcast %cst_130 : f32 to vector<8x128xf32>
    %469 = arith.subf %468, %464 : vector<8x128xf32>
    %470 = arith.mulf %469, %467 : vector<8x128xf32>
    %471 = arith.mulf %464, %440 : vector<8x128xf32>
    %472 = arith.addf %470, %471 : vector<8x128xf32>
    %473 = vector.broadcast %c1_i32_124 : i32 to vector<8x1xi32>
    %474 = arith.cmpi slt, %473, %0 : vector<8x1xi32>
    %cst_131 = arith.constant 0.000000e+00 : f32
    %475 = vector.shape_cast %474 : vector<8x1xi1> to vector<8x1xi1>
    %476 = vector.broadcast %475 : vector<8x1xi1> to vector<8x128xi1>
    %477 = vector.broadcast %cst_131 : f32 to vector<8x128xf32>
    %478 = arith.select %476, %472, %477 : vector<8x128xi1>, vector<8x128xf32>
    %479 = arith.index_cast %c1_i32_124 : i32 to index
    %c0_132 = arith.constant 0 : index
    %c0_133 = arith.constant 0 : index
    %480 = vector.load %arg7[%479, %c0_132, %c0_133] : memref<8x8x128xf32, #tpu.memory_space<vmem>>, vector<1x8x128xf32>
    %481 = vector.shape_cast %480 : vector<1x8x128xf32> to vector<8x128xf32>
    %482 = vector.shape_cast %478 : vector<8x128xf32> to vector<1x8x128xf32>
    tpu.vector_store %arg7[%479, %c0_132, %c0_133], %482 {strides = array<i32>} : memref<8x8x128xf32, #tpu.memory_space<vmem>>, vector<1x8x128xf32>,
    %483 = vector.shape_cast %474 : vector<8x1xi1> to vector<8x1xi1>
    %484 = vector.broadcast %483 : vector<8x1xi1> to vector<8x128xi1>
    %485 = arith.select %484, %472, %440 : vector<8x128xi1>, vector<8x128xf32>
    %c2_i32_134 = arith.constant 2 : i32
    %486 = arith.index_cast %c2_i32_134 : i32 to index
    %c0_135 = arith.constant 0 : index
    %c0_136 = arith.constant 0 : index
    %487 = vector.load %arg10[%486, %c0_135, %c0_136] : memref<8x8x384xf32, #tpu.memory_space<vmem>>, vector<1x8x384xf32>
    %488 = vector.shape_cast %487 : vector<1x8x384xf32> to vector<8x384xf32>
    %cst_137 = arith.constant dense<0.000000e+00> : vector<8x384xf32>
    %489 = tpu.matmul %485, %383, %cst_137 {dimension_numbers = #tpu.dot_dimension_numbers<[1], [0], [0], [1], [0, 0, 1, 1], [], []>} : vector<8x128xf32>, vector<128x384xf32>, vector<8x384xf32> -> vector<8x384xf32>
    %490 = vector.broadcast %387 : vector<1x384xf32> to vector<8x384xf32>
    %491 = arith.addf %489, %490 : vector<8x384xf32>
    %492 = vector.extract_strided_slice %488 {offsets = [0, 0], sizes = [8, 128], strides = [1, 1]} : vector<8x384xf32> to vector<8x128xf32>
    %493 = vector.extract_strided_slice %488 {offsets = [0, 128], sizes = [8, 128], strides = [1, 1]} : vector<8x384xf32> to vector<8x128xf32>
    %494 = vector.extract_strided_slice %488 {offsets = [0, 256], sizes = [8, 128], strides = [1, 1]} : vector<8x384xf32> to vector<8x128xf32>
    %495 = vector.extract_strided_slice %491 {offsets = [0, 0], sizes = [8, 128], strides = [1, 1]} : vector<8x384xf32> to vector<8x128xf32>
    %496 = vector.extract_strided_slice %491 {offsets = [0, 128], sizes = [8, 128], strides = [1, 1]} : vector<8x384xf32> to vector<8x128xf32>
    %497 = vector.extract_strided_slice %491 {offsets = [0, 256], sizes = [8, 128], strides = [1, 1]} : vector<8x384xf32> to vector<8x128xf32>
    %498 = arith.addf %492, %495 : vector<8x128xf32>
    %499 = arith.negf %498 : vector<8x128xf32>
    %500 = math.exp %499 : vector<8x128xf32>
    %cst_138 = arith.constant 1.000000e+00 : f32
    %501 = vector.broadcast %cst_138 : f32 to vector<8x128xf32>
    %502 = arith.addf %501, %500 : vector<8x128xf32>
    %503 = arith.divf %501, %502 : vector<8x128xf32>
    %504 = arith.addf %493, %496 : vector<8x128xf32>
    %505 = arith.negf %504 : vector<8x128xf32>
    %506 = math.exp %505 : vector<8x128xf32>
    %cst_139 = arith.constant 1.000000e+00 : f32
    %507 = vector.broadcast %cst_139 : f32 to vector<8x128xf32>
    %508 = arith.addf %507, %506 : vector<8x128xf32>
    %509 = arith.divf %507, %508 : vector<8x128xf32>
    %510 = arith.mulf %503, %497 : vector<8x128xf32>
    %511 = arith.addf %494, %510 : vector<8x128xf32>
    %512 = math.tanh %511 : vector<8x128xf32>
    %cst_140 = arith.constant 1.000000e+00 : f32
    %513 = vector.broadcast %cst_140 : f32 to vector<8x128xf32>
    %514 = arith.subf %513, %509 : vector<8x128xf32>
    %515 = arith.mulf %514, %512 : vector<8x128xf32>
    %516 = arith.mulf %509, %485 : vector<8x128xf32>
    %517 = arith.addf %515, %516 : vector<8x128xf32>
    %518 = vector.broadcast %c2_i32_134 : i32 to vector<8x1xi32>
    %519 = arith.cmpi slt, %518, %0 : vector<8x1xi32>
    %cst_141 = arith.constant 0.000000e+00 : f32
    %520 = vector.shape_cast %519 : vector<8x1xi1> to vector<8x1xi1>
    %521 = vector.broadcast %520 : vector<8x1xi1> to vector<8x128xi1>
    %522 = vector.broadcast %cst_141 : f32 to vector<8x128xf32>
    %523 = arith.select %521, %517, %522 : vector<8x128xi1>, vector<8x128xf32>
    %524 = arith.index_cast %c2_i32_134 : i32 to index
    %c0_142 = arith.constant 0 : index
    %c0_143 = arith.constant 0 : index
    %525 = vector.load %arg7[%524, %c0_142, %c0_143] : memref<8x8x128xf32, #tpu.memory_space<vmem>>, vector<1x8x128xf32>
    %526 = vector.shape_cast %525 : vector<1x8x128xf32> to vector<8x128xf32>
    %527 = vector.shape_cast %523 : vector<8x128xf32> to vector<1x8x128xf32>
    tpu.vector_store %arg7[%524, %c0_142, %c0_143], %527 {strides = array<i32>} : memref<8x8x128xf32, #tpu.memory_space<vmem>>, vector<1x8x128xf32>,
    %528 = vector.shape_cast %519 : vector<8x1xi1> to vector<8x1xi1>
    %529 = vector.broadcast %528 : vector<8x1xi1> to vector<8x128xi1>
    %530 = arith.select %529, %517, %485 : vector<8x128xi1>, vector<8x128xf32>
    %c3_i32_144 = arith.constant 3 : i32
    %531 = arith.index_cast %c3_i32_144 : i32 to index
    %c0_145 = arith.constant 0 : index
    %c0_146 = arith.constant 0 : index
    %532 = vector.load %arg10[%531, %c0_145, %c0_146] : memref<8x8x384xf32, #tpu.memory_space<vmem>>, vector<1x8x384xf32>
    %533 = vector.shape_cast %532 : vector<1x8x384xf32> to vector<8x384xf32>
    %cst_147 = arith.constant dense<0.000000e+00> : vector<8x384xf32>
    %534 = tpu.matmul %530, %383, %cst_147 {dimension_numbers = #tpu.dot_dimension_numbers<[1], [0], [0], [1], [0, 0, 1, 1], [], []>} : vector<8x128xf32>, vector<128x384xf32>, vector<8x384xf32> -> vector<8x384xf32>
    %535 = vector.broadcast %387 : vector<1x384xf32> to vector<8x384xf32>
    %536 = arith.addf %534, %535 : vector<8x384xf32>
    %537 = vector.extract_strided_slice %533 {offsets = [0, 0], sizes = [8, 128], strides = [1, 1]} : vector<8x384xf32> to vector<8x128xf32>
    %538 = vector.extract_strided_slice %533 {offsets = [0, 128], sizes = [8, 128], strides = [1, 1]} : vector<8x384xf32> to vector<8x128xf32>
    %539 = vector.extract_strided_slice %533 {offsets = [0, 256], sizes = [8, 128], strides = [1, 1]} : vector<8x384xf32> to vector<8x128xf32>
    %540 = vector.extract_strided_slice %536 {offsets = [0, 0], sizes = [8, 128], strides = [1, 1]} : vector<8x384xf32> to vector<8x128xf32>
    %541 = vector.extract_strided_slice %536 {offsets = [0, 128], sizes = [8, 128], strides = [1, 1]} : vector<8x384xf32> to vector<8x128xf32>
    %542 = vector.extract_strided_slice %536 {offsets = [0, 256], sizes = [8, 128], strides = [1, 1]} : vector<8x384xf32> to vector<8x128xf32>
    %543 = arith.addf %537, %540 : vector<8x128xf32>
    %544 = arith.negf %543 : vector<8x128xf32>
    %545 = math.exp %544 : vector<8x128xf32>
    %cst_148 = arith.constant 1.000000e+00 : f32
    %546 = vector.broadcast %cst_148 : f32 to vector<8x128xf32>
    %547 = arith.addf %546, %545 : vector<8x128xf32>
    %548 = arith.divf %546, %547 : vector<8x128xf32>
    %549 = arith.addf %538, %541 : vector<8x128xf32>
    %550 = arith.negf %549 : vector<8x128xf32>
    %551 = math.exp %550 : vector<8x128xf32>
    %cst_149 = arith.constant 1.000000e+00 : f32
    %552 = vector.broadcast %cst_149 : f32 to vector<8x128xf32>
    %553 = arith.addf %552, %551 : vector<8x128xf32>
    %554 = arith.divf %552, %553 : vector<8x128xf32>
    %555 = arith.mulf %548, %542 : vector<8x128xf32>
    %556 = arith.addf %539, %555 : vector<8x128xf32>
    %557 = math.tanh %556 : vector<8x128xf32>
    %cst_150 = arith.constant 1.000000e+00 : f32
    %558 = vector.broadcast %cst_150 : f32 to vector<8x128xf32>
    %559 = arith.subf %558, %554 : vector<8x128xf32>
    %560 = arith.mulf %559, %557 : vector<8x128xf32>
    %561 = arith.mulf %554, %530 : vector<8x128xf32>
    %562 = arith.addf %560, %561 : vector<8x128xf32>
    %563 = vector.broadcast %c3_i32_144 : i32 to vector<8x1xi32>
    %564 = arith.cmpi slt, %563, %0 : vector<8x1xi32>
    %cst_151 = arith.constant 0.000000e+00 : f32
    %565 = vector.shape_cast %564 : vector<8x1xi1> to vector<8x1xi1>
    %566 = vector.broadcast %565 : vector<8x1xi1> to vector<8x128xi1>
    %567 = vector.broadcast %cst_151 : f32 to vector<8x128xf32>
    %568 = arith.select %566, %562, %567 : vector<8x128xi1>, vector<8x128xf32>
    %569 = arith.index_cast %c3_i32_144 : i32 to index
    %c0_152 = arith.constant 0 : index
    %c0_153 = arith.constant 0 : index
    %570 = vector.load %arg7[%569, %c0_152, %c0_153] : memref<8x8x128xf32, #tpu.memory_space<vmem>>, vector<1x8x128xf32>
    %571 = vector.shape_cast %570 : vector<1x8x128xf32> to vector<8x128xf32>
    %572 = vector.shape_cast %568 : vector<8x128xf32> to vector<1x8x128xf32>
    tpu.vector_store %arg7[%569, %c0_152, %c0_153], %572 {strides = array<i32>} : memref<8x8x128xf32, #tpu.memory_space<vmem>>, vector<1x8x128xf32>,
    %573 = vector.shape_cast %564 : vector<8x1xi1> to vector<8x1xi1>
    %574 = vector.broadcast %573 : vector<8x1xi1> to vector<8x128xi1>
    %575 = arith.select %574, %562, %530 : vector<8x128xi1>, vector<8x128xf32>
    %c4_i32_154 = arith.constant 4 : i32
    %576 = arith.index_cast %c4_i32_154 : i32 to index
    %c0_155 = arith.constant 0 : index
    %c0_156 = arith.constant 0 : index
    %577 = vector.load %arg10[%576, %c0_155, %c0_156] : memref<8x8x384xf32, #tpu.memory_space<vmem>>, vector<1x8x384xf32>
    %578 = vector.shape_cast %577 : vector<1x8x384xf32> to vector<8x384xf32>
    %cst_157 = arith.constant dense<0.000000e+00> : vector<8x384xf32>
    %579 = tpu.matmul %575, %383, %cst_157 {dimension_numbers = #tpu.dot_dimension_numbers<[1], [0], [0], [1], [0, 0, 1, 1], [], []>} : vector<8x128xf32>, vector<128x384xf32>, vector<8x384xf32> -> vector<8x384xf32>
    %580 = vector.broadcast %387 : vector<1x384xf32> to vector<8x384xf32>
    %581 = arith.addf %579, %580 : vector<8x384xf32>
    %582 = vector.extract_strided_slice %578 {offsets = [0, 0], sizes = [8, 128], strides = [1, 1]} : vector<8x384xf32> to vector<8x128xf32>
    %583 = vector.extract_strided_slice %578 {offsets = [0, 128], sizes = [8, 128], strides = [1, 1]} : vector<8x384xf32> to vector<8x128xf32>
    %584 = vector.extract_strided_slice %578 {offsets = [0, 256], sizes = [8, 128], strides = [1, 1]} : vector<8x384xf32> to vector<8x128xf32>
    %585 = vector.extract_strided_slice %581 {offsets = [0, 0], sizes = [8, 128], strides = [1, 1]} : vector<8x384xf32> to vector<8x128xf32>
    %586 = vector.extract_strided_slice %581 {offsets = [0, 128], sizes = [8, 128], strides = [1, 1]} : vector<8x384xf32> to vector<8x128xf32>
    %587 = vector.extract_strided_slice %581 {offsets = [0, 256], sizes = [8, 128], strides = [1, 1]} : vector<8x384xf32> to vector<8x128xf32>
    %588 = arith.addf %582, %585 : vector<8x128xf32>
    %589 = arith.negf %588 : vector<8x128xf32>
    %590 = math.exp %589 : vector<8x128xf32>
    %cst_158 = arith.constant 1.000000e+00 : f32
    %591 = vector.broadcast %cst_158 : f32 to vector<8x128xf32>
    %592 = arith.addf %591, %590 : vector<8x128xf32>
    %593 = arith.divf %591, %592 : vector<8x128xf32>
    %594 = arith.addf %583, %586 : vector<8x128xf32>
    %595 = arith.negf %594 : vector<8x128xf32>
    %596 = math.exp %595 : vector<8x128xf32>
    %cst_159 = arith.constant 1.000000e+00 : f32
    %597 = vector.broadcast %cst_159 : f32 to vector<8x128xf32>
    %598 = arith.addf %597, %596 : vector<8x128xf32>
    %599 = arith.divf %597, %598 : vector<8x128xf32>
    %600 = arith.mulf %593, %587 : vector<8x128xf32>
    %601 = arith.addf %584, %600 : vector<8x128xf32>
    %602 = math.tanh %601 : vector<8x128xf32>
    %cst_160 = arith.constant 1.000000e+00 : f32
    %603 = vector.broadcast %cst_160 : f32 to vector<8x128xf32>
    %604 = arith.subf %603, %599 : vector<8x128xf32>
    %605 = arith.mulf %604, %602 : vector<8x128xf32>
    %606 = arith.mulf %599, %575 : vector<8x128xf32>
    %607 = arith.addf %605, %606 : vector<8x128xf32>
    %608 = vector.broadcast %c4_i32_154 : i32 to vector<8x1xi32>
    %609 = arith.cmpi slt, %608, %0 : vector<8x1xi32>
    %cst_161 = arith.constant 0.000000e+00 : f32
    %610 = vector.shape_cast %609 : vector<8x1xi1> to vector<8x1xi1>
    %611 = vector.broadcast %610 : vector<8x1xi1> to vector<8x128xi1>
    %612 = vector.broadcast %cst_161 : f32 to vector<8x128xf32>
    %613 = arith.select %611, %607, %612 : vector<8x128xi1>, vector<8x128xf32>
    %614 = arith.index_cast %c4_i32_154 : i32 to index
    %c0_162 = arith.constant 0 : index
    %c0_163 = arith.constant 0 : index
    %615 = vector.load %arg7[%614, %c0_162, %c0_163] : memref<8x8x128xf32, #tpu.memory_space<vmem>>, vector<1x8x128xf32>
    %616 = vector.shape_cast %615 : vector<1x8x128xf32> to vector<8x128xf32>
    %617 = vector.shape_cast %613 : vector<8x128xf32> to vector<1x8x128xf32>
    tpu.vector_store %arg7[%614, %c0_162, %c0_163], %617 {strides = array<i32>} : memref<8x8x128xf32, #tpu.memory_space<vmem>>, vector<1x8x128xf32>,
    %618 = vector.shape_cast %609 : vector<8x1xi1> to vector<8x1xi1>
    %619 = vector.broadcast %618 : vector<8x1xi1> to vector<8x128xi1>
    %620 = arith.select %619, %607, %575 : vector<8x128xi1>, vector<8x128xf32>
    %c5_i32_164 = arith.constant 5 : i32
    %621 = arith.index_cast %c5_i32_164 : i32 to index
    %c0_165 = arith.constant 0 : index
    %c0_166 = arith.constant 0 : index
    %622 = vector.load %arg10[%621, %c0_165, %c0_166] : memref<8x8x384xf32, #tpu.memory_space<vmem>>, vector<1x8x384xf32>
    %623 = vector.shape_cast %622 : vector<1x8x384xf32> to vector<8x384xf32>
    %cst_167 = arith.constant dense<0.000000e+00> : vector<8x384xf32>
    %624 = tpu.matmul %620, %383, %cst_167 {dimension_numbers = #tpu.dot_dimension_numbers<[1], [0], [0], [1], [0, 0, 1, 1], [], []>} : vector<8x128xf32>, vector<128x384xf32>, vector<8x384xf32> -> vector<8x384xf32>
    %625 = vector.broadcast %387 : vector<1x384xf32> to vector<8x384xf32>
    %626 = arith.addf %624, %625 : vector<8x384xf32>
    %627 = vector.extract_strided_slice %623 {offsets = [0, 0], sizes = [8, 128], strides = [1, 1]} : vector<8x384xf32> to vector<8x128xf32>
    %628 = vector.extract_strided_slice %623 {offsets = [0, 128], sizes = [8, 128], strides = [1, 1]} : vector<8x384xf32> to vector<8x128xf32>
    %629 = vector.extract_strided_slice %623 {offsets = [0, 256], sizes = [8, 128], strides = [1, 1]} : vector<8x384xf32> to vector<8x128xf32>
    %630 = vector.extract_strided_slice %626 {offsets = [0, 0], sizes = [8, 128], strides = [1, 1]} : vector<8x384xf32> to vector<8x128xf32>
    %631 = vector.extract_strided_slice %626 {offsets = [0, 128], sizes = [8, 128], strides = [1, 1]} : vector<8x384xf32> to vector<8x128xf32>
    %632 = vector.extract_strided_slice %626 {offsets = [0, 256], sizes = [8, 128], strides = [1, 1]} : vector<8x384xf32> to vector<8x128xf32>
    %633 = arith.addf %627, %630 : vector<8x128xf32>
    %634 = arith.negf %633 : vector<8x128xf32>
    %635 = math.exp %634 : vector<8x128xf32>
    %cst_168 = arith.constant 1.000000e+00 : f32
    %636 = vector.broadcast %cst_168 : f32 to vector<8x128xf32>
    %637 = arith.addf %636, %635 : vector<8x128xf32>
    %638 = arith.divf %636, %637 : vector<8x128xf32>
    %639 = arith.addf %628, %631 : vector<8x128xf32>
    %640 = arith.negf %639 : vector<8x128xf32>
    %641 = math.exp %640 : vector<8x128xf32>
    %cst_169 = arith.constant 1.000000e+00 : f32
    %642 = vector.broadcast %cst_169 : f32 to vector<8x128xf32>
    %643 = arith.addf %642, %641 : vector<8x128xf32>
    %644 = arith.divf %642, %643 : vector<8x128xf32>
    %645 = arith.mulf %638, %632 : vector<8x128xf32>
    %646 = arith.addf %629, %645 : vector<8x128xf32>
    %647 = math.tanh %646 : vector<8x128xf32>
    %cst_170 = arith.constant 1.000000e+00 : f32
    %648 = vector.broadcast %cst_170 : f32 to vector<8x128xf32>
    %649 = arith.subf %648, %644 : vector<8x128xf32>
    %650 = arith.mulf %649, %647 : vector<8x128xf32>
    %651 = arith.mulf %644, %620 : vector<8x128xf32>
    %652 = arith.addf %650, %651 : vector<8x128xf32>
    %653 = vector.broadcast %c5_i32_164 : i32 to vector<8x1xi32>
    %654 = arith.cmpi slt, %653, %0 : vector<8x1xi32>
    %cst_171 = arith.constant 0.000000e+00 : f32
    %655 = vector.shape_cast %654 : vector<8x1xi1> to vector<8x1xi1>
    %656 = vector.broadcast %655 : vector<8x1xi1> to vector<8x128xi1>
    %657 = vector.broadcast %cst_171 : f32 to vector<8x128xf32>
    %658 = arith.select %656, %652, %657 : vector<8x128xi1>, vector<8x128xf32>
    %659 = arith.index_cast %c5_i32_164 : i32 to index
    %c0_172 = arith.constant 0 : index
    %c0_173 = arith.constant 0 : index
    %660 = vector.load %arg7[%659, %c0_172, %c0_173] : memref<8x8x128xf32, #tpu.memory_space<vmem>>, vector<1x8x128xf32>
    %661 = vector.shape_cast %660 : vector<1x8x128xf32> to vector<8x128xf32>
    %662 = vector.shape_cast %658 : vector<8x128xf32> to vector<1x8x128xf32>
    tpu.vector_store %arg7[%659, %c0_172, %c0_173], %662 {strides = array<i32>} : memref<8x8x128xf32, #tpu.memory_space<vmem>>, vector<1x8x128xf32>,
    %663 = vector.shape_cast %654 : vector<8x1xi1> to vector<8x1xi1>
    %664 = vector.broadcast %663 : vector<8x1xi1> to vector<8x128xi1>
    %665 = arith.select %664, %652, %620 : vector<8x128xi1>, vector<8x128xf32>
    %c6_i32_174 = arith.constant 6 : i32
    %666 = arith.index_cast %c6_i32_174 : i32 to index
    %c0_175 = arith.constant 0 : index
    %c0_176 = arith.constant 0 : index
    %667 = vector.load %arg10[%666, %c0_175, %c0_176] : memref<8x8x384xf32, #tpu.memory_space<vmem>>, vector<1x8x384xf32>
    %668 = vector.shape_cast %667 : vector<1x8x384xf32> to vector<8x384xf32>
    %cst_177 = arith.constant dense<0.000000e+00> : vector<8x384xf32>
    %669 = tpu.matmul %665, %383, %cst_177 {dimension_numbers = #tpu.dot_dimension_numbers<[1], [0], [0], [1], [0, 0, 1, 1], [], []>} : vector<8x128xf32>, vector<128x384xf32>, vector<8x384xf32> -> vector<8x384xf32>
    %670 = vector.broadcast %387 : vector<1x384xf32> to vector<8x384xf32>
    %671 = arith.addf %669, %670 : vector<8x384xf32>
    %672 = vector.extract_strided_slice %668 {offsets = [0, 0], sizes = [8, 128], strides = [1, 1]} : vector<8x384xf32> to vector<8x128xf32>
    %673 = vector.extract_strided_slice %668 {offsets = [0, 128], sizes = [8, 128], strides = [1, 1]} : vector<8x384xf32> to vector<8x128xf32>
    %674 = vector.extract_strided_slice %668 {offsets = [0, 256], sizes = [8, 128], strides = [1, 1]} : vector<8x384xf32> to vector<8x128xf32>
    %675 = vector.extract_strided_slice %671 {offsets = [0, 0], sizes = [8, 128], strides = [1, 1]} : vector<8x384xf32> to vector<8x128xf32>
    %676 = vector.extract_strided_slice %671 {offsets = [0, 128], sizes = [8, 128], strides = [1, 1]} : vector<8x384xf32> to vector<8x128xf32>
    %677 = vector.extract_strided_slice %671 {offsets = [0, 256], sizes = [8, 128], strides = [1, 1]} : vector<8x384xf32> to vector<8x128xf32>
    %678 = arith.addf %672, %675 : vector<8x128xf32>
    %679 = arith.negf %678 : vector<8x128xf32>
    %680 = math.exp %679 : vector<8x128xf32>
    %cst_178 = arith.constant 1.000000e+00 : f32
    %681 = vector.broadcast %cst_178 : f32 to vector<8x128xf32>
    %682 = arith.addf %681, %680 : vector<8x128xf32>
    %683 = arith.divf %681, %682 : vector<8x128xf32>
    %684 = arith.addf %673, %676 : vector<8x128xf32>
    %685 = arith.negf %684 : vector<8x128xf32>
    %686 = math.exp %685 : vector<8x128xf32>
    %cst_179 = arith.constant 1.000000e+00 : f32
    %687 = vector.broadcast %cst_179 : f32 to vector<8x128xf32>
    %688 = arith.addf %687, %686 : vector<8x128xf32>
    %689 = arith.divf %687, %688 : vector<8x128xf32>
    %690 = arith.mulf %683, %677 : vector<8x128xf32>
    %691 = arith.addf %674, %690 : vector<8x128xf32>
    %692 = math.tanh %691 : vector<8x128xf32>
    %cst_180 = arith.constant 1.000000e+00 : f32
    %693 = vector.broadcast %cst_180 : f32 to vector<8x128xf32>
    %694 = arith.subf %693, %689 : vector<8x128xf32>
    %695 = arith.mulf %694, %692 : vector<8x128xf32>
    %696 = arith.mulf %689, %665 : vector<8x128xf32>
    %697 = arith.addf %695, %696 : vector<8x128xf32>
    %698 = vector.broadcast %c6_i32_174 : i32 to vector<8x1xi32>
    %699 = arith.cmpi slt, %698, %0 : vector<8x1xi32>
    %cst_181 = arith.constant 0.000000e+00 : f32
    %700 = vector.shape_cast %699 : vector<8x1xi1> to vector<8x1xi1>
    %701 = vector.broadcast %700 : vector<8x1xi1> to vector<8x128xi1>
    %702 = vector.broadcast %cst_181 : f32 to vector<8x128xf32>
    %703 = arith.select %701, %697, %702 : vector<8x128xi1>, vector<8x128xf32>
    %704 = arith.index_cast %c6_i32_174 : i32 to index
    %c0_182 = arith.constant 0 : index
    %c0_183 = arith.constant 0 : index
    %705 = vector.load %arg7[%704, %c0_182, %c0_183] : memref<8x8x128xf32, #tpu.memory_space<vmem>>, vector<1x8x128xf32>
    %706 = vector.shape_cast %705 : vector<1x8x128xf32> to vector<8x128xf32>
    %707 = vector.shape_cast %703 : vector<8x128xf32> to vector<1x8x128xf32>
    tpu.vector_store %arg7[%704, %c0_182, %c0_183], %707 {strides = array<i32>} : memref<8x8x128xf32, #tpu.memory_space<vmem>>, vector<1x8x128xf32>,
    %708 = vector.shape_cast %699 : vector<8x1xi1> to vector<8x1xi1>
    %709 = vector.broadcast %708 : vector<8x1xi1> to vector<8x128xi1>
    %710 = arith.select %709, %697, %665 : vector<8x128xi1>, vector<8x128xf32>
    %c7_i32_184 = arith.constant 7 : i32
    %711 = arith.index_cast %c7_i32_184 : i32 to index
    %c0_185 = arith.constant 0 : index
    %c0_186 = arith.constant 0 : index
    %712 = vector.load %arg10[%711, %c0_185, %c0_186] : memref<8x8x384xf32, #tpu.memory_space<vmem>>, vector<1x8x384xf32>
    %713 = vector.shape_cast %712 : vector<1x8x384xf32> to vector<8x384xf32>
    %cst_187 = arith.constant dense<0.000000e+00> : vector<8x384xf32>
    %714 = tpu.matmul %710, %383, %cst_187 {dimension_numbers = #tpu.dot_dimension_numbers<[1], [0], [0], [1], [0, 0, 1, 1], [], []>} : vector<8x128xf32>, vector<128x384xf32>, vector<8x384xf32> -> vector<8x384xf32>
    %715 = vector.broadcast %387 : vector<1x384xf32> to vector<8x384xf32>
    %716 = arith.addf %714, %715 : vector<8x384xf32>
    %717 = vector.extract_strided_slice %713 {offsets = [0, 0], sizes = [8, 128], strides = [1, 1]} : vector<8x384xf32> to vector<8x128xf32>
    %718 = vector.extract_strided_slice %713 {offsets = [0, 128], sizes = [8, 128], strides = [1, 1]} : vector<8x384xf32> to vector<8x128xf32>
    %719 = vector.extract_strided_slice %713 {offsets = [0, 256], sizes = [8, 128], strides = [1, 1]} : vector<8x384xf32> to vector<8x128xf32>
    %720 = vector.extract_strided_slice %716 {offsets = [0, 0], sizes = [8, 128], strides = [1, 1]} : vector<8x384xf32> to vector<8x128xf32>
    %721 = vector.extract_strided_slice %716 {offsets = [0, 128], sizes = [8, 128], strides = [1, 1]} : vector<8x384xf32> to vector<8x128xf32>
    %722 = vector.extract_strided_slice %716 {offsets = [0, 256], sizes = [8, 128], strides = [1, 1]} : vector<8x384xf32> to vector<8x128xf32>
    %723 = arith.addf %717, %720 : vector<8x128xf32>
    %724 = arith.negf %723 : vector<8x128xf32>
    %725 = math.exp %724 : vector<8x128xf32>
    %cst_188 = arith.constant 1.000000e+00 : f32
    %726 = vector.broadcast %cst_188 : f32 to vector<8x128xf32>
    %727 = arith.addf %726, %725 : vector<8x128xf32>
    %728 = arith.divf %726, %727 : vector<8x128xf32>
    %729 = arith.addf %718, %721 : vector<8x128xf32>
    %730 = arith.negf %729 : vector<8x128xf32>
    %731 = math.exp %730 : vector<8x128xf32>
    %cst_189 = arith.constant 1.000000e+00 : f32
    %732 = vector.broadcast %cst_189 : f32 to vector<8x128xf32>
    %733 = arith.addf %732, %731 : vector<8x128xf32>
    %734 = arith.divf %732, %733 : vector<8x128xf32>
    %735 = arith.mulf %728, %722 : vector<8x128xf32>
    %736 = arith.addf %719, %735 : vector<8x128xf32>
    %737 = math.tanh %736 : vector<8x128xf32>
    %cst_190 = arith.constant 1.000000e+00 : f32
    %738 = vector.broadcast %cst_190 : f32 to vector<8x128xf32>
    %739 = arith.subf %738, %734 : vector<8x128xf32>
    %740 = arith.mulf %739, %737 : vector<8x128xf32>
    %741 = arith.mulf %734, %710 : vector<8x128xf32>
    %742 = arith.addf %740, %741 : vector<8x128xf32>
    %743 = vector.broadcast %c7_i32_184 : i32 to vector<8x1xi32>
    %744 = arith.cmpi slt, %743, %0 : vector<8x1xi32>
    %cst_191 = arith.constant 0.000000e+00 : f32
    %745 = vector.shape_cast %744 : vector<8x1xi1> to vector<8x1xi1>
    %746 = vector.broadcast %745 : vector<8x1xi1> to vector<8x128xi1>
    %747 = vector.broadcast %cst_191 : f32 to vector<8x128xf32>
    %748 = arith.select %746, %742, %747 : vector<8x128xi1>, vector<8x128xf32>
    %749 = arith.index_cast %c7_i32_184 : i32 to index
    %c0_192 = arith.constant 0 : index
    %c0_193 = arith.constant 0 : index
    %750 = vector.load %arg7[%749, %c0_192, %c0_193] : memref<8x8x128xf32, #tpu.memory_space<vmem>>, vector<1x8x128xf32>
    %751 = vector.shape_cast %750 : vector<1x8x128xf32> to vector<8x128xf32>
    %752 = vector.shape_cast %748 : vector<8x128xf32> to vector<1x8x128xf32>
    tpu.vector_store %arg7[%749, %c0_192, %c0_193], %752 {strides = array<i32>} : memref<8x8x128xf32, #tpu.memory_space<vmem>>, vector<1x8x128xf32>,
    %753 = vector.shape_cast %744 : vector<8x1xi1> to vector<8x1xi1>
    %754 = vector.broadcast %753 : vector<8x1xi1> to vector<8x128xi1>
    %755 = arith.select %754, %742, %710 : vector<8x128xi1>, vector<8x128xf32>
    %c8_i32_194 = arith.constant 8 : i32
    %c1_195 = arith.constant 1 : index
    %c0_196 = arith.constant 0 : index
    %c0_197 = arith.constant 0 : index
    %756 = vector.load %arg8[%c1_195, %c0_196, %c0_197] : memref<4x8x128xf32, #tpu.memory_space<vmem>>, vector<1x8x128xf32>
    %757 = vector.shape_cast %756 : vector<1x8x128xf32> to vector<8x128xf32>
    %758 = vector.shape_cast %755 : vector<8x128xf32> to vector<1x8x128xf32>
    tpu.vector_store %arg8[%c1_195, %c0_196, %c0_197], %758 {strides = array<i32>} : memref<4x8x128xf32, #tpu.memory_space<vmem>>, vector<1x8x128xf32>,
    %c2 = arith.constant 2 : index
    %c0_198 = arith.constant 0 : index
    %c0_199 = arith.constant 0 : index
    %759 = vector.load %arg3[%c2, %c0_198, %c0_199] : memref<4x128x384xf32, #tpu.memory_space<vmem>>, vector<1x128x384xf32>
    %760 = vector.shape_cast %759 : vector<1x128x384xf32> to vector<128x384xf32>
    %c2_200 = arith.constant 2 : index
    %c0_201 = arith.constant 0 : index
    %c0_202 = arith.constant 0 : index
    %761 = vector.load %arg4[%c2_200, %c0_201, %c0_202] : memref<4x128x384xf32, #tpu.memory_space<vmem>>, vector<1x128x384xf32>
    %762 = vector.shape_cast %761 : vector<1x128x384xf32> to vector<128x384xf32>
    %c2_203 = arith.constant 2 : index
    %c0_204 = arith.constant 0 : index
    %c0_205 = arith.constant 0 : index
    %763 = vector.load %arg5[%c2_203, %c0_204, %c0_205] : memref<4x1x384xf32, #tpu.memory_space<vmem>>, vector<1x1x384xf32>
    %764 = vector.shape_cast %763 : vector<1x1x384xf32> to vector<1x384xf32>
    %c2_206 = arith.constant 2 : index
    %c0_207 = arith.constant 0 : index
    %c0_208 = arith.constant 0 : index
    %765 = vector.load %arg6[%c2_206, %c0_207, %c0_208] : memref<4x1x384xf32, #tpu.memory_space<vmem>>, vector<1x1x384xf32>
    %766 = vector.shape_cast %765 : vector<1x1x384xf32> to vector<1x384xf32>
    %c0_209 = arith.constant 0 : index
    %c0_210 = arith.constant 0 : index
    %c0_211 = arith.constant 0 : index
    %767 = vector.load %arg7[%c0_209, %c0_210, %c0_211] : memref<8x8x128xf32, #tpu.memory_space<vmem>>, vector<8x8x128xf32>
    %768 = vector.shape_cast %767 : vector<8x8x128xf32> to vector<64x128xf32>
    %cst_212 = arith.constant dense<0.000000e+00> : vector<64x384xf32>
    %769 = tpu.matmul %768, %760, %cst_212 {dimension_numbers = #tpu.dot_dimension_numbers<[1], [0], [0], [1], [0, 0, 1, 1], [], []>} : vector<64x128xf32>, vector<128x384xf32>, vector<64x384xf32> -> vector<64x384xf32>
    %770 = vector.broadcast %764 : vector<1x384xf32> to vector<64x384xf32>
    %771 = arith.addf %769, %770 : vector<64x384xf32>
    %772 = vector.shape_cast %771 : vector<64x384xf32> to vector<8x8x384xf32>
    %c0_213 = arith.constant 0 : index
    %c0_214 = arith.constant 0 : index
    %c0_215 = arith.constant 0 : index
    %773 = vector.load %arg10[%c0_213, %c0_214, %c0_215] : memref<8x8x384xf32, #tpu.memory_space<vmem>>, vector<8x8x384xf32>
    tpu.vector_store %arg10[%c0_213, %c0_214, %c0_215], %772 {strides = array<i32>} : memref<8x8x384xf32, #tpu.memory_space<vmem>>, vector<8x8x384xf32>,
    %cst_216 = arith.constant 0.000000e+00 : f32
    %774 = vector.broadcast %cst_216 : f32 to vector<8x128xf32>
    %c0_i32_217 = arith.constant 0 : i32
    %775 = arith.index_cast %c0_i32_217 : i32 to index
    %c0_218 = arith.constant 0 : index
    %c0_219 = arith.constant 0 : index
    %776 = vector.load %arg10[%775, %c0_218, %c0_219] : memref<8x8x384xf32, #tpu.memory_space<vmem>>, vector<1x8x384xf32>
    %777 = vector.shape_cast %776 : vector<1x8x384xf32> to vector<8x384xf32>
    %cst_220 = arith.constant dense<0.000000e+00> : vector<8x384xf32>
    %778 = tpu.matmul %774, %762, %cst_220 {dimension_numbers = #tpu.dot_dimension_numbers<[1], [0], [0], [1], [0, 0, 1, 1], [], []>} : vector<8x128xf32>, vector<128x384xf32>, vector<8x384xf32> -> vector<8x384xf32>
    %779 = vector.broadcast %766 : vector<1x384xf32> to vector<8x384xf32>
    %780 = arith.addf %778, %779 : vector<8x384xf32>
    %781 = vector.extract_strided_slice %777 {offsets = [0, 0], sizes = [8, 128], strides = [1, 1]} : vector<8x384xf32> to vector<8x128xf32>
    %782 = vector.extract_strided_slice %777 {offsets = [0, 128], sizes = [8, 128], strides = [1, 1]} : vector<8x384xf32> to vector<8x128xf32>
    %783 = vector.extract_strided_slice %777 {offsets = [0, 256], sizes = [8, 128], strides = [1, 1]} : vector<8x384xf32> to vector<8x128xf32>
    %784 = vector.extract_strided_slice %780 {offsets = [0, 0], sizes = [8, 128], strides = [1, 1]} : vector<8x384xf32> to vector<8x128xf32>
    %785 = vector.extract_strided_slice %780 {offsets = [0, 128], sizes = [8, 128], strides = [1, 1]} : vector<8x384xf32> to vector<8x128xf32>
    %786 = vector.extract_strided_slice %780 {offsets = [0, 256], sizes = [8, 128], strides = [1, 1]} : vector<8x384xf32> to vector<8x128xf32>
    %787 = arith.addf %781, %784 : vector<8x128xf32>
    %788 = arith.negf %787 : vector<8x128xf32>
    %789 = math.exp %788 : vector<8x128xf32>
    %cst_221 = arith.constant 1.000000e+00 : f32
    %790 = vector.broadcast %cst_221 : f32 to vector<8x128xf32>
    %791 = arith.addf %790, %789 : vector<8x128xf32>
    %792 = arith.divf %790, %791 : vector<8x128xf32>
    %793 = arith.addf %782, %785 : vector<8x128xf32>
    %794 = arith.negf %793 : vector<8x128xf32>
    %795 = math.exp %794 : vector<8x128xf32>
    %cst_222 = arith.constant 1.000000e+00 : f32
    %796 = vector.broadcast %cst_222 : f32 to vector<8x128xf32>
    %797 = arith.addf %796, %795 : vector<8x128xf32>
    %798 = arith.divf %796, %797 : vector<8x128xf32>
    %799 = arith.mulf %792, %786 : vector<8x128xf32>
    %800 = arith.addf %783, %799 : vector<8x128xf32>
    %801 = math.tanh %800 : vector<8x128xf32>
    %cst_223 = arith.constant 1.000000e+00 : f32
    %802 = vector.broadcast %cst_223 : f32 to vector<8x128xf32>
    %803 = arith.subf %802, %798 : vector<8x128xf32>
    %804 = arith.mulf %803, %801 : vector<8x128xf32>
    %805 = arith.mulf %798, %774 : vector<8x128xf32>
    %806 = arith.addf %804, %805 : vector<8x128xf32>
    %807 = vector.broadcast %c0_i32_217 : i32 to vector<8x1xi32>
    %808 = arith.cmpi slt, %807, %0 : vector<8x1xi32>
    %cst_224 = arith.constant 0.000000e+00 : f32
    %809 = vector.shape_cast %808 : vector<8x1xi1> to vector<8x1xi1>
    %810 = vector.broadcast %809 : vector<8x1xi1> to vector<8x128xi1>
    %811 = vector.broadcast %cst_224 : f32 to vector<8x128xf32>
    %812 = arith.select %810, %806, %811 : vector<8x128xi1>, vector<8x128xf32>
    %813 = arith.index_cast %c0_i32_217 : i32 to index
    %c0_225 = arith.constant 0 : index
    %c0_226 = arith.constant 0 : index
    %814 = vector.load %arg9[%813, %c0_225, %c0_226] : memref<8x8x128xf32, #tpu.memory_space<vmem>>, vector<1x8x128xf32>
    %815 = vector.shape_cast %814 : vector<1x8x128xf32> to vector<8x128xf32>
    %816 = vector.shape_cast %812 : vector<8x128xf32> to vector<1x8x128xf32>
    tpu.vector_store %arg9[%813, %c0_225, %c0_226], %816 {strides = array<i32>} : memref<8x8x128xf32, #tpu.memory_space<vmem>>, vector<1x8x128xf32>,
    %817 = vector.shape_cast %808 : vector<8x1xi1> to vector<8x1xi1>
    %818 = vector.broadcast %817 : vector<8x1xi1> to vector<8x128xi1>
    %819 = arith.select %818, %806, %774 : vector<8x128xi1>, vector<8x128xf32>
    %c1_i32_227 = arith.constant 1 : i32
    %820 = arith.index_cast %c1_i32_227 : i32 to index
    %c0_228 = arith.constant 0 : index
    %c0_229 = arith.constant 0 : index
    %821 = vector.load %arg10[%820, %c0_228, %c0_229] : memref<8x8x384xf32, #tpu.memory_space<vmem>>, vector<1x8x384xf32>
    %822 = vector.shape_cast %821 : vector<1x8x384xf32> to vector<8x384xf32>
    %cst_230 = arith.constant dense<0.000000e+00> : vector<8x384xf32>
    %823 = tpu.matmul %819, %762, %cst_230 {dimension_numbers = #tpu.dot_dimension_numbers<[1], [0], [0], [1], [0, 0, 1, 1], [], []>} : vector<8x128xf32>, vector<128x384xf32>, vector<8x384xf32> -> vector<8x384xf32>
    %824 = vector.broadcast %766 : vector<1x384xf32> to vector<8x384xf32>
    %825 = arith.addf %823, %824 : vector<8x384xf32>
    %826 = vector.extract_strided_slice %822 {offsets = [0, 0], sizes = [8, 128], strides = [1, 1]} : vector<8x384xf32> to vector<8x128xf32>
    %827 = vector.extract_strided_slice %822 {offsets = [0, 128], sizes = [8, 128], strides = [1, 1]} : vector<8x384xf32> to vector<8x128xf32>
    %828 = vector.extract_strided_slice %822 {offsets = [0, 256], sizes = [8, 128], strides = [1, 1]} : vector<8x384xf32> to vector<8x128xf32>
    %829 = vector.extract_strided_slice %825 {offsets = [0, 0], sizes = [8, 128], strides = [1, 1]} : vector<8x384xf32> to vector<8x128xf32>
    %830 = vector.extract_strided_slice %825 {offsets = [0, 128], sizes = [8, 128], strides = [1, 1]} : vector<8x384xf32> to vector<8x128xf32>
    %831 = vector.extract_strided_slice %825 {offsets = [0, 256], sizes = [8, 128], strides = [1, 1]} : vector<8x384xf32> to vector<8x128xf32>
    %832 = arith.addf %826, %829 : vector<8x128xf32>
    %833 = arith.negf %832 : vector<8x128xf32>
    %834 = math.exp %833 : vector<8x128xf32>
    %cst_231 = arith.constant 1.000000e+00 : f32
    %835 = vector.broadcast %cst_231 : f32 to vector<8x128xf32>
    %836 = arith.addf %835, %834 : vector<8x128xf32>
    %837 = arith.divf %835, %836 : vector<8x128xf32>
    %838 = arith.addf %827, %830 : vector<8x128xf32>
    %839 = arith.negf %838 : vector<8x128xf32>
    %840 = math.exp %839 : vector<8x128xf32>
    %cst_232 = arith.constant 1.000000e+00 : f32
    %841 = vector.broadcast %cst_232 : f32 to vector<8x128xf32>
    %842 = arith.addf %841, %840 : vector<8x128xf32>
    %843 = arith.divf %841, %842 : vector<8x128xf32>
    %844 = arith.mulf %837, %831 : vector<8x128xf32>
    %845 = arith.addf %828, %844 : vector<8x128xf32>
    %846 = math.tanh %845 : vector<8x128xf32>
    %cst_233 = arith.constant 1.000000e+00 : f32
    %847 = vector.broadcast %cst_233 : f32 to vector<8x128xf32>
    %848 = arith.subf %847, %843 : vector<8x128xf32>
    %849 = arith.mulf %848, %846 : vector<8x128xf32>
    %850 = arith.mulf %843, %819 : vector<8x128xf32>
    %851 = arith.addf %849, %850 : vector<8x128xf32>
    %852 = vector.broadcast %c1_i32_227 : i32 to vector<8x1xi32>
    %853 = arith.cmpi slt, %852, %0 : vector<8x1xi32>
    %cst_234 = arith.constant 0.000000e+00 : f32
    %854 = vector.shape_cast %853 : vector<8x1xi1> to vector<8x1xi1>
    %855 = vector.broadcast %854 : vector<8x1xi1> to vector<8x128xi1>
    %856 = vector.broadcast %cst_234 : f32 to vector<8x128xf32>
    %857 = arith.select %855, %851, %856 : vector<8x128xi1>, vector<8x128xf32>
    %858 = arith.index_cast %c1_i32_227 : i32 to index
    %c0_235 = arith.constant 0 : index
    %c0_236 = arith.constant 0 : index
    %859 = vector.load %arg9[%858, %c0_235, %c0_236] : memref<8x8x128xf32, #tpu.memory_space<vmem>>, vector<1x8x128xf32>
    %860 = vector.shape_cast %859 : vector<1x8x128xf32> to vector<8x128xf32>
    %861 = vector.shape_cast %857 : vector<8x128xf32> to vector<1x8x128xf32>
    tpu.vector_store %arg9[%858, %c0_235, %c0_236], %861 {strides = array<i32>} : memref<8x8x128xf32, #tpu.memory_space<vmem>>, vector<1x8x128xf32>,
    %862 = vector.shape_cast %853 : vector<8x1xi1> to vector<8x1xi1>
    %863 = vector.broadcast %862 : vector<8x1xi1> to vector<8x128xi1>
    %864 = arith.select %863, %851, %819 : vector<8x128xi1>, vector<8x128xf32>
    %c2_i32_237 = arith.constant 2 : i32
    %865 = arith.index_cast %c2_i32_237 : i32 to index
    %c0_238 = arith.constant 0 : index
    %c0_239 = arith.constant 0 : index
    %866 = vector.load %arg10[%865, %c0_238, %c0_239] : memref<8x8x384xf32, #tpu.memory_space<vmem>>, vector<1x8x384xf32>
    %867 = vector.shape_cast %866 : vector<1x8x384xf32> to vector<8x384xf32>
    %cst_240 = arith.constant dense<0.000000e+00> : vector<8x384xf32>
    %868 = tpu.matmul %864, %762, %cst_240 {dimension_numbers = #tpu.dot_dimension_numbers<[1], [0], [0], [1], [0, 0, 1, 1], [], []>} : vector<8x128xf32>, vector<128x384xf32>, vector<8x384xf32> -> vector<8x384xf32>
    %869 = vector.broadcast %766 : vector<1x384xf32> to vector<8x384xf32>
    %870 = arith.addf %868, %869 : vector<8x384xf32>
    %871 = vector.extract_strided_slice %867 {offsets = [0, 0], sizes = [8, 128], strides = [1, 1]} : vector<8x384xf32> to vector<8x128xf32>
    %872 = vector.extract_strided_slice %867 {offsets = [0, 128], sizes = [8, 128], strides = [1, 1]} : vector<8x384xf32> to vector<8x128xf32>
    %873 = vector.extract_strided_slice %867 {offsets = [0, 256], sizes = [8, 128], strides = [1, 1]} : vector<8x384xf32> to vector<8x128xf32>
    %874 = vector.extract_strided_slice %870 {offsets = [0, 0], sizes = [8, 128], strides = [1, 1]} : vector<8x384xf32> to vector<8x128xf32>
    %875 = vector.extract_strided_slice %870 {offsets = [0, 128], sizes = [8, 128], strides = [1, 1]} : vector<8x384xf32> to vector<8x128xf32>
    %876 = vector.extract_strided_slice %870 {offsets = [0, 256], sizes = [8, 128], strides = [1, 1]} : vector<8x384xf32> to vector<8x128xf32>
    %877 = arith.addf %871, %874 : vector<8x128xf32>
    %878 = arith.negf %877 : vector<8x128xf32>
    %879 = math.exp %878 : vector<8x128xf32>
    %cst_241 = arith.constant 1.000000e+00 : f32
    %880 = vector.broadcast %cst_241 : f32 to vector<8x128xf32>
    %881 = arith.addf %880, %879 : vector<8x128xf32>
    %882 = arith.divf %880, %881 : vector<8x128xf32>
    %883 = arith.addf %872, %875 : vector<8x128xf32>
    %884 = arith.negf %883 : vector<8x128xf32>
    %885 = math.exp %884 : vector<8x128xf32>
    %cst_242 = arith.constant 1.000000e+00 : f32
    %886 = vector.broadcast %cst_242 : f32 to vector<8x128xf32>
    %887 = arith.addf %886, %885 : vector<8x128xf32>
    %888 = arith.divf %886, %887 : vector<8x128xf32>
    %889 = arith.mulf %882, %876 : vector<8x128xf32>
    %890 = arith.addf %873, %889 : vector<8x128xf32>
    %891 = math.tanh %890 : vector<8x128xf32>
    %cst_243 = arith.constant 1.000000e+00 : f32
    %892 = vector.broadcast %cst_243 : f32 to vector<8x128xf32>
    %893 = arith.subf %892, %888 : vector<8x128xf32>
    %894 = arith.mulf %893, %891 : vector<8x128xf32>
    %895 = arith.mulf %888, %864 : vector<8x128xf32>
    %896 = arith.addf %894, %895 : vector<8x128xf32>
    %897 = vector.broadcast %c2_i32_237 : i32 to vector<8x1xi32>
    %898 = arith.cmpi slt, %897, %0 : vector<8x1xi32>
    %cst_244 = arith.constant 0.000000e+00 : f32
    %899 = vector.shape_cast %898 : vector<8x1xi1> to vector<8x1xi1>
    %900 = vector.broadcast %899 : vector<8x1xi1> to vector<8x128xi1>
    %901 = vector.broadcast %cst_244 : f32 to vector<8x128xf32>
    %902 = arith.select %900, %896, %901 : vector<8x128xi1>, vector<8x128xf32>
    %903 = arith.index_cast %c2_i32_237 : i32 to index
    %c0_245 = arith.constant 0 : index
    %c0_246 = arith.constant 0 : index
    %904 = vector.load %arg9[%903, %c0_245, %c0_246] : memref<8x8x128xf32, #tpu.memory_space<vmem>>, vector<1x8x128xf32>
    %905 = vector.shape_cast %904 : vector<1x8x128xf32> to vector<8x128xf32>
    %906 = vector.shape_cast %902 : vector<8x128xf32> to vector<1x8x128xf32>
    tpu.vector_store %arg9[%903, %c0_245, %c0_246], %906 {strides = array<i32>} : memref<8x8x128xf32, #tpu.memory_space<vmem>>, vector<1x8x128xf32>,
    %907 = vector.shape_cast %898 : vector<8x1xi1> to vector<8x1xi1>
    %908 = vector.broadcast %907 : vector<8x1xi1> to vector<8x128xi1>
    %909 = arith.select %908, %896, %864 : vector<8x128xi1>, vector<8x128xf32>
    %c3_i32_247 = arith.constant 3 : i32
    %910 = arith.index_cast %c3_i32_247 : i32 to index
    %c0_248 = arith.constant 0 : index
    %c0_249 = arith.constant 0 : index
    %911 = vector.load %arg10[%910, %c0_248, %c0_249] : memref<8x8x384xf32, #tpu.memory_space<vmem>>, vector<1x8x384xf32>
    %912 = vector.shape_cast %911 : vector<1x8x384xf32> to vector<8x384xf32>
    %cst_250 = arith.constant dense<0.000000e+00> : vector<8x384xf32>
    %913 = tpu.matmul %909, %762, %cst_250 {dimension_numbers = #tpu.dot_dimension_numbers<[1], [0], [0], [1], [0, 0, 1, 1], [], []>} : vector<8x128xf32>, vector<128x384xf32>, vector<8x384xf32> -> vector<8x384xf32>
    %914 = vector.broadcast %766 : vector<1x384xf32> to vector<8x384xf32>
    %915 = arith.addf %913, %914 : vector<8x384xf32>
    %916 = vector.extract_strided_slice %912 {offsets = [0, 0], sizes = [8, 128], strides = [1, 1]} : vector<8x384xf32> to vector<8x128xf32>
    %917 = vector.extract_strided_slice %912 {offsets = [0, 128], sizes = [8, 128], strides = [1, 1]} : vector<8x384xf32> to vector<8x128xf32>
    %918 = vector.extract_strided_slice %912 {offsets = [0, 256], sizes = [8, 128], strides = [1, 1]} : vector<8x384xf32> to vector<8x128xf32>
    %919 = vector.extract_strided_slice %915 {offsets = [0, 0], sizes = [8, 128], strides = [1, 1]} : vector<8x384xf32> to vector<8x128xf32>
    %920 = vector.extract_strided_slice %915 {offsets = [0, 128], sizes = [8, 128], strides = [1, 1]} : vector<8x384xf32> to vector<8x128xf32>
    %921 = vector.extract_strided_slice %915 {offsets = [0, 256], sizes = [8, 128], strides = [1, 1]} : vector<8x384xf32> to vector<8x128xf32>
    %922 = arith.addf %916, %919 : vector<8x128xf32>
    %923 = arith.negf %922 : vector<8x128xf32>
    %924 = math.exp %923 : vector<8x128xf32>
    %cst_251 = arith.constant 1.000000e+00 : f32
    %925 = vector.broadcast %cst_251 : f32 to vector<8x128xf32>
    %926 = arith.addf %925, %924 : vector<8x128xf32>
    %927 = arith.divf %925, %926 : vector<8x128xf32>
    %928 = arith.addf %917, %920 : vector<8x128xf32>
    %929 = arith.negf %928 : vector<8x128xf32>
    %930 = math.exp %929 : vector<8x128xf32>
    %cst_252 = arith.constant 1.000000e+00 : f32
    %931 = vector.broadcast %cst_252 : f32 to vector<8x128xf32>
    %932 = arith.addf %931, %930 : vector<8x128xf32>
    %933 = arith.divf %931, %932 : vector<8x128xf32>
    %934 = arith.mulf %927, %921 : vector<8x128xf32>
    %935 = arith.addf %918, %934 : vector<8x128xf32>
    %936 = math.tanh %935 : vector<8x128xf32>
    %cst_253 = arith.constant 1.000000e+00 : f32
    %937 = vector.broadcast %cst_253 : f32 to vector<8x128xf32>
    %938 = arith.subf %937, %933 : vector<8x128xf32>
    %939 = arith.mulf %938, %936 : vector<8x128xf32>
    %940 = arith.mulf %933, %909 : vector<8x128xf32>
    %941 = arith.addf %939, %940 : vector<8x128xf32>
    %942 = vector.broadcast %c3_i32_247 : i32 to vector<8x1xi32>
    %943 = arith.cmpi slt, %942, %0 : vector<8x1xi32>
    %cst_254 = arith.constant 0.000000e+00 : f32
    %944 = vector.shape_cast %943 : vector<8x1xi1> to vector<8x1xi1>
    %945 = vector.broadcast %944 : vector<8x1xi1> to vector<8x128xi1>
    %946 = vector.broadcast %cst_254 : f32 to vector<8x128xf32>
    %947 = arith.select %945, %941, %946 : vector<8x128xi1>, vector<8x128xf32>
    %948 = arith.index_cast %c3_i32_247 : i32 to index
    %c0_255 = arith.constant 0 : index
    %c0_256 = arith.constant 0 : index
    %949 = vector.load %arg9[%948, %c0_255, %c0_256] : memref<8x8x128xf32, #tpu.memory_space<vmem>>, vector<1x8x128xf32>
    %950 = vector.shape_cast %949 : vector<1x8x128xf32> to vector<8x128xf32>
    %951 = vector.shape_cast %947 : vector<8x128xf32> to vector<1x8x128xf32>
    tpu.vector_store %arg9[%948, %c0_255, %c0_256], %951 {strides = array<i32>} : memref<8x8x128xf32, #tpu.memory_space<vmem>>, vector<1x8x128xf32>,
    %952 = vector.shape_cast %943 : vector<8x1xi1> to vector<8x1xi1>
    %953 = vector.broadcast %952 : vector<8x1xi1> to vector<8x128xi1>
    %954 = arith.select %953, %941, %909 : vector<8x128xi1>, vector<8x128xf32>
    %c4_i32_257 = arith.constant 4 : i32
    %955 = arith.index_cast %c4_i32_257 : i32 to index
    %c0_258 = arith.constant 0 : index
    %c0_259 = arith.constant 0 : index
    %956 = vector.load %arg10[%955, %c0_258, %c0_259] : memref<8x8x384xf32, #tpu.memory_space<vmem>>, vector<1x8x384xf32>
    %957 = vector.shape_cast %956 : vector<1x8x384xf32> to vector<8x384xf32>
    %cst_260 = arith.constant dense<0.000000e+00> : vector<8x384xf32>
    %958 = tpu.matmul %954, %762, %cst_260 {dimension_numbers = #tpu.dot_dimension_numbers<[1], [0], [0], [1], [0, 0, 1, 1], [], []>} : vector<8x128xf32>, vector<128x384xf32>, vector<8x384xf32> -> vector<8x384xf32>
    %959 = vector.broadcast %766 : vector<1x384xf32> to vector<8x384xf32>
    %960 = arith.addf %958, %959 : vector<8x384xf32>
    %961 = vector.extract_strided_slice %957 {offsets = [0, 0], sizes = [8, 128], strides = [1, 1]} : vector<8x384xf32> to vector<8x128xf32>
    %962 = vector.extract_strided_slice %957 {offsets = [0, 128], sizes = [8, 128], strides = [1, 1]} : vector<8x384xf32> to vector<8x128xf32>
    %963 = vector.extract_strided_slice %957 {offsets = [0, 256], sizes = [8, 128], strides = [1, 1]} : vector<8x384xf32> to vector<8x128xf32>
    %964 = vector.extract_strided_slice %960 {offsets = [0, 0], sizes = [8, 128], strides = [1, 1]} : vector<8x384xf32> to vector<8x128xf32>
    %965 = vector.extract_strided_slice %960 {offsets = [0, 128], sizes = [8, 128], strides = [1, 1]} : vector<8x384xf32> to vector<8x128xf32>
    %966 = vector.extract_strided_slice %960 {offsets = [0, 256], sizes = [8, 128], strides = [1, 1]} : vector<8x384xf32> to vector<8x128xf32>
    %967 = arith.addf %961, %964 : vector<8x128xf32>
    %968 = arith.negf %967 : vector<8x128xf32>
    %969 = math.exp %968 : vector<8x128xf32>
    %cst_261 = arith.constant 1.000000e+00 : f32
    %970 = vector.broadcast %cst_261 : f32 to vector<8x128xf32>
    %971 = arith.addf %970, %969 : vector<8x128xf32>
    %972 = arith.divf %970, %971 : vector<8x128xf32>
    %973 = arith.addf %962, %965 : vector<8x128xf32>
    %974 = arith.negf %973 : vector<8x128xf32>
    %975 = math.exp %974 : vector<8x128xf32>
    %cst_262 = arith.constant 1.000000e+00 : f32
    %976 = vector.broadcast %cst_262 : f32 to vector<8x128xf32>
    %977 = arith.addf %976, %975 : vector<8x128xf32>
    %978 = arith.divf %976, %977 : vector<8x128xf32>
    %979 = arith.mulf %972, %966 : vector<8x128xf32>
    %980 = arith.addf %963, %979 : vector<8x128xf32>
    %981 = math.tanh %980 : vector<8x128xf32>
    %cst_263 = arith.constant 1.000000e+00 : f32
    %982 = vector.broadcast %cst_263 : f32 to vector<8x128xf32>
    %983 = arith.subf %982, %978 : vector<8x128xf32>
    %984 = arith.mulf %983, %981 : vector<8x128xf32>
    %985 = arith.mulf %978, %954 : vector<8x128xf32>
    %986 = arith.addf %984, %985 : vector<8x128xf32>
    %987 = vector.broadcast %c4_i32_257 : i32 to vector<8x1xi32>
    %988 = arith.cmpi slt, %987, %0 : vector<8x1xi32>
    %cst_264 = arith.constant 0.000000e+00 : f32
    %989 = vector.shape_cast %988 : vector<8x1xi1> to vector<8x1xi1>
    %990 = vector.broadcast %989 : vector<8x1xi1> to vector<8x128xi1>
    %991 = vector.broadcast %cst_264 : f32 to vector<8x128xf32>
    %992 = arith.select %990, %986, %991 : vector<8x128xi1>, vector<8x128xf32>
    %993 = arith.index_cast %c4_i32_257 : i32 to index
    %c0_265 = arith.constant 0 : index
    %c0_266 = arith.constant 0 : index
    %994 = vector.load %arg9[%993, %c0_265, %c0_266] : memref<8x8x128xf32, #tpu.memory_space<vmem>>, vector<1x8x128xf32>
    %995 = vector.shape_cast %994 : vector<1x8x128xf32> to vector<8x128xf32>
    %996 = vector.shape_cast %992 : vector<8x128xf32> to vector<1x8x128xf32>
    tpu.vector_store %arg9[%993, %c0_265, %c0_266], %996 {strides = array<i32>} : memref<8x8x128xf32, #tpu.memory_space<vmem>>, vector<1x8x128xf32>,
    %997 = vector.shape_cast %988 : vector<8x1xi1> to vector<8x1xi1>
    %998 = vector.broadcast %997 : vector<8x1xi1> to vector<8x128xi1>
    %999 = arith.select %998, %986, %954 : vector<8x128xi1>, vector<8x128xf32>
    %c5_i32_267 = arith.constant 5 : i32
    %1000 = arith.index_cast %c5_i32_267 : i32 to index
    %c0_268 = arith.constant 0 : index
    %c0_269 = arith.constant 0 : index
    %1001 = vector.load %arg10[%1000, %c0_268, %c0_269] : memref<8x8x384xf32, #tpu.memory_space<vmem>>, vector<1x8x384xf32>
    %1002 = vector.shape_cast %1001 : vector<1x8x384xf32> to vector<8x384xf32>
    %cst_270 = arith.constant dense<0.000000e+00> : vector<8x384xf32>
    %1003 = tpu.matmul %999, %762, %cst_270 {dimension_numbers = #tpu.dot_dimension_numbers<[1], [0], [0], [1], [0, 0, 1, 1], [], []>} : vector<8x128xf32>, vector<128x384xf32>, vector<8x384xf32> -> vector<8x384xf32>
    %1004 = vector.broadcast %766 : vector<1x384xf32> to vector<8x384xf32>
    %1005 = arith.addf %1003, %1004 : vector<8x384xf32>
    %1006 = vector.extract_strided_slice %1002 {offsets = [0, 0], sizes = [8, 128], strides = [1, 1]} : vector<8x384xf32> to vector<8x128xf32>
    %1007 = vector.extract_strided_slice %1002 {offsets = [0, 128], sizes = [8, 128], strides = [1, 1]} : vector<8x384xf32> to vector<8x128xf32>
    %1008 = vector.extract_strided_slice %1002 {offsets = [0, 256], sizes = [8, 128], strides = [1, 1]} : vector<8x384xf32> to vector<8x128xf32>
    %1009 = vector.extract_strided_slice %1005 {offsets = [0, 0], sizes = [8, 128], strides = [1, 1]} : vector<8x384xf32> to vector<8x128xf32>
    %1010 = vector.extract_strided_slice %1005 {offsets = [0, 128], sizes = [8, 128], strides = [1, 1]} : vector<8x384xf32> to vector<8x128xf32>
    %1011 = vector.extract_strided_slice %1005 {offsets = [0, 256], sizes = [8, 128], strides = [1, 1]} : vector<8x384xf32> to vector<8x128xf32>
    %1012 = arith.addf %1006, %1009 : vector<8x128xf32>
    %1013 = arith.negf %1012 : vector<8x128xf32>
    %1014 = math.exp %1013 : vector<8x128xf32>
    %cst_271 = arith.constant 1.000000e+00 : f32
    %1015 = vector.broadcast %cst_271 : f32 to vector<8x128xf32>
    %1016 = arith.addf %1015, %1014 : vector<8x128xf32>
    %1017 = arith.divf %1015, %1016 : vector<8x128xf32>
    %1018 = arith.addf %1007, %1010 : vector<8x128xf32>
    %1019 = arith.negf %1018 : vector<8x128xf32>
    %1020 = math.exp %1019 : vector<8x128xf32>
    %cst_272 = arith.constant 1.000000e+00 : f32
    %1021 = vector.broadcast %cst_272 : f32 to vector<8x128xf32>
    %1022 = arith.addf %1021, %1020 : vector<8x128xf32>
    %1023 = arith.divf %1021, %1022 : vector<8x128xf32>
    %1024 = arith.mulf %1017, %1011 : vector<8x128xf32>
    %1025 = arith.addf %1008, %1024 : vector<8x128xf32>
    %1026 = math.tanh %1025 : vector<8x128xf32>
    %cst_273 = arith.constant 1.000000e+00 : f32
    %1027 = vector.broadcast %cst_273 : f32 to vector<8x128xf32>
    %1028 = arith.subf %1027, %1023 : vector<8x128xf32>
    %1029 = arith.mulf %1028, %1026 : vector<8x128xf32>
    %1030 = arith.mulf %1023, %999 : vector<8x128xf32>
    %1031 = arith.addf %1029, %1030 : vector<8x128xf32>
    %1032 = vector.broadcast %c5_i32_267 : i32 to vector<8x1xi32>
    %1033 = arith.cmpi slt, %1032, %0 : vector<8x1xi32>
    %cst_274 = arith.constant 0.000000e+00 : f32
    %1034 = vector.shape_cast %1033 : vector<8x1xi1> to vector<8x1xi1>
    %1035 = vector.broadcast %1034 : vector<8x1xi1> to vector<8x128xi1>
    %1036 = vector.broadcast %cst_274 : f32 to vector<8x128xf32>
    %1037 = arith.select %1035, %1031, %1036 : vector<8x128xi1>, vector<8x128xf32>
    %1038 = arith.index_cast %c5_i32_267 : i32 to index
    %c0_275 = arith.constant 0 : index
    %c0_276 = arith.constant 0 : index
    %1039 = vector.load %arg9[%1038, %c0_275, %c0_276] : memref<8x8x128xf32, #tpu.memory_space<vmem>>, vector<1x8x128xf32>
    %1040 = vector.shape_cast %1039 : vector<1x8x128xf32> to vector<8x128xf32>
    %1041 = vector.shape_cast %1037 : vector<8x128xf32> to vector<1x8x128xf32>
    tpu.vector_store %arg9[%1038, %c0_275, %c0_276], %1041 {strides = array<i32>} : memref<8x8x128xf32, #tpu.memory_space<vmem>>, vector<1x8x128xf32>,
    %1042 = vector.shape_cast %1033 : vector<8x1xi1> to vector<8x1xi1>
    %1043 = vector.broadcast %1042 : vector<8x1xi1> to vector<8x128xi1>
    %1044 = arith.select %1043, %1031, %999 : vector<8x128xi1>, vector<8x128xf32>
    %c6_i32_277 = arith.constant 6 : i32
    %1045 = arith.index_cast %c6_i32_277 : i32 to index
    %c0_278 = arith.constant 0 : index
    %c0_279 = arith.constant 0 : index
    %1046 = vector.load %arg10[%1045, %c0_278, %c0_279] : memref<8x8x384xf32, #tpu.memory_space<vmem>>, vector<1x8x384xf32>
    %1047 = vector.shape_cast %1046 : vector<1x8x384xf32> to vector<8x384xf32>
    %cst_280 = arith.constant dense<0.000000e+00> : vector<8x384xf32>
    %1048 = tpu.matmul %1044, %762, %cst_280 {dimension_numbers = #tpu.dot_dimension_numbers<[1], [0], [0], [1], [0, 0, 1, 1], [], []>} : vector<8x128xf32>, vector<128x384xf32>, vector<8x384xf32> -> vector<8x384xf32>
    %1049 = vector.broadcast %766 : vector<1x384xf32> to vector<8x384xf32>
    %1050 = arith.addf %1048, %1049 : vector<8x384xf32>
    %1051 = vector.extract_strided_slice %1047 {offsets = [0, 0], sizes = [8, 128], strides = [1, 1]} : vector<8x384xf32> to vector<8x128xf32>
    %1052 = vector.extract_strided_slice %1047 {offsets = [0, 128], sizes = [8, 128], strides = [1, 1]} : vector<8x384xf32> to vector<8x128xf32>
    %1053 = vector.extract_strided_slice %1047 {offsets = [0, 256], sizes = [8, 128], strides = [1, 1]} : vector<8x384xf32> to vector<8x128xf32>
    %1054 = vector.extract_strided_slice %1050 {offsets = [0, 0], sizes = [8, 128], strides = [1, 1]} : vector<8x384xf32> to vector<8x128xf32>
    %1055 = vector.extract_strided_slice %1050 {offsets = [0, 128], sizes = [8, 128], strides = [1, 1]} : vector<8x384xf32> to vector<8x128xf32>
    %1056 = vector.extract_strided_slice %1050 {offsets = [0, 256], sizes = [8, 128], strides = [1, 1]} : vector<8x384xf32> to vector<8x128xf32>
    %1057 = arith.addf %1051, %1054 : vector<8x128xf32>
    %1058 = arith.negf %1057 : vector<8x128xf32>
    %1059 = math.exp %1058 : vector<8x128xf32>
    %cst_281 = arith.constant 1.000000e+00 : f32
    %1060 = vector.broadcast %cst_281 : f32 to vector<8x128xf32>
    %1061 = arith.addf %1060, %1059 : vector<8x128xf32>
    %1062 = arith.divf %1060, %1061 : vector<8x128xf32>
    %1063 = arith.addf %1052, %1055 : vector<8x128xf32>
    %1064 = arith.negf %1063 : vector<8x128xf32>
    %1065 = math.exp %1064 : vector<8x128xf32>
    %cst_282 = arith.constant 1.000000e+00 : f32
    %1066 = vector.broadcast %cst_282 : f32 to vector<8x128xf32>
    %1067 = arith.addf %1066, %1065 : vector<8x128xf32>
    %1068 = arith.divf %1066, %1067 : vector<8x128xf32>
    %1069 = arith.mulf %1062, %1056 : vector<8x128xf32>
    %1070 = arith.addf %1053, %1069 : vector<8x128xf32>
    %1071 = math.tanh %1070 : vector<8x128xf32>
    %cst_283 = arith.constant 1.000000e+00 : f32
    %1072 = vector.broadcast %cst_283 : f32 to vector<8x128xf32>
    %1073 = arith.subf %1072, %1068 : vector<8x128xf32>
    %1074 = arith.mulf %1073, %1071 : vector<8x128xf32>
    %1075 = arith.mulf %1068, %1044 : vector<8x128xf32>
    %1076 = arith.addf %1074, %1075 : vector<8x128xf32>
    %1077 = vector.broadcast %c6_i32_277 : i32 to vector<8x1xi32>
    %1078 = arith.cmpi slt, %1077, %0 : vector<8x1xi32>
    %cst_284 = arith.constant 0.000000e+00 : f32
    %1079 = vector.shape_cast %1078 : vector<8x1xi1> to vector<8x1xi1>
    %1080 = vector.broadcast %1079 : vector<8x1xi1> to vector<8x128xi1>
    %1081 = vector.broadcast %cst_284 : f32 to vector<8x128xf32>
    %1082 = arith.select %1080, %1076, %1081 : vector<8x128xi1>, vector<8x128xf32>
    %1083 = arith.index_cast %c6_i32_277 : i32 to index
    %c0_285 = arith.constant 0 : index
    %c0_286 = arith.constant 0 : index
    %1084 = vector.load %arg9[%1083, %c0_285, %c0_286] : memref<8x8x128xf32, #tpu.memory_space<vmem>>, vector<1x8x128xf32>
    %1085 = vector.shape_cast %1084 : vector<1x8x128xf32> to vector<8x128xf32>
    %1086 = vector.shape_cast %1082 : vector<8x128xf32> to vector<1x8x128xf32>
    tpu.vector_store %arg9[%1083, %c0_285, %c0_286], %1086 {strides = array<i32>} : memref<8x8x128xf32, #tpu.memory_space<vmem>>, vector<1x8x128xf32>,
    %1087 = vector.shape_cast %1078 : vector<8x1xi1> to vector<8x1xi1>
    %1088 = vector.broadcast %1087 : vector<8x1xi1> to vector<8x128xi1>
    %1089 = arith.select %1088, %1076, %1044 : vector<8x128xi1>, vector<8x128xf32>
    %c7_i32_287 = arith.constant 7 : i32
    %1090 = arith.index_cast %c7_i32_287 : i32 to index
    %c0_288 = arith.constant 0 : index
    %c0_289 = arith.constant 0 : index
    %1091 = vector.load %arg10[%1090, %c0_288, %c0_289] : memref<8x8x384xf32, #tpu.memory_space<vmem>>, vector<1x8x384xf32>
    %1092 = vector.shape_cast %1091 : vector<1x8x384xf32> to vector<8x384xf32>
    %cst_290 = arith.constant dense<0.000000e+00> : vector<8x384xf32>
    %1093 = tpu.matmul %1089, %762, %cst_290 {dimension_numbers = #tpu.dot_dimension_numbers<[1], [0], [0], [1], [0, 0, 1, 1], [], []>} : vector<8x128xf32>, vector<128x384xf32>, vector<8x384xf32> -> vector<8x384xf32>
    %1094 = vector.broadcast %766 : vector<1x384xf32> to vector<8x384xf32>
    %1095 = arith.addf %1093, %1094 : vector<8x384xf32>
    %1096 = vector.extract_strided_slice %1092 {offsets = [0, 0], sizes = [8, 128], strides = [1, 1]} : vector<8x384xf32> to vector<8x128xf32>
    %1097 = vector.extract_strided_slice %1092 {offsets = [0, 128], sizes = [8, 128], strides = [1, 1]} : vector<8x384xf32> to vector<8x128xf32>
    %1098 = vector.extract_strided_slice %1092 {offsets = [0, 256], sizes = [8, 128], strides = [1, 1]} : vector<8x384xf32> to vector<8x128xf32>
    %1099 = vector.extract_strided_slice %1095 {offsets = [0, 0], sizes = [8, 128], strides = [1, 1]} : vector<8x384xf32> to vector<8x128xf32>
    %1100 = vector.extract_strided_slice %1095 {offsets = [0, 128], sizes = [8, 128], strides = [1, 1]} : vector<8x384xf32> to vector<8x128xf32>
    %1101 = vector.extract_strided_slice %1095 {offsets = [0, 256], sizes = [8, 128], strides = [1, 1]} : vector<8x384xf32> to vector<8x128xf32>
    %1102 = arith.addf %1096, %1099 : vector<8x128xf32>
    %1103 = arith.negf %1102 : vector<8x128xf32>
    %1104 = math.exp %1103 : vector<8x128xf32>
    %cst_291 = arith.constant 1.000000e+00 : f32
    %1105 = vector.broadcast %cst_291 : f32 to vector<8x128xf32>
    %1106 = arith.addf %1105, %1104 : vector<8x128xf32>
    %1107 = arith.divf %1105, %1106 : vector<8x128xf32>
    %1108 = arith.addf %1097, %1100 : vector<8x128xf32>
    %1109 = arith.negf %1108 : vector<8x128xf32>
    %1110 = math.exp %1109 : vector<8x128xf32>
    %cst_292 = arith.constant 1.000000e+00 : f32
    %1111 = vector.broadcast %cst_292 : f32 to vector<8x128xf32>
    %1112 = arith.addf %1111, %1110 : vector<8x128xf32>
    %1113 = arith.divf %1111, %1112 : vector<8x128xf32>
    %1114 = arith.mulf %1107, %1101 : vector<8x128xf32>
    %1115 = arith.addf %1098, %1114 : vector<8x128xf32>
    %1116 = math.tanh %1115 : vector<8x128xf32>
    %cst_293 = arith.constant 1.000000e+00 : f32
    %1117 = vector.broadcast %cst_293 : f32 to vector<8x128xf32>
    %1118 = arith.subf %1117, %1113 : vector<8x128xf32>
    %1119 = arith.mulf %1118, %1116 : vector<8x128xf32>
    %1120 = arith.mulf %1113, %1089 : vector<8x128xf32>
    %1121 = arith.addf %1119, %1120 : vector<8x128xf32>
    %1122 = vector.broadcast %c7_i32_287 : i32 to vector<8x1xi32>
    %1123 = arith.cmpi slt, %1122, %0 : vector<8x1xi32>
    %cst_294 = arith.constant 0.000000e+00 : f32
    %1124 = vector.shape_cast %1123 : vector<8x1xi1> to vector<8x1xi1>
    %1125 = vector.broadcast %1124 : vector<8x1xi1> to vector<8x128xi1>
    %1126 = vector.broadcast %cst_294 : f32 to vector<8x128xf32>
    %1127 = arith.select %1125, %1121, %1126 : vector<8x128xi1>, vector<8x128xf32>
    %1128 = arith.index_cast %c7_i32_287 : i32 to index
    %c0_295 = arith.constant 0 : index
    %c0_296 = arith.constant 0 : index
    %1129 = vector.load %arg9[%1128, %c0_295, %c0_296] : memref<8x8x128xf32, #tpu.memory_space<vmem>>, vector<1x8x128xf32>
    %1130 = vector.shape_cast %1129 : vector<1x8x128xf32> to vector<8x128xf32>
    %1131 = vector.shape_cast %1127 : vector<8x128xf32> to vector<1x8x128xf32>
    tpu.vector_store %arg9[%1128, %c0_295, %c0_296], %1131 {strides = array<i32>} : memref<8x8x128xf32, #tpu.memory_space<vmem>>, vector<1x8x128xf32>,
    %1132 = vector.shape_cast %1123 : vector<8x1xi1> to vector<8x1xi1>
    %1133 = vector.broadcast %1132 : vector<8x1xi1> to vector<8x128xi1>
    %1134 = arith.select %1133, %1121, %1089 : vector<8x128xi1>, vector<8x128xf32>
    %c8_i32_297 = arith.constant 8 : i32
    %c2_298 = arith.constant 2 : index
    %c0_299 = arith.constant 0 : index
    %c0_300 = arith.constant 0 : index
    %1135 = vector.load %arg8[%c2_298, %c0_299, %c0_300] : memref<4x8x128xf32, #tpu.memory_space<vmem>>, vector<1x8x128xf32>
    %1136 = vector.shape_cast %1135 : vector<1x8x128xf32> to vector<8x128xf32>
    %1137 = vector.shape_cast %1134 : vector<8x128xf32> to vector<1x8x128xf32>
    tpu.vector_store %arg8[%c2_298, %c0_299, %c0_300], %1137 {strides = array<i32>} : memref<4x8x128xf32, #tpu.memory_space<vmem>>, vector<1x8x128xf32>,
    %c3 = arith.constant 3 : index
    %c0_301 = arith.constant 0 : index
    %c0_302 = arith.constant 0 : index
    %1138 = vector.load %arg3[%c3, %c0_301, %c0_302] : memref<4x128x384xf32, #tpu.memory_space<vmem>>, vector<1x128x384xf32>
    %1139 = vector.shape_cast %1138 : vector<1x128x384xf32> to vector<128x384xf32>
    %c3_303 = arith.constant 3 : index
    %c0_304 = arith.constant 0 : index
    %c0_305 = arith.constant 0 : index
    %1140 = vector.load %arg4[%c3_303, %c0_304, %c0_305] : memref<4x128x384xf32, #tpu.memory_space<vmem>>, vector<1x128x384xf32>
    %1141 = vector.shape_cast %1140 : vector<1x128x384xf32> to vector<128x384xf32>
    %c3_306 = arith.constant 3 : index
    %c0_307 = arith.constant 0 : index
    %c0_308 = arith.constant 0 : index
    %1142 = vector.load %arg5[%c3_306, %c0_307, %c0_308] : memref<4x1x384xf32, #tpu.memory_space<vmem>>, vector<1x1x384xf32>
    %1143 = vector.shape_cast %1142 : vector<1x1x384xf32> to vector<1x384xf32>
    %c3_309 = arith.constant 3 : index
    %c0_310 = arith.constant 0 : index
    %c0_311 = arith.constant 0 : index
    %1144 = vector.load %arg6[%c3_309, %c0_310, %c0_311] : memref<4x1x384xf32, #tpu.memory_space<vmem>>, vector<1x1x384xf32>
    %1145 = vector.shape_cast %1144 : vector<1x1x384xf32> to vector<1x384xf32>
    %c0_312 = arith.constant 0 : index
    %c0_313 = arith.constant 0 : index
    %c0_314 = arith.constant 0 : index
    %1146 = vector.load %arg9[%c0_312, %c0_313, %c0_314] : memref<8x8x128xf32, #tpu.memory_space<vmem>>, vector<8x8x128xf32>
    %1147 = vector.shape_cast %1146 : vector<8x8x128xf32> to vector<64x128xf32>
    %cst_315 = arith.constant dense<0.000000e+00> : vector<64x384xf32>
    %1148 = tpu.matmul %1147, %1139, %cst_315 {dimension_numbers = #tpu.dot_dimension_numbers<[1], [0], [0], [1], [0, 0, 1, 1], [], []>} : vector<64x128xf32>, vector<128x384xf32>, vector<64x384xf32> -> vector<64x384xf32>
    %1149 = vector.broadcast %1143 : vector<1x384xf32> to vector<64x384xf32>
    %1150 = arith.addf %1148, %1149 : vector<64x384xf32>
    %1151 = vector.shape_cast %1150 : vector<64x384xf32> to vector<8x8x384xf32>
    %c0_316 = arith.constant 0 : index
    %c0_317 = arith.constant 0 : index
    %c0_318 = arith.constant 0 : index
    %1152 = vector.load %arg10[%c0_316, %c0_317, %c0_318] : memref<8x8x384xf32, #tpu.memory_space<vmem>>, vector<8x8x384xf32>
    tpu.vector_store %arg10[%c0_316, %c0_317, %c0_318], %1151 {strides = array<i32>} : memref<8x8x384xf32, #tpu.memory_space<vmem>>, vector<8x8x384xf32>,
    %cst_319 = arith.constant 0.000000e+00 : f32
    %1153 = vector.broadcast %cst_319 : f32 to vector<8x128xf32>
    %c0_i32_320 = arith.constant 0 : i32
    %1154 = arith.index_cast %c0_i32_320 : i32 to index
    %c0_321 = arith.constant 0 : index
    %c0_322 = arith.constant 0 : index
    %1155 = vector.load %arg10[%1154, %c0_321, %c0_322] : memref<8x8x384xf32, #tpu.memory_space<vmem>>, vector<1x8x384xf32>
    %1156 = vector.shape_cast %1155 : vector<1x8x384xf32> to vector<8x384xf32>
    %cst_323 = arith.constant dense<0.000000e+00> : vector<8x384xf32>
    %1157 = tpu.matmul %1153, %1141, %cst_323 {dimension_numbers = #tpu.dot_dimension_numbers<[1], [0], [0], [1], [0, 0, 1, 1], [], []>} : vector<8x128xf32>, vector<128x384xf32>, vector<8x384xf32> -> vector<8x384xf32>
    %1158 = vector.broadcast %1145 : vector<1x384xf32> to vector<8x384xf32>
    %1159 = arith.addf %1157, %1158 : vector<8x384xf32>
    %1160 = vector.extract_strided_slice %1156 {offsets = [0, 0], sizes = [8, 128], strides = [1, 1]} : vector<8x384xf32> to vector<8x128xf32>
    %1161 = vector.extract_strided_slice %1156 {offsets = [0, 128], sizes = [8, 128], strides = [1, 1]} : vector<8x384xf32> to vector<8x128xf32>
    %1162 = vector.extract_strided_slice %1156 {offsets = [0, 256], sizes = [8, 128], strides = [1, 1]} : vector<8x384xf32> to vector<8x128xf32>
    %1163 = vector.extract_strided_slice %1159 {offsets = [0, 0], sizes = [8, 128], strides = [1, 1]} : vector<8x384xf32> to vector<8x128xf32>
    %1164 = vector.extract_strided_slice %1159 {offsets = [0, 128], sizes = [8, 128], strides = [1, 1]} : vector<8x384xf32> to vector<8x128xf32>
    %1165 = vector.extract_strided_slice %1159 {offsets = [0, 256], sizes = [8, 128], strides = [1, 1]} : vector<8x384xf32> to vector<8x128xf32>
    %1166 = arith.addf %1160, %1163 : vector<8x128xf32>
    %1167 = arith.negf %1166 : vector<8x128xf32>
    %1168 = math.exp %1167 : vector<8x128xf32>
    %cst_324 = arith.constant 1.000000e+00 : f32
    %1169 = vector.broadcast %cst_324 : f32 to vector<8x128xf32>
    %1170 = arith.addf %1169, %1168 : vector<8x128xf32>
    %1171 = arith.divf %1169, %1170 : vector<8x128xf32>
    %1172 = arith.addf %1161, %1164 : vector<8x128xf32>
    %1173 = arith.negf %1172 : vector<8x128xf32>
    %1174 = math.exp %1173 : vector<8x128xf32>
    %cst_325 = arith.constant 1.000000e+00 : f32
    %1175 = vector.broadcast %cst_325 : f32 to vector<8x128xf32>
    %1176 = arith.addf %1175, %1174 : vector<8x128xf32>
    %1177 = arith.divf %1175, %1176 : vector<8x128xf32>
    %1178 = arith.mulf %1171, %1165 : vector<8x128xf32>
    %1179 = arith.addf %1162, %1178 : vector<8x128xf32>
    %1180 = math.tanh %1179 : vector<8x128xf32>
    %cst_326 = arith.constant 1.000000e+00 : f32
    %1181 = vector.broadcast %cst_326 : f32 to vector<8x128xf32>
    %1182 = arith.subf %1181, %1177 : vector<8x128xf32>
    %1183 = arith.mulf %1182, %1180 : vector<8x128xf32>
    %1184 = arith.mulf %1177, %1153 : vector<8x128xf32>
    %1185 = arith.addf %1183, %1184 : vector<8x128xf32>
    %1186 = vector.broadcast %c0_i32_320 : i32 to vector<8x1xi32>
    %1187 = arith.cmpi slt, %1186, %0 : vector<8x1xi32>
    %cst_327 = arith.constant 0.000000e+00 : f32
    %1188 = vector.shape_cast %1187 : vector<8x1xi1> to vector<8x1xi1>
    %1189 = vector.broadcast %1188 : vector<8x1xi1> to vector<8x128xi1>
    %1190 = vector.broadcast %cst_327 : f32 to vector<8x128xf32>
    %1191 = arith.select %1189, %1185, %1190 : vector<8x128xi1>, vector<8x128xf32>
    %1192 = arith.index_cast %c0_i32_320 : i32 to index
    %c0_328 = arith.constant 0 : index
    %c0_329 = arith.constant 0 : index
    %1193 = vector.load %arg7[%1192, %c0_328, %c0_329] : memref<8x8x128xf32, #tpu.memory_space<vmem>>, vector<1x8x128xf32>
    %1194 = vector.shape_cast %1193 : vector<1x8x128xf32> to vector<8x128xf32>
    %1195 = vector.shape_cast %1191 : vector<8x128xf32> to vector<1x8x128xf32>
    tpu.vector_store %arg7[%1192, %c0_328, %c0_329], %1195 {strides = array<i32>} : memref<8x8x128xf32, #tpu.memory_space<vmem>>, vector<1x8x128xf32>,
    %1196 = vector.shape_cast %1187 : vector<8x1xi1> to vector<8x1xi1>
    %1197 = vector.broadcast %1196 : vector<8x1xi1> to vector<8x128xi1>
    %1198 = arith.select %1197, %1185, %1153 : vector<8x128xi1>, vector<8x128xf32>
    %c1_i32_330 = arith.constant 1 : i32
    %1199 = arith.index_cast %c1_i32_330 : i32 to index
    %c0_331 = arith.constant 0 : index
    %c0_332 = arith.constant 0 : index
    %1200 = vector.load %arg10[%1199, %c0_331, %c0_332] : memref<8x8x384xf32, #tpu.memory_space<vmem>>, vector<1x8x384xf32>
    %1201 = vector.shape_cast %1200 : vector<1x8x384xf32> to vector<8x384xf32>
    %cst_333 = arith.constant dense<0.000000e+00> : vector<8x384xf32>
    %1202 = tpu.matmul %1198, %1141, %cst_333 {dimension_numbers = #tpu.dot_dimension_numbers<[1], [0], [0], [1], [0, 0, 1, 1], [], []>} : vector<8x128xf32>, vector<128x384xf32>, vector<8x384xf32> -> vector<8x384xf32>
    %1203 = vector.broadcast %1145 : vector<1x384xf32> to vector<8x384xf32>
    %1204 = arith.addf %1202, %1203 : vector<8x384xf32>
    %1205 = vector.extract_strided_slice %1201 {offsets = [0, 0], sizes = [8, 128], strides = [1, 1]} : vector<8x384xf32> to vector<8x128xf32>
    %1206 = vector.extract_strided_slice %1201 {offsets = [0, 128], sizes = [8, 128], strides = [1, 1]} : vector<8x384xf32> to vector<8x128xf32>
    %1207 = vector.extract_strided_slice %1201 {offsets = [0, 256], sizes = [8, 128], strides = [1, 1]} : vector<8x384xf32> to vector<8x128xf32>
    %1208 = vector.extract_strided_slice %1204 {offsets = [0, 0], sizes = [8, 128], strides = [1, 1]} : vector<8x384xf32> to vector<8x128xf32>
    %1209 = vector.extract_strided_slice %1204 {offsets = [0, 128], sizes = [8, 128], strides = [1, 1]} : vector<8x384xf32> to vector<8x128xf32>
    %1210 = vector.extract_strided_slice %1204 {offsets = [0, 256], sizes = [8, 128], strides = [1, 1]} : vector<8x384xf32> to vector<8x128xf32>
    %1211 = arith.addf %1205, %1208 : vector<8x128xf32>
    %1212 = arith.negf %1211 : vector<8x128xf32>
    %1213 = math.exp %1212 : vector<8x128xf32>
    %cst_334 = arith.constant 1.000000e+00 : f32
    %1214 = vector.broadcast %cst_334 : f32 to vector<8x128xf32>
    %1215 = arith.addf %1214, %1213 : vector<8x128xf32>
    %1216 = arith.divf %1214, %1215 : vector<8x128xf32>
    %1217 = arith.addf %1206, %1209 : vector<8x128xf32>
    %1218 = arith.negf %1217 : vector<8x128xf32>
    %1219 = math.exp %1218 : vector<8x128xf32>
    %cst_335 = arith.constant 1.000000e+00 : f32
    %1220 = vector.broadcast %cst_335 : f32 to vector<8x128xf32>
    %1221 = arith.addf %1220, %1219 : vector<8x128xf32>
    %1222 = arith.divf %1220, %1221 : vector<8x128xf32>
    %1223 = arith.mulf %1216, %1210 : vector<8x128xf32>
    %1224 = arith.addf %1207, %1223 : vector<8x128xf32>
    %1225 = math.tanh %1224 : vector<8x128xf32>
    %cst_336 = arith.constant 1.000000e+00 : f32
    %1226 = vector.broadcast %cst_336 : f32 to vector<8x128xf32>
    %1227 = arith.subf %1226, %1222 : vector<8x128xf32>
    %1228 = arith.mulf %1227, %1225 : vector<8x128xf32>
    %1229 = arith.mulf %1222, %1198 : vector<8x128xf32>
    %1230 = arith.addf %1228, %1229 : vector<8x128xf32>
    %1231 = vector.broadcast %c1_i32_330 : i32 to vector<8x1xi32>
    %1232 = arith.cmpi slt, %1231, %0 : vector<8x1xi32>
    %cst_337 = arith.constant 0.000000e+00 : f32
    %1233 = vector.shape_cast %1232 : vector<8x1xi1> to vector<8x1xi1>
    %1234 = vector.broadcast %1233 : vector<8x1xi1> to vector<8x128xi1>
    %1235 = vector.broadcast %cst_337 : f32 to vector<8x128xf32>
    %1236 = arith.select %1234, %1230, %1235 : vector<8x128xi1>, vector<8x128xf32>
    %1237 = arith.index_cast %c1_i32_330 : i32 to index
    %c0_338 = arith.constant 0 : index
    %c0_339 = arith.constant 0 : index
    %1238 = vector.load %arg7[%1237, %c0_338, %c0_339] : memref<8x8x128xf32, #tpu.memory_space<vmem>>, vector<1x8x128xf32>
    %1239 = vector.shape_cast %1238 : vector<1x8x128xf32> to vector<8x128xf32>
    %1240 = vector.shape_cast %1236 : vector<8x128xf32> to vector<1x8x128xf32>
    tpu.vector_store %arg7[%1237, %c0_338, %c0_339], %1240 {strides = array<i32>} : memref<8x8x128xf32, #tpu.memory_space<vmem>>, vector<1x8x128xf32>,
    %1241 = vector.shape_cast %1232 : vector<8x1xi1> to vector<8x1xi1>
    %1242 = vector.broadcast %1241 : vector<8x1xi1> to vector<8x128xi1>
    %1243 = arith.select %1242, %1230, %1198 : vector<8x128xi1>, vector<8x128xf32>
    %c2_i32_340 = arith.constant 2 : i32
    %1244 = arith.index_cast %c2_i32_340 : i32 to index
    %c0_341 = arith.constant 0 : index
    %c0_342 = arith.constant 0 : index
    %1245 = vector.load %arg10[%1244, %c0_341, %c0_342] : memref<8x8x384xf32, #tpu.memory_space<vmem>>, vector<1x8x384xf32>
    %1246 = vector.shape_cast %1245 : vector<1x8x384xf32> to vector<8x384xf32>
    %cst_343 = arith.constant dense<0.000000e+00> : vector<8x384xf32>
    %1247 = tpu.matmul %1243, %1141, %cst_343 {dimension_numbers = #tpu.dot_dimension_numbers<[1], [0], [0], [1], [0, 0, 1, 1], [], []>} : vector<8x128xf32>, vector<128x384xf32>, vector<8x384xf32> -> vector<8x384xf32>
    %1248 = vector.broadcast %1145 : vector<1x384xf32> to vector<8x384xf32>
    %1249 = arith.addf %1247, %1248 : vector<8x384xf32>
    %1250 = vector.extract_strided_slice %1246 {offsets = [0, 0], sizes = [8, 128], strides = [1, 1]} : vector<8x384xf32> to vector<8x128xf32>
    %1251 = vector.extract_strided_slice %1246 {offsets = [0, 128], sizes = [8, 128], strides = [1, 1]} : vector<8x384xf32> to vector<8x128xf32>
    %1252 = vector.extract_strided_slice %1246 {offsets = [0, 256], sizes = [8, 128], strides = [1, 1]} : vector<8x384xf32> to vector<8x128xf32>
    %1253 = vector.extract_strided_slice %1249 {offsets = [0, 0], sizes = [8, 128], strides = [1, 1]} : vector<8x384xf32> to vector<8x128xf32>
    %1254 = vector.extract_strided_slice %1249 {offsets = [0, 128], sizes = [8, 128], strides = [1, 1]} : vector<8x384xf32> to vector<8x128xf32>
    %1255 = vector.extract_strided_slice %1249 {offsets = [0, 256], sizes = [8, 128], strides = [1, 1]} : vector<8x384xf32> to vector<8x128xf32>
    %1256 = arith.addf %1250, %1253 : vector<8x128xf32>
    %1257 = arith.negf %1256 : vector<8x128xf32>
    %1258 = math.exp %1257 : vector<8x128xf32>
    %cst_344 = arith.constant 1.000000e+00 : f32
    %1259 = vector.broadcast %cst_344 : f32 to vector<8x128xf32>
    %1260 = arith.addf %1259, %1258 : vector<8x128xf32>
    %1261 = arith.divf %1259, %1260 : vector<8x128xf32>
    %1262 = arith.addf %1251, %1254 : vector<8x128xf32>
    %1263 = arith.negf %1262 : vector<8x128xf32>
    %1264 = math.exp %1263 : vector<8x128xf32>
    %cst_345 = arith.constant 1.000000e+00 : f32
    %1265 = vector.broadcast %cst_345 : f32 to vector<8x128xf32>
    %1266 = arith.addf %1265, %1264 : vector<8x128xf32>
    %1267 = arith.divf %1265, %1266 : vector<8x128xf32>
    %1268 = arith.mulf %1261, %1255 : vector<8x128xf32>
    %1269 = arith.addf %1252, %1268 : vector<8x128xf32>
    %1270 = math.tanh %1269 : vector<8x128xf32>
    %cst_346 = arith.constant 1.000000e+00 : f32
    %1271 = vector.broadcast %cst_346 : f32 to vector<8x128xf32>
    %1272 = arith.subf %1271, %1267 : vector<8x128xf32>
    %1273 = arith.mulf %1272, %1270 : vector<8x128xf32>
    %1274 = arith.mulf %1267, %1243 : vector<8x128xf32>
    %1275 = arith.addf %1273, %1274 : vector<8x128xf32>
    %1276 = vector.broadcast %c2_i32_340 : i32 to vector<8x1xi32>
    %1277 = arith.cmpi slt, %1276, %0 : vector<8x1xi32>
    %cst_347 = arith.constant 0.000000e+00 : f32
    %1278 = vector.shape_cast %1277 : vector<8x1xi1> to vector<8x1xi1>
    %1279 = vector.broadcast %1278 : vector<8x1xi1> to vector<8x128xi1>
    %1280 = vector.broadcast %cst_347 : f32 to vector<8x128xf32>
    %1281 = arith.select %1279, %1275, %1280 : vector<8x128xi1>, vector<8x128xf32>
    %1282 = arith.index_cast %c2_i32_340 : i32 to index
    %c0_348 = arith.constant 0 : index
    %c0_349 = arith.constant 0 : index
    %1283 = vector.load %arg7[%1282, %c0_348, %c0_349] : memref<8x8x128xf32, #tpu.memory_space<vmem>>, vector<1x8x128xf32>
    %1284 = vector.shape_cast %1283 : vector<1x8x128xf32> to vector<8x128xf32>
    %1285 = vector.shape_cast %1281 : vector<8x128xf32> to vector<1x8x128xf32>
    tpu.vector_store %arg7[%1282, %c0_348, %c0_349], %1285 {strides = array<i32>} : memref<8x8x128xf32, #tpu.memory_space<vmem>>, vector<1x8x128xf32>,
    %1286 = vector.shape_cast %1277 : vector<8x1xi1> to vector<8x1xi1>
    %1287 = vector.broadcast %1286 : vector<8x1xi1> to vector<8x128xi1>
    %1288 = arith.select %1287, %1275, %1243 : vector<8x128xi1>, vector<8x128xf32>
    %c3_i32_350 = arith.constant 3 : i32
    %1289 = arith.index_cast %c3_i32_350 : i32 to index
    %c0_351 = arith.constant 0 : index
    %c0_352 = arith.constant 0 : index
    %1290 = vector.load %arg10[%1289, %c0_351, %c0_352] : memref<8x8x384xf32, #tpu.memory_space<vmem>>, vector<1x8x384xf32>
    %1291 = vector.shape_cast %1290 : vector<1x8x384xf32> to vector<8x384xf32>
    %cst_353 = arith.constant dense<0.000000e+00> : vector<8x384xf32>
    %1292 = tpu.matmul %1288, %1141, %cst_353 {dimension_numbers = #tpu.dot_dimension_numbers<[1], [0], [0], [1], [0, 0, 1, 1], [], []>} : vector<8x128xf32>, vector<128x384xf32>, vector<8x384xf32> -> vector<8x384xf32>
    %1293 = vector.broadcast %1145 : vector<1x384xf32> to vector<8x384xf32>
    %1294 = arith.addf %1292, %1293 : vector<8x384xf32>
    %1295 = vector.extract_strided_slice %1291 {offsets = [0, 0], sizes = [8, 128], strides = [1, 1]} : vector<8x384xf32> to vector<8x128xf32>
    %1296 = vector.extract_strided_slice %1291 {offsets = [0, 128], sizes = [8, 128], strides = [1, 1]} : vector<8x384xf32> to vector<8x128xf32>
    %1297 = vector.extract_strided_slice %1291 {offsets = [0, 256], sizes = [8, 128], strides = [1, 1]} : vector<8x384xf32> to vector<8x128xf32>
    %1298 = vector.extract_strided_slice %1294 {offsets = [0, 0], sizes = [8, 128], strides = [1, 1]} : vector<8x384xf32> to vector<8x128xf32>
    %1299 = vector.extract_strided_slice %1294 {offsets = [0, 128], sizes = [8, 128], strides = [1, 1]} : vector<8x384xf32> to vector<8x128xf32>
    %1300 = vector.extract_strided_slice %1294 {offsets = [0, 256], sizes = [8, 128], strides = [1, 1]} : vector<8x384xf32> to vector<8x128xf32>
    %1301 = arith.addf %1295, %1298 : vector<8x128xf32>
    %1302 = arith.negf %1301 : vector<8x128xf32>
    %1303 = math.exp %1302 : vector<8x128xf32>
    %cst_354 = arith.constant 1.000000e+00 : f32
    %1304 = vector.broadcast %cst_354 : f32 to vector<8x128xf32>
    %1305 = arith.addf %1304, %1303 : vector<8x128xf32>
    %1306 = arith.divf %1304, %1305 : vector<8x128xf32>
    %1307 = arith.addf %1296, %1299 : vector<8x128xf32>
    %1308 = arith.negf %1307 : vector<8x128xf32>
    %1309 = math.exp %1308 : vector<8x128xf32>
    %cst_355 = arith.constant 1.000000e+00 : f32
    %1310 = vector.broadcast %cst_355 : f32 to vector<8x128xf32>
    %1311 = arith.addf %1310, %1309 : vector<8x128xf32>
    %1312 = arith.divf %1310, %1311 : vector<8x128xf32>
    %1313 = arith.mulf %1306, %1300 : vector<8x128xf32>
    %1314 = arith.addf %1297, %1313 : vector<8x128xf32>
    %1315 = math.tanh %1314 : vector<8x128xf32>
    %cst_356 = arith.constant 1.000000e+00 : f32
    %1316 = vector.broadcast %cst_356 : f32 to vector<8x128xf32>
    %1317 = arith.subf %1316, %1312 : vector<8x128xf32>
    %1318 = arith.mulf %1317, %1315 : vector<8x128xf32>
    %1319 = arith.mulf %1312, %1288 : vector<8x128xf32>
    %1320 = arith.addf %1318, %1319 : vector<8x128xf32>
    %1321 = vector.broadcast %c3_i32_350 : i32 to vector<8x1xi32>
    %1322 = arith.cmpi slt, %1321, %0 : vector<8x1xi32>
    %cst_357 = arith.constant 0.000000e+00 : f32
    %1323 = vector.shape_cast %1322 : vector<8x1xi1> to vector<8x1xi1>
    %1324 = vector.broadcast %1323 : vector<8x1xi1> to vector<8x128xi1>
    %1325 = vector.broadcast %cst_357 : f32 to vector<8x128xf32>
    %1326 = arith.select %1324, %1320, %1325 : vector<8x128xi1>, vector<8x128xf32>
    %1327 = arith.index_cast %c3_i32_350 : i32 to index
    %c0_358 = arith.constant 0 : index
    %c0_359 = arith.constant 0 : index
    %1328 = vector.load %arg7[%1327, %c0_358, %c0_359] : memref<8x8x128xf32, #tpu.memory_space<vmem>>, vector<1x8x128xf32>
    %1329 = vector.shape_cast %1328 : vector<1x8x128xf32> to vector<8x128xf32>
    %1330 = vector.shape_cast %1326 : vector<8x128xf32> to vector<1x8x128xf32>
    tpu.vector_store %arg7[%1327, %c0_358, %c0_359], %1330 {strides = array<i32>} : memref<8x8x128xf32, #tpu.memory_space<vmem>>, vector<1x8x128xf32>,
    %1331 = vector.shape_cast %1322 : vector<8x1xi1> to vector<8x1xi1>
    %1332 = vector.broadcast %1331 : vector<8x1xi1> to vector<8x128xi1>
    %1333 = arith.select %1332, %1320, %1288 : vector<8x128xi1>, vector<8x128xf32>
    %c4_i32_360 = arith.constant 4 : i32
    %1334 = arith.index_cast %c4_i32_360 : i32 to index
    %c0_361 = arith.constant 0 : index
    %c0_362 = arith.constant 0 : index
    %1335 = vector.load %arg10[%1334, %c0_361, %c0_362] : memref<8x8x384xf32, #tpu.memory_space<vmem>>, vector<1x8x384xf32>
    %1336 = vector.shape_cast %1335 : vector<1x8x384xf32> to vector<8x384xf32>
    %cst_363 = arith.constant dense<0.000000e+00> : vector<8x384xf32>
    %1337 = tpu.matmul %1333, %1141, %cst_363 {dimension_numbers = #tpu.dot_dimension_numbers<[1], [0], [0], [1], [0, 0, 1, 1], [], []>} : vector<8x128xf32>, vector<128x384xf32>, vector<8x384xf32> -> vector<8x384xf32>
    %1338 = vector.broadcast %1145 : vector<1x384xf32> to vector<8x384xf32>
    %1339 = arith.addf %1337, %1338 : vector<8x384xf32>
    %1340 = vector.extract_strided_slice %1336 {offsets = [0, 0], sizes = [8, 128], strides = [1, 1]} : vector<8x384xf32> to vector<8x128xf32>
    %1341 = vector.extract_strided_slice %1336 {offsets = [0, 128], sizes = [8, 128], strides = [1, 1]} : vector<8x384xf32> to vector<8x128xf32>
    %1342 = vector.extract_strided_slice %1336 {offsets = [0, 256], sizes = [8, 128], strides = [1, 1]} : vector<8x384xf32> to vector<8x128xf32>
    %1343 = vector.extract_strided_slice %1339 {offsets = [0, 0], sizes = [8, 128], strides = [1, 1]} : vector<8x384xf32> to vector<8x128xf32>
    %1344 = vector.extract_strided_slice %1339 {offsets = [0, 128], sizes = [8, 128], strides = [1, 1]} : vector<8x384xf32> to vector<8x128xf32>
    %1345 = vector.extract_strided_slice %1339 {offsets = [0, 256], sizes = [8, 128], strides = [1, 1]} : vector<8x384xf32> to vector<8x128xf32>
    %1346 = arith.addf %1340, %1343 : vector<8x128xf32>
    %1347 = arith.negf %1346 : vector<8x128xf32>
    %1348 = math.exp %1347 : vector<8x128xf32>
    %cst_364 = arith.constant 1.000000e+00 : f32
    %1349 = vector.broadcast %cst_364 : f32 to vector<8x128xf32>
    %1350 = arith.addf %1349, %1348 : vector<8x128xf32>
    %1351 = arith.divf %1349, %1350 : vector<8x128xf32>
    %1352 = arith.addf %1341, %1344 : vector<8x128xf32>
    %1353 = arith.negf %1352 : vector<8x128xf32>
    %1354 = math.exp %1353 : vector<8x128xf32>
    %cst_365 = arith.constant 1.000000e+00 : f32
    %1355 = vector.broadcast %cst_365 : f32 to vector<8x128xf32>
    %1356 = arith.addf %1355, %1354 : vector<8x128xf32>
    %1357 = arith.divf %1355, %1356 : vector<8x128xf32>
    %1358 = arith.mulf %1351, %1345 : vector<8x128xf32>
    %1359 = arith.addf %1342, %1358 : vector<8x128xf32>
    %1360 = math.tanh %1359 : vector<8x128xf32>
    %cst_366 = arith.constant 1.000000e+00 : f32
    %1361 = vector.broadcast %cst_366 : f32 to vector<8x128xf32>
    %1362 = arith.subf %1361, %1357 : vector<8x128xf32>
    %1363 = arith.mulf %1362, %1360 : vector<8x128xf32>
    %1364 = arith.mulf %1357, %1333 : vector<8x128xf32>
    %1365 = arith.addf %1363, %1364 : vector<8x128xf32>
    %1366 = vector.broadcast %c4_i32_360 : i32 to vector<8x1xi32>
    %1367 = arith.cmpi slt, %1366, %0 : vector<8x1xi32>
    %cst_367 = arith.constant 0.000000e+00 : f32
    %1368 = vector.shape_cast %1367 : vector<8x1xi1> to vector<8x1xi1>
    %1369 = vector.broadcast %1368 : vector<8x1xi1> to vector<8x128xi1>
    %1370 = vector.broadcast %cst_367 : f32 to vector<8x128xf32>
    %1371 = arith.select %1369, %1365, %1370 : vector<8x128xi1>, vector<8x128xf32>
    %1372 = arith.index_cast %c4_i32_360 : i32 to index
    %c0_368 = arith.constant 0 : index
    %c0_369 = arith.constant 0 : index
    %1373 = vector.load %arg7[%1372, %c0_368, %c0_369] : memref<8x8x128xf32, #tpu.memory_space<vmem>>, vector<1x8x128xf32>
    %1374 = vector.shape_cast %1373 : vector<1x8x128xf32> to vector<8x128xf32>
    %1375 = vector.shape_cast %1371 : vector<8x128xf32> to vector<1x8x128xf32>
    tpu.vector_store %arg7[%1372, %c0_368, %c0_369], %1375 {strides = array<i32>} : memref<8x8x128xf32, #tpu.memory_space<vmem>>, vector<1x8x128xf32>,
    %1376 = vector.shape_cast %1367 : vector<8x1xi1> to vector<8x1xi1>
    %1377 = vector.broadcast %1376 : vector<8x1xi1> to vector<8x128xi1>
    %1378 = arith.select %1377, %1365, %1333 : vector<8x128xi1>, vector<8x128xf32>
    %c5_i32_370 = arith.constant 5 : i32
    %1379 = arith.index_cast %c5_i32_370 : i32 to index
    %c0_371 = arith.constant 0 : index
    %c0_372 = arith.constant 0 : index
    %1380 = vector.load %arg10[%1379, %c0_371, %c0_372] : memref<8x8x384xf32, #tpu.memory_space<vmem>>, vector<1x8x384xf32>
    %1381 = vector.shape_cast %1380 : vector<1x8x384xf32> to vector<8x384xf32>
    %cst_373 = arith.constant dense<0.000000e+00> : vector<8x384xf32>
    %1382 = tpu.matmul %1378, %1141, %cst_373 {dimension_numbers = #tpu.dot_dimension_numbers<[1], [0], [0], [1], [0, 0, 1, 1], [], []>} : vector<8x128xf32>, vector<128x384xf32>, vector<8x384xf32> -> vector<8x384xf32>
    %1383 = vector.broadcast %1145 : vector<1x384xf32> to vector<8x384xf32>
    %1384 = arith.addf %1382, %1383 : vector<8x384xf32>
    %1385 = vector.extract_strided_slice %1381 {offsets = [0, 0], sizes = [8, 128], strides = [1, 1]} : vector<8x384xf32> to vector<8x128xf32>
    %1386 = vector.extract_strided_slice %1381 {offsets = [0, 128], sizes = [8, 128], strides = [1, 1]} : vector<8x384xf32> to vector<8x128xf32>
    %1387 = vector.extract_strided_slice %1381 {offsets = [0, 256], sizes = [8, 128], strides = [1, 1]} : vector<8x384xf32> to vector<8x128xf32>
    %1388 = vector.extract_strided_slice %1384 {offsets = [0, 0], sizes = [8, 128], strides = [1, 1]} : vector<8x384xf32> to vector<8x128xf32>
    %1389 = vector.extract_strided_slice %1384 {offsets = [0, 128], sizes = [8, 128], strides = [1, 1]} : vector<8x384xf32> to vector<8x128xf32>
    %1390 = vector.extract_strided_slice %1384 {offsets = [0, 256], sizes = [8, 128], strides = [1, 1]} : vector<8x384xf32> to vector<8x128xf32>
    %1391 = arith.addf %1385, %1388 : vector<8x128xf32>
    %1392 = arith.negf %1391 : vector<8x128xf32>
    %1393 = math.exp %1392 : vector<8x128xf32>
    %cst_374 = arith.constant 1.000000e+00 : f32
    %1394 = vector.broadcast %cst_374 : f32 to vector<8x128xf32>
    %1395 = arith.addf %1394, %1393 : vector<8x128xf32>
    %1396 = arith.divf %1394, %1395 : vector<8x128xf32>
    %1397 = arith.addf %1386, %1389 : vector<8x128xf32>
    %1398 = arith.negf %1397 : vector<8x128xf32>
    %1399 = math.exp %1398 : vector<8x128xf32>
    %cst_375 = arith.constant 1.000000e+00 : f32
    %1400 = vector.broadcast %cst_375 : f32 to vector<8x128xf32>
    %1401 = arith.addf %1400, %1399 : vector<8x128xf32>
    %1402 = arith.divf %1400, %1401 : vector<8x128xf32>
    %1403 = arith.mulf %1396, %1390 : vector<8x128xf32>
    %1404 = arith.addf %1387, %1403 : vector<8x128xf32>
    %1405 = math.tanh %1404 : vector<8x128xf32>
    %cst_376 = arith.constant 1.000000e+00 : f32
    %1406 = vector.broadcast %cst_376 : f32 to vector<8x128xf32>
    %1407 = arith.subf %1406, %1402 : vector<8x128xf32>
    %1408 = arith.mulf %1407, %1405 : vector<8x128xf32>
    %1409 = arith.mulf %1402, %1378 : vector<8x128xf32>
    %1410 = arith.addf %1408, %1409 : vector<8x128xf32>
    %1411 = vector.broadcast %c5_i32_370 : i32 to vector<8x1xi32>
    %1412 = arith.cmpi slt, %1411, %0 : vector<8x1xi32>
    %cst_377 = arith.constant 0.000000e+00 : f32
    %1413 = vector.shape_cast %1412 : vector<8x1xi1> to vector<8x1xi1>
    %1414 = vector.broadcast %1413 : vector<8x1xi1> to vector<8x128xi1>
    %1415 = vector.broadcast %cst_377 : f32 to vector<8x128xf32>
    %1416 = arith.select %1414, %1410, %1415 : vector<8x128xi1>, vector<8x128xf32>
    %1417 = arith.index_cast %c5_i32_370 : i32 to index
    %c0_378 = arith.constant 0 : index
    %c0_379 = arith.constant 0 : index
    %1418 = vector.load %arg7[%1417, %c0_378, %c0_379] : memref<8x8x128xf32, #tpu.memory_space<vmem>>, vector<1x8x128xf32>
    %1419 = vector.shape_cast %1418 : vector<1x8x128xf32> to vector<8x128xf32>
    %1420 = vector.shape_cast %1416 : vector<8x128xf32> to vector<1x8x128xf32>
    tpu.vector_store %arg7[%1417, %c0_378, %c0_379], %1420 {strides = array<i32>} : memref<8x8x128xf32, #tpu.memory_space<vmem>>, vector<1x8x128xf32>,
    %1421 = vector.shape_cast %1412 : vector<8x1xi1> to vector<8x1xi1>
    %1422 = vector.broadcast %1421 : vector<8x1xi1> to vector<8x128xi1>
    %1423 = arith.select %1422, %1410, %1378 : vector<8x128xi1>, vector<8x128xf32>
    %c6_i32_380 = arith.constant 6 : i32
    %1424 = arith.index_cast %c6_i32_380 : i32 to index
    %c0_381 = arith.constant 0 : index
    %c0_382 = arith.constant 0 : index
    %1425 = vector.load %arg10[%1424, %c0_381, %c0_382] : memref<8x8x384xf32, #tpu.memory_space<vmem>>, vector<1x8x384xf32>
    %1426 = vector.shape_cast %1425 : vector<1x8x384xf32> to vector<8x384xf32>
    %cst_383 = arith.constant dense<0.000000e+00> : vector<8x384xf32>
    %1427 = tpu.matmul %1423, %1141, %cst_383 {dimension_numbers = #tpu.dot_dimension_numbers<[1], [0], [0], [1], [0, 0, 1, 1], [], []>} : vector<8x128xf32>, vector<128x384xf32>, vector<8x384xf32> -> vector<8x384xf32>
    %1428 = vector.broadcast %1145 : vector<1x384xf32> to vector<8x384xf32>
    %1429 = arith.addf %1427, %1428 : vector<8x384xf32>
    %1430 = vector.extract_strided_slice %1426 {offsets = [0, 0], sizes = [8, 128], strides = [1, 1]} : vector<8x384xf32> to vector<8x128xf32>
    %1431 = vector.extract_strided_slice %1426 {offsets = [0, 128], sizes = [8, 128], strides = [1, 1]} : vector<8x384xf32> to vector<8x128xf32>
    %1432 = vector.extract_strided_slice %1426 {offsets = [0, 256], sizes = [8, 128], strides = [1, 1]} : vector<8x384xf32> to vector<8x128xf32>
    %1433 = vector.extract_strided_slice %1429 {offsets = [0, 0], sizes = [8, 128], strides = [1, 1]} : vector<8x384xf32> to vector<8x128xf32>
    %1434 = vector.extract_strided_slice %1429 {offsets = [0, 128], sizes = [8, 128], strides = [1, 1]} : vector<8x384xf32> to vector<8x128xf32>
    %1435 = vector.extract_strided_slice %1429 {offsets = [0, 256], sizes = [8, 128], strides = [1, 1]} : vector<8x384xf32> to vector<8x128xf32>
    %1436 = arith.addf %1430, %1433 : vector<8x128xf32>
    %1437 = arith.negf %1436 : vector<8x128xf32>
    %1438 = math.exp %1437 : vector<8x128xf32>
    %cst_384 = arith.constant 1.000000e+00 : f32
    %1439 = vector.broadcast %cst_384 : f32 to vector<8x128xf32>
    %1440 = arith.addf %1439, %1438 : vector<8x128xf32>
    %1441 = arith.divf %1439, %1440 : vector<8x128xf32>
    %1442 = arith.addf %1431, %1434 : vector<8x128xf32>
    %1443 = arith.negf %1442 : vector<8x128xf32>
    %1444 = math.exp %1443 : vector<8x128xf32>
    %cst_385 = arith.constant 1.000000e+00 : f32
    %1445 = vector.broadcast %cst_385 : f32 to vector<8x128xf32>
    %1446 = arith.addf %1445, %1444 : vector<8x128xf32>
    %1447 = arith.divf %1445, %1446 : vector<8x128xf32>
    %1448 = arith.mulf %1441, %1435 : vector<8x128xf32>
    %1449 = arith.addf %1432, %1448 : vector<8x128xf32>
    %1450 = math.tanh %1449 : vector<8x128xf32>
    %cst_386 = arith.constant 1.000000e+00 : f32
    %1451 = vector.broadcast %cst_386 : f32 to vector<8x128xf32>
    %1452 = arith.subf %1451, %1447 : vector<8x128xf32>
    %1453 = arith.mulf %1452, %1450 : vector<8x128xf32>
    %1454 = arith.mulf %1447, %1423 : vector<8x128xf32>
    %1455 = arith.addf %1453, %1454 : vector<8x128xf32>
    %1456 = vector.broadcast %c6_i32_380 : i32 to vector<8x1xi32>
    %1457 = arith.cmpi slt, %1456, %0 : vector<8x1xi32>
    %cst_387 = arith.constant 0.000000e+00 : f32
    %1458 = vector.shape_cast %1457 : vector<8x1xi1> to vector<8x1xi1>
    %1459 = vector.broadcast %1458 : vector<8x1xi1> to vector<8x128xi1>
    %1460 = vector.broadcast %cst_387 : f32 to vector<8x128xf32>
    %1461 = arith.select %1459, %1455, %1460 : vector<8x128xi1>, vector<8x128xf32>
    %1462 = arith.index_cast %c6_i32_380 : i32 to index
    %c0_388 = arith.constant 0 : index
    %c0_389 = arith.constant 0 : index
    %1463 = vector.load %arg7[%1462, %c0_388, %c0_389] : memref<8x8x128xf32, #tpu.memory_space<vmem>>, vector<1x8x128xf32>
    %1464 = vector.shape_cast %1463 : vector<1x8x128xf32> to vector<8x128xf32>
    %1465 = vector.shape_cast %1461 : vector<8x128xf32> to vector<1x8x128xf32>
    tpu.vector_store %arg7[%1462, %c0_388, %c0_389], %1465 {strides = array<i32>} : memref<8x8x128xf32, #tpu.memory_space<vmem>>, vector<1x8x128xf32>,
    %1466 = vector.shape_cast %1457 : vector<8x1xi1> to vector<8x1xi1>
    %1467 = vector.broadcast %1466 : vector<8x1xi1> to vector<8x128xi1>
    %1468 = arith.select %1467, %1455, %1423 : vector<8x128xi1>, vector<8x128xf32>
    %c7_i32_390 = arith.constant 7 : i32
    %1469 = arith.index_cast %c7_i32_390 : i32 to index
    %c0_391 = arith.constant 0 : index
    %c0_392 = arith.constant 0 : index
    %1470 = vector.load %arg10[%1469, %c0_391, %c0_392] : memref<8x8x384xf32, #tpu.memory_space<vmem>>, vector<1x8x384xf32>
    %1471 = vector.shape_cast %1470 : vector<1x8x384xf32> to vector<8x384xf32>
    %cst_393 = arith.constant dense<0.000000e+00> : vector<8x384xf32>
    %1472 = tpu.matmul %1468, %1141, %cst_393 {dimension_numbers = #tpu.dot_dimension_numbers<[1], [0], [0], [1], [0, 0, 1, 1], [], []>} : vector<8x128xf32>, vector<128x384xf32>, vector<8x384xf32> -> vector<8x384xf32>
    %1473 = vector.broadcast %1145 : vector<1x384xf32> to vector<8x384xf32>
    %1474 = arith.addf %1472, %1473 : vector<8x384xf32>
    %1475 = vector.extract_strided_slice %1471 {offsets = [0, 0], sizes = [8, 128], strides = [1, 1]} : vector<8x384xf32> to vector<8x128xf32>
    %1476 = vector.extract_strided_slice %1471 {offsets = [0, 128], sizes = [8, 128], strides = [1, 1]} : vector<8x384xf32> to vector<8x128xf32>
    %1477 = vector.extract_strided_slice %1471 {offsets = [0, 256], sizes = [8, 128], strides = [1, 1]} : vector<8x384xf32> to vector<8x128xf32>
    %1478 = vector.extract_strided_slice %1474 {offsets = [0, 0], sizes = [8, 128], strides = [1, 1]} : vector<8x384xf32> to vector<8x128xf32>
    %1479 = vector.extract_strided_slice %1474 {offsets = [0, 128], sizes = [8, 128], strides = [1, 1]} : vector<8x384xf32> to vector<8x128xf32>
    %1480 = vector.extract_strided_slice %1474 {offsets = [0, 256], sizes = [8, 128], strides = [1, 1]} : vector<8x384xf32> to vector<8x128xf32>
    %1481 = arith.addf %1475, %1478 : vector<8x128xf32>
    %1482 = arith.negf %1481 : vector<8x128xf32>
    %1483 = math.exp %1482 : vector<8x128xf32>
    %cst_394 = arith.constant 1.000000e+00 : f32
    %1484 = vector.broadcast %cst_394 : f32 to vector<8x128xf32>
    %1485 = arith.addf %1484, %1483 : vector<8x128xf32>
    %1486 = arith.divf %1484, %1485 : vector<8x128xf32>
    %1487 = arith.addf %1476, %1479 : vector<8x128xf32>
    %1488 = arith.negf %1487 : vector<8x128xf32>
    %1489 = math.exp %1488 : vector<8x128xf32>
    %cst_395 = arith.constant 1.000000e+00 : f32
    %1490 = vector.broadcast %cst_395 : f32 to vector<8x128xf32>
    %1491 = arith.addf %1490, %1489 : vector<8x128xf32>
    %1492 = arith.divf %1490, %1491 : vector<8x128xf32>
    %1493 = arith.mulf %1486, %1480 : vector<8x128xf32>
    %1494 = arith.addf %1477, %1493 : vector<8x128xf32>
    %1495 = math.tanh %1494 : vector<8x128xf32>
    %cst_396 = arith.constant 1.000000e+00 : f32
    %1496 = vector.broadcast %cst_396 : f32 to vector<8x128xf32>
    %1497 = arith.subf %1496, %1492 : vector<8x128xf32>
    %1498 = arith.mulf %1497, %1495 : vector<8x128xf32>
    %1499 = arith.mulf %1492, %1468 : vector<8x128xf32>
    %1500 = arith.addf %1498, %1499 : vector<8x128xf32>
    %1501 = vector.broadcast %c7_i32_390 : i32 to vector<8x1xi32>
    %1502 = arith.cmpi slt, %1501, %0 : vector<8x1xi32>
    %cst_397 = arith.constant 0.000000e+00 : f32
    %1503 = vector.shape_cast %1502 : vector<8x1xi1> to vector<8x1xi1>
    %1504 = vector.broadcast %1503 : vector<8x1xi1> to vector<8x128xi1>
    %1505 = vector.broadcast %cst_397 : f32 to vector<8x128xf32>
    %1506 = arith.select %1504, %1500, %1505 : vector<8x128xi1>, vector<8x128xf32>
    %1507 = arith.index_cast %c7_i32_390 : i32 to index
    %c0_398 = arith.constant 0 : index
    %c0_399 = arith.constant 0 : index
    %1508 = vector.load %arg7[%1507, %c0_398, %c0_399] : memref<8x8x128xf32, #tpu.memory_space<vmem>>, vector<1x8x128xf32>
    %1509 = vector.shape_cast %1508 : vector<1x8x128xf32> to vector<8x128xf32>
    %1510 = vector.shape_cast %1506 : vector<8x128xf32> to vector<1x8x128xf32>
    tpu.vector_store %arg7[%1507, %c0_398, %c0_399], %1510 {strides = array<i32>} : memref<8x8x128xf32, #tpu.memory_space<vmem>>, vector<1x8x128xf32>,
    %1511 = vector.shape_cast %1502 : vector<8x1xi1> to vector<8x1xi1>
    %1512 = vector.broadcast %1511 : vector<8x1xi1> to vector<8x128xi1>
    %1513 = arith.select %1512, %1500, %1468 : vector<8x128xi1>, vector<8x128xf32>
    %c8_i32_400 = arith.constant 8 : i32
    %c3_401 = arith.constant 3 : index
    %c0_402 = arith.constant 0 : index
    %c0_403 = arith.constant 0 : index
    %1514 = vector.load %arg8[%c3_401, %c0_402, %c0_403] : memref<4x8x128xf32, #tpu.memory_space<vmem>>, vector<1x8x128xf32>
    %1515 = vector.shape_cast %1514 : vector<1x8x128xf32> to vector<8x128xf32>
    %1516 = vector.shape_cast %1513 : vector<8x128xf32> to vector<1x8x128xf32>
    tpu.vector_store %arg8[%c3_401, %c0_402, %c0_403], %1516 {strides = array<i32>} : memref<4x8x128xf32, #tpu.memory_space<vmem>>, vector<1x8x128xf32>,
    return
  }
  func.func @transform_0(%arg0: i32) -> (i32, i32, i32) {
    %c0_i32 = arith.constant 0 : i32
    %c0_i32_0 = arith.constant 0 : i32
    %c0_i32_1 = arith.constant 0 : i32
    return %c0_i32, %arg0, %c0_i32_0 : i32, i32, i32
  }
  func.func @transform_1(%arg0: i32) -> (i32, i32) {
    %c0_i32 = arith.constant 0 : i32
    %c0_i32_0 = arith.constant 0 : i32
    return %arg0, %c0_i32 : i32, i32
  }
  func.func @transform_2(%arg0: i32) -> (i32, i32, i32) {
    %c0_i32 = arith.constant 0 : i32
    %c0_i32_0 = arith.constant 0 : i32
    %c0_i32_1 = arith.constant 0 : i32
    %c0_i32_2 = arith.constant 0 : i32
    return %c0_i32, %c0_i32_0, %c0_i32_1 : i32, i32, i32
  }
  func.func @transform_3(%arg0: i32) -> (i32, i32, i32) {
    %c0_i32 = arith.constant 0 : i32
    %c0_i32_0 = arith.constant 0 : i32
    %c0_i32_1 = arith.constant 0 : i32
    %c0_i32_2 = arith.constant 0 : i32
    return %c0_i32, %c0_i32_0, %c0_i32_1 : i32, i32, i32
  }
  func.func @transform_4(%arg0: i32) -> (i32, i32, i32) {
    %c0_i32 = arith.constant 0 : i32
    %c0_i32_0 = arith.constant 0 : i32
    %c0_i32_1 = arith.constant 0 : i32
    %c0_i32_2 = arith.constant 0 : i32
    return %c0_i32, %c0_i32_0, %c0_i32_1 : i32, i32, i32
  }
  func.func @transform_5(%arg0: i32) -> (i32, i32, i32) {
    %c0_i32 = arith.constant 0 : i32
    %c0_i32_0 = arith.constant 0 : i32
    %c0_i32_1 = arith.constant 0 : i32
    %c0_i32_2 = arith.constant 0 : i32
    return %c0_i32, %c0_i32_0, %c0_i32_1 : i32, i32, i32
  }
  func.func @transform_6(%arg0: i32) -> (i32, i32, i32) {
    %c0_i32 = arith.constant 0 : i32
    %c0_i32_0 = arith.constant 0 : i32
    %c0_i32_1 = arith.constant 0 : i32
    return %c0_i32, %arg0, %c0_i32_0 : i32, i32, i32
  }
  func.func @transform_7(%arg0: i32) -> (i32, i32, i32) {
    %c0_i32 = arith.constant 0 : i32
    %c0_i32_0 = arith.constant 0 : i32
    %c0_i32_1 = arith.constant 0 : i32
    return %c0_i32, %arg0, %c0_i32_0 : i32, i32, i32
  }
}

</mosaic_0001>

<llo_original>
// kernel: tpu_custom_call.1
$region0: #{tpu_custom_call.1}
  #allocation0 [shape = 'u32[]', space=smem, size = 0x4, offset = 0x4, fixed_abs, tag = 'smem constant byte address 0x4 - core index']
  #allocation1 [shape = 'u32[72,128]{1,0:T(1,128)}', space=vmem, size = 0x9000, scoped, tag = 'internal scratch']
  #allocation2 [shape = 'f32[8,8,128]{2,1,0:T(8,128)}', space=vmem, size = 0x8000, scoped, tag = 'scratch operand']
  #allocation3 [shape = 'f32[8,8,384]{2,1,0:T(8,128)}', space=vmem, size = 0x18000, scoped, tag = 'scratch operand']
  %s0 = inlined_call_operand.hbm [shape: f32[8,8,128], index: 0, kind: input, shape index: {}]
  %s1 = inlined_call_operand.vmem [shape: s32[8,1], index: 1, kind: input, shape index: {}]
  %s2 = inlined_call_operand.hbm [shape: f32[4,128,384], index: 2, kind: input, shape index: {}]
  %s3 = inlined_call_operand.hbm [shape: f32[4,128,384], index: 3, kind: input, shape index: {}]
  %s4 = inlined_call_operand.vmem [shape: f32[4,1,384], index: 4, kind: input, shape index: {}]
  %s5 = inlined_call_operand.hbm [shape: f32[4,1,384], index: 5, kind: input, shape index: {}]
  %s6 = inlined_call_operand.hbm [shape: f32[8,8,128], index: 6, kind: output, shape index: {0}]
  %s7 = inlined_call_operand.hbm [shape: f32[4,8,128], index: 7, kind: output, shape index: {1}]
  %8 = xla_tuple %s6, %s7
  %s9 = sld [smem:[#allocation0]]
  $region58: #{tpu_custom_call.1} parent=0
    _
  %s11 = ssub.s32 1, %s9
  %s12 = scalar_select 0, %s11, %s9
  $region1: #{tpu_custom_call.1} parent=0
    #allocation4 [shape = 'u8[32768]{0}', space=vmem, size = 0x8000, scoped, tag = 'input window, operand 0, single buffered']
    #allocation5 [shape = 's32[1]{0}', space=sflag, size = 0x4, scoped, tag = 'scoped memory for tpu_custom_call.1']
    #allocation6 [shape = 's32[1]{0}', space=sflag, size = 0x4, scoped, tag = 'scoped memory for tpu_custom_call.1']
    #allocation7 [shape = 'u8[786432]{0}', space=vmem, size = 0xc0000, scoped, tag = 'input window, operand 2, single buffered']
    #allocation8 [shape = 's32[1]{0}', space=sflag, size = 0x4, scoped, tag = 'scoped memory for tpu_custom_call.1']
    #allocation9 [shape = 'u8[786432]{0}', space=vmem, size = 0xc0000, scoped, tag = 'input window, operand 3, single buffered']
    #allocation10 [shape = 'u8[6144]{0}', space=vmem, size = 0x1800, scoped, tag = 'input window, operand 5, single buffered']
    #allocation11 [shape = 's32[1]{0}', space=sflag, size = 0x4, scoped, tag = 'scoped memory for tpu_custom_call.1']
    #allocation12 [shape = 'u8[32768]{0}', space=vmem, size = 0x8000, scoped, tag = 'output window, operand 0, single buffered']
    #allocation13 [shape = 'u8[16384]{0}', space=vmem, size = 0x4000, scoped, tag = 'output window, operand 1, single buffered']
    #allocation14 [shape = 's32[1]{0}', space=sflag, size = 0x4, scoped, tag = 'scoped memory for tpu_custom_call.1']
    %13 = vsyncpa [#allocation5], 0
    %14 = vsyncpa [#allocation8], 0
    %15 = vsyncpa [#allocation11], 0
    %16 = vsyncpa [#allocation6], 0
    %17 = vsyncpa [#allocation14], 0
    // Predicated region
    $region2: #{tpu_custom_call.1} parent=1 // pred_check
      _
    $region3: #{tpu_custom_call.1} parent=1 // pred_check_branch
      %19 = sbr.rel (0) target = $region5
    $region4: #{tpu_custom_call.1} parent=1 // pred_region
      %21 = vsyncadd [#allocation5], 0
      %s22 = sshll.u32 %s0, 4
      %s23 = int_to_ptr.hbm [resolvable:$true] %s22
      %s24 = sshll.u32 [#allocation4], 4
      %s25 = int_to_ptr.vmem [resolvable:$true] %s24
      %30 = dma.hbm_to_vmem [thread:$0]  %s23, 1024, %s25, [#allocation5], 128, 128, 8
    $region5: #{tpu_custom_call.1} parent=1 // pred_fallthru
      _
    // Predicated region
    $region6: #{tpu_custom_call.1} parent=1 // pred_check
      _
    $region7: #{tpu_custom_call.1} parent=1 // pred_check_branch
      %32 = sbr.rel (0) target = $region9
    $region8: #{tpu_custom_call.1} parent=1 // pred_region
      _
    $region9: #{tpu_custom_call.1} parent=1 // pred_fallthru
      _
    // Predicated region
    $region10: #{tpu_custom_call.1} parent=1 // pred_check
      _
    $region11: #{tpu_custom_call.1} parent=1 // pred_check_branch
      %34 = sbr.rel (0) target = $region13
    $region12: #{tpu_custom_call.1} parent=1 // pred_region
      %36 = vsyncadd [#allocation8], 0
      %s37 = sshll.u32 %s2, 4
      %s38 = int_to_ptr.hbm [resolvable:$true] %s37
      %s39 = sshll.u32 [#allocation7], 4
      %s40 = int_to_ptr.vmem [resolvable:$true] %s39
      %45 = dma.hbm_to_vmem [thread:$0]  %s38, 24576, %s40, [#allocation8], 384, 384, 24
    $region13: #{tpu_custom_call.1} parent=1 // pred_fallthru
      _
    // Predicated region
    $region14: #{tpu_custom_call.1} parent=1 // pred_check
      _
    $region15: #{tpu_custom_call.1} parent=1 // pred_check_branch
      %47 = sbr.rel (0) target = $region17
    $region16: #{tpu_custom_call.1} parent=1 // pred_region
      %49 = vsyncadd [#allocation8], 0
      %s50 = sshll.u32 %s3, 4
      %s51 = int_to_ptr.hbm [resolvable:$true] %s50
      %s52 = sshll.u32 [#allocation9], 4
      %s53 = int_to_ptr.vmem [resolvable:$true] %s52
      %58 = dma.hbm_to_vmem [thread:$0]  %s51, 24576, %s53, [#allocation8], 384, 384, 24
    $region17: #{tpu_custom_call.1} parent=1 // pred_fallthru
      _
    // Predicated region
    $region18: #{tpu_custom_call.1} parent=1 // pred_check
      _
    $region19: #{tpu_custom_call.1} parent=1 // pred_check_branch
      %60 = sbr.rel (0) target = $region21
    $region20: #{tpu_custom_call.1} parent=1 // pred_region
      _
    $region21: #{tpu_custom_call.1} parent=1 // pred_fallthru
      _
    // Predicated region
    $region22: #{tpu_custom_call.1} parent=1 // pred_check
      _
    $region23: #{tpu_custom_call.1} parent=1 // pred_check_branch
      %62 = sbr.rel (0) target = $region25
    $region24: #{tpu_custom_call.1} parent=1 // pred_region
      %64 = vsyncadd [#allocation11], 0
      %s65 = sshll.u32 %s5, 4
      %s66 = int_to_ptr.hbm [resolvable:$true] %s65
      %s67 = sshll.u32 [#allocation10], 4
      %s68 = int_to_ptr.vmem [resolvable:$true] %s67
      %73 = dma.hbm_to_vmem [thread:$0]  %s66, 192, %s68, [#allocation11], 48, 48, 3
    $region25: #{tpu_custom_call.1} parent=1 // pred_fallthru
      _
    // Predicated region
    $region26: #{tpu_custom_call.1} parent=1 // pred_check
      _
    $region27: #{tpu_custom_call.1} parent=1 // pred_check_branch
      %75 = sbr.rel (0) target = $region29
    $region28: #{tpu_custom_call.1} parent=1 // pred_region
      %77 = dma.done [#allocation5], 1024
    $region29: #{tpu_custom_call.1} parent=1 // pred_fallthru
      _
    // Predicated region
    $region30: #{tpu_custom_call.1} parent=1 // pred_check
      _
    $region31: #{tpu_custom_call.1} parent=1 // pred_check_branch
      %79 = sbr.rel (0) target = $region33
    $region32: #{tpu_custom_call.1} parent=1 // pred_region
      %81 = dma.done [#allocation8], 24576
    $region33: #{tpu_custom_call.1} parent=1 // pred_fallthru
      _
    // Predicated region
    $region34: #{tpu_custom_call.1} parent=1 // pred_check
      _
    $region35: #{tpu_custom_call.1} parent=1 // pred_check_branch
      %83 = sbr.rel (0) target = $region37
    $region36: #{tpu_custom_call.1} parent=1 // pred_region
      %85 = dma.done [#allocation8], 24576
    $region37: #{tpu_custom_call.1} parent=1 // pred_fallthru
      _
    // Predicated region
    $region38: #{tpu_custom_call.1} parent=1 // pred_check
      _
    $region39: #{tpu_custom_call.1} parent=1 // pred_check_branch
      %87 = sbr.rel (0) target = $region41
    $region40: #{tpu_custom_call.1} parent=1 // pred_region
      %89 = dma.done [#allocation11], 192
    $region41: #{tpu_custom_call.1} parent=1 // pred_fallthru
      _
    %v90 = vld [vmem:[%s1] sm:$0xff]
    %v91 = vld [vmem:[#allocation7] sm:$0xff]
    %v92 = vld [vmem:[#allocation7 + $0x8] sm:$0xff]
    %v93 = vld [vmem:[#allocation7 + $0x10] sm:$0xff]
    %v94 = vld [vmem:[#allocation7 + $0x18] sm:$0xff]
    %v95 = vld [vmem:[#allocation7 + $0x20] sm:$0xff]
    %v96 = vld [vmem:[#allocation7 + $0x28] sm:$0xff]
    %v97 = vld [vmem:[#allocation7 + $0x30] sm:$0xff]
    %v98 = vld [vmem:[#allocation7 + $0x38] sm:$0xff]
    %v99 = vld [vmem:[#allocation7 + $0x40] sm:$0xff]
    %v100 = vld [vmem:[#allocation7 + $0x48] sm:$0xff]
    %v101 = vld [vmem:[#allocation7 + $0x50] sm:$0xff]
    %v102 = vld [vmem:[#allocation7 + $0x58] sm:$0xff]
    %v103 = vld [vmem:[#allocation7 + $0x60] sm:$0xff]
    %v104 = vld [vmem:[#allocation7 + $0x68] sm:$0xff]
    %v105 = vld [vmem:[#allocation7 + $0x70] sm:$0xff]
    %v106 = vld [vmem:[#allocation7 + $0x78] sm:$0xff]
    %v107 = vld [vmem:[#allocation7 + $0x80] sm:$0xff]
    %v108 = vld [vmem:[#allocation7 + $0x88] sm:$0xff]
    %v109 = vld [vmem:[#allocation7 + $0x90] sm:$0xff]
    %v110 = vld [vmem:[#allocation7 + $0x98] sm:$0xff]
    %v111 = vld [vmem:[#allocation7 + $0xa0] sm:$0xff]
    %v112 = vld [vmem:[#allocation7 + $0xa8] sm:$0xff]
    %v113 = vld [vmem:[#allocation7 + $0xb0] sm:$0xff]
    %v114 = vld [vmem:[#allocation7 + $0xb8] sm:$0xff]
    %v115 = vld [vmem:[#allocation7 + $0xc0] sm:$0xff]
    %v116 = vld [vmem:[#allocation7 + $0xc8] sm:$0xff]
    %v117 = vld [vmem:[#allocation7 + $0xd0] sm:$0xff]
    %v118 = vld [vmem:[#allocation7 + $0xd8] sm:$0xff]
    %v119 = vld [vmem:[#allocation7 + $0xe0] sm:$0xff]
    %v120 = vld [vmem:[#allocation7 + $0xe8] sm:$0xff]
    %v121 = vld [vmem:[#allocation7 + $0xf0] sm:$0xff]
    %v122 = vld [vmem:[#allocation7 + $0xf8] sm:$0xff]
    %v123 = vld [vmem:[#allocation7 + $0x100] sm:$0xff]
    %v124 = vld [vmem:[#allocation7 + $0x108] sm:$0xff]
    %v125 = vld [vmem:[#allocation7 + $0x110] sm:$0xff]
    %v126 = vld [vmem:[#allocation7 + $0x118] sm:$0xff]
    %v127 = vld [vmem:[#allocation7 + $0x120] sm:$0xff]
    %v128 = vld [vmem:[#allocation7 + $0x128] sm:$0xff]
    %v129 = vld [vmem:[#allocation7 + $0x130] sm:$0xff]
    %v130 = vld [vmem:[#allocation7 + $0x138] sm:$0xff]
    %v131 = vld [vmem:[#allocation7 + $0x140] sm:$0xff]
    %v132 = vld [vmem:[#allocation7 + $0x148] sm:$0xff]
    %v133 = vld [vmem:[#allocation7 + $0x150] sm:$0xff]
    %v134 = vld [vmem:[#allocation7 + $0x158] sm:$0xff]
    %v135 = vld [vmem:[#allocation7 + $0x160] sm:$0xff]
    %v136 = vld [vmem:[#allocation7 + $0x168] sm:$0xff]
    %v137 = vld [vmem:[#allocation7 + $0x170] sm:$0xff]
    %v138 = vld [vmem:[#allocation7 + $0x178] sm:$0xff]
    %v139 = vld [vmem:[#allocation9] sm:$0xff]
    %v140 = vld [vmem:[#allocation9 + $0x8] sm:$0xff]
    %v141 = vld [vmem:[#allocation9 + $0x10] sm:$0xff]
    %v142 = vld [vmem:[#allocation9 + $0x18] sm:$0xff]
    %v143 = vld [vmem:[#allocation9 + $0x20] sm:$0xff]
    %v144 = vld [vmem:[#allocation9 + $0x28] sm:$0xff]
    %v145 = vld [vmem:[#allocation9 + $0x30] sm:$0xff]
    %v146 = vld [vmem:[#allocation9 + $0x38] sm:$0xff]
    %v147 = vld [vmem:[#allocation9 + $0x40] sm:$0xff]
    %v148 = vld [vmem:[#allocation9 + $0x48] sm:$0xff]
    %v149 = vld [vmem:[#allocation9 + $0x50] sm:$0xff]
    %v150 = vld [vmem:[#allocation9 + $0x58] sm:$0xff]
    %v151 = vld [vmem:[#allocation9 + $0x60] sm:$0xff]
    %v152 = vld [vmem:[#allocation9 + $0x68] sm:$0xff]
    %v153 = vld [vmem:[#allocation9 + $0x70] sm:$0xff]
    %v154 = vld [vmem:[#allocation9 + $0x78] sm:$0xff]
    %v155 = vld [vmem:[#allocation9 + $0x80] sm:$0xff]
    %v156 = vld [vmem:[#allocation9 + $0x88] sm:$0xff]
    %v157 = vld [vmem:[#allocation9 + $0x90] sm:$0xff]
    %v158 = vld [vmem:[#allocation9 + $0x98] sm:$0xff]
    %v159 = vld [vmem:[#allocation9 + $0xa0] sm:$0xff]
    %v160 = vld [vmem:[#allocation9 + $0xa8] sm:$0xff]
    %v161 = vld [vmem:[#allocation9 + $0xb0] sm:$0xff]
    %v162 = vld [vmem:[#allocation9 + $0xb8] sm:$0xff]
    %v163 = vld [vmem:[#allocation9 + $0xc0] sm:$0xff]
    %v164 = vld [vmem:[#allocation9 + $0xc8] sm:$0xff]
    %v165 = vld [vmem:[#allocation9 + $0xd0] sm:$0xff]
    %v166 = vld [vmem:[#allocation9 + $0xd8] sm:$0xff]
    %v167 = vld [vmem:[#allocation9 + $0xe0] sm:$0xff]
    %v168 = vld [vmem:[#allocation9 + $0xe8] sm:$0xff]
    %v169 = vld [vmem:[#allocation9 + $0xf0] sm:$0xff]
    %v170 = vld [vmem:[#allocation9 + $0xf8] sm:$0xff]
    %v171 = vld [vmem:[#allocation9 + $0x100] sm:$0xff]
    %v172 = vld [vmem:[#allocation9 + $0x108] sm:$0xff]
    %v173 = vld [vmem:[#allocation9 + $0x110] sm:$0xff]
    %v174 = vld [vmem:[#allocation9 + $0x118] sm:$0xff]
    %v175 = vld [vmem:[#allocation9 + $0x120] sm:$0xff]
    %v176 = vld [vmem:[#allocation9 + $0x128] sm:$0xff]
    %v177 = vld [vmem:[#allocation9 + $0x130] sm:$0xff]
    %v178 = vld [vmem:[#allocation9 + $0x138] sm:$0xff]
    %v179 = vld [vmem:[#allocation9 + $0x140] sm:$0xff]
    %v180 = vld [vmem:[#allocation9 + $0x148] sm:$0xff]
    %v181 = vld [vmem:[#allocation9 + $0x150] sm:$0xff]
    %v182 = vld [vmem:[#allocation9 + $0x158] sm:$0xff]
    %v183 = vld [vmem:[#allocation9 + $0x160] sm:$0xff]
    %v184 = vld [vmem:[#allocation9 + $0x168] sm:$0xff]
    %v185 = vld [vmem:[#allocation9 + $0x170] sm:$0xff]
    %v186 = vld [vmem:[#allocation9 + $0x178] sm:$0xff]
    %v187 = vld [vmem:[%s4] sm:$0x7]
    %v188 = vld [vmem:[#allocation10] sm:$0x7]
    %v189 = vld [vmem:[#allocation4] sm:$0xff]
    %v190 = vld [vmem:[#allocation4 + $0x8] sm:$0xff]
    %v191 = vld [vmem:[#allocation4 + $0x10] sm:$0xff]
    %v192 = vld [vmem:[#allocation4 + $0x18] sm:$0xff]
    %v193 = vld [vmem:[#allocation4 + $0x20] sm:$0xff]
    %v194 = vld [vmem:[#allocation4 + $0x28] sm:$0xff]
    %v195 = vld [vmem:[#allocation4 + $0x30] sm:$0xff]
    %v196 = vld [vmem:[#allocation4 + $0x38] sm:$0xff]
    %v198 = vperm.slane %v187, 0
    %v199 = vperm.slane %v187, 1
    %v200 = vperm.slane %v187, 2
    %204 = vmatpush.msra.mxu0 %v136
    %205 = vmatpush.msra.mxu0 %v133
    %206 = vmatpush.msra.mxu0 %v130
    %207 = vmatpush.msra.mxu0 %v127
    %208 = vmatpush.msra.mxu0 %v124
    %209 = vmatpush.msra.mxu0 %v121
    %210 = vmatpush.msra.mxu0 %v118
    %211 = vmatpush.msra.mxu0 %v115
    %212 = vmatpush.msra.mxu0 %v112
    %213 = vmatpush.msra.mxu0 %v109
    %214 = vmatpush.msra.mxu0 %v106
    %215 = vmatpush.msra.mxu0 %v103
    %216 = vmatpush.msra.mxu0 %v100
    %217 = vmatpush.msra.mxu0 %v97
    %218 = vmatpush.msra.mxu0 %v94
    %219 = vmatpush.msra.mxu0 %v91
    %220 = vmatmul.f32.gmra.mxu0 %v189
    %v221 = vpop.f32.mrf.mxu0
    %v222 = vadd.f32 %v198, %v221
    %223 = vmatmul.f32.gmra.mxu0 %v190
    %v224 = vpop.f32.mrf.mxu0
    %v225 = vadd.f32 %v198, %v224
    %226 = vmatmul.f32.gmra.mxu0 %v191
    %v227 = vpop.f32.mrf.mxu0
    %v228 = vadd.f32 %v198, %v227
    %229 = vmatmul.f32.gmra.mxu0 %v192
    %v230 = vpop.f32.mrf.mxu0
    %v231 = vadd.f32 %v198, %v230
    %232 = vmatmul.f32.gmra.mxu0 %v193
    %v233 = vpop.f32.mrf.mxu0
    %v234 = vadd.f32 %v198, %v233
    %235 = vmatmul.f32.gmra.mxu0 %v194
    %v236 = vpop.f32.mrf.mxu0
    %v237 = vadd.f32 %v198, %v236
    %238 = vmatmul.f32.gmra.mxu0 %v195
    %v239 = vpop.f32.mrf.mxu0
    %v240 = vadd.f32 %v198, %v239
    %241 = vmatmul.f32.gmra.mxu0 %v196
    %v242 = vpop.f32.mrf.mxu0
    %v243 = vadd.f32 %v198, %v242
    %244 = vdwg.mxu0
    %245 = vmatpush.msra.mxu0 %v137
    %246 = vmatpush.msra.mxu0 %v134
    %247 = vmatpush.msra.mxu0 %v131
    %248 = vmatpush.msra.mxu0 %v128
    %249 = vmatpush.msra.mxu0 %v125
    %250 = vmatpush.msra.mxu0 %v122
    %251 = vmatpush.msra.mxu0 %v119
    %252 = vmatpush.msra.mxu0 %v116
    %253 = vmatpush.msra.mxu0 %v113
    %254 = vmatpush.msra.mxu0 %v110
    %255 = vmatpush.msra.mxu0 %v107
    %256 = vmatpush.msra.mxu0 %v104
    %257 = vmatpush.msra.mxu0 %v101
    %258 = vmatpush.msra.mxu0 %v98
    %259 = vmatpush.msra.mxu0 %v95
    %260 = vmatpush.msra.mxu0 %v92
    %261 = vmatmul.f32.gmra.mxu0 %v189
    %v262 = vpop.f32.mrf.mxu0
    %v263 = vadd.f32 %v199, %v262
    %264 = vmatmul.f32.gmra.mxu0 %v190
    %v265 = vpop.f32.mrf.mxu0
    %v266 = vadd.f32 %v199, %v265
    %267 = vmatmul.f32.gmra.mxu0 %v191
    %v268 = vpop.f32.mrf.mxu0
    %v269 = vadd.f32 %v199, %v268
    %270 = vmatmul.f32.gmra.mxu0 %v192
    %v271 = vpop.f32.mrf.mxu0
    %v272 = vadd.f32 %v199, %v271
    %273 = vmatmul.f32.gmra.mxu0 %v193
    %v274 = vpop.f32.mrf.mxu0
    %v275 = vadd.f32 %v199, %v274
    %276 = vmatmul.f32.gmra.mxu0 %v194
    %v277 = vpop.f32.mrf.mxu0
    %v278 = vadd.f32 %v199, %v277
    %279 = vmatmul.f32.gmra.mxu0 %v195
    %v280 = vpop.f32.mrf.mxu0
    %v281 = vadd.f32 %v199, %v280
    %282 = vmatmul.f32.gmra.mxu0 %v196
    %v283 = vpop.f32.mrf.mxu0
    %v284 = vadd.f32 %v199, %v283
    %285 = vdwg.mxu0
    %286 = vmatpush.msra.mxu0 %v138
    %287 = vmatpush.msra.mxu0 %v135
    %288 = vmatpush.msra.mxu0 %v132
    %289 = vmatpush.msra.mxu0 %v129
    %290 = vmatpush.msra.mxu0 %v126
    %291 = vmatpush.msra.mxu0 %v123
    %292 = vmatpush.msra.mxu0 %v120
    %293 = vmatpush.msra.mxu0 %v117
    %294 = vmatpush.msra.mxu0 %v114
    %295 = vmatpush.msra.mxu0 %v111
    %296 = vmatpush.msra.mxu0 %v108
    %297 = vmatpush.msra.mxu0 %v105
    %298 = vmatpush.msra.mxu0 %v102
    %299 = vmatpush.msra.mxu0 %v99
    %300 = vmatpush.msra.mxu0 %v96
    %301 = vmatpush.msra.mxu0 %v93
    %302 = vmatmul.f32.gmra.mxu0 %v189
    %v303 = vpop.f32.mrf.mxu0
    %v304 = vadd.f32 %v200, %v303
    %305 = vmatmul.f32.gmra.mxu0 %v190
    %v306 = vpop.f32.mrf.mxu0
    %v307 = vadd.f32 %v200, %v306
    %308 = vmatmul.f32.gmra.mxu0 %v191
    %v309 = vpop.f32.mrf.mxu0
    %v310 = vadd.f32 %v200, %v309
    %311 = vmatmul.f32.gmra.mxu0 %v192
    %v312 = vpop.f32.mrf.mxu0
    %v313 = vadd.f32 %v200, %v312
    %314 = vmatmul.f32.gmra.mxu0 %v193
    %v315 = vpop.f32.mrf.mxu0
    %v316 = vadd.f32 %v200, %v315
    %317 = vmatmul.f32.gmra.mxu0 %v194
    %v318 = vpop.f32.mrf.mxu0
    %v319 = vadd.f32 %v200, %v318
    %320 = vmatmul.f32.gmra.mxu0 %v195
    %v321 = vpop.f32.mrf.mxu0
    %v322 = vadd.f32 %v200, %v321
    %323 = vmatmul.f32.gmra.mxu0 %v196
    %v324 = vpop.f32.mrf.mxu0
    %v325 = vadd.f32 %v200, %v324
    %326 = vdwg.mxu0
    %327 = vst [vmem:[#allocation3] sm:$0xff] %v222
    %328 = vst [vmem:[#allocation3 + $0x8] sm:$0xff] %v263
    %329 = vst [vmem:[#allocation3 + $0x10] sm:$0xff] %v304
    %330 = vst [vmem:[#allocation3 + $0x18] sm:$0xff] %v225
    %331 = vst [vmem:[#allocation3 + $0x20] sm:$0xff] %v266
    %332 = vst [vmem:[#allocation3 + $0x28] sm:$0xff] %v307
    %333 = vst [vmem:[#allocation3 + $0x30] sm:$0xff] %v228
    %334 = vst [vmem:[#allocation3 + $0x38] sm:$0xff] %v269
    %335 = vst [vmem:[#allocation3 + $0x40] sm:$0xff] %v310
    %336 = vst [vmem:[#allocation3 + $0x48] sm:$0xff] %v231
    %337 = vst [vmem:[#allocation3 + $0x50] sm:$0xff] %v272
    %338 = vst [vmem:[#allocation3 + $0x58] sm:$0xff] %v313
    %339 = vst [vmem:[#allocation3 + $0x60] sm:$0xff] %v234
    %340 = vst [vmem:[#allocation3 + $0x68] sm:$0xff] %v275
    %341 = vst [vmem:[#allocation3 + $0x70] sm:$0xff] %v316
    %342 = vst [vmem:[#allocation3 + $0x78] sm:$0xff] %v237
    %343 = vst [vmem:[#allocation3 + $0x80] sm:$0xff] %v278
    %344 = vst [vmem:[#allocation3 + $0x88] sm:$0xff] %v319
    %345 = vst [vmem:[#allocation3 + $0x90] sm:$0xff] %v240
    %346 = vst [vmem:[#allocation3 + $0x98] sm:$0xff] %v281
    %347 = vst [vmem:[#allocation3 + $0xa0] sm:$0xff] %v322
    %348 = vst [vmem:[#allocation3 + $0xa8] sm:$0xff] %v243
    %349 = vst [vmem:[#allocation3 + $0xb0] sm:$0xff] %v284
    %350 = vst [vmem:[#allocation3 + $0xb8] sm:$0xff] %v325
    %v351 = vld [vmem:[#allocation3] sm:$0xff]
    %v352 = vld [vmem:[#allocation3 + $0x8] sm:$0xff]
    %v353 = vld [vmem:[#allocation3 + $0x10] sm:$0xff]
    %v355 = vperm.slane %v188, 0
    %v356 = vperm.slane %v188, 1
    %v357 = vperm.slane %v188, 2
    %361 = vmatpush.msra.mxu0 %v184
    %362 = vmatpush.msra.mxu0 %v181
    %363 = vmatpush.msra.mxu0 %v178
    %364 = vmatpush.msra.mxu0 %v175
    %365 = vmatpush.msra.mxu0 %v172
    %366 = vmatpush.msra.mxu0 %v169
    %367 = vmatpush.msra.mxu0 %v166
    %368 = vmatpush.msra.mxu0 %v163
    %369 = vmatpush.msra.mxu0 %v160
    %370 = vmatpush.msra.mxu0 %v157
    %371 = vmatpush.msra.mxu0 %v154
    %372 = vmatpush.msra.mxu0 %v151
    %373 = vmatpush.msra.mxu0 %v148
    %374 = vmatpush.msra.mxu0 %v145
    %375 = vmatpush.msra.mxu0 %v142
    %376 = vmatpush.msra.mxu0 %v139
    %377 = vmatmul.f32.gmra.mxu0 0.0
    %v378 = vpop.f32.mrf.mxu0
    %v379 = vadd.f32 %v355, %v378
    %380 = vdwg.mxu0
    %381 = vmatpush.msra.mxu0 %v185
    %382 = vmatpush.msra.mxu0 %v182
    %383 = vmatpush.msra.mxu0 %v179
    %384 = vmatpush.msra.mxu0 %v176
    %385 = vmatpush.msra.mxu0 %v173
    %386 = vmatpush.msra.mxu0 %v170
    %387 = vmatpush.msra.mxu0 %v167
    %388 = vmatpush.msra.mxu0 %v164
    %389 = vmatpush.msra.mxu0 %v161
    %390 = vmatpush.msra.mxu0 %v158
    %391 = vmatpush.msra.mxu0 %v155
    %392 = vmatpush.msra.mxu0 %v152
    %393 = vmatpush.msra.mxu0 %v149
    %394 = vmatpush.msra.mxu0 %v146
    %395 = vmatpush.msra.mxu0 %v143
    %396 = vmatpush.msra.mxu0 %v140
    %397 = vmatmul.f32.gmra.mxu0 0.0
    %v398 = vpop.f32.mrf.mxu0
    %v399 = vadd.f32 %v356, %v398
    %400 = vdwg.mxu0
    %401 = vmatpush.msra.mxu0 %v186
    %402 = vmatpush.msra.mxu0 %v183
    %403 = vmatpush.msra.mxu0 %v180
    %404 = vmatpush.msra.mxu0 %v177
    %405 = vmatpush.msra.mxu0 %v174
    %406 = vmatpush.msra.mxu0 %v171
    %407 = vmatpush.msra.mxu0 %v168
    %408 = vmatpush.msra.mxu0 %v165
    %409 = vmatpush.msra.mxu0 %v162
    %410 = vmatpush.msra.mxu0 %v159
    %411 = vmatpush.msra.mxu0 %v156
    %412 = vmatpush.msra.mxu0 %v153
    %413 = vmatpush.msra.mxu0 %v150
    %414 = vmatpush.msra.mxu0 %v147
    %415 = vmatpush.msra.mxu0 %v144
    %416 = vmatpush.msra.mxu0 %v141
    %417 = vmatmul.f32.gmra.mxu0 0.0
    %v418 = vpop.f32.mrf.mxu0
    %v419 = vadd.f32 %v357, %v418
    %420 = vdwg.mxu0
    %v421 = vadd.f32 %v351, %v379
    %v422 = vxor.u32 %v421, 2147483648
    %v423 = vmul.f32 %v422, 1.442695
    %v424 = vpow.pop %v423
    %v425 = vadd.f32 %v424, 1.0
    %v426 = vrcp.pop %v425
    %v427 = vmul.f32 %v425, %v426
    %v428 = vsub.f32 1.0, %v427
    %v429 = vmul.f32 %v426, %v428
    %v430 = vadd.f32 %v426, %v429
    %vm431 = vweird.f32 %v425
    %vm432 = vweird.f32 %v426
    %vm433 = vmor %vm431, %vm432
    %v434 = vsel %vm433, %v426, %v430
    %v435 = vand.u32 2147483647, %v425
    %vm436 = vcmp.eq.f32.partialorder %v435, 8.507059e+37
    %v437 = vand.u32 %v425, 2147483648
    %v438 = vor.u32 1.1754944e-38, %v437
    %v439 = vsel %vm436, %v438, %v434
    %v440 = vmul.f32 1.0, %v439
    %v441 = vadd.f32 %v352, %v399
    %v442 = vxor.u32 %v441, 2147483648
    %v443 = vmul.f32 %v442, 1.442695
    %v444 = vpow.pop %v443
    %v445 = vadd.f32 %v444, 1.0
    %v446 = vrcp.pop %v445
    %v447 = vmul.f32 %v445, %v446
    %v448 = vsub.f32 1.0, %v447
    %v449 = vmul.f32 %v446, %v448
    %v450 = vadd.f32 %v446, %v449
    %vm451 = vweird.f32 %v445
    %vm452 = vweird.f32 %v446
    %vm453 = vmor %vm451, %vm452
    %v454 = vsel %vm453, %v446, %v450
    %v455 = vand.u32 2147483647, %v445
    %vm456 = vcmp.eq.f32.partialorder %v455, 8.507059e+37
    %v457 = vand.u32 %v445, 2147483648
    %v458 = vor.u32 1.1754944e-38, %v457
    %v459 = vsel %vm456, %v458, %v454
    %v460 = vmul.f32 1.0, %v459
    %v461 = vmul.f32 %v440, %v419
    %v462 = vadd.f32 %v353, %v461
    %v463 = vtanh.pop %v462
    %v464 = vsub.f32 1.0, %v460
    %v465 = vmul.f32 %v464, %v463
    %v466 = vmul.f32 %v460, 0.0
    %v467 = vadd.f32 %v465, %v466
    %vm468 = vcmp.gt.s32.totalorder %v90, 0
    %v469 = vsel %vm468, 1, 0
    %470 = vset.pattern.permute.xlu0 0
    %471 = vperm.xlu0 %470, %v469
    %v472 = vpop.permute.xlu0 %471
    %vm473 = vcmp.eq.s32.totalorder %v472, 1
    %v474 = vsel %vm473, %v467, 0.0
    %475 = vst [vmem:[#allocation2] sm:$0xff] %v474
    %s476 = scalar_lea.vmem [#allocation3], 24
    %v477 = vld [vmem:[%s476] sm:$0xff]
    %v478 = vld [vmem:[%s476 + $0x8] sm:$0xff]
    %v479 = vld [vmem:[%s476 + $0x10] sm:$0xff]
    %480 = vmatpush.msra.mxu0 %v184
    %481 = vmatpush.msra.mxu0 %v181
    %482 = vmatpush.msra.mxu0 %v178
    %483 = vmatpush.msra.mxu0 %v175
    %484 = vmatpush.msra.mxu0 %v172
    %485 = vmatpush.msra.mxu0 %v169
    %486 = vmatpush.msra.mxu0 %v166
    %487 = vmatpush.msra.mxu0 %v163
    %488 = vmatpush.msra.mxu0 %v160
    %489 = vmatpush.msra.mxu0 %v157
    %490 = vmatpush.msra.mxu0 %v154
    %491 = vmatpush.msra.mxu0 %v151
    %492 = vmatpush.msra.mxu0 %v148
    %493 = vmatpush.msra.mxu0 %v145
    %494 = vmatpush.msra.mxu0 %v142
    %495 = vmatpush.msra.mxu0 %v139
    %496 = vmatmul.f32.gmra.mxu0 %v474
    %v497 = vpop.f32.mrf.mxu0
    %v498 = vadd.f32 %v355, %v497
    %499 = vdwg.mxu0
    %500 = vmatpush.msra.mxu0 %v185
    %501 = vmatpush.msra.mxu0 %v182
    %502 = vmatpush.msra.mxu0 %v179
    %503 = vmatpush.msra.mxu0 %v176
    %504 = vmatpush.msra.mxu0 %v173
    %505 = vmatpush.msra.mxu0 %v170
    %506 = vmatpush.msra.mxu0 %v167
    %507 = vmatpush.msra.mxu0 %v164
    %508 = vmatpush.msra.mxu0 %v161
    %509 = vmatpush.msra.mxu0 %v158
    %510 = vmatpush.msra.mxu0 %v155
    %511 = vmatpush.msra.mxu0 %v152
    %512 = vmatpush.msra.mxu0 %v149
    %513 = vmatpush.msra.mxu0 %v146
    %514 = vmatpush.msra.mxu0 %v143
    %515 = vmatpush.msra.mxu0 %v140
    %516 = vmatmul.f32.gmra.mxu0 %v474
    %v517 = vpop.f32.mrf.mxu0
    %v518 = vadd.f32 %v356, %v517
    %519 = vdwg.mxu0
    %520 = vmatpush.msra.mxu0 %v186
    %521 = vmatpush.msra.mxu0 %v183
    %522 = vmatpush.msra.mxu0 %v180
    %523 = vmatpush.msra.mxu0 %v177
    %524 = vmatpush.msra.mxu0 %v174
    %525 = vmatpush.msra.mxu0 %v171
    %526 = vmatpush.msra.mxu0 %v168
    %527 = vmatpush.msra.mxu0 %v165
    %528 = vmatpush.msra.mxu0 %v162
    %529 = vmatpush.msra.mxu0 %v159
    %530 = vmatpush.msra.mxu0 %v156
    %531 = vmatpush.msra.mxu0 %v153
    %532 = vmatpush.msra.mxu0 %v150
    %533 = vmatpush.msra.mxu0 %v147
    %534 = vmatpush.msra.mxu0 %v144
    %535 = vmatpush.msra.mxu0 %v141
    %536 = vmatmul.f32.gmra.mxu0 %v474
    %v537 = vpop.f32.mrf.mxu0
    %v538 = vadd.f32 %v357, %v537
    %539 = vdwg.mxu0
    %v540 = vadd.f32 %v477, %v498
    %v541 = vxor.u32 %v540, 2147483648
    %v542 = vmul.f32 %v541, 1.442695
    %v543 = vpow.pop %v542
    %v544 = vadd.f32 %v543, 1.0
    %v545 = vrcp.pop %v544
    %v546 = vmul.f32 %v544, %v545
    %v547 = vsub.f32 1.0, %v546
    %v548 = vmul.f32 %v545, %v547
    %v549 = vadd.f32 %v545, %v548
    %vm550 = vweird.f32 %v544
    %vm551 = vweird.f32 %v545
    %vm552 = vmor %vm550, %vm551
    %v553 = vsel %vm552, %v545, %v549
    %v554 = vand.u32 2147483647, %v544
    %vm555 = vcmp.eq.f32.partialorder %v554, 8.507059e+37
    %v556 = vand.u32 %v544, 2147483648
    %v557 = vor.u32 1.1754944e-38, %v556
    %v558 = vsel %vm555, %v557, %v553
    %v559 = vmul.f32 1.0, %v558
    %v560 = vadd.f32 %v478, %v518
    %v561 = vxor.u32 %v560, 2147483648
    %v562 = vmul.f32 %v561, 1.442695
    %v563 = vpow.pop %v562
    %v564 = vadd.f32 %v563, 1.0
    %v565 = vrcp.pop %v564
    %v566 = vmul.f32 %v564, %v565
    %v567 = vsub.f32 1.0, %v566
    %v568 = vmul.f32 %v565, %v567
    %v569 = vadd.f32 %v565, %v568
    %vm570 = vweird.f32 %v564
    %vm571 = vweird.f32 %v565
    %vm572 = vmor %vm570, %vm571
    %v573 = vsel %vm572, %v565, %v569
    %v574 = vand.u32 2147483647, %v564
    %vm575 = vcmp.eq.f32.partialorder %v574, 8.507059e+37
    %v576 = vand.u32 %v564, 2147483648
    %v577 = vor.u32 1.1754944e-38, %v576
    %v578 = vsel %vm575, %v577, %v573
    %v579 = vmul.f32 1.0, %v578
    %v580 = vmul.f32 %v559, %v538
    %v581 = vadd.f32 %v479, %v580
    %v582 = vtanh.pop %v581
    %v583 = vsub.f32 1.0, %v579
    %v584 = vmul.f32 %v583, %v582
    %v585 = vmul.f32 %v579, %v474
    %v586 = vadd.f32 %v584, %v585
    %vm587 = vcmp.gt.s32.totalorder %v90, 1
    %v588 = vsel %vm587, 1, 0
    %589 = vset.pattern.permute.xlu0 0
    %590 = vperm.xlu0 %589, %v588
    %v591 = vpop.permute.xlu0 %590
    %vm592 = vcmp.eq.s32.totalorder %v591, 1
    %v593 = vsel %vm592, %v586, 0.0
    %s594 = scalar_lea.vmem [#allocation2], 8
    %595 = vst [vmem:[%s594] sm:$0xff] %v593
    %v596 = vsel %vm592, %v586, %v474
    %s597 = scalar_lea.vmem [#allocation3], 48
    %v598 = vld [vmem:[%s597] sm:$0xff]
    %v599 = vld [vmem:[%s597 + $0x8] sm:$0xff]
    %v600 = vld [vmem:[%s597 + $0x10] sm:$0xff]
    %601 = vmatpush.msra.mxu0 %v184
    %602 = vmatpush.msra.mxu0 %v181
    %603 = vmatpush.msra.mxu0 %v178
    %604 = vmatpush.msra.mxu0 %v175
    %605 = vmatpush.msra.mxu0 %v172
    %606 = vmatpush.msra.mxu0 %v169
    %607 = vmatpush.msra.mxu0 %v166
    %608 = vmatpush.msra.mxu0 %v163
    %609 = vmatpush.msra.mxu0 %v160
    %610 = vmatpush.msra.mxu0 %v157
    %611 = vmatpush.msra.mxu0 %v154
    %612 = vmatpush.msra.mxu0 %v151
    %613 = vmatpush.msra.mxu0 %v148
    %614 = vmatpush.msra.mxu0 %v145
    %615 = vmatpush.msra.mxu0 %v142
    %616 = vmatpush.msra.mxu0 %v139
    %617 = vmatmul.f32.gmra.mxu0 %v596
    %v618 = vpop.f32.mrf.mxu0
    %v619 = vadd.f32 %v355, %v618
    %620 = vdwg.mxu0
    %621 = vmatpush.msra.mxu0 %v185
    %622 = vmatpush.msra.mxu0 %v182
    %623 = vmatpush.msra.mxu0 %v179
    %624 = vmatpush.msra.mxu0 %v176
    %625 = vmatpush.msra.mxu0 %v173
    %626 = vmatpush.msra.mxu0 %v170
    %627 = vmatpush.msra.mxu0 %v167
    %628 = vmatpush.msra.mxu0 %v164
    %629 = vmatpush.msra.mxu0 %v161
    %630 = vmatpush.msra.mxu0 %v158
    %631 = vmatpush.msra.mxu0 %v155
    %632 = vmatpush.msra.mxu0 %v152
    %633 = vmatpush.msra.mxu0 %v149
    %634 = vmatpush.msra.mxu0 %v146
    %635 = vmatpush.msra.mxu0 %v143
    %636 = vmatpush.msra.mxu0 %v140
    %637 = vmatmul.f32.gmra.mxu0 %v596
    %v638 = vpop.f32.mrf.mxu0
    %v639 = vadd.f32 %v356, %v638
    %640 = vdwg.mxu0
    %641 = vmatpush.msra.mxu0 %v186
    %642 = vmatpush.msra.mxu0 %v183
    %643 = vmatpush.msra.mxu0 %v180
    %644 = vmatpush.msra.mxu0 %v177
    %645 = vmatpush.msra.mxu0 %v174
    %646 = vmatpush.msra.mxu0 %v171
    %647 = vmatpush.msra.mxu0 %v168
    %648 = vmatpush.msra.mxu0 %v165
    %649 = vmatpush.msra.mxu0 %v162
    %650 = vmatpush.msra.mxu0 %v159
    %651 = vmatpush.msra.mxu0 %v156
    %652 = vmatpush.msra.mxu0 %v153
    %653 = vmatpush.msra.mxu0 %v150
    %654 = vmatpush.msra.mxu0 %v147
    %655 = vmatpush.msra.mxu0 %v144
    %656 = vmatpush.msra.mxu0 %v141
    %657 = vmatmul.f32.gmra.mxu0 %v596
    %v658 = vpop.f32.mrf.mxu0
    %v659 = vadd.f32 %v357, %v658
    %660 = vdwg.mxu0
    %v661 = vadd.f32 %v598, %v619
    %v662 = vxor.u32 %v661, 2147483648
    %v663 = vmul.f32 %v662, 1.442695
    %v664 = vpow.pop %v663
    %v665 = vadd.f32 %v664, 1.0
    %v666 = vrcp.pop %v665
    %v667 = vmul.f32 %v665, %v666
    %v668 = vsub.f32 1.0, %v667
    %v669 = vmul.f32 %v666, %v668
    %v670 = vadd.f32 %v666, %v669
    %vm671 = vweird.f32 %v665
    %vm672 = vweird.f32 %v666
    %vm673 = vmor %vm671, %vm672
    %v674 = vsel %vm673, %v666, %v670
    %v675 = vand.u32 2147483647, %v665
    %vm676 = vcmp.eq.f32.partialorder %v675, 8.507059e+37
    %v677 = vand.u32 %v665, 2147483648
    %v678 = vor.u32 1.1754944e-38, %v677
    %v679 = vsel %vm676, %v678, %v674
    %v680 = vmul.f32 1.0, %v679
    %v681 = vadd.f32 %v599, %v639
    %v682 = vxor.u32 %v681, 2147483648
    %v683 = vmul.f32 %v682, 1.442695
    %v684 = vpow.pop %v683
    %v685 = vadd.f32 %v684, 1.0
    %v686 = vrcp.pop %v685
    %v687 = vmul.f32 %v685, %v686
    %v688 = vsub.f32 1.0, %v687
    %v689 = vmul.f32 %v686, %v688
    %v690 = vadd.f32 %v686, %v689
    %vm691 = vweird.f32 %v685
    %vm692 = vweird.f32 %v686
    %vm693 = vmor %vm691, %vm692
    %v694 = vsel %vm693, %v686, %v690
    %v695 = vand.u32 2147483647, %v685
    %vm696 = vcmp.eq.f32.partialorder %v695, 8.507059e+37
    %v697 = vand.u32 %v685, 2147483648
    %v698 = vor.u32 1.1754944e-38, %v697
    %v699 = vsel %vm696, %v698, %v694
    %v700 = vmul.f32 1.0, %v699
    %v701 = vmul.f32 %v680, %v659
    %v702 = vadd.f32 %v600, %v701
    %v703 = vtanh.pop %v702
    %v704 = vsub.f32 1.0, %v700
    %v705 = vmul.f32 %v704, %v703
    %v706 = vmul.f32 %v700, %v596
    %v707 = vadd.f32 %v705, %v706
    %vm708 = vcmp.gt.s32.totalorder %v90, 2
    %v709 = vsel %vm708, 1, 0
    %710 = vset.pattern.permute.xlu0 0
    %711 = vperm.xlu0 %710, %v709
    %v712 = vpop.permute.xlu0 %711
    %vm713 = vcmp.eq.s32.totalorder %v712, 1
    %v714 = vsel %vm713, %v707, 0.0
    %s715 = scalar_lea.vmem [#allocation2], 16
    %716 = vst [vmem:[%s715] sm:$0xff] %v714
    %v717 = vsel %vm713, %v707, %v596
    %s718 = scalar_lea.vmem [#allocation3], 72
    %v719 = vld [vmem:[%s718] sm:$0xff]
    %v720 = vld [vmem:[%s718 + $0x8] sm:$0xff]
    %v721 = vld [vmem:[%s718 + $0x10] sm:$0xff]
    %722 = vmatpush.msra.mxu0 %v184
    %723 = vmatpush.msra.mxu0 %v181
    %724 = vmatpush.msra.mxu0 %v178
    %725 = vmatpush.msra.mxu0 %v175
    %726 = vmatpush.msra.mxu0 %v172
    %727 = vmatpush.msra.mxu0 %v169
    %728 = vmatpush.msra.mxu0 %v166
    %729 = vmatpush.msra.mxu0 %v163
    %730 = vmatpush.msra.mxu0 %v160
    %731 = vmatpush.msra.mxu0 %v157
    %732 = vmatpush.msra.mxu0 %v154
    %733 = vmatpush.msra.mxu0 %v151
    %734 = vmatpush.msra.mxu0 %v148
    %735 = vmatpush.msra.mxu0 %v145
    %736 = vmatpush.msra.mxu0 %v142
    %737 = vmatpush.msra.mxu0 %v139
    %738 = vmatmul.f32.gmra.mxu0 %v717
    %v739 = vpop.f32.mrf.mxu0
    %v740 = vadd.f32 %v355, %v739
    %741 = vdwg.mxu0
    %742 = vmatpush.msra.mxu0 %v185
    %743 = vmatpush.msra.mxu0 %v182
    %744 = vmatpush.msra.mxu0 %v179
    %745 = vmatpush.msra.mxu0 %v176
    %746 = vmatpush.msra.mxu0 %v173
    %747 = vmatpush.msra.mxu0 %v170
    %748 = vmatpush.msra.mxu0 %v167
    %749 = vmatpush.msra.mxu0 %v164
    %750 = vmatpush.msra.mxu0 %v161
    %751 = vmatpush.msra.mxu0 %v158
    %752 = vmatpush.msra.mxu0 %v155
    %753 = vmatpush.msra.mxu0 %v152
    %754 = vmatpush.msra.mxu0 %v149
    %755 = vmatpush.msra.mxu0 %v146
    %756 = vmatpush.msra.mxu0 %v143
    %757 = vmatpush.msra.mxu0 %v140
    %758 = vmatmul.f32.gmra.mxu0 %v717
    %v759 = vpop.f32.mrf.mxu0
    %v760 = vadd.f32 %v356, %v759
    %761 = vdwg.mxu0
    %762 = vmatpush.msra.mxu0 %v186
    %763 = vmatpush.msra.mxu0 %v183
    %764 = vmatpush.msra.mxu0 %v180
    %765 = vmatpush.msra.mxu0 %v177
    %766 = vmatpush.msra.mxu0 %v174
    %767 = vmatpush.msra.mxu0 %v171
    %768 = vmatpush.msra.mxu0 %v168
    %769 = vmatpush.msra.mxu0 %v165
    %770 = vmatpush.msra.mxu0 %v162
    %771 = vmatpush.msra.mxu0 %v159
    %772 = vmatpush.msra.mxu0 %v156
    %773 = vmatpush.msra.mxu0 %v153
    %774 = vmatpush.msra.mxu0 %v150
    %775 = vmatpush.msra.mxu0 %v147
    %776 = vmatpush.msra.mxu0 %v144
    %777 = vmatpush.msra.mxu0 %v141
    %778 = vmatmul.f32.gmra.mxu0 %v717
    %v779 = vpop.f32.mrf.mxu0
    %v780 = vadd.f32 %v357, %v779
    %781 = vdwg.mxu0
    %v782 = vadd.f32 %v719, %v740
    %v783 = vxor.u32 %v782, 2147483648
    %v784 = vmul.f32 %v783, 1.442695
    %v785 = vpow.pop %v784
    %v786 = vadd.f32 %v785, 1.0
    %v787 = vrcp.pop %v786
    %v788 = vmul.f32 %v786, %v787
    %v789 = vsub.f32 1.0, %v788
    %v790 = vmul.f32 %v787, %v789
    %v791 = vadd.f32 %v787, %v790
    %vm792 = vweird.f32 %v786
    %vm793 = vweird.f32 %v787
    %vm794 = vmor %vm792, %vm793
    %v795 = vsel %vm794, %v787, %v791
    %v796 = vand.u32 2147483647, %v786
    %vm797 = vcmp.eq.f32.partialorder %v796, 8.507059e+37
    %v798 = vand.u32 %v786, 2147483648
    %v799 = vor.u32 1.1754944e-38, %v798
    %v800 = vsel %vm797, %v799, %v795
    %v801 = vmul.f32 1.0, %v800
    %v802 = vadd.f32 %v720, %v760
    %v803 = vxor.u32 %v802, 2147483648
    %v804 = vmul.f32 %v803, 1.442695
    %v805 = vpow.pop %v804
    %v806 = vadd.f32 %v805, 1.0
    %v807 = vrcp.pop %v806
    %v808 = vmul.f32 %v806, %v807
    %v809 = vsub.f32 1.0, %v808
    %v810 = vmul.f32 %v807, %v809
    %v811 = vadd.f32 %v807, %v810
    %vm812 = vweird.f32 %v806
    %vm813 = vweird.f32 %v807
    %vm814 = vmor %vm812, %vm813
    %v815 = vsel %vm814, %v807, %v811
    %v816 = vand.u32 2147483647, %v806
    %vm817 = vcmp.eq.f32.partialorder %v816, 8.507059e+37
    %v818 = vand.u32 %v806, 2147483648
    %v819 = vor.u32 1.1754944e-38, %v818
    %v820 = vsel %vm817, %v819, %v815
    %v821 = vmul.f32 1.0, %v820
    %v822 = vmul.f32 %v801, %v780
    %v823 = vadd.f32 %v721, %v822
    %v824 = vtanh.pop %v823
    %v825 = vsub.f32 1.0, %v821
    %v826 = vmul.f32 %v825, %v824
    %v827 = vmul.f32 %v821, %v717
    %v828 = vadd.f32 %v826, %v827
    %vm829 = vcmp.gt.s32.totalorder %v90, 3
    %v830 = vsel %vm829, 1, 0
    %831 = vset.pattern.permute.xlu0 0
    %832 = vperm.xlu0 %831, %v830
    %v833 = vpop.permute.xlu0 %832
    %vm834 = vcmp.eq.s32.totalorder %v833, 1
    %v835 = vsel %vm834, %v828, 0.0
    %s836 = scalar_lea.vmem [#allocation2], 24
    %837 = vst [vmem:[%s836] sm:$0xff] %v835
    %v838 = vsel %vm834, %v828, %v717
    %s839 = scalar_lea.vmem [#allocation3], 96
    %v840 = vld [vmem:[%s839] sm:$0xff]
    %v841 = vld [vmem:[%s839 + $0x8] sm:$0xff]
    %v842 = vld [vmem:[%s839 + $0x10] sm:$0xff]
    %843 = vmatpush.msra.mxu0 %v184
    %844 = vmatpush.msra.mxu0 %v181
    %845 = vmatpush.msra.mxu0 %v178
    %846 = vmatpush.msra.mxu0 %v175
    %847 = vmatpush.msra.mxu0 %v172
    %848 = vmatpush.msra.mxu0 %v169
    %849 = vmatpush.msra.mxu0 %v166
    %850 = vmatpush.msra.mxu0 %v163
    %851 = vmatpush.msra.mxu0 %v160
    %852 = vmatpush.msra.mxu0 %v157
    %853 = vmatpush.msra.mxu0 %v154
    %854 = vmatpush.msra.mxu0 %v151
    %855 = vmatpush.msra.mxu0 %v148
    %856 = vmatpush.msra.mxu0 %v145
    %857 = vmatpush.msra.mxu0 %v142
    %858 = vmatpush.msra.mxu0 %v139
    %859 = vmatmul.f32.gmra.mxu0 %v838
    %v860 = vpop.f32.mrf.mxu0
    %v861 = vadd.f32 %v355, %v860
    %862 = vdwg.mxu0
    %863 = vmatpush.msra.mxu0 %v185
    %864 = vmatpush.msra.mxu0 %v182
    %865 = vmatpush.msra.mxu0 %v179
    %866 = vmatpush.msra.mxu0 %v176
    %867 = vmatpush.msra.mxu0 %v173
    %868 = vmatpush.msra.mxu0 %v170
    %869 = vmatpush.msra.mxu0 %v167
    %870 = vmatpush.msra.mxu0 %v164
    %871 = vmatpush.msra.mxu0 %v161
    %872 = vmatpush.msra.mxu0 %v158
    %873 = vmatpush.msra.mxu0 %v155
    %874 = vmatpush.msra.mxu0 %v152
    %875 = vmatpush.msra.mxu0 %v149
    %876 = vmatpush.msra.mxu0 %v146
    %877 = vmatpush.msra.mxu0 %v143
    %878 = vmatpush.msra.mxu0 %v140
    %879 = vmatmul.f32.gmra.mxu0 %v838
    %v880 = vpop.f32.mrf.mxu0
    %v881 = vadd.f32 %v356, %v880
    %882 = vdwg.mxu0
    %883 = vmatpush.msra.mxu0 %v186
    %884 = vmatpush.msra.mxu0 %v183
    %885 = vmatpush.msra.mxu0 %v180
    %886 = vmatpush.msra.mxu0 %v177
    %887 = vmatpush.msra.mxu0 %v174
    %888 = vmatpush.msra.mxu0 %v171
    %889 = vmatpush.msra.mxu0 %v168
    %890 = vmatpush.msra.mxu0 %v165
    %891 = vmatpush.msra.mxu0 %v162
    %892 = vmatpush.msra.mxu0 %v159
    %893 = vmatpush.msra.mxu0 %v156
    %894 = vmatpush.msra.mxu0 %v153
    %895 = vmatpush.msra.mxu0 %v150
    %896 = vmatpush.msra.mxu0 %v147
    %897 = vmatpush.msra.mxu0 %v144
    %898 = vmatpush.msra.mxu0 %v141
    %899 = vmatmul.f32.gmra.mxu0 %v838
    %v900 = vpop.f32.mrf.mxu0
    %v901 = vadd.f32 %v357, %v900
    %902 = vdwg.mxu0
    %v903 = vadd.f32 %v840, %v861
    %v904 = vxor.u32 %v903, 2147483648
    %v905 = vmul.f32 %v904, 1.442695
    %v906 = vpow.pop %v905
    %v907 = vadd.f32 %v906, 1.0
    %v908 = vrcp.pop %v907
    %v909 = vmul.f32 %v907, %v908
    %v910 = vsub.f32 1.0, %v909
    %v911 = vmul.f32 %v908, %v910
    %v912 = vadd.f32 %v908, %v911
    %vm913 = vweird.f32 %v907
    %vm914 = vweird.f32 %v908
    %vm915 = vmor %vm913, %vm914
    %v916 = vsel %vm915, %v908, %v912
    %v917 = vand.u32 2147483647, %v907
    %vm918 = vcmp.eq.f32.partialorder %v917, 8.507059e+37
    %v919 = vand.u32 %v907, 2147483648
    %v920 = vor.u32 1.1754944e-38, %v919
    %v921 = vsel %vm918, %v920, %v916
    %v922 = vmul.f32 1.0, %v921
    %v923 = vadd.f32 %v841, %v881
    %v924 = vxor.u32 %v923, 2147483648
    %v925 = vmul.f32 %v924, 1.442695
    %v926 = vpow.pop %v925
    %v927 = vadd.f32 %v926, 1.0
    %v928 = vrcp.pop %v927
    %v929 = vmul.f32 %v927, %v928
    %v930 = vsub.f32 1.0, %v929
    %v931 = vmul.f32 %v928, %v930
    %v932 = vadd.f32 %v928, %v931
    %vm933 = vweird.f32 %v927
    %vm934 = vweird.f32 %v928
    %vm935 = vmor %vm933, %vm934
    %v936 = vsel %vm935, %v928, %v932
    %v937 = vand.u32 2147483647, %v927
    %vm938 = vcmp.eq.f32.partialorder %v937, 8.507059e+37
    %v939 = vand.u32 %v927, 2147483648
    %v940 = vor.u32 1.1754944e-38, %v939
    %v941 = vsel %vm938, %v940, %v936
    %v942 = vmul.f32 1.0, %v941
    %v943 = vmul.f32 %v922, %v901
    %v944 = vadd.f32 %v842, %v943
    %v945 = vtanh.pop %v944
    %v946 = vsub.f32 1.0, %v942
    %v947 = vmul.f32 %v946, %v945
    %v948 = vmul.f32 %v942, %v838
    %v949 = vadd.f32 %v947, %v948
    %vm950 = vcmp.gt.s32.totalorder %v90, 4
    %v951 = vsel %vm950, 1, 0
    %952 = vset.pattern.permute.xlu0 0
    %953 = vperm.xlu0 %952, %v951
    %v954 = vpop.permute.xlu0 %953
    %vm955 = vcmp.eq.s32.totalorder %v954, 1
    %v956 = vsel %vm955, %v949, 0.0
    %s957 = scalar_lea.vmem [#allocation2], 32
    %958 = vst [vmem:[%s957] sm:$0xff] %v956
    %v959 = vsel %vm955, %v949, %v838
    %s960 = scalar_lea.vmem [#allocation3], 120
    %v961 = vld [vmem:[%s960] sm:$0xff]
    %v962 = vld [vmem:[%s960 + $0x8] sm:$0xff]
    %v963 = vld [vmem:[%s960 + $0x10] sm:$0xff]
    %964 = vmatpush.msra.mxu0 %v184
    %965 = vmatpush.msra.mxu0 %v181
    %966 = vmatpush.msra.mxu0 %v178
    %967 = vmatpush.msra.mxu0 %v175
    %968 = vmatpush.msra.mxu0 %v172
    %969 = vmatpush.msra.mxu0 %v169
    %970 = vmatpush.msra.mxu0 %v166
    %971 = vmatpush.msra.mxu0 %v163
    %972 = vmatpush.msra.mxu0 %v160
    %973 = vmatpush.msra.mxu0 %v157
    %974 = vmatpush.msra.mxu0 %v154
    %975 = vmatpush.msra.mxu0 %v151
    %976 = vmatpush.msra.mxu0 %v148
    %977 = vmatpush.msra.mxu0 %v145
    %978 = vmatpush.msra.mxu0 %v142
    %979 = vmatpush.msra.mxu0 %v139
    %980 = vmatmul.f32.gmra.mxu0 %v959
    %v981 = vpop.f32.mrf.mxu0
    %v982 = vadd.f32 %v355, %v981
    %983 = vdwg.mxu0
    %984 = vmatpush.msra.mxu0 %v185
    %985 = vmatpush.msra.mxu0 %v182
    %986 = vmatpush.msra.mxu0 %v179
    %987 = vmatpush.msra.mxu0 %v176
    %988 = vmatpush.msra.mxu0 %v173
    %989 = vmatpush.msra.mxu0 %v170
    %990 = vmatpush.msra.mxu0 %v167
    %991 = vmatpush.msra.mxu0 %v164
    %992 = vmatpush.msra.mxu0 %v161
    %993 = vmatpush.msra.mxu0 %v158
    %994 = vmatpush.msra.mxu0 %v155
    %995 = vmatpush.msra.mxu0 %v152
    %996 = vmatpush.msra.mxu0 %v149
    %997 = vmatpush.msra.mxu0 %v146
    %998 = vmatpush.msra.mxu0 %v143
    %999 = vmatpush.msra.mxu0 %v140
    %1000 = vmatmul.f32.gmra.mxu0 %v959
    %v1001 = vpop.f32.mrf.mxu0
    %v1002 = vadd.f32 %v356, %v1001
    %1003 = vdwg.mxu0
    %1004 = vmatpush.msra.mxu0 %v186
    %1005 = vmatpush.msra.mxu0 %v183
    %1006 = vmatpush.msra.mxu0 %v180
    %1007 = vmatpush.msra.mxu0 %v177
    %1008 = vmatpush.msra.mxu0 %v174
    %1009 = vmatpush.msra.mxu0 %v171
    %1010 = vmatpush.msra.mxu0 %v168
    %1011 = vmatpush.msra.mxu0 %v165
    %1012 = vmatpush.msra.mxu0 %v162
    %1013 = vmatpush.msra.mxu0 %v159
    %1014 = vmatpush.msra.mxu0 %v156
    %1015 = vmatpush.msra.mxu0 %v153
    %1016 = vmatpush.msra.mxu0 %v150
    %1017 = vmatpush.msra.mxu0 %v147
    %1018 = vmatpush.msra.mxu0 %v144
    %1019 = vmatpush.msra.mxu0 %v141
    %1020 = vmatmul.f32.gmra.mxu0 %v959
    %v1021 = vpop.f32.mrf.mxu0
    %v1022 = vadd.f32 %v357, %v1021
    %1023 = vdwg.mxu0
    %v1024 = vadd.f32 %v961, %v982
    %v1025 = vxor.u32 %v1024, 2147483648
    %v1026 = vmul.f32 %v1025, 1.442695
    %v1027 = vpow.pop %v1026
    %v1028 = vadd.f32 %v1027, 1.0
    %v1029 = vrcp.pop %v1028
    %v1030 = vmul.f32 %v1028, %v1029
    %v1031 = vsub.f32 1.0, %v1030
    %v1032 = vmul.f32 %v1029, %v1031
    %v1033 = vadd.f32 %v1029, %v1032
    %vm1034 = vweird.f32 %v1028
    %vm1035 = vweird.f32 %v1029
    %vm1036 = vmor %vm1034, %vm1035
    %v1037 = vsel %vm1036, %v1029, %v1033
    %v1038 = vand.u32 2147483647, %v1028
    %vm1039 = vcmp.eq.f32.partialorder %v1038, 8.507059e+37
    %v1040 = vand.u32 %v1028, 2147483648
    %v1041 = vor.u32 1.1754944e-38, %v1040
    %v1042 = vsel %vm1039, %v1041, %v1037
    %v1043 = vmul.f32 1.0, %v1042
    %v1044 = vadd.f32 %v962, %v1002
    %v1045 = vxor.u32 %v1044, 2147483648
    %v1046 = vmul.f32 %v1045, 1.442695
    %v1047 = vpow.pop %v1046
    %v1048 = vadd.f32 %v1047, 1.0
    %v1049 = vrcp.pop %v1048
    %v1050 = vmul.f32 %v1048, %v1049
    %v1051 = vsub.f32 1.0, %v1050
    %v1052 = vmul.f32 %v1049, %v1051
    %v1053 = vadd.f32 %v1049, %v1052
    %vm1054 = vweird.f32 %v1048
    %vm1055 = vweird.f32 %v1049
    %vm1056 = vmor %vm1054, %vm1055
    %v1057 = vsel %vm1056, %v1049, %v1053
    %v1058 = vand.u32 2147483647, %v1048
    %vm1059 = vcmp.eq.f32.partialorder %v1058, 8.507059e+37
    %v1060 = vand.u32 %v1048, 2147483648
    %v1061 = vor.u32 1.1754944e-38, %v1060
    %v1062 = vsel %vm1059, %v1061, %v1057
    %v1063 = vmul.f32 1.0, %v1062
    %v1064 = vmul.f32 %v1043, %v1022
    %v1065 = vadd.f32 %v963, %v1064
    %v1066 = vtanh.pop %v1065
    %v1067 = vsub.f32 1.0, %v1063
    %v1068 = vmul.f32 %v1067, %v1066
    %v1069 = vmul.f32 %v1063, %v959
    %v1070 = vadd.f32 %v1068, %v1069
    %vm1071 = vcmp.gt.s32.totalorder %v90, 5
    %v1072 = vsel %vm1071, 1, 0
    %1073 = vset.pattern.permute.xlu0 0
    %1074 = vperm.xlu0 %1073, %v1072
    %v1075 = vpop.permute.xlu0 %1074
    %vm1076 = vcmp.eq.s32.totalorder %v1075, 1
    %v1077 = vsel %vm1076, %v1070, 0.0
    %s1078 = scalar_lea.vmem [#allocation2], 40
    %1079 = vst [vmem:[%s1078] sm:$0xff] %v1077
    %v1080 = vsel %vm1076, %v1070, %v959
    %s1081 = scalar_lea.vmem [#allocation3], 144
    %v1082 = vld [vmem:[%s1081] sm:$0xff]
    %v1083 = vld [vmem:[%s1081 + $0x8] sm:$0xff]
    %v1084 = vld [vmem:[%s1081 + $0x10] sm:$0xff]
    %1085 = vmatpush.msra.mxu0 %v184
    %1086 = vmatpush.msra.mxu0 %v181
    %1087 = vmatpush.msra.mxu0 %v178
    %1088 = vmatpush.msra.mxu0 %v175
    %1089 = vmatpush.msra.mxu0 %v172
    %1090 = vmatpush.msra.mxu0 %v169
    %1091 = vmatpush.msra.mxu0 %v166
    %1092 = vmatpush.msra.mxu0 %v163
    %1093 = vmatpush.msra.mxu0 %v160
    %1094 = vmatpush.msra.mxu0 %v157
    %1095 = vmatpush.msra.mxu0 %v154
    %1096 = vmatpush.msra.mxu0 %v151
    %1097 = vmatpush.msra.mxu0 %v148
    %1098 = vmatpush.msra.mxu0 %v145
    %1099 = vmatpush.msra.mxu0 %v142
    %1100 = vmatpush.msra.mxu0 %v139
    %1101 = vmatmul.f32.gmra.mxu0 %v1080
    %v1102 = vpop.f32.mrf.mxu0
    %v1103 = vadd.f32 %v355, %v1102
    %1104 = vdwg.mxu0
    %1105 = vmatpush.msra.mxu0 %v185
    %1106 = vmatpush.msra.mxu0 %v182
    %1107 = vmatpush.msra.mxu0 %v179
    %1108 = vmatpush.msra.mxu0 %v176
    %1109 = vmatpush.msra.mxu0 %v173
    %1110 = vmatpush.msra.mxu0 %v170
    %1111 = vmatpush.msra.mxu0 %v167
    %1112 = vmatpush.msra.mxu0 %v164
    %1113 = vmatpush.msra.mxu0 %v161
    %1114 = vmatpush.msra.mxu0 %v158
    %1115 = vmatpush.msra.mxu0 %v155
    %1116 = vmatpush.msra.mxu0 %v152
    %1117 = vmatpush.msra.mxu0 %v149
    %1118 = vmatpush.msra.mxu0 %v146
    %1119 = vmatpush.msra.mxu0 %v143
    %1120 = vmatpush.msra.mxu0 %v140
    %1121 = vmatmul.f32.gmra.mxu0 %v1080
    %v1122 = vpop.f32.mrf.mxu0
    %v1123 = vadd.f32 %v356, %v1122
    %1124 = vdwg.mxu0
    %1125 = vmatpush.msra.mxu0 %v186
    %1126 = vmatpush.msra.mxu0 %v183
    %1127 = vmatpush.msra.mxu0 %v180
    %1128 = vmatpush.msra.mxu0 %v177
    %1129 = vmatpush.msra.mxu0 %v174
    %1130 = vmatpush.msra.mxu0 %v171
    %1131 = vmatpush.msra.mxu0 %v168
    %1132 = vmatpush.msra.mxu0 %v165
    %1133 = vmatpush.msra.mxu0 %v162
    %1134 = vmatpush.msra.mxu0 %v159
    %1135 = vmatpush.msra.mxu0 %v156
    %1136 = vmatpush.msra.mxu0 %v153
    %1137 = vmatpush.msra.mxu0 %v150
    %1138 = vmatpush.msra.mxu0 %v147
    %1139 = vmatpush.msra.mxu0 %v144
    %1140 = vmatpush.msra.mxu0 %v141
    %1141 = vmatmul.f32.gmra.mxu0 %v1080
    %v1142 = vpop.f32.mrf.mxu0
    %v1143 = vadd.f32 %v357, %v1142
    %1144 = vdwg.mxu0
    %v1145 = vadd.f32 %v1082, %v1103
    %v1146 = vxor.u32 %v1145, 2147483648
    %v1147 = vmul.f32 %v1146, 1.442695
    %v1148 = vpow.pop %v1147
    %v1149 = vadd.f32 %v1148, 1.0
    %v1150 = vrcp.pop %v1149
    %v1151 = vmul.f32 %v1149, %v1150
    %v1152 = vsub.f32 1.0, %v1151
    %v1153 = vmul.f32 %v1150, %v1152
    %v1154 = vadd.f32 %v1150, %v1153
    %vm1155 = vweird.f32 %v1149
    %vm1156 = vweird.f32 %v1150
    %vm1157 = vmor %vm1155, %vm1156
    %v1158 = vsel %vm1157, %v1150, %v1154
    %v1159 = vand.u32 2147483647, %v1149
    %vm1160 = vcmp.eq.f32.partialorder %v1159, 8.507059e+37
    %v1161 = vand.u32 %v1149, 2147483648
    %v1162 = vor.u32 1.1754944e-38, %v1161
    %v1163 = vsel %vm1160, %v1162, %v1158
    %v1164 = vmul.f32 1.0, %v1163
    %v1165 = vadd.f32 %v1083, %v1123
    %v1166 = vxor.u32 %v1165, 2147483648
    %v1167 = vmul.f32 %v1166, 1.442695
    %v1168 = vpow.pop %v1167
    %v1169 = vadd.f32 %v1168, 1.0
    %v1170 = vrcp.pop %v1169
    %v1171 = vmul.f32 %v1169, %v1170
    %v1172 = vsub.f32 1.0, %v1171
    %v1173 = vmul.f32 %v1170, %v1172
    %v1174 = vadd.f32 %v1170, %v1173
    %vm1175 = vweird.f32 %v1169
    %vm1176 = vweird.f32 %v1170
    %vm1177 = vmor %vm1175, %vm1176
    %v1178 = vsel %vm1177, %v1170, %v1174
    %v1179 = vand.u32 2147483647, %v1169
    %vm1180 = vcmp.eq.f32.partialorder %v1179, 8.507059e+37
    %v1181 = vand.u32 %v1169, 2147483648
    %v1182 = vor.u32 1.1754944e-38, %v1181
    %v1183 = vsel %vm1180, %v1182, %v1178
    %v1184 = vmul.f32 1.0, %v1183
    %v1185 = vmul.f32 %v1164, %v1143
    %v1186 = vadd.f32 %v1084, %v1185
    %v1187 = vtanh.pop %v1186
    %v1188 = vsub.f32 1.0, %v1184
    %v1189 = vmul.f32 %v1188, %v1187
    %v1190 = vmul.f32 %v1184, %v1080
    %v1191 = vadd.f32 %v1189, %v1190
    %vm1192 = vcmp.gt.s32.totalorder %v90, 6
    %v1193 = vsel %vm1192, 1, 0
    %1194 = vset.pattern.permute.xlu0 0
    %1195 = vperm.xlu0 %1194, %v1193
    %v1196 = vpop.permute.xlu0 %1195
    %vm1197 = vcmp.eq.s32.totalorder %v1196, 1
    %v1198 = vsel %vm1197, %v1191, 0.0
    %s1199 = scalar_lea.vmem [#allocation2], 48
    %1200 = vst [vmem:[%s1199] sm:$0xff] %v1198
    %v1201 = vsel %vm1197, %v1191, %v1080
    %s1202 = scalar_lea.vmem [#allocation3], 168
    %v1203 = vld [vmem:[%s1202] sm:$0xff]
    %v1204 = vld [vmem:[%s1202 + $0x8] sm:$0xff]
    %v1205 = vld [vmem:[%s1202 + $0x10] sm:$0xff]
    %1206 = vmatpush.msra.mxu0 %v184
    %1207 = vmatpush.msra.mxu0 %v181
    %1208 = vmatpush.msra.mxu0 %v178
    %1209 = vmatpush.msra.mxu0 %v175
    %1210 = vmatpush.msra.mxu0 %v172
    %1211 = vmatpush.msra.mxu0 %v169
    %1212 = vmatpush.msra.mxu0 %v166
    %1213 = vmatpush.msra.mxu0 %v163
    %1214 = vmatpush.msra.mxu0 %v160
    %1215 = vmatpush.msra.mxu0 %v157
    %1216 = vmatpush.msra.mxu0 %v154
    %1217 = vmatpush.msra.mxu0 %v151
    %1218 = vmatpush.msra.mxu0 %v148
    %1219 = vmatpush.msra.mxu0 %v145
    %1220 = vmatpush.msra.mxu0 %v142
    %1221 = vmatpush.msra.mxu0 %v139
    %1222 = vmatmul.f32.gmra.mxu0 %v1201
    %v1223 = vpop.f32.mrf.mxu0
    %v1224 = vadd.f32 %v355, %v1223
    %1225 = vdwg.mxu0
    %1226 = vmatpush.msra.mxu0 %v185
    %1227 = vmatpush.msra.mxu0 %v182
    %1228 = vmatpush.msra.mxu0 %v179
    %1229 = vmatpush.msra.mxu0 %v176
    %1230 = vmatpush.msra.mxu0 %v173
    %1231 = vmatpush.msra.mxu0 %v170
    %1232 = vmatpush.msra.mxu0 %v167
    %1233 = vmatpush.msra.mxu0 %v164
    %1234 = vmatpush.msra.mxu0 %v161
    %1235 = vmatpush.msra.mxu0 %v158
    %1236 = vmatpush.msra.mxu0 %v155
    %1237 = vmatpush.msra.mxu0 %v152
    %1238 = vmatpush.msra.mxu0 %v149
    %1239 = vmatpush.msra.mxu0 %v146
    %1240 = vmatpush.msra.mxu0 %v143
    %1241 = vmatpush.msra.mxu0 %v140
    %1242 = vmatmul.f32.gmra.mxu0 %v1201
    %v1243 = vpop.f32.mrf.mxu0
    %v1244 = vadd.f32 %v356, %v1243
    %1245 = vdwg.mxu0
    %1246 = vmatpush.msra.mxu0 %v186
    %1247 = vmatpush.msra.mxu0 %v183
    %1248 = vmatpush.msra.mxu0 %v180
    %1249 = vmatpush.msra.mxu0 %v177
    %1250 = vmatpush.msra.mxu0 %v174
    %1251 = vmatpush.msra.mxu0 %v171
    %1252 = vmatpush.msra.mxu0 %v168
    %1253 = vmatpush.msra.mxu0 %v165
    %1254 = vmatpush.msra.mxu0 %v162
    %1255 = vmatpush.msra.mxu0 %v159
    %1256 = vmatpush.msra.mxu0 %v156
    %1257 = vmatpush.msra.mxu0 %v153
    %1258 = vmatpush.msra.mxu0 %v150
    %1259 = vmatpush.msra.mxu0 %v147
    %1260 = vmatpush.msra.mxu0 %v144
    %1261 = vmatpush.msra.mxu0 %v141
    %1262 = vmatmul.f32.gmra.mxu0 %v1201
    %v1263 = vpop.f32.mrf.mxu0
    %v1264 = vadd.f32 %v357, %v1263
    %1265 = vdwg.mxu0
    %v1266 = vadd.f32 %v1203, %v1224
    %v1267 = vxor.u32 %v1266, 2147483648
    %v1268 = vmul.f32 %v1267, 1.442695
    %v1269 = vpow.pop %v1268
    %v1270 = vadd.f32 %v1269, 1.0
    %v1271 = vrcp.pop %v1270
    %v1272 = vmul.f32 %v1270, %v1271
    %v1273 = vsub.f32 1.0, %v1272
    %v1274 = vmul.f32 %v1271, %v1273
    %v1275 = vadd.f32 %v1271, %v1274
    %vm1276 = vweird.f32 %v1270
    %vm1277 = vweird.f32 %v1271
    %vm1278 = vmor %vm1276, %vm1277
    %v1279 = vsel %vm1278, %v1271, %v1275
    %v1280 = vand.u32 2147483647, %v1270
    %vm1281 = vcmp.eq.f32.partialorder %v1280, 8.507059e+37
    %v1282 = vand.u32 %v1270, 2147483648
    %v1283 = vor.u32 1.1754944e-38, %v1282
    %v1284 = vsel %vm1281, %v1283, %v1279
    %v1285 = vmul.f32 1.0, %v1284
    %v1286 = vadd.f32 %v1204, %v1244
    %v1287 = vxor.u32 %v1286, 2147483648
    %v1288 = vmul.f32 %v1287, 1.442695
    %v1289 = vpow.pop %v1288
    %v1290 = vadd.f32 %v1289, 1.0
    %v1291 = vrcp.pop %v1290
    %v1292 = vmul.f32 %v1290, %v1291
    %v1293 = vsub.f32 1.0, %v1292
    %v1294 = vmul.f32 %v1291, %v1293
    %v1295 = vadd.f32 %v1291, %v1294
    %vm1296 = vweird.f32 %v1290
    %vm1297 = vweird.f32 %v1291
    %vm1298 = vmor %vm1296, %vm1297
    %v1299 = vsel %vm1298, %v1291, %v1295
    %v1300 = vand.u32 2147483647, %v1290
    %vm1301 = vcmp.eq.f32.partialorder %v1300, 8.507059e+37
    %v1302 = vand.u32 %v1290, 2147483648
    %v1303 = vor.u32 1.1754944e-38, %v1302
    %v1304 = vsel %vm1301, %v1303, %v1299
    %v1305 = vmul.f32 1.0, %v1304
    %v1306 = vmul.f32 %v1285, %v1264
    %v1307 = vadd.f32 %v1205, %v1306
    %v1308 = vtanh.pop %v1307
    %v1309 = vsub.f32 1.0, %v1305
    %v1310 = vmul.f32 %v1309, %v1308
    %v1311 = vmul.f32 %v1305, %v1201
    %v1312 = vadd.f32 %v1310, %v1311
    %vm1313 = vcmp.gt.s32.totalorder %v90, 7
    %v1314 = vsel %vm1313, 1, 0
    %1315 = vset.pattern.permute.xlu0 0
    %1316 = vperm.xlu0 %1315, %v1314
    %v1317 = vpop.permute.xlu0 %1316
    %vm1318 = vcmp.eq.s32.totalorder %v1317, 1
    %v1319 = vsel %vm1318, %v1312, 0.0
    %s1320 = scalar_lea.vmem [#allocation2], 56
    %1321 = vst [vmem:[%s1320] sm:$0xff] %v1319
    %v1322 = vsel %vm1318, %v1312, %v1201
    %1323 = vst [vmem:[#allocation13] sm:$0xff] %v1322
    %s1324 = scalar_lea.vmem [#allocation7], 384
    %v1325 = vld [vmem:[%s1324] sm:$0xff]
    %v1326 = vld [vmem:[%s1324 + $0x8] sm:$0xff]
    %v1327 = vld [vmem:[%s1324 + $0x10] sm:$0xff]
    %v1328 = vld [vmem:[%s1324 + $0x18] sm:$0xff]
    %v1329 = vld [vmem:[%s1324 + $0x20] sm:$0xff]
    %v1330 = vld [vmem:[%s1324 + $0x28] sm:$0xff]
    %v1331 = vld [vmem:[%s1324 + $0x30] sm:$0xff]
    %v1332 = vld [vmem:[%s1324 + $0x38] sm:$0xff]
    %v1333 = vld [vmem:[%s1324 + $0x40] sm:$0xff]
    %v1334 = vld [vmem:[%s1324 + $0x48] sm:$0xff]
    %v1335 = vld [vmem:[%s1324 + $0x50] sm:$0xff]
    %v1336 = vld [vmem:[%s1324 + $0x58] sm:$0xff]
    %v1337 = vld [vmem:[%s1324 + $0x60] sm:$0xff]
    %v1338 = vld [vmem:[%s1324 + $0x68] sm:$0xff]
    %v1339 = vld [vmem:[%s1324 + $0x70] sm:$0xff]
    %v1340 = vld [vmem:[%s1324 + $0x78] sm:$0xff]
    %v1341 = vld [vmem:[%s1324 + $0x80] sm:$0xff]
    %v1342 = vld [vmem:[%s1324 + $0x88] sm:$0xff]
    %v1343 = vld [vmem:[%s1324 + $0x90] sm:$0xff]
    %v1344 = vld [vmem:[%s1324 + $0x98] sm:$0xff]
    %v1345 = vld [vmem:[%s1324 + $0xa0] sm:$0xff]
    %v1346 = vld [vmem:[%s1324 + $0xa8] sm:$0xff]
    %v1347 = vld [vmem:[%s1324 + $0xb0] sm:$0xff]
    %v1348 = vld [vmem:[%s1324 + $0xb8] sm:$0xff]
    %v1349 = vld [vmem:[%s1324 + $0xc0] sm:$0xff]
    %v1350 = vld [vmem:[%s1324 + $0xc8] sm:$0xff]
    %v1351 = vld [vmem:[%s1324 + $0xd0] sm:$0xff]
    %v1352 = vld [vmem:[%s1324 + $0xd8] sm:$0xff]
    %v1353 = vld [vmem:[%s1324 + $0xe0] sm:$0xff]
    %v1354 = vld [vmem:[%s1324 + $0xe8] sm:$0xff]
    %v1355 = vld [vmem:[%s1324 + $0xf0] sm:$0xff]
    %v1356 = vld [vmem:[%s1324 + $0xf8] sm:$0xff]
    %v1357 = vld [vmem:[%s1324 + $0x100] sm:$0xff]
    %v1358 = vld [vmem:[%s1324 + $0x108] sm:$0xff]
    %v1359 = vld [vmem:[%s1324 + $0x110] sm:$0xff]
    %v1360 = vld [vmem:[%s1324 + $0x118] sm:$0xff]
    %v1361 = vld [vmem:[%s1324 + $0x120] sm:$0xff]
    %v1362 = vld [vmem:[%s1324 + $0x128] sm:$0xff]
    %v1363 = vld [vmem:[%s1324 + $0x130] sm:$0xff]
    %v1364 = vld [vmem:[%s1324 + $0x138] sm:$0xff]
    %v1365 = vld [vmem:[%s1324 + $0x140] sm:$0xff]
    %v1366 = vld [vmem:[%s1324 + $0x148] sm:$0xff]
    %v1367 = vld [vmem:[%s1324 + $0x150] sm:$0xff]
    %v1368 = vld [vmem:[%s1324 + $0x158] sm:$0xff]
    %v1369 = vld [vmem:[%s1324 + $0x160] sm:$0xff]
    %v1370 = vld [vmem:[%s1324 + $0x168] sm:$0xff]
    %v1371 = vld [vmem:[%s1324 + $0x170] sm:$0xff]
    %v1372 = vld [vmem:[%s1324 + $0x178] sm:$0xff]
    %s1373 = scalar_lea.vmem [#allocation9], 384
    %v1374 = vld [vmem:[%s1373] sm:$0xff]
    %v1375 = vld [vmem:[%s1373 + $0x8] sm:$0xff]
    %v1376 = vld [vmem:[%s1373 + $0x10] sm:$0xff]
    %v1377 = vld [vmem:[%s1373 + $0x18] sm:$0xff]
    %v1378 = vld [vmem:[%s1373 + $0x20] sm:$0xff]
    %v1379 = vld [vmem:[%s1373 + $0x28] sm:$0xff]
    %v1380 = vld [vmem:[%s1373 + $0x30] sm:$0xff]
    %v1381 = vld [vmem:[%s1373 + $0x38] sm:$0xff]
    %v1382 = vld [vmem:[%s1373 + $0x40] sm:$0xff]
    %v1383 = vld [vmem:[%s1373 + $0x48] sm:$0xff]
    %v1384 = vld [vmem:[%s1373 + $0x50] sm:$0xff]
    %v1385 = vld [vmem:[%s1373 + $0x58] sm:$0xff]
    %v1386 = vld [vmem:[%s1373 + $0x60] sm:$0xff]
    %v1387 = vld [vmem:[%s1373 + $0x68] sm:$0xff]
    %v1388 = vld [vmem:[%s1373 + $0x70] sm:$0xff]
    %v1389 = vld [vmem:[%s1373 + $0x78] sm:$0xff]
    %v1390 = vld [vmem:[%s1373 + $0x80] sm:$0xff]
    %v1391 = vld [vmem:[%s1373 + $0x88] sm:$0xff]
    %v1392 = vld [vmem:[%s1373 + $0x90] sm:$0xff]
    %v1393 = vld [vmem:[%s1373 + $0x98] sm:$0xff]
    %v1394 = vld [vmem:[%s1373 + $0xa0] sm:$0xff]
    %v1395 = vld [vmem:[%s1373 + $0xa8] sm:$0xff]
    %v1396 = vld [vmem:[%s1373 + $0xb0] sm:$0xff]
    %v1397 = vld [vmem:[%s1373 + $0xb8] sm:$0xff]
    %v1398 = vld [vmem:[%s1373 + $0xc0] sm:$0xff]
    %v1399 = vld [vmem:[%s1373 + $0xc8] sm:$0xff]
    %v1400 = vld [vmem:[%s1373 + $0xd0] sm:$0xff]
    %v1401 = vld [vmem:[%s1373 + $0xd8] sm:$0xff]
    %v1402 = vld [vmem:[%s1373 + $0xe0] sm:$0xff]
    %v1403 = vld [vmem:[%s1373 + $0xe8] sm:$0xff]
    %v1404 = vld [vmem:[%s1373 + $0xf0] sm:$0xff]
    %v1405 = vld [vmem:[%s1373 + $0xf8] sm:$0xff]
    %v1406 = vld [vmem:[%s1373 + $0x100] sm:$0xff]
    %v1407 = vld [vmem:[%s1373 + $0x108] sm:$0xff]
    %v1408 = vld [vmem:[%s1373 + $0x110] sm:$0xff]
    %v1409 = vld [vmem:[%s1373 + $0x118] sm:$0xff]
    %v1410 = vld [vmem:[%s1373 + $0x120] sm:$0xff]
    %v1411 = vld [vmem:[%s1373 + $0x128] sm:$0xff]
    %v1412 = vld [vmem:[%s1373 + $0x130] sm:$0xff]
    %v1413 = vld [vmem:[%s1373 + $0x138] sm:$0xff]
    %v1414 = vld [vmem:[%s1373 + $0x140] sm:$0xff]
    %v1415 = vld [vmem:[%s1373 + $0x148] sm:$0xff]
    %v1416 = vld [vmem:[%s1373 + $0x150] sm:$0xff]
    %v1417 = vld [vmem:[%s1373 + $0x158] sm:$0xff]
    %v1418 = vld [vmem:[%s1373 + $0x160] sm:$0xff]
    %v1419 = vld [vmem:[%s1373 + $0x168] sm:$0xff]
    %v1420 = vld [vmem:[%s1373 + $0x170] sm:$0xff]
    %v1421 = vld [vmem:[%s1373 + $0x178] sm:$0xff]
    %s1422 = scalar_lea.vmem %s4, 3
    %v1423 = vld [vmem:[%s1422] sm:$0x7]
    %s1424 = scalar_lea.vmem [#allocation10], 3
    %v1425 = vld [vmem:[%s1424] sm:$0x7]
    %v1426 = vld [vmem:[#allocation2] sm:$0xff]
    %v1427 = vld [vmem:[#allocation2 + $0x8] sm:$0xff]
    %v1428 = vld [vmem:[#allocation2 + $0x10] sm:$0xff]
    %v1429 = vld [vmem:[#allocation2 + $0x18] sm:$0xff]
    %v1430 = vld [vmem:[#allocation2 + $0x20] sm:$0xff]
    %v1431 = vld [vmem:[#allocation2 + $0x28] sm:$0xff]
    %v1432 = vld [vmem:[#allocation2 + $0x30] sm:$0xff]
    %v1433 = vld [vmem:[#allocation2 + $0x38] sm:$0xff]
    %v1435 = vperm.slane %v1423, 0
    %v1436 = vperm.slane %v1423, 1
    %v1437 = vperm.slane %v1423, 2
    %1441 = vmatpush.msra.mxu0 %v1370
    %1442 = vmatpush.msra.mxu0 %v1367
    %1443 = vmatpush.msra.mxu0 %v1364
    %1444 = vmatpush.msra.mxu0 %v1361
    %1445 = vmatpush.msra.mxu0 %v1358
    %1446 = vmatpush.msra.mxu0 %v1355
    %1447 = vmatpush.msra.mxu0 %v1352
    %1448 = vmatpush.msra.mxu0 %v1349
    %1449 = vmatpush.msra.mxu0 %v1346
    %1450 = vmatpush.msra.mxu0 %v1343
    %1451 = vmatpush.msra.mxu0 %v1340
    %1452 = vmatpush.msra.mxu0 %v1337
    %1453 = vmatpush.msra.mxu0 %v1334
    %1454 = vmatpush.msra.mxu0 %v1331
    %1455 = vmatpush.msra.mxu0 %v1328
    %1456 = vmatpush.msra.mxu0 %v1325
    %1457 = vmatmul.f32.gmra.mxu0 %v1426
    %v1458 = vpop.f32.mrf.mxu0
    %v1459 = vadd.f32 %v1435, %v1458
    %1460 = vmatmul.f32.gmra.mxu0 %v1427
    %v1461 = vpop.f32.mrf.mxu0
    %v1462 = vadd.f32 %v1435, %v1461
    %1463 = vmatmul.f32.gmra.mxu0 %v1428
    %v1464 = vpop.f32.mrf.mxu0
    %v1465 = vadd.f32 %v1435, %v1464
    %1466 = vmatmul.f32.gmra.mxu0 %v1429
    %v1467 = vpop.f32.mrf.mxu0
    %v1468 = vadd.f32 %v1435, %v1467
    %1469 = vmatmul.f32.gmra.mxu0 %v1430
    %v1470 = vpop.f32.mrf.mxu0
    %v1471 = vadd.f32 %v1435, %v1470
    %1472 = vmatmul.f32.gmra.mxu0 %v1431
    %v1473 = vpop.f32.mrf.mxu0
    %v1474 = vadd.f32 %v1435, %v1473
    %1475 = vmatmul.f32.gmra.mxu0 %v1432
    %v1476 = vpop.f32.mrf.mxu0
    %v1477 = vadd.f32 %v1435, %v1476
    %1478 = vmatmul.f32.gmra.mxu0 %v1433
    %v1479 = vpop.f32.mrf.mxu0
    %v1480 = vadd.f32 %v1435, %v1479
    %1481 = vdwg.mxu0
    %1482 = vmatpush.msra.mxu0 %v1371
    %1483 = vmatpush.msra.mxu0 %v1368
    %1484 = vmatpush.msra.mxu0 %v1365
    %1485 = vmatpush.msra.mxu0 %v1362
    %1486 = vmatpush.msra.mxu0 %v1359
    %1487 = vmatpush.msra.mxu0 %v1356
    %1488 = vmatpush.msra.mxu0 %v1353
    %1489 = vmatpush.msra.mxu0 %v1350
    %1490 = vmatpush.msra.mxu0 %v1347
    %1491 = vmatpush.msra.mxu0 %v1344
    %1492 = vmatpush.msra.mxu0 %v1341
    %1493 = vmatpush.msra.mxu0 %v1338
    %1494 = vmatpush.msra.mxu0 %v1335
    %1495 = vmatpush.msra.mxu0 %v1332
    %1496 = vmatpush.msra.mxu0 %v1329
    %1497 = vmatpush.msra.mxu0 %v1326
    %1498 = vmatmul.f32.gmra.mxu0 %v1426
    %v1499 = vpop.f32.mrf.mxu0
    %v1500 = vadd.f32 %v1436, %v1499
    %1501 = vmatmul.f32.gmra.mxu0 %v1427
    %v1502 = vpop.f32.mrf.mxu0
    %v1503 = vadd.f32 %v1436, %v1502
    %1504 = vmatmul.f32.gmra.mxu0 %v1428
    %v1505 = vpop.f32.mrf.mxu0
    %v1506 = vadd.f32 %v1436, %v1505
    %1507 = vmatmul.f32.gmra.mxu0 %v1429
    %v1508 = vpop.f32.mrf.mxu0
    %v1509 = vadd.f32 %v1436, %v1508
    %1510 = vmatmul.f32.gmra.mxu0 %v1430
    %v1511 = vpop.f32.mrf.mxu0
    %v1512 = vadd.f32 %v1436, %v1511
    %1513 = vmatmul.f32.gmra.mxu0 %v1431
    %v1514 = vpop.f32.mrf.mxu0
    %v1515 = vadd.f32 %v1436, %v1514
    %1516 = vmatmul.f32.gmra.mxu0 %v1432
    %v1517 = vpop.f32.mrf.mxu0
    %v1518 = vadd.f32 %v1436, %v1517
    %1519 = vmatmul.f32.gmra.mxu0 %v1433
    %v1520 = vpop.f32.mrf.mxu0
    %v1521 = vadd.f32 %v1436, %v1520
    %1522 = vdwg.mxu0
    %1523 = vmatpush.msra.mxu0 %v1372
    %1524 = vmatpush.msra.mxu0 %v1369
    %1525 = vmatpush.msra.mxu0 %v1366
    %1526 = vmatpush.msra.mxu0 %v1363
    %1527 = vmatpush.msra.mxu0 %v1360
    %1528 = vmatpush.msra.mxu0 %v1357
    %1529 = vmatpush.msra.mxu0 %v1354
    %1530 = vmatpush.msra.mxu0 %v1351
    %1531 = vmatpush.msra.mxu0 %v1348
    %1532 = vmatpush.msra.mxu0 %v1345
    %1533 = vmatpush.msra.mxu0 %v1342
    %1534 = vmatpush.msra.mxu0 %v1339
    %1535 = vmatpush.msra.mxu0 %v1336
    %1536 = vmatpush.msra.mxu0 %v1333
    %1537 = vmatpush.msra.mxu0 %v1330
    %1538 = vmatpush.msra.mxu0 %v1327
    %1539 = vmatmul.f32.gmra.mxu0 %v1426
    %v1540 = vpop.f32.mrf.mxu0
    %v1541 = vadd.f32 %v1437, %v1540
    %1542 = vmatmul.f32.gmra.mxu0 %v1427
    %v1543 = vpop.f32.mrf.mxu0
    %v1544 = vadd.f32 %v1437, %v1543
    %1545 = vmatmul.f32.gmra.mxu0 %v1428
    %v1546 = vpop.f32.mrf.mxu0
    %v1547 = vadd.f32 %v1437, %v1546
    %1548 = vmatmul.f32.gmra.mxu0 %v1429
    %v1549 = vpop.f32.mrf.mxu0
    %v1550 = vadd.f32 %v1437, %v1549
    %1551 = vmatmul.f32.gmra.mxu0 %v1430
    %v1552 = vpop.f32.mrf.mxu0
    %v1553 = vadd.f32 %v1437, %v1552
    %1554 = vmatmul.f32.gmra.mxu0 %v1431
    %v1555 = vpop.f32.mrf.mxu0
    %v1556 = vadd.f32 %v1437, %v1555
    %1557 = vmatmul.f32.gmra.mxu0 %v1432
    %v1558 = vpop.f32.mrf.mxu0
    %v1559 = vadd.f32 %v1437, %v1558
    %1560 = vmatmul.f32.gmra.mxu0 %v1433
    %v1561 = vpop.f32.mrf.mxu0
    %v1562 = vadd.f32 %v1437, %v1561
    %1563 = vdwg.mxu0
    %1564 = vst [vmem:[#allocation3] sm:$0xff] %v1459
    %1565 = vst [vmem:[#allocation3 + $0x8] sm:$0xff] %v1500
    %1566 = vst [vmem:[#allocation3 + $0x10] sm:$0xff] %v1541
    %1567 = vst [vmem:[#allocation3 + $0x18] sm:$0xff] %v1462
    %1568 = vst [vmem:[#allocation3 + $0x20] sm:$0xff] %v1503
    %1569 = vst [vmem:[#allocation3 + $0x28] sm:$0xff] %v1544
    %1570 = vst [vmem:[#allocation3 + $0x30] sm:$0xff] %v1465
    %1571 = vst [vmem:[#allocation3 + $0x38] sm:$0xff] %v1506
    %1572 = vst [vmem:[#allocation3 + $0x40] sm:$0xff] %v1547
    %1573 = vst [vmem:[#allocation3 + $0x48] sm:$0xff] %v1468
    %1574 = vst [vmem:[#allocation3 + $0x50] sm:$0xff] %v1509
    %1575 = vst [vmem:[#allocation3 + $0x58] sm:$0xff] %v1550
    %1576 = vst [vmem:[#allocation3 + $0x60] sm:$0xff] %v1471
    %1577 = vst [vmem:[#allocation3 + $0x68] sm:$0xff] %v1512
    %1578 = vst [vmem:[#allocation3 + $0x70] sm:$0xff] %v1553
    %1579 = vst [vmem:[#allocation3 + $0x78] sm:$0xff] %v1474
    %1580 = vst [vmem:[#allocation3 + $0x80] sm:$0xff] %v1515
    %1581 = vst [vmem:[#allocation3 + $0x88] sm:$0xff] %v1556
    %1582 = vst [vmem:[#allocation3 + $0x90] sm:$0xff] %v1477
    %1583 = vst [vmem:[#allocation3 + $0x98] sm:$0xff] %v1518
    %1584 = vst [vmem:[#allocation3 + $0xa0] sm:$0xff] %v1559
    %1585 = vst [vmem:[#allocation3 + $0xa8] sm:$0xff] %v1480
    %1586 = vst [vmem:[#allocation3 + $0xb0] sm:$0xff] %v1521
    %1587 = vst [vmem:[#allocation3 + $0xb8] sm:$0xff] %v1562
    %v1588 = vld [vmem:[#allocation3] sm:$0xff]
    %v1589 = vld [vmem:[#allocation3 + $0x8] sm:$0xff]
    %v1590 = vld [vmem:[#allocation3 + $0x10] sm:$0xff]
    %v1592 = vperm.slane %v1425, 0
    %v1593 = vperm.slane %v1425, 1
    %v1594 = vperm.slane %v1425, 2
    %1598 = vmatpush.msra.mxu0 %v1419
    %1599 = vmatpush.msra.mxu0 %v1416
    %1600 = vmatpush.msra.mxu0 %v1413
    %1601 = vmatpush.msra.mxu0 %v1410
    %1602 = vmatpush.msra.mxu0 %v1407
    %1603 = vmatpush.msra.mxu0 %v1404
    %1604 = vmatpush.msra.mxu0 %v1401
    %1605 = vmatpush.msra.mxu0 %v1398
    %1606 = vmatpush.msra.mxu0 %v1395
    %1607 = vmatpush.msra.mxu0 %v1392
    %1608 = vmatpush.msra.mxu0 %v1389
    %1609 = vmatpush.msra.mxu0 %v1386
    %1610 = vmatpush.msra.mxu0 %v1383
    %1611 = vmatpush.msra.mxu0 %v1380
    %1612 = vmatpush.msra.mxu0 %v1377
    %1613 = vmatpush.msra.mxu0 %v1374
    %1614 = vmatmul.f32.gmra.mxu0 0.0
    %v1615 = vpop.f32.mrf.mxu0
    %v1616 = vadd.f32 %v1592, %v1615
    %1617 = vdwg.mxu0
    %1618 = vmatpush.msra.mxu0 %v1420
    %1619 = vmatpush.msra.mxu0 %v1417
    %1620 = vmatpush.msra.mxu0 %v1414
    %1621 = vmatpush.msra.mxu0 %v1411
    %1622 = vmatpush.msra.mxu0 %v1408
    %1623 = vmatpush.msra.mxu0 %v1405
    %1624 = vmatpush.msra.mxu0 %v1402
    %1625 = vmatpush.msra.mxu0 %v1399
    %1626 = vmatpush.msra.mxu0 %v1396
    %1627 = vmatpush.msra.mxu0 %v1393
    %1628 = vmatpush.msra.mxu0 %v1390
    %1629 = vmatpush.msra.mxu0 %v1387
    %1630 = vmatpush.msra.mxu0 %v1384
    %1631 = vmatpush.msra.mxu0 %v1381
    %1632 = vmatpush.msra.mxu0 %v1378
    %1633 = vmatpush.msra.mxu0 %v1375
    %1634 = vmatmul.f32.gmra.mxu0 0.0
    %v1635 = vpop.f32.mrf.mxu0
    %v1636 = vadd.f32 %v1593, %v1635
    %1637 = vdwg.mxu0
    %1638 = vmatpush.msra.mxu0 %v1421
    %1639 = vmatpush.msra.mxu0 %v1418
    %1640 = vmatpush.msra.mxu0 %v1415
    %1641 = vmatpush.msra.mxu0 %v1412
    %1642 = vmatpush.msra.mxu0 %v1409
    %1643 = vmatpush.msra.mxu0 %v1406
    %1644 = vmatpush.msra.mxu0 %v1403
    %1645 = vmatpush.msra.mxu0 %v1400
    %1646 = vmatpush.msra.mxu0 %v1397
    %1647 = vmatpush.msra.mxu0 %v1394
    %1648 = vmatpush.msra.mxu0 %v1391
    %1649 = vmatpush.msra.mxu0 %v1388
    %1650 = vmatpush.msra.mxu0 %v1385
    %1651 = vmatpush.msra.mxu0 %v1382
    %1652 = vmatpush.msra.mxu0 %v1379
    %1653 = vmatpush.msra.mxu0 %v1376
    %1654 = vmatmul.f32.gmra.mxu0 0.0
    %v1655 = vpop.f32.mrf.mxu0
    %v1656 = vadd.f32 %v1594, %v1655
    %1657 = vdwg.mxu0
    %v1658 = vadd.f32 %v1588, %v1616
    %v1659 = vxor.u32 %v1658, 2147483648
    %v1660 = vmul.f32 %v1659, 1.442695
    %v1661 = vpow.pop %v1660
    %v1662 = vadd.f32 %v1661, 1.0
    %v1663 = vrcp.pop %v1662
    %v1664 = vmul.f32 %v1662, %v1663
    %v1665 = vsub.f32 1.0, %v1664
    %v1666 = vmul.f32 %v1663, %v1665
    %v1667 = vadd.f32 %v1663, %v1666
    %vm1668 = vweird.f32 %v1662
    %vm1669 = vweird.f32 %v1663
    %vm1670 = vmor %vm1668, %vm1669
    %v1671 = vsel %vm1670, %v1663, %v1667
    %v1672 = vand.u32 2147483647, %v1662
    %vm1673 = vcmp.eq.f32.partialorder %v1672, 8.507059e+37
    %v1674 = vand.u32 %v1662, 2147483648
    %v1675 = vor.u32 1.1754944e-38, %v1674
    %v1676 = vsel %vm1673, %v1675, %v1671
    %v1677 = vmul.f32 1.0, %v1676
    %v1678 = vadd.f32 %v1589, %v1636
    %v1679 = vxor.u32 %v1678, 2147483648
    %v1680 = vmul.f32 %v1679, 1.442695
    %v1681 = vpow.pop %v1680
    %v1682 = vadd.f32 %v1681, 1.0
    %v1683 = vrcp.pop %v1682
    %v1684 = vmul.f32 %v1682, %v1683
    %v1685 = vsub.f32 1.0, %v1684
    %v1686 = vmul.f32 %v1683, %v1685
    %v1687 = vadd.f32 %v1683, %v1686
    %vm1688 = vweird.f32 %v1682
    %vm1689 = vweird.f32 %v1683
    %vm1690 = vmor %vm1688, %vm1689
    %v1691 = vsel %vm1690, %v1683, %v1687
    %v1692 = vand.u32 2147483647, %v1682
    %vm1693 = vcmp.eq.f32.partialorder %v1692, 8.507059e+37
    %v1694 = vand.u32 %v1682, 2147483648
    %v1695 = vor.u32 1.1754944e-38, %v1694
    %v1696 = vsel %vm1693, %v1695, %v1691
    %v1697 = vmul.f32 1.0, %v1696
    %v1698 = vmul.f32 %v1677, %v1656
    %v1699 = vadd.f32 %v1590, %v1698
    %v1700 = vtanh.pop %v1699
    %v1701 = vsub.f32 1.0, %v1697
    %v1702 = vmul.f32 %v1701, %v1700
    %v1703 = vmul.f32 %v1697, 0.0
    %v1704 = vadd.f32 %v1702, %v1703
    %v1705 = vsel %vm473, %v1704, 0.0
    %1706 = vst [vmem:[#allocation12] sm:$0xff] %v1705
    %v1707 = vld [vmem:[%s476] sm:$0xff]
    %v1708 = vld [vmem:[%s476 + $0x8] sm:$0xff]
    %v1709 = vld [vmem:[%s476 + $0x10] sm:$0xff]
    %1710 = vmatpush.msra.mxu0 %v1419
    %1711 = vmatpush.msra.mxu0 %v1416
    %1712 = vmatpush.msra.mxu0 %v1413
    %1713 = vmatpush.msra.mxu0 %v1410
    %1714 = vmatpush.msra.mxu0 %v1407
    %1715 = vmatpush.msra.mxu0 %v1404
    %1716 = vmatpush.msra.mxu0 %v1401
    %1717 = vmatpush.msra.mxu0 %v1398
    %1718 = vmatpush.msra.mxu0 %v1395
    %1719 = vmatpush.msra.mxu0 %v1392
    %1720 = vmatpush.msra.mxu0 %v1389
    %1721 = vmatpush.msra.mxu0 %v1386
    %1722 = vmatpush.msra.mxu0 %v1383
    %1723 = vmatpush.msra.mxu0 %v1380
    %1724 = vmatpush.msra.mxu0 %v1377
    %1725 = vmatpush.msra.mxu0 %v1374
    %1726 = vmatmul.f32.gmra.mxu0 %v1705
    %v1727 = vpop.f32.mrf.mxu0
    %v1728 = vadd.f32 %v1592, %v1727
    %1729 = vdwg.mxu0
    %1730 = vmatpush.msra.mxu0 %v1420
    %1731 = vmatpush.msra.mxu0 %v1417
    %1732 = vmatpush.msra.mxu0 %v1414
    %1733 = vmatpush.msra.mxu0 %v1411
    %1734 = vmatpush.msra.mxu0 %v1408
    %1735 = vmatpush.msra.mxu0 %v1405
    %1736 = vmatpush.msra.mxu0 %v1402
    %1737 = vmatpush.msra.mxu0 %v1399
    %1738 = vmatpush.msra.mxu0 %v1396
    %1739 = vmatpush.msra.mxu0 %v1393
    %1740 = vmatpush.msra.mxu0 %v1390
    %1741 = vmatpush.msra.mxu0 %v1387
    %1742 = vmatpush.msra.mxu0 %v1384
    %1743 = vmatpush.msra.mxu0 %v1381
    %1744 = vmatpush.msra.mxu0 %v1378
    %1745 = vmatpush.msra.mxu0 %v1375
    %1746 = vmatmul.f32.gmra.mxu0 %v1705
    %v1747 = vpop.f32.mrf.mxu0
    %v1748 = vadd.f32 %v1593, %v1747
    %1749 = vdwg.mxu0
    %1750 = vmatpush.msra.mxu0 %v1421
    %1751 = vmatpush.msra.mxu0 %v1418
    %1752 = vmatpush.msra.mxu0 %v1415
    %1753 = vmatpush.msra.mxu0 %v1412
    %1754 = vmatpush.msra.mxu0 %v1409
    %1755 = vmatpush.msra.mxu0 %v1406
    %1756 = vmatpush.msra.mxu0 %v1403
    %1757 = vmatpush.msra.mxu0 %v1400
    %1758 = vmatpush.msra.mxu0 %v1397
    %1759 = vmatpush.msra.mxu0 %v1394
    %1760 = vmatpush.msra.mxu0 %v1391
    %1761 = vmatpush.msra.mxu0 %v1388
    %1762 = vmatpush.msra.mxu0 %v1385
    %1763 = vmatpush.msra.mxu0 %v1382
    %1764 = vmatpush.msra.mxu0 %v1379
    %1765 = vmatpush.msra.mxu0 %v1376
    %1766 = vmatmul.f32.gmra.mxu0 %v1705
    %v1767 = vpop.f32.mrf.mxu0
    %v1768 = vadd.f32 %v1594, %v1767
    %1769 = vdwg.mxu0
    %v1770 = vadd.f32 %v1707, %v1728
    %v1771 = vxor.u32 %v1770, 2147483648
    %v1772 = vmul.f32 %v1771, 1.442695
    %v1773 = vpow.pop %v1772
    %v1774 = vadd.f32 %v1773, 1.0
    %v1775 = vrcp.pop %v1774
    %v1776 = vmul.f32 %v1774, %v1775
    %v1777 = vsub.f32 1.0, %v1776
    %v1778 = vmul.f32 %v1775, %v1777
    %v1779 = vadd.f32 %v1775, %v1778
    %vm1780 = vweird.f32 %v1774
    %vm1781 = vweird.f32 %v1775
    %vm1782 = vmor %vm1780, %vm1781
    %v1783 = vsel %vm1782, %v1775, %v1779
    %v1784 = vand.u32 2147483647, %v1774
    %vm1785 = vcmp.eq.f32.partialorder %v1784, 8.507059e+37
    %v1786 = vand.u32 %v1774, 2147483648
    %v1787 = vor.u32 1.1754944e-38, %v1786
    %v1788 = vsel %vm1785, %v1787, %v1783
    %v1789 = vmul.f32 1.0, %v1788
    %v1790 = vadd.f32 %v1708, %v1748
    %v1791 = vxor.u32 %v1790, 2147483648
    %v1792 = vmul.f32 %v1791, 1.442695
    %v1793 = vpow.pop %v1792
    %v1794 = vadd.f32 %v1793, 1.0
    %v1795 = vrcp.pop %v1794
    %v1796 = vmul.f32 %v1794, %v1795
    %v1797 = vsub.f32 1.0, %v1796
    %v1798 = vmul.f32 %v1795, %v1797
    %v1799 = vadd.f32 %v1795, %v1798
    %vm1800 = vweird.f32 %v1794
    %vm1801 = vweird.f32 %v1795
    %vm1802 = vmor %vm1800, %vm1801
    %v1803 = vsel %vm1802, %v1795, %v1799
    %v1804 = vand.u32 2147483647, %v1794
    %vm1805 = vcmp.eq.f32.partialorder %v1804, 8.507059e+37
    %v1806 = vand.u32 %v1794, 2147483648
    %v1807 = vor.u32 1.1754944e-38, %v1806
    %v1808 = vsel %vm1805, %v1807, %v1803
    %v1809 = vmul.f32 1.0, %v1808
    %v1810 = vmul.f32 %v1789, %v1768
    %v1811 = vadd.f32 %v1709, %v1810
    %v1812 = vtanh.pop %v1811
    %v1813 = vsub.f32 1.0, %v1809
    %v1814 = vmul.f32 %v1813, %v1812
    %v1815 = vmul.f32 %v1809, %v1705
    %v1816 = vadd.f32 %v1814, %v1815
    %v1817 = vsel %vm592, %v1816, 0.0
    %s1818 = scalar_lea.vmem [#allocation12], 8
    %1819 = vst [vmem:[%s1818] sm:$0xff] %v1817
    %v1820 = vsel %vm592, %v1816, %v1705
    %v1821 = vld [vmem:[%s597] sm:$0xff]
    %v1822 = vld [vmem:[%s597 + $0x8] sm:$0xff]
    %v1823 = vld [vmem:[%s597 + $0x10] sm:$0xff]
    %1824 = vmatpush.msra.mxu0 %v1419
    %1825 = vmatpush.msra.mxu0 %v1416
    %1826 = vmatpush.msra.mxu0 %v1413
    %1827 = vmatpush.msra.mxu0 %v1410
    %1828 = vmatpush.msra.mxu0 %v1407
    %1829 = vmatpush.msra.mxu0 %v1404
    %1830 = vmatpush.msra.mxu0 %v1401
    %1831 = vmatpush.msra.mxu0 %v1398
    %1832 = vmatpush.msra.mxu0 %v1395
    %1833 = vmatpush.msra.mxu0 %v1392
    %1834 = vmatpush.msra.mxu0 %v1389
    %1835 = vmatpush.msra.mxu0 %v1386
    %1836 = vmatpush.msra.mxu0 %v1383
    %1837 = vmatpush.msra.mxu0 %v1380
    %1838 = vmatpush.msra.mxu0 %v1377
    %1839 = vmatpush.msra.mxu0 %v1374
    %1840 = vmatmul.f32.gmra.mxu0 %v1820
    %v1841 = vpop.f32.mrf.mxu0
    %v1842 = vadd.f32 %v1592, %v1841
    %1843 = vdwg.mxu0
    %1844 = vmatpush.msra.mxu0 %v1420
    %1845 = vmatpush.msra.mxu0 %v1417
    %1846 = vmatpush.msra.mxu0 %v1414
    %1847 = vmatpush.msra.mxu0 %v1411
    %1848 = vmatpush.msra.mxu0 %v1408
    %1849 = vmatpush.msra.mxu0 %v1405
    %1850 = vmatpush.msra.mxu0 %v1402
    %1851 = vmatpush.msra.mxu0 %v1399
    %1852 = vmatpush.msra.mxu0 %v1396
    %1853 = vmatpush.msra.mxu0 %v1393
    %1854 = vmatpush.msra.mxu0 %v1390
    %1855 = vmatpush.msra.mxu0 %v1387
    %1856 = vmatpush.msra.mxu0 %v1384
    %1857 = vmatpush.msra.mxu0 %v1381
    %1858 = vmatpush.msra.mxu0 %v1378
    %1859 = vmatpush.msra.mxu0 %v1375
    %1860 = vmatmul.f32.gmra.mxu0 %v1820
    %v1861 = vpop.f32.mrf.mxu0
    %v1862 = vadd.f32 %v1593, %v1861
    %1863 = vdwg.mxu0
    %1864 = vmatpush.msra.mxu0 %v1421
    %1865 = vmatpush.msra.mxu0 %v1418
    %1866 = vmatpush.msra.mxu0 %v1415
    %1867 = vmatpush.msra.mxu0 %v1412
    %1868 = vmatpush.msra.mxu0 %v1409
    %1869 = vmatpush.msra.mxu0 %v1406
    %1870 = vmatpush.msra.mxu0 %v1403
    %1871 = vmatpush.msra.mxu0 %v1400
    %1872 = vmatpush.msra.mxu0 %v1397
    %1873 = vmatpush.msra.mxu0 %v1394
    %1874 = vmatpush.msra.mxu0 %v1391
    %1875 = vmatpush.msra.mxu0 %v1388
    %1876 = vmatpush.msra.mxu0 %v1385
    %1877 = vmatpush.msra.mxu0 %v1382
    %1878 = vmatpush.msra.mxu0 %v1379
    %1879 = vmatpush.msra.mxu0 %v1376
    %1880 = vmatmul.f32.gmra.mxu0 %v1820
    %v1881 = vpop.f32.mrf.mxu0
    %v1882 = vadd.f32 %v1594, %v1881
    %1883 = vdwg.mxu0
    %v1884 = vadd.f32 %v1821, %v1842
    %v1885 = vxor.u32 %v1884, 2147483648
    %v1886 = vmul.f32 %v1885, 1.442695
    %v1887 = vpow.pop %v1886
    %v1888 = vadd.f32 %v1887, 1.0
    %v1889 = vrcp.pop %v1888
    %v1890 = vmul.f32 %v1888, %v1889
    %v1891 = vsub.f32 1.0, %v1890
    %v1892 = vmul.f32 %v1889, %v1891
    %v1893 = vadd.f32 %v1889, %v1892
    %vm1894 = vweird.f32 %v1888
    %vm1895 = vweird.f32 %v1889
    %vm1896 = vmor %vm1894, %vm1895
    %v1897 = vsel %vm1896, %v1889, %v1893
    %v1898 = vand.u32 2147483647, %v1888
    %vm1899 = vcmp.eq.f32.partialorder %v1898, 8.507059e+37
    %v1900 = vand.u32 %v1888, 2147483648
    %v1901 = vor.u32 1.1754944e-38, %v1900
    %v1902 = vsel %vm1899, %v1901, %v1897
    %v1903 = vmul.f32 1.0, %v1902
    %v1904 = vadd.f32 %v1822, %v1862
    %v1905 = vxor.u32 %v1904, 2147483648
    %v1906 = vmul.f32 %v1905, 1.442695
    %v1907 = vpow.pop %v1906
    %v1908 = vadd.f32 %v1907, 1.0
    %v1909 = vrcp.pop %v1908
    %v1910 = vmul.f32 %v1908, %v1909
    %v1911 = vsub.f32 1.0, %v1910
    %v1912 = vmul.f32 %v1909, %v1911
    %v1913 = vadd.f32 %v1909, %v1912
    %vm1914 = vweird.f32 %v1908
    %vm1915 = vweird.f32 %v1909
    %vm1916 = vmor %vm1914, %vm1915
    %v1917 = vsel %vm1916, %v1909, %v1913
    %v1918 = vand.u32 2147483647, %v1908
    %vm1919 = vcmp.eq.f32.partialorder %v1918, 8.507059e+37
    %v1920 = vand.u32 %v1908, 2147483648
    %v1921 = vor.u32 1.1754944e-38, %v1920
    %v1922 = vsel %vm1919, %v1921, %v1917
    %v1923 = vmul.f32 1.0, %v1922
    %v1924 = vmul.f32 %v1903, %v1882
    %v1925 = vadd.f32 %v1823, %v1924
    %v1926 = vtanh.pop %v1925
    %v1927 = vsub.f32 1.0, %v1923
    %v1928 = vmul.f32 %v1927, %v1926
    %v1929 = vmul.f32 %v1923, %v1820
    %v1930 = vadd.f32 %v1928, %v1929
    %v1931 = vsel %vm713, %v1930, 0.0
    %s1932 = scalar_lea.vmem [#allocation12], 16
    %1933 = vst [vmem:[%s1932] sm:$0xff] %v1931
    %v1934 = vsel %vm713, %v1930, %v1820
    %v1935 = vld [vmem:[%s718] sm:$0xff]
    %v1936 = vld [vmem:[%s718 + $0x8] sm:$0xff]
    %v1937 = vld [vmem:[%s718 + $0x10] sm:$0xff]
    %1938 = vmatpush.msra.mxu0 %v1419
    %1939 = vmatpush.msra.mxu0 %v1416
    %1940 = vmatpush.msra.mxu0 %v1413
    %1941 = vmatpush.msra.mxu0 %v1410
    %1942 = vmatpush.msra.mxu0 %v1407
    %1943 = vmatpush.msra.mxu0 %v1404
    %1944 = vmatpush.msra.mxu0 %v1401
    %1945 = vmatpush.msra.mxu0 %v1398
    %1946 = vmatpush.msra.mxu0 %v1395
    %1947 = vmatpush.msra.mxu0 %v1392
    %1948 = vmatpush.msra.mxu0 %v1389
    %1949 = vmatpush.msra.mxu0 %v1386
    %1950 = vmatpush.msra.mxu0 %v1383
    %1951 = vmatpush.msra.mxu0 %v1380
    %1952 = vmatpush.msra.mxu0 %v1377
    %1953 = vmatpush.msra.mxu0 %v1374
    %1954 = vmatmul.f32.gmra.mxu0 %v1934
    %v1955 = vpop.f32.mrf.mxu0
    %v1956 = vadd.f32 %v1592, %v1955
    %1957 = vdwg.mxu0
    %1958 = vmatpush.msra.mxu0 %v1420
    %1959 = vmatpush.msra.mxu0 %v1417
    %1960 = vmatpush.msra.mxu0 %v1414
    %1961 = vmatpush.msra.mxu0 %v1411
    %1962 = vmatpush.msra.mxu0 %v1408
    %1963 = vmatpush.msra.mxu0 %v1405
    %1964 = vmatpush.msra.mxu0 %v1402
    %1965 = vmatpush.msra.mxu0 %v1399
    %1966 = vmatpush.msra.mxu0 %v1396
    %1967 = vmatpush.msra.mxu0 %v1393
    %1968 = vmatpush.msra.mxu0 %v1390
    %1969 = vmatpush.msra.mxu0 %v1387
    %1970 = vmatpush.msra.mxu0 %v1384
    %1971 = vmatpush.msra.mxu0 %v1381
    %1972 = vmatpush.msra.mxu0 %v1378
    %1973 = vmatpush.msra.mxu0 %v1375
    %1974 = vmatmul.f32.gmra.mxu0 %v1934
    %v1975 = vpop.f32.mrf.mxu0
    %v1976 = vadd.f32 %v1593, %v1975
    %1977 = vdwg.mxu0
    %1978 = vmatpush.msra.mxu0 %v1421
    %1979 = vmatpush.msra.mxu0 %v1418
    %1980 = vmatpush.msra.mxu0 %v1415
    %1981 = vmatpush.msra.mxu0 %v1412
    %1982 = vmatpush.msra.mxu0 %v1409
    %1983 = vmatpush.msra.mxu0 %v1406
    %1984 = vmatpush.msra.mxu0 %v1403
    %1985 = vmatpush.msra.mxu0 %v1400
    %1986 = vmatpush.msra.mxu0 %v1397
    %1987 = vmatpush.msra.mxu0 %v1394
    %1988 = vmatpush.msra.mxu0 %v1391
    %1989 = vmatpush.msra.mxu0 %v1388
    %1990 = vmatpush.msra.mxu0 %v1385
    %1991 = vmatpush.msra.mxu0 %v1382
    %1992 = vmatpush.msra.mxu0 %v1379
    %1993 = vmatpush.msra.mxu0 %v1376
    %1994 = vmatmul.f32.gmra.mxu0 %v1934
    %v1995 = vpop.f32.mrf.mxu0
    %v1996 = vadd.f32 %v1594, %v1995
    %1997 = vdwg.mxu0
    %v1998 = vadd.f32 %v1935, %v1956
    %v1999 = vxor.u32 %v1998, 2147483648
    %v2000 = vmul.f32 %v1999, 1.442695
    %v2001 = vpow.pop %v2000
    %v2002 = vadd.f32 %v2001, 1.0
    %v2003 = vrcp.pop %v2002
    %v2004 = vmul.f32 %v2002, %v2003
    %v2005 = vsub.f32 1.0, %v2004
    %v2006 = vmul.f32 %v2003, %v2005
    %v2007 = vadd.f32 %v2003, %v2006
    %vm2008 = vweird.f32 %v2002
    %vm2009 = vweird.f32 %v2003
    %vm2010 = vmor %vm2008, %vm2009
    %v2011 = vsel %vm2010, %v2003, %v2007
    %v2012 = vand.u32 2147483647, %v2002
    %vm2013 = vcmp.eq.f32.partialorder %v2012, 8.507059e+37
    %v2014 = vand.u32 %v2002, 2147483648
    %v2015 = vor.u32 1.1754944e-38, %v2014
    %v2016 = vsel %vm2013, %v2015, %v2011
    %v2017 = vmul.f32 1.0, %v2016
    %v2018 = vadd.f32 %v1936, %v1976
    %v2019 = vxor.u32 %v2018, 2147483648
    %v2020 = vmul.f32 %v2019, 1.442695
    %v2021 = vpow.pop %v2020
    %v2022 = vadd.f32 %v2021, 1.0
    %v2023 = vrcp.pop %v2022
    %v2024 = vmul.f32 %v2022, %v2023
    %v2025 = vsub.f32 1.0, %v2024
    %v2026 = vmul.f32 %v2023, %v2025
    %v2027 = vadd.f32 %v2023, %v2026
    %vm2028 = vweird.f32 %v2022
    %vm2029 = vweird.f32 %v2023
    %vm2030 = vmor %vm2028, %vm2029
    %v2031 = vsel %vm2030, %v2023, %v2027
    %v2032 = vand.u32 2147483647, %v2022
    %vm2033 = vcmp.eq.f32.partialorder %v2032, 8.507059e+37
    %v2034 = vand.u32 %v2022, 2147483648
    %v2035 = vor.u32 1.1754944e-38, %v2034
    %v2036 = vsel %vm2033, %v2035, %v2031
    %v2037 = vmul.f32 1.0, %v2036
    %v2038 = vmul.f32 %v2017, %v1996
    %v2039 = vadd.f32 %v1937, %v2038
    %v2040 = vtanh.pop %v2039
    %v2041 = vsub.f32 1.0, %v2037
    %v2042 = vmul.f32 %v2041, %v2040
    %v2043 = vmul.f32 %v2037, %v1934
    %v2044 = vadd.f32 %v2042, %v2043
    %v2045 = vsel %vm834, %v2044, 0.0
    %s2046 = scalar_lea.vmem [#allocation12], 24
    %2047 = vst [vmem:[%s2046] sm:$0xff] %v2045
    %v2048 = vsel %vm834, %v2044, %v1934
    %v2049 = vld [vmem:[%s839] sm:$0xff]
    %v2050 = vld [vmem:[%s839 + $0x8] sm:$0xff]
    %v2051 = vld [vmem:[%s839 + $0x10] sm:$0xff]
    %2052 = vmatpush.msra.mxu0 %v1419
    %2053 = vmatpush.msra.mxu0 %v1416
    %2054 = vmatpush.msra.mxu0 %v1413
    %2055 = vmatpush.msra.mxu0 %v1410
    %2056 = vmatpush.msra.mxu0 %v1407
    %2057 = vmatpush.msra.mxu0 %v1404
    %2058 = vmatpush.msra.mxu0 %v1401
    %2059 = vmatpush.msra.mxu0 %v1398
    %2060 = vmatpush.msra.mxu0 %v1395
    %2061 = vmatpush.msra.mxu0 %v1392
    %2062 = vmatpush.msra.mxu0 %v1389
    %2063 = vmatpush.msra.mxu0 %v1386
    %2064 = vmatpush.msra.mxu0 %v1383
    %2065 = vmatpush.msra.mxu0 %v1380
    %2066 = vmatpush.msra.mxu0 %v1377
    %2067 = vmatpush.msra.mxu0 %v1374
    %2068 = vmatmul.f32.gmra.mxu0 %v2048
    %v2069 = vpop.f32.mrf.mxu0
    %v2070 = vadd.f32 %v1592, %v2069
    %2071 = vdwg.mxu0
    %2072 = vmatpush.msra.mxu0 %v1420
    %2073 = vmatpush.msra.mxu0 %v1417
    %2074 = vmatpush.msra.mxu0 %v1414
    %2075 = vmatpush.msra.mxu0 %v1411
    %2076 = vmatpush.msra.mxu0 %v1408
    %2077 = vmatpush.msra.mxu0 %v1405
    %2078 = vmatpush.msra.mxu0 %v1402
    %2079 = vmatpush.msra.mxu0 %v1399
    %2080 = vmatpush.msra.mxu0 %v1396
    %2081 = vmatpush.msra.mxu0 %v1393
    %2082 = vmatpush.msra.mxu0 %v1390
    %2083 = vmatpush.msra.mxu0 %v1387
    %2084 = vmatpush.msra.mxu0 %v1384
    %2085 = vmatpush.msra.mxu0 %v1381
    %2086 = vmatpush.msra.mxu0 %v1378
    %2087 = vmatpush.msra.mxu0 %v1375
    %2088 = vmatmul.f32.gmra.mxu0 %v2048
    %v2089 = vpop.f32.mrf.mxu0
    %v2090 = vadd.f32 %v1593, %v2089
    %2091 = vdwg.mxu0
    %2092 = vmatpush.msra.mxu0 %v1421
    %2093 = vmatpush.msra.mxu0 %v1418
    %2094 = vmatpush.msra.mxu0 %v1415
    %2095 = vmatpush.msra.mxu0 %v1412
    %2096 = vmatpush.msra.mxu0 %v1409
    %2097 = vmatpush.msra.mxu0 %v1406
    %2098 = vmatpush.msra.mxu0 %v1403
    %2099 = vmatpush.msra.mxu0 %v1400
    %2100 = vmatpush.msra.mxu0 %v1397
    %2101 = vmatpush.msra.mxu0 %v1394
    %2102 = vmatpush.msra.mxu0 %v1391
    %2103 = vmatpush.msra.mxu0 %v1388
    %2104 = vmatpush.msra.mxu0 %v1385
    %2105 = vmatpush.msra.mxu0 %v1382
    %2106 = vmatpush.msra.mxu0 %v1379
    %2107 = vmatpush.msra.mxu0 %v1376
    %2108 = vmatmul.f32.gmra.mxu0 %v2048
    %v2109 = vpop.f32.mrf.mxu0
    %v2110 = vadd.f32 %v1594, %v2109
    %2111 = vdwg.mxu0
    %v2112 = vadd.f32 %v2049, %v2070
    %v2113 = vxor.u32 %v2112, 2147483648
    %v2114 = vmul.f32 %v2113, 1.442695
    %v2115 = vpow.pop %v2114
    %v2116 = vadd.f32 %v2115, 1.0
    %v2117 = vrcp.pop %v2116
    %v2118 = vmul.f32 %v2116, %v2117
    %v2119 = vsub.f32 1.0, %v2118
    %v2120 = vmul.f32 %v2117, %v2119
    %v2121 = vadd.f32 %v2117, %v2120
    %vm2122 = vweird.f32 %v2116
    %vm2123 = vweird.f32 %v2117
    %vm2124 = vmor %vm2122, %vm2123
    %v2125 = vsel %vm2124, %v2117, %v2121
    %v2126 = vand.u32 2147483647, %v2116
    %vm2127 = vcmp.eq.f32.partialorder %v2126, 8.507059e+37
    %v2128 = vand.u32 %v2116, 2147483648
    %v2129 = vor.u32 1.1754944e-38, %v2128
    %v2130 = vsel %vm2127, %v2129, %v2125
    %v2131 = vmul.f32 1.0, %v2130
    %v2132 = vadd.f32 %v2050, %v2090
    %v2133 = vxor.u32 %v2132, 2147483648
    %v2134 = vmul.f32 %v2133, 1.442695
    %v2135 = vpow.pop %v2134
    %v2136 = vadd.f32 %v2135, 1.0
    %v2137 = vrcp.pop %v2136
    %v2138 = vmul.f32 %v2136, %v2137
    %v2139 = vsub.f32 1.0, %v2138
    %v2140 = vmul.f32 %v2137, %v2139
    %v2141 = vadd.f32 %v2137, %v2140
    %vm2142 = vweird.f32 %v2136
    %vm2143 = vweird.f32 %v2137
    %vm2144 = vmor %vm2142, %vm2143
    %v2145 = vsel %vm2144, %v2137, %v2141
    %v2146 = vand.u32 2147483647, %v2136
    %vm2147 = vcmp.eq.f32.partialorder %v2146, 8.507059e+37
    %v2148 = vand.u32 %v2136, 2147483648
    %v2149 = vor.u32 1.1754944e-38, %v2148
    %v2150 = vsel %vm2147, %v2149, %v2145
    %v2151 = vmul.f32 1.0, %v2150
    %v2152 = vmul.f32 %v2131, %v2110
    %v2153 = vadd.f32 %v2051, %v2152
    %v2154 = vtanh.pop %v2153
    %v2155 = vsub.f32 1.0, %v2151
    %v2156 = vmul.f32 %v2155, %v2154
    %v2157 = vmul.f32 %v2151, %v2048
    %v2158 = vadd.f32 %v2156, %v2157
    %v2159 = vsel %vm955, %v2158, 0.0
    %s2160 = scalar_lea.vmem [#allocation12], 32
    %2161 = vst [vmem:[%s2160] sm:$0xff] %v2159
    %v2162 = vsel %vm955, %v2158, %v2048
    %v2163 = vld [vmem:[%s960] sm:$0xff]
    %v2164 = vld [vmem:[%s960 + $0x8] sm:$0xff]
    %v2165 = vld [vmem:[%s960 + $0x10] sm:$0xff]
    %2166 = vmatpush.msra.mxu0 %v1419
    %2167 = vmatpush.msra.mxu0 %v1416
    %2168 = vmatpush.msra.mxu0 %v1413
    %2169 = vmatpush.msra.mxu0 %v1410
    %2170 = vmatpush.msra.mxu0 %v1407
    %2171 = vmatpush.msra.mxu0 %v1404
    %2172 = vmatpush.msra.mxu0 %v1401
    %2173 = vmatpush.msra.mxu0 %v1398
    %2174 = vmatpush.msra.mxu0 %v1395
    %2175 = vmatpush.msra.mxu0 %v1392
    %2176 = vmatpush.msra.mxu0 %v1389
    %2177 = vmatpush.msra.mxu0 %v1386
    %2178 = vmatpush.msra.mxu0 %v1383
    %2179 = vmatpush.msra.mxu0 %v1380
    %2180 = vmatpush.msra.mxu0 %v1377
    %2181 = vmatpush.msra.mxu0 %v1374
    %2182 = vmatmul.f32.gmra.mxu0 %v2162
    %v2183 = vpop.f32.mrf.mxu0
    %v2184 = vadd.f32 %v1592, %v2183
    %2185 = vdwg.mxu0
    %2186 = vmatpush.msra.mxu0 %v1420
    %2187 = vmatpush.msra.mxu0 %v1417
    %2188 = vmatpush.msra.mxu0 %v1414
    %2189 = vmatpush.msra.mxu0 %v1411
    %2190 = vmatpush.msra.mxu0 %v1408
    %2191 = vmatpush.msra.mxu0 %v1405
    %2192 = vmatpush.msra.mxu0 %v1402
    %2193 = vmatpush.msra.mxu0 %v1399
    %2194 = vmatpush.msra.mxu0 %v1396
    %2195 = vmatpush.msra.mxu0 %v1393
    %2196 = vmatpush.msra.mxu0 %v1390
    %2197 = vmatpush.msra.mxu0 %v1387
    %2198 = vmatpush.msra.mxu0 %v1384
    %2199 = vmatpush.msra.mxu0 %v1381
    %2200 = vmatpush.msra.mxu0 %v1378
    %2201 = vmatpush.msra.mxu0 %v1375
    %2202 = vmatmul.f32.gmra.mxu0 %v2162
    %v2203 = vpop.f32.mrf.mxu0
    %v2204 = vadd.f32 %v1593, %v2203
    %2205 = vdwg.mxu0
    %2206 = vmatpush.msra.mxu0 %v1421
    %2207 = vmatpush.msra.mxu0 %v1418
    %2208 = vmatpush.msra.mxu0 %v1415
    %2209 = vmatpush.msra.mxu0 %v1412
    %2210 = vmatpush.msra.mxu0 %v1409
    %2211 = vmatpush.msra.mxu0 %v1406
    %2212 = vmatpush.msra.mxu0 %v1403
    %2213 = vmatpush.msra.mxu0 %v1400
    %2214 = vmatpush.msra.mxu0 %v1397
    %2215 = vmatpush.msra.mxu0 %v1394
    %2216 = vmatpush.msra.mxu0 %v1391
    %2217 = vmatpush.msra.mxu0 %v1388
    %2218 = vmatpush.msra.mxu0 %v1385
    %2219 = vmatpush.msra.mxu0 %v1382
    %2220 = vmatpush.msra.mxu0 %v1379
    %2221 = vmatpush.msra.mxu0 %v1376
    %2222 = vmatmul.f32.gmra.mxu0 %v2162
    %v2223 = vpop.f32.mrf.mxu0
    %v2224 = vadd.f32 %v1594, %v2223
    %2225 = vdwg.mxu0
    %v2226 = vadd.f32 %v2163, %v2184
    %v2227 = vxor.u32 %v2226, 2147483648
    %v2228 = vmul.f32 %v2227, 1.442695
    %v2229 = vpow.pop %v2228
    %v2230 = vadd.f32 %v2229, 1.0
    %v2231 = vrcp.pop %v2230
    %v2232 = vmul.f32 %v2230, %v2231
    %v2233 = vsub.f32 1.0, %v2232
    %v2234 = vmul.f32 %v2231, %v2233
    %v2235 = vadd.f32 %v2231, %v2234
    %vm2236 = vweird.f32 %v2230
    %vm2237 = vweird.f32 %v2231
    %vm2238 = vmor %vm2236, %vm2237
    %v2239 = vsel %vm2238, %v2231, %v2235
    %v2240 = vand.u32 2147483647, %v2230
    %vm2241 = vcmp.eq.f32.partialorder %v2240, 8.507059e+37
    %v2242 = vand.u32 %v2230, 2147483648
    %v2243 = vor.u32 1.1754944e-38, %v2242
    %v2244 = vsel %vm2241, %v2243, %v2239
    %v2245 = vmul.f32 1.0, %v2244
    %v2246 = vadd.f32 %v2164, %v2204
    %v2247 = vxor.u32 %v2246, 2147483648
    %v2248 = vmul.f32 %v2247, 1.442695
    %v2249 = vpow.pop %v2248
    %v2250 = vadd.f32 %v2249, 1.0
    %v2251 = vrcp.pop %v2250
    %v2252 = vmul.f32 %v2250, %v2251
    %v2253 = vsub.f32 1.0, %v2252
    %v2254 = vmul.f32 %v2251, %v2253
    %v2255 = vadd.f32 %v2251, %v2254
    %vm2256 = vweird.f32 %v2250
    %vm2257 = vweird.f32 %v2251
    %vm2258 = vmor %vm2256, %vm2257
    %v2259 = vsel %vm2258, %v2251, %v2255
    %v2260 = vand.u32 2147483647, %v2250
    %vm2261 = vcmp.eq.f32.partialorder %v2260, 8.507059e+37
    %v2262 = vand.u32 %v2250, 2147483648
    %v2263 = vor.u32 1.1754944e-38, %v2262
    %v2264 = vsel %vm2261, %v2263, %v2259
    %v2265 = vmul.f32 1.0, %v2264
    %v2266 = vmul.f32 %v2245, %v2224
    %v2267 = vadd.f32 %v2165, %v2266
    %v2268 = vtanh.pop %v2267
    %v2269 = vsub.f32 1.0, %v2265
    %v2270 = vmul.f32 %v2269, %v2268
    %v2271 = vmul.f32 %v2265, %v2162
    %v2272 = vadd.f32 %v2270, %v2271
    %v2273 = vsel %vm1076, %v2272, 0.0
    %s2274 = scalar_lea.vmem [#allocation12], 40
    %2275 = vst [vmem:[%s2274] sm:$0xff] %v2273
    %v2276 = vsel %vm1076, %v2272, %v2162
    %v2277 = vld [vmem:[%s1081] sm:$0xff]
    %v2278 = vld [vmem:[%s1081 + $0x8] sm:$0xff]
    %v2279 = vld [vmem:[%s1081 + $0x10] sm:$0xff]
    %2280 = vmatpush.msra.mxu0 %v1419
    %2281 = vmatpush.msra.mxu0 %v1416
    %2282 = vmatpush.msra.mxu0 %v1413
    %2283 = vmatpush.msra.mxu0 %v1410
    %2284 = vmatpush.msra.mxu0 %v1407
    %2285 = vmatpush.msra.mxu0 %v1404
    %2286 = vmatpush.msra.mxu0 %v1401
    %2287 = vmatpush.msra.mxu0 %v1398
    %2288 = vmatpush.msra.mxu0 %v1395
    %2289 = vmatpush.msra.mxu0 %v1392
    %2290 = vmatpush.msra.mxu0 %v1389
    %2291 = vmatpush.msra.mxu0 %v1386
    %2292 = vmatpush.msra.mxu0 %v1383
    %2293 = vmatpush.msra.mxu0 %v1380
    %2294 = vmatpush.msra.mxu0 %v1377
    %2295 = vmatpush.msra.mxu0 %v1374
    %2296 = vmatmul.f32.gmra.mxu0 %v2276
    %v2297 = vpop.f32.mrf.mxu0
    %v2298 = vadd.f32 %v1592, %v2297
    %2299 = vdwg.mxu0
    %2300 = vmatpush.msra.mxu0 %v1420
    %2301 = vmatpush.msra.mxu0 %v1417
    %2302 = vmatpush.msra.mxu0 %v1414
    %2303 = vmatpush.msra.mxu0 %v1411
    %2304 = vmatpush.msra.mxu0 %v1408
    %2305 = vmatpush.msra.mxu0 %v1405
    %2306 = vmatpush.msra.mxu0 %v1402
    %2307 = vmatpush.msra.mxu0 %v1399
    %2308 = vmatpush.msra.mxu0 %v1396
    %2309 = vmatpush.msra.mxu0 %v1393
    %2310 = vmatpush.msra.mxu0 %v1390
    %2311 = vmatpush.msra.mxu0 %v1387
    %2312 = vmatpush.msra.mxu0 %v1384
    %2313 = vmatpush.msra.mxu0 %v1381
    %2314 = vmatpush.msra.mxu0 %v1378
    %2315 = vmatpush.msra.mxu0 %v1375
    %2316 = vmatmul.f32.gmra.mxu0 %v2276
    %v2317 = vpop.f32.mrf.mxu0
    %v2318 = vadd.f32 %v1593, %v2317
    %2319 = vdwg.mxu0
    %2320 = vmatpush.msra.mxu0 %v1421
    %2321 = vmatpush.msra.mxu0 %v1418
    %2322 = vmatpush.msra.mxu0 %v1415
    %2323 = vmatpush.msra.mxu0 %v1412
    %2324 = vmatpush.msra.mxu0 %v1409
    %2325 = vmatpush.msra.mxu0 %v1406
    %2326 = vmatpush.msra.mxu0 %v1403
    %2327 = vmatpush.msra.mxu0 %v1400
    %2328 = vmatpush.msra.mxu0 %v1397
    %2329 = vmatpush.msra.mxu0 %v1394
    %2330 = vmatpush.msra.mxu0 %v1391
    %2331 = vmatpush.msra.mxu0 %v1388
    %2332 = vmatpush.msra.mxu0 %v1385
    %2333 = vmatpush.msra.mxu0 %v1382
    %2334 = vmatpush.msra.mxu0 %v1379
    %2335 = vmatpush.msra.mxu0 %v1376
    %2336 = vmatmul.f32.gmra.mxu0 %v2276
    %v2337 = vpop.f32.mrf.mxu0
    %v2338 = vadd.f32 %v1594, %v2337
    %2339 = vdwg.mxu0
    %v2340 = vadd.f32 %v2277, %v2298
    %v2341 = vxor.u32 %v2340, 2147483648
    %v2342 = vmul.f32 %v2341, 1.442695
    %v2343 = vpow.pop %v2342
    %v2344 = vadd.f32 %v2343, 1.0
    %v2345 = vrcp.pop %v2344
    %v2346 = vmul.f32 %v2344, %v2345
    %v2347 = vsub.f32 1.0, %v2346
    %v2348 = vmul.f32 %v2345, %v2347
    %v2349 = vadd.f32 %v2345, %v2348
    %vm2350 = vweird.f32 %v2344
    %vm2351 = vweird.f32 %v2345
    %vm2352 = vmor %vm2350, %vm2351
    %v2353 = vsel %vm2352, %v2345, %v2349
    %v2354 = vand.u32 2147483647, %v2344
    %vm2355 = vcmp.eq.f32.partialorder %v2354, 8.507059e+37
    %v2356 = vand.u32 %v2344, 2147483648
    %v2357 = vor.u32 1.1754944e-38, %v2356
    %v2358 = vsel %vm2355, %v2357, %v2353
    %v2359 = vmul.f32 1.0, %v2358
    %v2360 = vadd.f32 %v2278, %v2318
    %v2361 = vxor.u32 %v2360, 2147483648
    %v2362 = vmul.f32 %v2361, 1.442695
    %v2363 = vpow.pop %v2362
    %v2364 = vadd.f32 %v2363, 1.0
    %v2365 = vrcp.pop %v2364
    %v2366 = vmul.f32 %v2364, %v2365
    %v2367 = vsub.f32 1.0, %v2366
    %v2368 = vmul.f32 %v2365, %v2367
    %v2369 = vadd.f32 %v2365, %v2368
    %vm2370 = vweird.f32 %v2364
    %vm2371 = vweird.f32 %v2365
    %vm2372 = vmor %vm2370, %vm2371
    %v2373 = vsel %vm2372, %v2365, %v2369
    %v2374 = vand.u32 2147483647, %v2364
    %vm2375 = vcmp.eq.f32.partialorder %v2374, 8.507059e+37
    %v2376 = vand.u32 %v2364, 2147483648
    %v2377 = vor.u32 1.1754944e-38, %v2376
    %v2378 = vsel %vm2375, %v2377, %v2373
    %v2379 = vmul.f32 1.0, %v2378
    %v2380 = vmul.f32 %v2359, %v2338
    %v2381 = vadd.f32 %v2279, %v2380
    %v2382 = vtanh.pop %v2381
    %v2383 = vsub.f32 1.0, %v2379
    %v2384 = vmul.f32 %v2383, %v2382
    %v2385 = vmul.f32 %v2379, %v2276
    %v2386 = vadd.f32 %v2384, %v2385
    %v2387 = vsel %vm1197, %v2386, 0.0
    %s2388 = scalar_lea.vmem [#allocation12], 48
    %2389 = vst [vmem:[%s2388] sm:$0xff] %v2387
    %v2390 = vsel %vm1197, %v2386, %v2276
    %v2391 = vld [vmem:[%s1202] sm:$0xff]
    %v2392 = vld [vmem:[%s1202 + $0x8] sm:$0xff]
    %v2393 = vld [vmem:[%s1202 + $0x10] sm:$0xff]
    %2394 = vmatpush.msra.mxu0 %v1419
    %2395 = vmatpush.msra.mxu0 %v1416
    %2396 = vmatpush.msra.mxu0 %v1413
    %2397 = vmatpush.msra.mxu0 %v1410
    %2398 = vmatpush.msra.mxu0 %v1407
    %2399 = vmatpush.msra.mxu0 %v1404
    %2400 = vmatpush.msra.mxu0 %v1401
    %2401 = vmatpush.msra.mxu0 %v1398
    %2402 = vmatpush.msra.mxu0 %v1395
    %2403 = vmatpush.msra.mxu0 %v1392
    %2404 = vmatpush.msra.mxu0 %v1389
    %2405 = vmatpush.msra.mxu0 %v1386
    %2406 = vmatpush.msra.mxu0 %v1383
    %2407 = vmatpush.msra.mxu0 %v1380
    %2408 = vmatpush.msra.mxu0 %v1377
    %2409 = vmatpush.msra.mxu0 %v1374
    %2410 = vmatmul.f32.gmra.mxu0 %v2390
    %v2411 = vpop.f32.mrf.mxu0
    %v2412 = vadd.f32 %v1592, %v2411
    %2413 = vdwg.mxu0
    %2414 = vmatpush.msra.mxu0 %v1420
    %2415 = vmatpush.msra.mxu0 %v1417
    %2416 = vmatpush.msra.mxu0 %v1414
    %2417 = vmatpush.msra.mxu0 %v1411
    %2418 = vmatpush.msra.mxu0 %v1408
    %2419 = vmatpush.msra.mxu0 %v1405
    %2420 = vmatpush.msra.mxu0 %v1402
    %2421 = vmatpush.msra.mxu0 %v1399
    %2422 = vmatpush.msra.mxu0 %v1396
    %2423 = vmatpush.msra.mxu0 %v1393
    %2424 = vmatpush.msra.mxu0 %v1390
    %2425 = vmatpush.msra.mxu0 %v1387
    %2426 = vmatpush.msra.mxu0 %v1384
    %2427 = vmatpush.msra.mxu0 %v1381
    %2428 = vmatpush.msra.mxu0 %v1378
    %2429 = vmatpush.msra.mxu0 %v1375
    %2430 = vmatmul.f32.gmra.mxu0 %v2390
    %v2431 = vpop.f32.mrf.mxu0
    %v2432 = vadd.f32 %v1593, %v2431
    %2433 = vdwg.mxu0
    %2434 = vmatpush.msra.mxu0 %v1421
    %2435 = vmatpush.msra.mxu0 %v1418
    %2436 = vmatpush.msra.mxu0 %v1415
    %2437 = vmatpush.msra.mxu0 %v1412
    %2438 = vmatpush.msra.mxu0 %v1409
    %2439 = vmatpush.msra.mxu0 %v1406
    %2440 = vmatpush.msra.mxu0 %v1403
    %2441 = vmatpush.msra.mxu0 %v1400
    %2442 = vmatpush.msra.mxu0 %v1397
    %2443 = vmatpush.msra.mxu0 %v1394
    %2444 = vmatpush.msra.mxu0 %v1391
    %2445 = vmatpush.msra.mxu0 %v1388
    %2446 = vmatpush.msra.mxu0 %v1385
    %2447 = vmatpush.msra.mxu0 %v1382
    %2448 = vmatpush.msra.mxu0 %v1379
    %2449 = vmatpush.msra.mxu0 %v1376
    %2450 = vmatmul.f32.gmra.mxu0 %v2390
    %v2451 = vpop.f32.mrf.mxu0
    %v2452 = vadd.f32 %v1594, %v2451
    %2453 = vdwg.mxu0
    %v2454 = vadd.f32 %v2391, %v2412
    %v2455 = vxor.u32 %v2454, 2147483648
    %v2456 = vmul.f32 %v2455, 1.442695
    %v2457 = vpow.pop %v2456
    %v2458 = vadd.f32 %v2457, 1.0
    %v2459 = vrcp.pop %v2458
    %v2460 = vmul.f32 %v2458, %v2459
    %v2461 = vsub.f32 1.0, %v2460
    %v2462 = vmul.f32 %v2459, %v2461
    %v2463 = vadd.f32 %v2459, %v2462
    %vm2464 = vweird.f32 %v2458
    %vm2465 = vweird.f32 %v2459
    %vm2466 = vmor %vm2464, %vm2465
    %v2467 = vsel %vm2466, %v2459, %v2463
    %v2468 = vand.u32 2147483647, %v2458
    %vm2469 = vcmp.eq.f32.partialorder %v2468, 8.507059e+37
    %v2470 = vand.u32 %v2458, 2147483648
    %v2471 = vor.u32 1.1754944e-38, %v2470
    %v2472 = vsel %vm2469, %v2471, %v2467
    %v2473 = vmul.f32 1.0, %v2472
    %v2474 = vadd.f32 %v2392, %v2432
    %v2475 = vxor.u32 %v2474, 2147483648
    %v2476 = vmul.f32 %v2475, 1.442695
    %v2477 = vpow.pop %v2476
    %v2478 = vadd.f32 %v2477, 1.0
    %v2479 = vrcp.pop %v2478
    %v2480 = vmul.f32 %v2478, %v2479
    %v2481 = vsub.f32 1.0, %v2480
    %v2482 = vmul.f32 %v2479, %v2481
    %v2483 = vadd.f32 %v2479, %v2482
    %vm2484 = vweird.f32 %v2478
    %vm2485 = vweird.f32 %v2479
    %vm2486 = vmor %vm2484, %vm2485
    %v2487 = vsel %vm2486, %v2479, %v2483
    %v2488 = vand.u32 2147483647, %v2478
    %vm2489 = vcmp.eq.f32.partialorder %v2488, 8.507059e+37
    %v2490 = vand.u32 %v2478, 2147483648
    %v2491 = vor.u32 1.1754944e-38, %v2490
    %v2492 = vsel %vm2489, %v2491, %v2487
    %v2493 = vmul.f32 1.0, %v2492
    %v2494 = vmul.f32 %v2473, %v2452
    %v2495 = vadd.f32 %v2393, %v2494
    %v2496 = vtanh.pop %v2495
    %v2497 = vsub.f32 1.0, %v2493
    %v2498 = vmul.f32 %v2497, %v2496
    %v2499 = vmul.f32 %v2493, %v2390
    %v2500 = vadd.f32 %v2498, %v2499
    %v2501 = vsel %vm1318, %v2500, 0.0
    %s2502 = scalar_lea.vmem [#allocation12], 56
    %2503 = vst [vmem:[%s2502] sm:$0xff] %v2501
    %v2504 = vsel %vm1318, %v2500, %v2390
    %s2505 = scalar_lea.vmem [#allocation13], 8
    %2506 = vst [vmem:[%s2505] sm:$0xff] %v2504
    %s2507 = scalar_lea.vmem [#allocation7], 768
    %v2508 = vld [vmem:[%s2507] sm:$0xff]
    %v2509 = vld [vmem:[%s2507 + $0x8] sm:$0xff]
    %v2510 = vld [vmem:[%s2507 + $0x10] sm:$0xff]
    %v2511 = vld [vmem:[%s2507 + $0x18] sm:$0xff]
    %v2512 = vld [vmem:[%s2507 + $0x20] sm:$0xff]
    %v2513 = vld [vmem:[%s2507 + $0x28] sm:$0xff]
    %v2514 = vld [vmem:[%s2507 + $0x30] sm:$0xff]
    %v2515 = vld [vmem:[%s2507 + $0x38] sm:$0xff]
    %v2516 = vld [vmem:[%s2507 + $0x40] sm:$0xff]
    %v2517 = vld [vmem:[%s2507 + $0x48] sm:$0xff]
    %v2518 = vld [vmem:[%s2507 + $0x50] sm:$0xff]
    %v2519 = vld [vmem:[%s2507 + $0x58] sm:$0xff]
    %v2520 = vld [vmem:[%s2507 + $0x60] sm:$0xff]
    %v2521 = vld [vmem:[%s2507 + $0x68] sm:$0xff]
    %v2522 = vld [vmem:[%s2507 + $0x70] sm:$0xff]
    %v2523 = vld [vmem:[%s2507 + $0x78] sm:$0xff]
    %v2524 = vld [vmem:[%s2507 + $0x80] sm:$0xff]
    %v2525 = vld [vmem:[%s2507 + $0x88] sm:$0xff]
    %v2526 = vld [vmem:[%s2507 + $0x90] sm:$0xff]
    %v2527 = vld [vmem:[%s2507 + $0x98] sm:$0xff]
    %v2528 = vld [vmem:[%s2507 + $0xa0] sm:$0xff]
    %v2529 = vld [vmem:[%s2507 + $0xa8] sm:$0xff]
    %v2530 = vld [vmem:[%s2507 + $0xb0] sm:$0xff]
    %v2531 = vld [vmem:[%s2507 + $0xb8] sm:$0xff]
    %v2532 = vld [vmem:[%s2507 + $0xc0] sm:$0xff]
    %v2533 = vld [vmem:[%s2507 + $0xc8] sm:$0xff]
    %v2534 = vld [vmem:[%s2507 + $0xd0] sm:$0xff]
    %v2535 = vld [vmem:[%s2507 + $0xd8] sm:$0xff]
    %v2536 = vld [vmem:[%s2507 + $0xe0] sm:$0xff]
    %v2537 = vld [vmem:[%s2507 + $0xe8] sm:$0xff]
    %v2538 = vld [vmem:[%s2507 + $0xf0] sm:$0xff]
    %v2539 = vld [vmem:[%s2507 + $0xf8] sm:$0xff]
    %v2540 = vld [vmem:[%s2507 + $0x100] sm:$0xff]
    %v2541 = vld [vmem:[%s2507 + $0x108] sm:$0xff]
    %v2542 = vld [vmem:[%s2507 + $0x110] sm:$0xff]
    %v2543 = vld [vmem:[%s2507 + $0x118] sm:$0xff]
    %v2544 = vld [vmem:[%s2507 + $0x120] sm:$0xff]
    %v2545 = vld [vmem:[%s2507 + $0x128] sm:$0xff]
    %v2546 = vld [vmem:[%s2507 + $0x130] sm:$0xff]
    %v2547 = vld [vmem:[%s2507 + $0x138] sm:$0xff]
    %v2548 = vld [vmem:[%s2507 + $0x140] sm:$0xff]
    %v2549 = vld [vmem:[%s2507 + $0x148] sm:$0xff]
    %v2550 = vld [vmem:[%s2507 + $0x150] sm:$0xff]
    %v2551 = vld [vmem:[%s2507 + $0x158] sm:$0xff]
    %v2552 = vld [vmem:[%s2507 + $0x160] sm:$0xff]
    %v2553 = vld [vmem:[%s2507 + $0x168] sm:$0xff]
    %v2554 = vld [vmem:[%s2507 + $0x170] sm:$0xff]
    %v2555 = vld [vmem:[%s2507 + $0x178] sm:$0xff]
    %s2556 = scalar_lea.vmem [#allocation9], 768
    %v2557 = vld [vmem:[%s2556] sm:$0xff]
    %v2558 = vld [vmem:[%s2556 + $0x8] sm:$0xff]
    %v2559 = vld [vmem:[%s2556 + $0x10] sm:$0xff]
    %v2560 = vld [vmem:[%s2556 + $0x18] sm:$0xff]
    %v2561 = vld [vmem:[%s2556 + $0x20] sm:$0xff]
    %v2562 = vld [vmem:[%s2556 + $0x28] sm:$0xff]
    %v2563 = vld [vmem:[%s2556 + $0x30] sm:$0xff]
    %v2564 = vld [vmem:[%s2556 + $0x38] sm:$0xff]
    %v2565 = vld [vmem:[%s2556 + $0x40] sm:$0xff]
    %v2566 = vld [vmem:[%s2556 + $0x48] sm:$0xff]
    %v2567 = vld [vmem:[%s2556 + $0x50] sm:$0xff]
    %v2568 = vld [vmem:[%s2556 + $0x58] sm:$0xff]
    %v2569 = vld [vmem:[%s2556 + $0x60] sm:$0xff]
    %v2570 = vld [vmem:[%s2556 + $0x68] sm:$0xff]
    %v2571 = vld [vmem:[%s2556 + $0x70] sm:$0xff]
    %v2572 = vld [vmem:[%s2556 + $0x78] sm:$0xff]
    %v2573 = vld [vmem:[%s2556 + $0x80] sm:$0xff]
    %v2574 = vld [vmem:[%s2556 + $0x88] sm:$0xff]
    %v2575 = vld [vmem:[%s2556 + $0x90] sm:$0xff]
    %v2576 = vld [vmem:[%s2556 + $0x98] sm:$0xff]
    %v2577 = vld [vmem:[%s2556 + $0xa0] sm:$0xff]
    %v2578 = vld [vmem:[%s2556 + $0xa8] sm:$0xff]
    %v2579 = vld [vmem:[%s2556 + $0xb0] sm:$0xff]
    %v2580 = vld [vmem:[%s2556 + $0xb8] sm:$0xff]
    %v2581 = vld [vmem:[%s2556 + $0xc0] sm:$0xff]
    %v2582 = vld [vmem:[%s2556 + $0xc8] sm:$0xff]
    %v2583 = vld [vmem:[%s2556 + $0xd0] sm:$0xff]
    %v2584 = vld [vmem:[%s2556 + $0xd8] sm:$0xff]
    %v2585 = vld [vmem:[%s2556 + $0xe0] sm:$0xff]
    %v2586 = vld [vmem:[%s2556 + $0xe8] sm:$0xff]
    %v2587 = vld [vmem:[%s2556 + $0xf0] sm:$0xff]
    %v2588 = vld [vmem:[%s2556 + $0xf8] sm:$0xff]
    %v2589 = vld [vmem:[%s2556 + $0x100] sm:$0xff]
    %v2590 = vld [vmem:[%s2556 + $0x108] sm:$0xff]
    %v2591 = vld [vmem:[%s2556 + $0x110] sm:$0xff]
    %v2592 = vld [vmem:[%s2556 + $0x118] sm:$0xff]
    %v2593 = vld [vmem:[%s2556 + $0x120] sm:$0xff]
    %v2594 = vld [vmem:[%s2556 + $0x128] sm:$0xff]
    %v2595 = vld [vmem:[%s2556 + $0x130] sm:$0xff]
    %v2596 = vld [vmem:[%s2556 + $0x138] sm:$0xff]
    %v2597 = vld [vmem:[%s2556 + $0x140] sm:$0xff]
    %v2598 = vld [vmem:[%s2556 + $0x148] sm:$0xff]
    %v2599 = vld [vmem:[%s2556 + $0x150] sm:$0xff]
    %v2600 = vld [vmem:[%s2556 + $0x158] sm:$0xff]
    %v2601 = vld [vmem:[%s2556 + $0x160] sm:$0xff]
    %v2602 = vld [vmem:[%s2556 + $0x168] sm:$0xff]
    %v2603 = vld [vmem:[%s2556 + $0x170] sm:$0xff]
    %v2604 = vld [vmem:[%s2556 + $0x178] sm:$0xff]
    %s2605 = scalar_lea.vmem %s4, 6
    %v2606 = vld [vmem:[%s2605] sm:$0x7]
    %s2607 = scalar_lea.vmem [#allocation10], 6
    %v2608 = vld [vmem:[%s2607] sm:$0x7]
    %v2609 = vld [vmem:[#allocation12] sm:$0xff]
    %v2610 = vld [vmem:[#allocation12 + $0x8] sm:$0xff]
    %v2611 = vld [vmem:[#allocation12 + $0x10] sm:$0xff]
    %v2612 = vld [vmem:[#allocation12 + $0x18] sm:$0xff]
    %v2613 = vld [vmem:[#allocation12 + $0x20] sm:$0xff]
    %v2614 = vld [vmem:[#allocation12 + $0x28] sm:$0xff]
    %v2615 = vld [vmem:[#allocation12 + $0x30] sm:$0xff]
    %v2616 = vld [vmem:[#allocation12 + $0x38] sm:$0xff]
    %v2618 = vperm.slane %v2606, 0
    %v2619 = vperm.slane %v2606, 1
    %v2620 = vperm.slane %v2606, 2
    %2624 = vmatpush.msra.mxu0 %v2553
    %2625 = vmatpush.msra.mxu0 %v2550
    %2626 = vmatpush.msra.mxu0 %v2547
    %2627 = vmatpush.msra.mxu0 %v2544
    %2628 = vmatpush.msra.mxu0 %v2541
    %2629 = vmatpush.msra.mxu0 %v2538
    %2630 = vmatpush.msra.mxu0 %v2535
    %2631 = vmatpush.msra.mxu0 %v2532
    %2632 = vmatpush.msra.mxu0 %v2529
    %2633 = vmatpush.msra.mxu0 %v2526
    %2634 = vmatpush.msra.mxu0 %v2523
    %2635 = vmatpush.msra.mxu0 %v2520
    %2636 = vmatpush.msra.mxu0 %v2517
    %2637 = vmatpush.msra.mxu0 %v2514
    %2638 = vmatpush.msra.mxu0 %v2511
    %2639 = vmatpush.msra.mxu0 %v2508
    %2640 = vmatmul.f32.gmra.mxu0 %v2609
    %v2641 = vpop.f32.mrf.mxu0
    %v2642 = vadd.f32 %v2618, %v2641
    %2643 = vmatmul.f32.gmra.mxu0 %v2610
    %v2644 = vpop.f32.mrf.mxu0
    %v2645 = vadd.f32 %v2618, %v2644
    %2646 = vmatmul.f32.gmra.mxu0 %v2611
    %v2647 = vpop.f32.mrf.mxu0
    %v2648 = vadd.f32 %v2618, %v2647
    %2649 = vmatmul.f32.gmra.mxu0 %v2612
    %v2650 = vpop.f32.mrf.mxu0
    %v2651 = vadd.f32 %v2618, %v2650
    %2652 = vmatmul.f32.gmra.mxu0 %v2613
    %v2653 = vpop.f32.mrf.mxu0
    %v2654 = vadd.f32 %v2618, %v2653
    %2655 = vmatmul.f32.gmra.mxu0 %v2614
    %v2656 = vpop.f32.mrf.mxu0
    %v2657 = vadd.f32 %v2618, %v2656
    %2658 = vmatmul.f32.gmra.mxu0 %v2615
    %v2659 = vpop.f32.mrf.mxu0
    %v2660 = vadd.f32 %v2618, %v2659
    %2661 = vmatmul.f32.gmra.mxu0 %v2616
    %v2662 = vpop.f32.mrf.mxu0
    %v2663 = vadd.f32 %v2618, %v2662
    %2664 = vdwg.mxu0
    %2665 = vmatpush.msra.mxu0 %v2554
    %2666 = vmatpush.msra.mxu0 %v2551
    %2667 = vmatpush.msra.mxu0 %v2548
    %2668 = vmatpush.msra.mxu0 %v2545
    %2669 = vmatpush.msra.mxu0 %v2542
    %2670 = vmatpush.msra.mxu0 %v2539
    %2671 = vmatpush.msra.mxu0 %v2536
    %2672 = vmatpush.msra.mxu0 %v2533
    %2673 = vmatpush.msra.mxu0 %v2530
    %2674 = vmatpush.msra.mxu0 %v2527
    %2675 = vmatpush.msra.mxu0 %v2524
    %2676 = vmatpush.msra.mxu0 %v2521
    %2677 = vmatpush.msra.mxu0 %v2518
    %2678 = vmatpush.msra.mxu0 %v2515
    %2679 = vmatpush.msra.mxu0 %v2512
    %2680 = vmatpush.msra.mxu0 %v2509
    %2681 = vmatmul.f32.gmra.mxu0 %v2609
    %v2682 = vpop.f32.mrf.mxu0
    %v2683 = vadd.f32 %v2619, %v2682
    %2684 = vmatmul.f32.gmra.mxu0 %v2610
    %v2685 = vpop.f32.mrf.mxu0
    %v2686 = vadd.f32 %v2619, %v2685
    %2687 = vmatmul.f32.gmra.mxu0 %v2611
    %v2688 = vpop.f32.mrf.mxu0
    %v2689 = vadd.f32 %v2619, %v2688
    %2690 = vmatmul.f32.gmra.mxu0 %v2612
    %v2691 = vpop.f32.mrf.mxu0
    %v2692 = vadd.f32 %v2619, %v2691
    %2693 = vmatmul.f32.gmra.mxu0 %v2613
    %v2694 = vpop.f32.mrf.mxu0
    %v2695 = vadd.f32 %v2619, %v2694
    %2696 = vmatmul.f32.gmra.mxu0 %v2614
    %v2697 = vpop.f32.mrf.mxu0
    %v2698 = vadd.f32 %v2619, %v2697
    %2699 = vmatmul.f32.gmra.mxu0 %v2615
    %v2700 = vpop.f32.mrf.mxu0
    %v2701 = vadd.f32 %v2619, %v2700
    %2702 = vmatmul.f32.gmra.mxu0 %v2616
    %v2703 = vpop.f32.mrf.mxu0
    %v2704 = vadd.f32 %v2619, %v2703
    %2705 = vdwg.mxu0
    %2706 = vmatpush.msra.mxu0 %v2555
    %2707 = vmatpush.msra.mxu0 %v2552
    %2708 = vmatpush.msra.mxu0 %v2549
    %2709 = vmatpush.msra.mxu0 %v2546
    %2710 = vmatpush.msra.mxu0 %v2543
    %2711 = vmatpush.msra.mxu0 %v2540
    %2712 = vmatpush.msra.mxu0 %v2537
    %2713 = vmatpush.msra.mxu0 %v2534
    %2714 = vmatpush.msra.mxu0 %v2531
    %2715 = vmatpush.msra.mxu0 %v2528
    %2716 = vmatpush.msra.mxu0 %v2525
    %2717 = vmatpush.msra.mxu0 %v2522
    %2718 = vmatpush.msra.mxu0 %v2519
    %2719 = vmatpush.msra.mxu0 %v2516
    %2720 = vmatpush.msra.mxu0 %v2513
    %2721 = vmatpush.msra.mxu0 %v2510
    %2722 = vmatmul.f32.gmra.mxu0 %v2609
    %v2723 = vpop.f32.mrf.mxu0
    %v2724 = vadd.f32 %v2620, %v2723
    %2725 = vmatmul.f32.gmra.mxu0 %v2610
    %v2726 = vpop.f32.mrf.mxu0
    %v2727 = vadd.f32 %v2620, %v2726
    %2728 = vmatmul.f32.gmra.mxu0 %v2611
    %v2729 = vpop.f32.mrf.mxu0
    %v2730 = vadd.f32 %v2620, %v2729
    %2731 = vmatmul.f32.gmra.mxu0 %v2612
    %v2732 = vpop.f32.mrf.mxu0
    %v2733 = vadd.f32 %v2620, %v2732
    %2734 = vmatmul.f32.gmra.mxu0 %v2613
    %v2735 = vpop.f32.mrf.mxu0
    %v2736 = vadd.f32 %v2620, %v2735
    %2737 = vmatmul.f32.gmra.mxu0 %v2614
    %v2738 = vpop.f32.mrf.mxu0
    %v2739 = vadd.f32 %v2620, %v2738
    %2740 = vmatmul.f32.gmra.mxu0 %v2615
    %v2741 = vpop.f32.mrf.mxu0
    %v2742 = vadd.f32 %v2620, %v2741
    %2743 = vmatmul.f32.gmra.mxu0 %v2616
    %v2744 = vpop.f32.mrf.mxu0
    %v2745 = vadd.f32 %v2620, %v2744
    %2746 = vdwg.mxu0
    %2747 = vst [vmem:[#allocation3] sm:$0xff] %v2642
    %2748 = vst [vmem:[#allocation3 + $0x8] sm:$0xff] %v2683
    %2749 = vst [vmem:[#allocation3 + $0x10] sm:$0xff] %v2724
    %2750 = vst [vmem:[#allocation3 + $0x18] sm:$0xff] %v2645
    %2751 = vst [vmem:[#allocation3 + $0x20] sm:$0xff] %v2686
    %2752 = vst [vmem:[#allocation3 + $0x28] sm:$0xff] %v2727
    %2753 = vst [vmem:[#allocation3 + $0x30] sm:$0xff] %v2648
    %2754 = vst [vmem:[#allocation3 + $0x38] sm:$0xff] %v2689
    %2755 = vst [vmem:[#allocation3 + $0x40] sm:$0xff] %v2730
    %2756 = vst [vmem:[#allocation3 + $0x48] sm:$0xff] %v2651
    %2757 = vst [vmem:[#allocation3 + $0x50] sm:$0xff] %v2692
    %2758 = vst [vmem:[#allocation3 + $0x58] sm:$0xff] %v2733
    %2759 = vst [vmem:[#allocation3 + $0x60] sm:$0xff] %v2654
    %2760 = vst [vmem:[#allocation3 + $0x68] sm:$0xff] %v2695
    %2761 = vst [vmem:[#allocation3 + $0x70] sm:$0xff] %v2736
    %2762 = vst [vmem:[#allocation3 + $0x78] sm:$0xff] %v2657
    %2763 = vst [vmem:[#allocation3 + $0x80] sm:$0xff] %v2698
    %2764 = vst [vmem:[#allocation3 + $0x88] sm:$0xff] %v2739
    %2765 = vst [vmem:[#allocation3 + $0x90] sm:$0xff] %v2660
    %2766 = vst [vmem:[#allocation3 + $0x98] sm:$0xff] %v2701
    %2767 = vst [vmem:[#allocation3 + $0xa0] sm:$0xff] %v2742
    %2768 = vst [vmem:[#allocation3 + $0xa8] sm:$0xff] %v2663
    %2769 = vst [vmem:[#allocation3 + $0xb0] sm:$0xff] %v2704
    %2770 = vst [vmem:[#allocation3 + $0xb8] sm:$0xff] %v2745
    %v2771 = vld [vmem:[#allocation3] sm:$0xff]
    %v2772 = vld [vmem:[#allocation3 + $0x8] sm:$0xff]
    %v2773 = vld [vmem:[#allocation3 + $0x10] sm:$0xff]
    %v2775 = vperm.slane %v2608, 0
    %v2776 = vperm.slane %v2608, 1
    %v2777 = vperm.slane %v2608, 2
    %2781 = vmatpush.msra.mxu0 %v2602
    %2782 = vmatpush.msra.mxu0 %v2599
    %2783 = vmatpush.msra.mxu0 %v2596
    %2784 = vmatpush.msra.mxu0 %v2593
    %2785 = vmatpush.msra.mxu0 %v2590
    %2786 = vmatpush.msra.mxu0 %v2587
    %2787 = vmatpush.msra.mxu0 %v2584
    %2788 = vmatpush.msra.mxu0 %v2581
    %2789 = vmatpush.msra.mxu0 %v2578
    %2790 = vmatpush.msra.mxu0 %v2575
    %2791 = vmatpush.msra.mxu0 %v2572
    %2792 = vmatpush.msra.mxu0 %v2569
    %2793 = vmatpush.msra.mxu0 %v2566
    %2794 = vmatpush.msra.mxu0 %v2563
    %2795 = vmatpush.msra.mxu0 %v2560
    %2796 = vmatpush.msra.mxu0 %v2557
    %2797 = vmatmul.f32.gmra.mxu0 0.0
    %v2798 = vpop.f32.mrf.mxu0
    %v2799 = vadd.f32 %v2775, %v2798
    %2800 = vdwg.mxu0
    %2801 = vmatpush.msra.mxu0 %v2603
    %2802 = vmatpush.msra.mxu0 %v2600
    %2803 = vmatpush.msra.mxu0 %v2597
    %2804 = vmatpush.msra.mxu0 %v2594
    %2805 = vmatpush.msra.mxu0 %v2591
    %2806 = vmatpush.msra.mxu0 %v2588
    %2807 = vmatpush.msra.mxu0 %v2585
    %2808 = vmatpush.msra.mxu0 %v2582
    %2809 = vmatpush.msra.mxu0 %v2579
    %2810 = vmatpush.msra.mxu0 %v2576
    %2811 = vmatpush.msra.mxu0 %v2573
    %2812 = vmatpush.msra.mxu0 %v2570
    %2813 = vmatpush.msra.mxu0 %v2567
    %2814 = vmatpush.msra.mxu0 %v2564
    %2815 = vmatpush.msra.mxu0 %v2561
    %2816 = vmatpush.msra.mxu0 %v2558
    %2817 = vmatmul.f32.gmra.mxu0 0.0
    %v2818 = vpop.f32.mrf.mxu0
    %v2819 = vadd.f32 %v2776, %v2818
    %2820 = vdwg.mxu0
    %2821 = vmatpush.msra.mxu0 %v2604
    %2822 = vmatpush.msra.mxu0 %v2601
    %2823 = vmatpush.msra.mxu0 %v2598
    %2824 = vmatpush.msra.mxu0 %v2595
    %2825 = vmatpush.msra.mxu0 %v2592
    %2826 = vmatpush.msra.mxu0 %v2589
    %2827 = vmatpush.msra.mxu0 %v2586
    %2828 = vmatpush.msra.mxu0 %v2583
    %2829 = vmatpush.msra.mxu0 %v2580
    %2830 = vmatpush.msra.mxu0 %v2577
    %2831 = vmatpush.msra.mxu0 %v2574
    %2832 = vmatpush.msra.mxu0 %v2571
    %2833 = vmatpush.msra.mxu0 %v2568
    %2834 = vmatpush.msra.mxu0 %v2565
    %2835 = vmatpush.msra.mxu0 %v2562
    %2836 = vmatpush.msra.mxu0 %v2559
    %2837 = vmatmul.f32.gmra.mxu0 0.0
    %v2838 = vpop.f32.mrf.mxu0
    %v2839 = vadd.f32 %v2777, %v2838
    %2840 = vdwg.mxu0
    %v2841 = vadd.f32 %v2771, %v2799
    %v2842 = vxor.u32 %v2841, 2147483648
    %v2843 = vmul.f32 %v2842, 1.442695
    %v2844 = vpow.pop %v2843
    %v2845 = vadd.f32 %v2844, 1.0
    %v2846 = vrcp.pop %v2845
    %v2847 = vmul.f32 %v2845, %v2846
    %v2848 = vsub.f32 1.0, %v2847
    %v2849 = vmul.f32 %v2846, %v2848
    %v2850 = vadd.f32 %v2846, %v2849
    %vm2851 = vweird.f32 %v2845
    %vm2852 = vweird.f32 %v2846
    %vm2853 = vmor %vm2851, %vm2852
    %v2854 = vsel %vm2853, %v2846, %v2850
    %v2855 = vand.u32 2147483647, %v2845
    %vm2856 = vcmp.eq.f32.partialorder %v2855, 8.507059e+37
    %v2857 = vand.u32 %v2845, 2147483648
    %v2858 = vor.u32 1.1754944e-38, %v2857
    %v2859 = vsel %vm2856, %v2858, %v2854
    %v2860 = vmul.f32 1.0, %v2859
    %v2861 = vadd.f32 %v2772, %v2819
    %v2862 = vxor.u32 %v2861, 2147483648
    %v2863 = vmul.f32 %v2862, 1.442695
    %v2864 = vpow.pop %v2863
    %v2865 = vadd.f32 %v2864, 1.0
    %v2866 = vrcp.pop %v2865
    %v2867 = vmul.f32 %v2865, %v2866
    %v2868 = vsub.f32 1.0, %v2867
    %v2869 = vmul.f32 %v2866, %v2868
    %v2870 = vadd.f32 %v2866, %v2869
    %vm2871 = vweird.f32 %v2865
    %vm2872 = vweird.f32 %v2866
    %vm2873 = vmor %vm2871, %vm2872
    %v2874 = vsel %vm2873, %v2866, %v2870
    %v2875 = vand.u32 2147483647, %v2865
    %vm2876 = vcmp.eq.f32.partialorder %v2875, 8.507059e+37
    %v2877 = vand.u32 %v2865, 2147483648
    %v2878 = vor.u32 1.1754944e-38, %v2877
    %v2879 = vsel %vm2876, %v2878, %v2874
    %v2880 = vmul.f32 1.0, %v2879
    %v2881 = vmul.f32 %v2860, %v2839
    %v2882 = vadd.f32 %v2773, %v2881
    %v2883 = vtanh.pop %v2882
    %v2884 = vsub.f32 1.0, %v2880
    %v2885 = vmul.f32 %v2884, %v2883
    %v2886 = vmul.f32 %v2880, 0.0
    %v2887 = vadd.f32 %v2885, %v2886
    %v2888 = vsel %vm473, %v2887, 0.0
    %2889 = vst [vmem:[#allocation2] sm:$0xff] %v2888
    %v2890 = vld [vmem:[%s476] sm:$0xff]
    %v2891 = vld [vmem:[%s476 + $0x8] sm:$0xff]
    %v2892 = vld [vmem:[%s476 + $0x10] sm:$0xff]
    %2893 = vmatpush.msra.mxu0 %v2602
    %2894 = vmatpush.msra.mxu0 %v2599
    %2895 = vmatpush.msra.mxu0 %v2596
    %2896 = vmatpush.msra.mxu0 %v2593
    %2897 = vmatpush.msra.mxu0 %v2590
    %2898 = vmatpush.msra.mxu0 %v2587
    %2899 = vmatpush.msra.mxu0 %v2584
    %2900 = vmatpush.msra.mxu0 %v2581
    %2901 = vmatpush.msra.mxu0 %v2578
    %2902 = vmatpush.msra.mxu0 %v2575
    %2903 = vmatpush.msra.mxu0 %v2572
    %2904 = vmatpush.msra.mxu0 %v2569
    %2905 = vmatpush.msra.mxu0 %v2566
    %2906 = vmatpush.msra.mxu0 %v2563
    %2907 = vmatpush.msra.mxu0 %v2560
    %2908 = vmatpush.msra.mxu0 %v2557
    %2909 = vmatmul.f32.gmra.mxu0 %v2888
    %v2910 = vpop.f32.mrf.mxu0
    %v2911 = vadd.f32 %v2775, %v2910
    %2912 = vdwg.mxu0
    %2913 = vmatpush.msra.mxu0 %v2603
    %2914 = vmatpush.msra.mxu0 %v2600
    %2915 = vmatpush.msra.mxu0 %v2597
    %2916 = vmatpush.msra.mxu0 %v2594
    %2917 = vmatpush.msra.mxu0 %v2591
    %2918 = vmatpush.msra.mxu0 %v2588
    %2919 = vmatpush.msra.mxu0 %v2585
    %2920 = vmatpush.msra.mxu0 %v2582
    %2921 = vmatpush.msra.mxu0 %v2579
    %2922 = vmatpush.msra.mxu0 %v2576
    %2923 = vmatpush.msra.mxu0 %v2573
    %2924 = vmatpush.msra.mxu0 %v2570
    %2925 = vmatpush.msra.mxu0 %v2567
    %2926 = vmatpush.msra.mxu0 %v2564
    %2927 = vmatpush.msra.mxu0 %v2561
    %2928 = vmatpush.msra.mxu0 %v2558
    %2929 = vmatmul.f32.gmra.mxu0 %v2888
    %v2930 = vpop.f32.mrf.mxu0
    %v2931 = vadd.f32 %v2776, %v2930
    %2932 = vdwg.mxu0
    %2933 = vmatpush.msra.mxu0 %v2604
    %2934 = vmatpush.msra.mxu0 %v2601
    %2935 = vmatpush.msra.mxu0 %v2598
    %2936 = vmatpush.msra.mxu0 %v2595
    %2937 = vmatpush.msra.mxu0 %v2592
    %2938 = vmatpush.msra.mxu0 %v2589
    %2939 = vmatpush.msra.mxu0 %v2586
    %2940 = vmatpush.msra.mxu0 %v2583
    %2941 = vmatpush.msra.mxu0 %v2580
    %2942 = vmatpush.msra.mxu0 %v2577
    %2943 = vmatpush.msra.mxu0 %v2574
    %2944 = vmatpush.msra.mxu0 %v2571
    %2945 = vmatpush.msra.mxu0 %v2568
    %2946 = vmatpush.msra.mxu0 %v2565
    %2947 = vmatpush.msra.mxu0 %v2562
    %2948 = vmatpush.msra.mxu0 %v2559
    %2949 = vmatmul.f32.gmra.mxu0 %v2888
    %v2950 = vpop.f32.mrf.mxu0
    %v2951 = vadd.f32 %v2777, %v2950
    %2952 = vdwg.mxu0
    %v2953 = vadd.f32 %v2890, %v2911
    %v2954 = vxor.u32 %v2953, 2147483648
    %v2955 = vmul.f32 %v2954, 1.442695
    %v2956 = vpow.pop %v2955
    %v2957 = vadd.f32 %v2956, 1.0
    %v2958 = vrcp.pop %v2957
    %v2959 = vmul.f32 %v2957, %v2958
    %v2960 = vsub.f32 1.0, %v2959
    %v2961 = vmul.f32 %v2958, %v2960
    %v2962 = vadd.f32 %v2958, %v2961
    %vm2963 = vweird.f32 %v2957
    %vm2964 = vweird.f32 %v2958
    %vm2965 = vmor %vm2963, %vm2964
    %v2966 = vsel %vm2965, %v2958, %v2962
    %v2967 = vand.u32 2147483647, %v2957
    %vm2968 = vcmp.eq.f32.partialorder %v2967, 8.507059e+37
    %v2969 = vand.u32 %v2957, 2147483648
    %v2970 = vor.u32 1.1754944e-38, %v2969
    %v2971 = vsel %vm2968, %v2970, %v2966
    %v2972 = vmul.f32 1.0, %v2971
    %v2973 = vadd.f32 %v2891, %v2931
    %v2974 = vxor.u32 %v2973, 2147483648
    %v2975 = vmul.f32 %v2974, 1.442695
    %v2976 = vpow.pop %v2975
    %v2977 = vadd.f32 %v2976, 1.0
    %v2978 = vrcp.pop %v2977
    %v2979 = vmul.f32 %v2977, %v2978
    %v2980 = vsub.f32 1.0, %v2979
    %v2981 = vmul.f32 %v2978, %v2980
    %v2982 = vadd.f32 %v2978, %v2981
    %vm2983 = vweird.f32 %v2977
    %vm2984 = vweird.f32 %v2978
    %vm2985 = vmor %vm2983, %vm2984
    %v2986 = vsel %vm2985, %v2978, %v2982
    %v2987 = vand.u32 2147483647, %v2977
    %vm2988 = vcmp.eq.f32.partialorder %v2987, 8.507059e+37
    %v2989 = vand.u32 %v2977, 2147483648
    %v2990 = vor.u32 1.1754944e-38, %v2989
    %v2991 = vsel %vm2988, %v2990, %v2986
    %v2992 = vmul.f32 1.0, %v2991
    %v2993 = vmul.f32 %v2972, %v2951
    %v2994 = vadd.f32 %v2892, %v2993
    %v2995 = vtanh.pop %v2994
    %v2996 = vsub.f32 1.0, %v2992
    %v2997 = vmul.f32 %v2996, %v2995
    %v2998 = vmul.f32 %v2992, %v2888
    %v2999 = vadd.f32 %v2997, %v2998
    %v3000 = vsel %vm592, %v2999, 0.0
    %3001 = vst [vmem:[%s594] sm:$0xff] %v3000
    %v3002 = vsel %vm592, %v2999, %v2888
    %v3003 = vld [vmem:[%s597] sm:$0xff]
    %v3004 = vld [vmem:[%s597 + $0x8] sm:$0xff]
    %v3005 = vld [vmem:[%s597 + $0x10] sm:$0xff]
    %3006 = vmatpush.msra.mxu0 %v2602
    %3007 = vmatpush.msra.mxu0 %v2599
    %3008 = vmatpush.msra.mxu0 %v2596
    %3009 = vmatpush.msra.mxu0 %v2593
    %3010 = vmatpush.msra.mxu0 %v2590
    %3011 = vmatpush.msra.mxu0 %v2587
    %3012 = vmatpush.msra.mxu0 %v2584
    %3013 = vmatpush.msra.mxu0 %v2581
    %3014 = vmatpush.msra.mxu0 %v2578
    %3015 = vmatpush.msra.mxu0 %v2575
    %3016 = vmatpush.msra.mxu0 %v2572
    %3017 = vmatpush.msra.mxu0 %v2569
    %3018 = vmatpush.msra.mxu0 %v2566
    %3019 = vmatpush.msra.mxu0 %v2563
    %3020 = vmatpush.msra.mxu0 %v2560
    %3021 = vmatpush.msra.mxu0 %v2557
    %3022 = vmatmul.f32.gmra.mxu0 %v3002
    %v3023 = vpop.f32.mrf.mxu0
    %v3024 = vadd.f32 %v2775, %v3023
    %3025 = vdwg.mxu0
    %3026 = vmatpush.msra.mxu0 %v2603
    %3027 = vmatpush.msra.mxu0 %v2600
    %3028 = vmatpush.msra.mxu0 %v2597
    %3029 = vmatpush.msra.mxu0 %v2594
    %3030 = vmatpush.msra.mxu0 %v2591
    %3031 = vmatpush.msra.mxu0 %v2588
    %3032 = vmatpush.msra.mxu0 %v2585
    %3033 = vmatpush.msra.mxu0 %v2582
    %3034 = vmatpush.msra.mxu0 %v2579
    %3035 = vmatpush.msra.mxu0 %v2576
    %3036 = vmatpush.msra.mxu0 %v2573
    %3037 = vmatpush.msra.mxu0 %v2570
    %3038 = vmatpush.msra.mxu0 %v2567
    %3039 = vmatpush.msra.mxu0 %v2564
    %3040 = vmatpush.msra.mxu0 %v2561
    %3041 = vmatpush.msra.mxu0 %v2558
    %3042 = vmatmul.f32.gmra.mxu0 %v3002
    %v3043 = vpop.f32.mrf.mxu0
    %v3044 = vadd.f32 %v2776, %v3043
    %3045 = vdwg.mxu0
    %3046 = vmatpush.msra.mxu0 %v2604
    %3047 = vmatpush.msra.mxu0 %v2601
    %3048 = vmatpush.msra.mxu0 %v2598
    %3049 = vmatpush.msra.mxu0 %v2595
    %3050 = vmatpush.msra.mxu0 %v2592
    %3051 = vmatpush.msra.mxu0 %v2589
    %3052 = vmatpush.msra.mxu0 %v2586
    %3053 = vmatpush.msra.mxu0 %v2583
    %3054 = vmatpush.msra.mxu0 %v2580
    %3055 = vmatpush.msra.mxu0 %v2577
    %3056 = vmatpush.msra.mxu0 %v2574
    %3057 = vmatpush.msra.mxu0 %v2571
    %3058 = vmatpush.msra.mxu0 %v2568
    %3059 = vmatpush.msra.mxu0 %v2565
    %3060 = vmatpush.msra.mxu0 %v2562
    %3061 = vmatpush.msra.mxu0 %v2559
    %3062 = vmatmul.f32.gmra.mxu0 %v3002
    %v3063 = vpop.f32.mrf.mxu0
    %v3064 = vadd.f32 %v2777, %v3063
    %3065 = vdwg.mxu0
    %v3066 = vadd.f32 %v3003, %v3024
    %v3067 = vxor.u32 %v3066, 2147483648
    %v3068 = vmul.f32 %v3067, 1.442695
    %v3069 = vpow.pop %v3068
    %v3070 = vadd.f32 %v3069, 1.0
    %v3071 = vrcp.pop %v3070
    %v3072 = vmul.f32 %v3070, %v3071
    %v3073 = vsub.f32 1.0, %v3072
    %v3074 = vmul.f32 %v3071, %v3073
    %v3075 = vadd.f32 %v3071, %v3074
    %vm3076 = vweird.f32 %v3070
    %vm3077 = vweird.f32 %v3071
    %vm3078 = vmor %vm3076, %vm3077
    %v3079 = vsel %vm3078, %v3071, %v3075
    %v3080 = vand.u32 2147483647, %v3070
    %vm3081 = vcmp.eq.f32.partialorder %v3080, 8.507059e+37
    %v3082 = vand.u32 %v3070, 2147483648
    %v3083 = vor.u32 1.1754944e-38, %v3082
    %v3084 = vsel %vm3081, %v3083, %v3079
    %v3085 = vmul.f32 1.0, %v3084
    %v3086 = vadd.f32 %v3004, %v3044
    %v3087 = vxor.u32 %v3086, 2147483648
    %v3088 = vmul.f32 %v3087, 1.442695
    %v3089 = vpow.pop %v3088
    %v3090 = vadd.f32 %v3089, 1.0
    %v3091 = vrcp.pop %v3090
    %v3092 = vmul.f32 %v3090, %v3091
    %v3093 = vsub.f32 1.0, %v3092
    %v3094 = vmul.f32 %v3091, %v3093
    %v3095 = vadd.f32 %v3091, %v3094
    %vm3096 = vweird.f32 %v3090
    %vm3097 = vweird.f32 %v3091
    %vm3098 = vmor %vm3096, %vm3097
    %v3099 = vsel %vm3098, %v3091, %v3095
    %v3100 = vand.u32 2147483647, %v3090
    %vm3101 = vcmp.eq.f32.partialorder %v3100, 8.507059e+37
    %v3102 = vand.u32 %v3090, 2147483648
    %v3103 = vor.u32 1.1754944e-38, %v3102
    %v3104 = vsel %vm3101, %v3103, %v3099
    %v3105 = vmul.f32 1.0, %v3104
    %v3106 = vmul.f32 %v3085, %v3064
    %v3107 = vadd.f32 %v3005, %v3106
    %v3108 = vtanh.pop %v3107
    %v3109 = vsub.f32 1.0, %v3105
    %v3110 = vmul.f32 %v3109, %v3108
    %v3111 = vmul.f32 %v3105, %v3002
    %v3112 = vadd.f32 %v3110, %v3111
    %v3113 = vsel %vm713, %v3112, 0.0
    %3114 = vst [vmem:[%s715] sm:$0xff] %v3113
    %v3115 = vsel %vm713, %v3112, %v3002
    %v3116 = vld [vmem:[%s718] sm:$0xff]
    %v3117 = vld [vmem:[%s718 + $0x8] sm:$0xff]
    %v3118 = vld [vmem:[%s718 + $0x10] sm:$0xff]
    %3119 = vmatpush.msra.mxu0 %v2602
    %3120 = vmatpush.msra.mxu0 %v2599
    %3121 = vmatpush.msra.mxu0 %v2596
    %3122 = vmatpush.msra.mxu0 %v2593
    %3123 = vmatpush.msra.mxu0 %v2590
    %3124 = vmatpush.msra.mxu0 %v2587
    %3125 = vmatpush.msra.mxu0 %v2584
    %3126 = vmatpush.msra.mxu0 %v2581
    %3127 = vmatpush.msra.mxu0 %v2578
    %3128 = vmatpush.msra.mxu0 %v2575
    %3129 = vmatpush.msra.mxu0 %v2572
    %3130 = vmatpush.msra.mxu0 %v2569
    %3131 = vmatpush.msra.mxu0 %v2566
    %3132 = vmatpush.msra.mxu0 %v2563
    %3133 = vmatpush.msra.mxu0 %v2560
    %3134 = vmatpush.msra.mxu0 %v2557
    %3135 = vmatmul.f32.gmra.mxu0 %v3115
    %v3136 = vpop.f32.mrf.mxu0
    %v3137 = vadd.f32 %v2775, %v3136
    %3138 = vdwg.mxu0
    %3139 = vmatpush.msra.mxu0 %v2603
    %3140 = vmatpush.msra.mxu0 %v2600
    %3141 = vmatpush.msra.mxu0 %v2597
    %3142 = vmatpush.msra.mxu0 %v2594
    %3143 = vmatpush.msra.mxu0 %v2591
    %3144 = vmatpush.msra.mxu0 %v2588
    %3145 = vmatpush.msra.mxu0 %v2585
    %3146 = vmatpush.msra.mxu0 %v2582
    %3147 = vmatpush.msra.mxu0 %v2579
    %3148 = vmatpush.msra.mxu0 %v2576
    %3149 = vmatpush.msra.mxu0 %v2573
    %3150 = vmatpush.msra.mxu0 %v2570
    %3151 = vmatpush.msra.mxu0 %v2567
    %3152 = vmatpush.msra.mxu0 %v2564
    %3153 = vmatpush.msra.mxu0 %v2561
    %3154 = vmatpush.msra.mxu0 %v2558
    %3155 = vmatmul.f32.gmra.mxu0 %v3115
    %v3156 = vpop.f32.mrf.mxu0
    %v3157 = vadd.f32 %v2776, %v3156
    %3158 = vdwg.mxu0
    %3159 = vmatpush.msra.mxu0 %v2604
    %3160 = vmatpush.msra.mxu0 %v2601
    %3161 = vmatpush.msra.mxu0 %v2598
    %3162 = vmatpush.msra.mxu0 %v2595
    %3163 = vmatpush.msra.mxu0 %v2592
    %3164 = vmatpush.msra.mxu0 %v2589
    %3165 = vmatpush.msra.mxu0 %v2586
    %3166 = vmatpush.msra.mxu0 %v2583
    %3167 = vmatpush.msra.mxu0 %v2580
    %3168 = vmatpush.msra.mxu0 %v2577
    %3169 = vmatpush.msra.mxu0 %v2574
    %3170 = vmatpush.msra.mxu0 %v2571
    %3171 = vmatpush.msra.mxu0 %v2568
    %3172 = vmatpush.msra.mxu0 %v2565
    %3173 = vmatpush.msra.mxu0 %v2562
    %3174 = vmatpush.msra.mxu0 %v2559
    %3175 = vmatmul.f32.gmra.mxu0 %v3115
    %v3176 = vpop.f32.mrf.mxu0
    %v3177 = vadd.f32 %v2777, %v3176
    %3178 = vdwg.mxu0
    %v3179 = vadd.f32 %v3116, %v3137
    %v3180 = vxor.u32 %v3179, 2147483648
    %v3181 = vmul.f32 %v3180, 1.442695
    %v3182 = vpow.pop %v3181
    %v3183 = vadd.f32 %v3182, 1.0
    %v3184 = vrcp.pop %v3183
    %v3185 = vmul.f32 %v3183, %v3184
    %v3186 = vsub.f32 1.0, %v3185
    %v3187 = vmul.f32 %v3184, %v3186
    %v3188 = vadd.f32 %v3184, %v3187
    %vm3189 = vweird.f32 %v3183
    %vm3190 = vweird.f32 %v3184
    %vm3191 = vmor %vm3189, %vm3190
    %v3192 = vsel %vm3191, %v3184, %v3188
    %v3193 = vand.u32 2147483647, %v3183
    %vm3194 = vcmp.eq.f32.partialorder %v3193, 8.507059e+37
    %v3195 = vand.u32 %v3183, 2147483648
    %v3196 = vor.u32 1.1754944e-38, %v3195
    %v3197 = vsel %vm3194, %v3196, %v3192
    %v3198 = vmul.f32 1.0, %v3197
    %v3199 = vadd.f32 %v3117, %v3157
    %v3200 = vxor.u32 %v3199, 2147483648
    %v3201 = vmul.f32 %v3200, 1.442695
    %v3202 = vpow.pop %v3201
    %v3203 = vadd.f32 %v3202, 1.0
    %v3204 = vrcp.pop %v3203
    %v3205 = vmul.f32 %v3203, %v3204
    %v3206 = vsub.f32 1.0, %v3205
    %v3207 = vmul.f32 %v3204, %v3206
    %v3208 = vadd.f32 %v3204, %v3207
    %vm3209 = vweird.f32 %v3203
    %vm3210 = vweird.f32 %v3204
    %vm3211 = vmor %vm3209, %vm3210
    %v3212 = vsel %vm3211, %v3204, %v3208
    %v3213 = vand.u32 2147483647, %v3203
    %vm3214 = vcmp.eq.f32.partialorder %v3213, 8.507059e+37
    %v3215 = vand.u32 %v3203, 2147483648
    %v3216 = vor.u32 1.1754944e-38, %v3215
    %v3217 = vsel %vm3214, %v3216, %v3212
    %v3218 = vmul.f32 1.0, %v3217
    %v3219 = vmul.f32 %v3198, %v3177
    %v3220 = vadd.f32 %v3118, %v3219
    %v3221 = vtanh.pop %v3220
    %v3222 = vsub.f32 1.0, %v3218
    %v3223 = vmul.f32 %v3222, %v3221
    %v3224 = vmul.f32 %v3218, %v3115
    %v3225 = vadd.f32 %v3223, %v3224
    %v3226 = vsel %vm834, %v3225, 0.0
    %3227 = vst [vmem:[%s836] sm:$0xff] %v3226
    %v3228 = vsel %vm834, %v3225, %v3115
    %v3229 = vld [vmem:[%s839] sm:$0xff]
    %v3230 = vld [vmem:[%s839 + $0x8] sm:$0xff]
    %v3231 = vld [vmem:[%s839 + $0x10] sm:$0xff]
    %3232 = vmatpush.msra.mxu0 %v2602
    %3233 = vmatpush.msra.mxu0 %v2599
    %3234 = vmatpush.msra.mxu0 %v2596
    %3235 = vmatpush.msra.mxu0 %v2593
    %3236 = vmatpush.msra.mxu0 %v2590
    %3237 = vmatpush.msra.mxu0 %v2587
    %3238 = vmatpush.msra.mxu0 %v2584
    %3239 = vmatpush.msra.mxu0 %v2581
    %3240 = vmatpush.msra.mxu0 %v2578
    %3241 = vmatpush.msra.mxu0 %v2575
    %3242 = vmatpush.msra.mxu0 %v2572
    %3243 = vmatpush.msra.mxu0 %v2569
    %3244 = vmatpush.msra.mxu0 %v2566
    %3245 = vmatpush.msra.mxu0 %v2563
    %3246 = vmatpush.msra.mxu0 %v2560
    %3247 = vmatpush.msra.mxu0 %v2557
    %3248 = vmatmul.f32.gmra.mxu0 %v3228
    %v3249 = vpop.f32.mrf.mxu0
    %v3250 = vadd.f32 %v2775, %v3249
    %3251 = vdwg.mxu0
    %3252 = vmatpush.msra.mxu0 %v2603
    %3253 = vmatpush.msra.mxu0 %v2600
    %3254 = vmatpush.msra.mxu0 %v2597
    %3255 = vmatpush.msra.mxu0 %v2594
    %3256 = vmatpush.msra.mxu0 %v2591
    %3257 = vmatpush.msra.mxu0 %v2588
    %3258 = vmatpush.msra.mxu0 %v2585
    %3259 = vmatpush.msra.mxu0 %v2582
    %3260 = vmatpush.msra.mxu0 %v2579
    %3261 = vmatpush.msra.mxu0 %v2576
    %3262 = vmatpush.msra.mxu0 %v2573
    %3263 = vmatpush.msra.mxu0 %v2570
    %3264 = vmatpush.msra.mxu0 %v2567
    %3265 = vmatpush.msra.mxu0 %v2564
    %3266 = vmatpush.msra.mxu0 %v2561
    %3267 = vmatpush.msra.mxu0 %v2558
    %3268 = vmatmul.f32.gmra.mxu0 %v3228
    %v3269 = vpop.f32.mrf.mxu0
    %v3270 = vadd.f32 %v2776, %v3269
    %3271 = vdwg.mxu0
    %3272 = vmatpush.msra.mxu0 %v2604
    %3273 = vmatpush.msra.mxu0 %v2601
    %3274 = vmatpush.msra.mxu0 %v2598
    %3275 = vmatpush.msra.mxu0 %v2595
    %3276 = vmatpush.msra.mxu0 %v2592
    %3277 = vmatpush.msra.mxu0 %v2589
    %3278 = vmatpush.msra.mxu0 %v2586
    %3279 = vmatpush.msra.mxu0 %v2583
    %3280 = vmatpush.msra.mxu0 %v2580
    %3281 = vmatpush.msra.mxu0 %v2577
    %3282 = vmatpush.msra.mxu0 %v2574
    %3283 = vmatpush.msra.mxu0 %v2571
    %3284 = vmatpush.msra.mxu0 %v2568
    %3285 = vmatpush.msra.mxu0 %v2565
    %3286 = vmatpush.msra.mxu0 %v2562
    %3287 = vmatpush.msra.mxu0 %v2559
    %3288 = vmatmul.f32.gmra.mxu0 %v3228
    %v3289 = vpop.f32.mrf.mxu0
    %v3290 = vadd.f32 %v2777, %v3289
    %3291 = vdwg.mxu0
    %v3292 = vadd.f32 %v3229, %v3250
    %v3293 = vxor.u32 %v3292, 2147483648
    %v3294 = vmul.f32 %v3293, 1.442695
    %v3295 = vpow.pop %v3294
    %v3296 = vadd.f32 %v3295, 1.0
    %v3297 = vrcp.pop %v3296
    %v3298 = vmul.f32 %v3296, %v3297
    %v3299 = vsub.f32 1.0, %v3298
    %v3300 = vmul.f32 %v3297, %v3299
    %v3301 = vadd.f32 %v3297, %v3300
    %vm3302 = vweird.f32 %v3296
    %vm3303 = vweird.f32 %v3297
    %vm3304 = vmor %vm3302, %vm3303
    %v3305 = vsel %vm3304, %v3297, %v3301
    %v3306 = vand.u32 2147483647, %v3296
    %vm3307 = vcmp.eq.f32.partialorder %v3306, 8.507059e+37
    %v3308 = vand.u32 %v3296, 2147483648
    %v3309 = vor.u32 1.1754944e-38, %v3308
    %v3310 = vsel %vm3307, %v3309, %v3305
    %v3311 = vmul.f32 1.0, %v3310
    %v3312 = vadd.f32 %v3230, %v3270
    %v3313 = vxor.u32 %v3312, 2147483648
    %v3314 = vmul.f32 %v3313, 1.442695
    %v3315 = vpow.pop %v3314
    %v3316 = vadd.f32 %v3315, 1.0
    %v3317 = vrcp.pop %v3316
    %v3318 = vmul.f32 %v3316, %v3317
    %v3319 = vsub.f32 1.0, %v3318
    %v3320 = vmul.f32 %v3317, %v3319
    %v3321 = vadd.f32 %v3317, %v3320
    %vm3322 = vweird.f32 %v3316
    %vm3323 = vweird.f32 %v3317
    %vm3324 = vmor %vm3322, %vm3323
    %v3325 = vsel %vm3324, %v3317, %v3321
    %v3326 = vand.u32 2147483647, %v3316
    %vm3327 = vcmp.eq.f32.partialorder %v3326, 8.507059e+37
    %v3328 = vand.u32 %v3316, 2147483648
    %v3329 = vor.u32 1.1754944e-38, %v3328
    %v3330 = vsel %vm3327, %v3329, %v3325
    %v3331 = vmul.f32 1.0, %v3330
    %v3332 = vmul.f32 %v3311, %v3290
    %v3333 = vadd.f32 %v3231, %v3332
    %v3334 = vtanh.pop %v3333
    %v3335 = vsub.f32 1.0, %v3331
    %v3336 = vmul.f32 %v3335, %v3334
    %v3337 = vmul.f32 %v3331, %v3228
    %v3338 = vadd.f32 %v3336, %v3337
    %v3339 = vsel %vm955, %v3338, 0.0
    %3340 = vst [vmem:[%s957] sm:$0xff] %v3339
    %v3341 = vsel %vm955, %v3338, %v3228
    %v3342 = vld [vmem:[%s960] sm:$0xff]
    %v3343 = vld [vmem:[%s960 + $0x8] sm:$0xff]
    %v3344 = vld [vmem:[%s960 + $0x10] sm:$0xff]
    %3345 = vmatpush.msra.mxu0 %v2602
    %3346 = vmatpush.msra.mxu0 %v2599
    %3347 = vmatpush.msra.mxu0 %v2596
    %3348 = vmatpush.msra.mxu0 %v2593
    %3349 = vmatpush.msra.mxu0 %v2590
    %3350 = vmatpush.msra.mxu0 %v2587
    %3351 = vmatpush.msra.mxu0 %v2584
    %3352 = vmatpush.msra.mxu0 %v2581
    %3353 = vmatpush.msra.mxu0 %v2578
    %3354 = vmatpush.msra.mxu0 %v2575
    %3355 = vmatpush.msra.mxu0 %v2572
    %3356 = vmatpush.msra.mxu0 %v2569
    %3357 = vmatpush.msra.mxu0 %v2566
    %3358 = vmatpush.msra.mxu0 %v2563
    %3359 = vmatpush.msra.mxu0 %v2560
    %3360 = vmatpush.msra.mxu0 %v2557
    %3361 = vmatmul.f32.gmra.mxu0 %v3341
    %v3362 = vpop.f32.mrf.mxu0
    %v3363 = vadd.f32 %v2775, %v3362
    %3364 = vdwg.mxu0
    %3365 = vmatpush.msra.mxu0 %v2603
    %3366 = vmatpush.msra.mxu0 %v2600
    %3367 = vmatpush.msra.mxu0 %v2597
    %3368 = vmatpush.msra.mxu0 %v2594
    %3369 = vmatpush.msra.mxu0 %v2591
    %3370 = vmatpush.msra.mxu0 %v2588
    %3371 = vmatpush.msra.mxu0 %v2585
    %3372 = vmatpush.msra.mxu0 %v2582
    %3373 = vmatpush.msra.mxu0 %v2579
    %3374 = vmatpush.msra.mxu0 %v2576
    %3375 = vmatpush.msra.mxu0 %v2573
    %3376 = vmatpush.msra.mxu0 %v2570
    %3377 = vmatpush.msra.mxu0 %v2567
    %3378 = vmatpush.msra.mxu0 %v2564
    %3379 = vmatpush.msra.mxu0 %v2561
    %3380 = vmatpush.msra.mxu0 %v2558
    %3381 = vmatmul.f32.gmra.mxu0 %v3341
    %v3382 = vpop.f32.mrf.mxu0
    %v3383 = vadd.f32 %v2776, %v3382
    %3384 = vdwg.mxu0
    %3385 = vmatpush.msra.mxu0 %v2604
    %3386 = vmatpush.msra.mxu0 %v2601
    %3387 = vmatpush.msra.mxu0 %v2598
    %3388 = vmatpush.msra.mxu0 %v2595
    %3389 = vmatpush.msra.mxu0 %v2592
    %3390 = vmatpush.msra.mxu0 %v2589
    %3391 = vmatpush.msra.mxu0 %v2586
    %3392 = vmatpush.msra.mxu0 %v2583
    %3393 = vmatpush.msra.mxu0 %v2580
    %3394 = vmatpush.msra.mxu0 %v2577
    %3395 = vmatpush.msra.mxu0 %v2574
    %3396 = vmatpush.msra.mxu0 %v2571
    %3397 = vmatpush.msra.mxu0 %v2568
    %3398 = vmatpush.msra.mxu0 %v2565
    %3399 = vmatpush.msra.mxu0 %v2562
    %3400 = vmatpush.msra.mxu0 %v2559
    %3401 = vmatmul.f32.gmra.mxu0 %v3341
    %v3402 = vpop.f32.mrf.mxu0
    %v3403 = vadd.f32 %v2777, %v3402
    %3404 = vdwg.mxu0
    %v3405 = vadd.f32 %v3342, %v3363
    %v3406 = vxor.u32 %v3405, 2147483648
    %v3407 = vmul.f32 %v3406, 1.442695
    %v3408 = vpow.pop %v3407
    %v3409 = vadd.f32 %v3408, 1.0
    %v3410 = vrcp.pop %v3409
    %v3411 = vmul.f32 %v3409, %v3410
    %v3412 = vsub.f32 1.0, %v3411
    %v3413 = vmul.f32 %v3410, %v3412
    %v3414 = vadd.f32 %v3410, %v3413
    %vm3415 = vweird.f32 %v3409
    %vm3416 = vweird.f32 %v3410
    %vm3417 = vmor %vm3415, %vm3416
    %v3418 = vsel %vm3417, %v3410, %v3414
    %v3419 = vand.u32 2147483647, %v3409
    %vm3420 = vcmp.eq.f32.partialorder %v3419, 8.507059e+37
    %v3421 = vand.u32 %v3409, 2147483648
    %v3422 = vor.u32 1.1754944e-38, %v3421
    %v3423 = vsel %vm3420, %v3422, %v3418
    %v3424 = vmul.f32 1.0, %v3423
    %v3425 = vadd.f32 %v3343, %v3383
    %v3426 = vxor.u32 %v3425, 2147483648
    %v3427 = vmul.f32 %v3426, 1.442695
    %v3428 = vpow.pop %v3427
    %v3429 = vadd.f32 %v3428, 1.0
    %v3430 = vrcp.pop %v3429
    %v3431 = vmul.f32 %v3429, %v3430
    %v3432 = vsub.f32 1.0, %v3431
    %v3433 = vmul.f32 %v3430, %v3432
    %v3434 = vadd.f32 %v3430, %v3433
    %vm3435 = vweird.f32 %v3429
    %vm3436 = vweird.f32 %v3430
    %vm3437 = vmor %vm3435, %vm3436
    %v3438 = vsel %vm3437, %v3430, %v3434
    %v3439 = vand.u32 2147483647, %v3429
    %vm3440 = vcmp.eq.f32.partialorder %v3439, 8.507059e+37
    %v3441 = vand.u32 %v3429, 2147483648
    %v3442 = vor.u32 1.1754944e-38, %v3441
    %v3443 = vsel %vm3440, %v3442, %v3438
    %v3444 = vmul.f32 1.0, %v3443
    %v3445 = vmul.f32 %v3424, %v3403
    %v3446 = vadd.f32 %v3344, %v3445
    %v3447 = vtanh.pop %v3446
    %v3448 = vsub.f32 1.0, %v3444
    %v3449 = vmul.f32 %v3448, %v3447
    %v3450 = vmul.f32 %v3444, %v3341
    %v3451 = vadd.f32 %v3449, %v3450
    %v3452 = vsel %vm1076, %v3451, 0.0
    %3453 = vst [vmem:[%s1078] sm:$0xff] %v3452
    %v3454 = vsel %vm1076, %v3451, %v3341
    %v3455 = vld [vmem:[%s1081] sm:$0xff]
    %v3456 = vld [vmem:[%s1081 + $0x8] sm:$0xff]
    %v3457 = vld [vmem:[%s1081 + $0x10] sm:$0xff]
    %3458 = vmatpush.msra.mxu0 %v2602
    %3459 = vmatpush.msra.mxu0 %v2599
    %3460 = vmatpush.msra.mxu0 %v2596
    %3461 = vmatpush.msra.mxu0 %v2593
    %3462 = vmatpush.msra.mxu0 %v2590
    %3463 = vmatpush.msra.mxu0 %v2587
    %3464 = vmatpush.msra.mxu0 %v2584
    %3465 = vmatpush.msra.mxu0 %v2581
    %3466 = vmatpush.msra.mxu0 %v2578
    %3467 = vmatpush.msra.mxu0 %v2575
    %3468 = vmatpush.msra.mxu0 %v2572
    %3469 = vmatpush.msra.mxu0 %v2569
    %3470 = vmatpush.msra.mxu0 %v2566
    %3471 = vmatpush.msra.mxu0 %v2563
    %3472 = vmatpush.msra.mxu0 %v2560
    %3473 = vmatpush.msra.mxu0 %v2557
    %3474 = vmatmul.f32.gmra.mxu0 %v3454
    %v3475 = vpop.f32.mrf.mxu0
    %v3476 = vadd.f32 %v2775, %v3475
    %3477 = vdwg.mxu0
    %3478 = vmatpush.msra.mxu0 %v2603
    %3479 = vmatpush.msra.mxu0 %v2600
    %3480 = vmatpush.msra.mxu0 %v2597
    %3481 = vmatpush.msra.mxu0 %v2594
    %3482 = vmatpush.msra.mxu0 %v2591
    %3483 = vmatpush.msra.mxu0 %v2588
    %3484 = vmatpush.msra.mxu0 %v2585
    %3485 = vmatpush.msra.mxu0 %v2582
    %3486 = vmatpush.msra.mxu0 %v2579
    %3487 = vmatpush.msra.mxu0 %v2576
    %3488 = vmatpush.msra.mxu0 %v2573
    %3489 = vmatpush.msra.mxu0 %v2570
    %3490 = vmatpush.msra.mxu0 %v2567
    %3491 = vmatpush.msra.mxu0 %v2564
    %3492 = vmatpush.msra.mxu0 %v2561
    %3493 = vmatpush.msra.mxu0 %v2558
    %3494 = vmatmul.f32.gmra.mxu0 %v3454
    %v3495 = vpop.f32.mrf.mxu0
    %v3496 = vadd.f32 %v2776, %v3495
    %3497 = vdwg.mxu0
    %3498 = vmatpush.msra.mxu0 %v2604
    %3499 = vmatpush.msra.mxu0 %v2601
    %3500 = vmatpush.msra.mxu0 %v2598
    %3501 = vmatpush.msra.mxu0 %v2595
    %3502 = vmatpush.msra.mxu0 %v2592
    %3503 = vmatpush.msra.mxu0 %v2589
    %3504 = vmatpush.msra.mxu0 %v2586
    %3505 = vmatpush.msra.mxu0 %v2583
    %3506 = vmatpush.msra.mxu0 %v2580
    %3507 = vmatpush.msra.mxu0 %v2577
    %3508 = vmatpush.msra.mxu0 %v2574
    %3509 = vmatpush.msra.mxu0 %v2571
    %3510 = vmatpush.msra.mxu0 %v2568
    %3511 = vmatpush.msra.mxu0 %v2565
    %3512 = vmatpush.msra.mxu0 %v2562
    %3513 = vmatpush.msra.mxu0 %v2559
    %3514 = vmatmul.f32.gmra.mxu0 %v3454
    %v3515 = vpop.f32.mrf.mxu0
    %v3516 = vadd.f32 %v2777, %v3515
    %3517 = vdwg.mxu0
    %v3518 = vadd.f32 %v3455, %v3476
    %v3519 = vxor.u32 %v3518, 2147483648
    %v3520 = vmul.f32 %v3519, 1.442695
    %v3521 = vpow.pop %v3520
    %v3522 = vadd.f32 %v3521, 1.0
    %v3523 = vrcp.pop %v3522
    %v3524 = vmul.f32 %v3522, %v3523
    %v3525 = vsub.f32 1.0, %v3524
    %v3526 = vmul.f32 %v3523, %v3525
    %v3527 = vadd.f32 %v3523, %v3526
    %vm3528 = vweird.f32 %v3522
    %vm3529 = vweird.f32 %v3523
    %vm3530 = vmor %vm3528, %vm3529
    %v3531 = vsel %vm3530, %v3523, %v3527
    %v3532 = vand.u32 2147483647, %v3522
    %vm3533 = vcmp.eq.f32.partialorder %v3532, 8.507059e+37
    %v3534 = vand.u32 %v3522, 2147483648
    %v3535 = vor.u32 1.1754944e-38, %v3534
    %v3536 = vsel %vm3533, %v3535, %v3531
    %v3537 = vmul.f32 1.0, %v3536
    %v3538 = vadd.f32 %v3456, %v3496
    %v3539 = vxor.u32 %v3538, 2147483648
    %v3540 = vmul.f32 %v3539, 1.442695
    %v3541 = vpow.pop %v3540
    %v3542 = vadd.f32 %v3541, 1.0
    %v3543 = vrcp.pop %v3542
    %v3544 = vmul.f32 %v3542, %v3543
    %v3545 = vsub.f32 1.0, %v3544
    %v3546 = vmul.f32 %v3543, %v3545
    %v3547 = vadd.f32 %v3543, %v3546
    %vm3548 = vweird.f32 %v3542
    %vm3549 = vweird.f32 %v3543
    %vm3550 = vmor %vm3548, %vm3549
    %v3551 = vsel %vm3550, %v3543, %v3547
    %v3552 = vand.u32 2147483647, %v3542
    %vm3553 = vcmp.eq.f32.partialorder %v3552, 8.507059e+37
    %v3554 = vand.u32 %v3542, 2147483648
    %v3555 = vor.u32 1.1754944e-38, %v3554
    %v3556 = vsel %vm3553, %v3555, %v3551
    %v3557 = vmul.f32 1.0, %v3556
    %v3558 = vmul.f32 %v3537, %v3516
    %v3559 = vadd.f32 %v3457, %v3558
    %v3560 = vtanh.pop %v3559
    %v3561 = vsub.f32 1.0, %v3557
    %v3562 = vmul.f32 %v3561, %v3560
    %v3563 = vmul.f32 %v3557, %v3454
    %v3564 = vadd.f32 %v3562, %v3563
    %v3565 = vsel %vm1197, %v3564, 0.0
    %3566 = vst [vmem:[%s1199] sm:$0xff] %v3565
    %v3567 = vsel %vm1197, %v3564, %v3454
    %v3568 = vld [vmem:[%s1202] sm:$0xff]
    %v3569 = vld [vmem:[%s1202 + $0x8] sm:$0xff]
    %v3570 = vld [vmem:[%s1202 + $0x10] sm:$0xff]
    %3571 = vmatpush.msra.mxu0 %v2602
    %3572 = vmatpush.msra.mxu0 %v2599
    %3573 = vmatpush.msra.mxu0 %v2596
    %3574 = vmatpush.msra.mxu0 %v2593
    %3575 = vmatpush.msra.mxu0 %v2590
    %3576 = vmatpush.msra.mxu0 %v2587
    %3577 = vmatpush.msra.mxu0 %v2584
    %3578 = vmatpush.msra.mxu0 %v2581
    %3579 = vmatpush.msra.mxu0 %v2578
    %3580 = vmatpush.msra.mxu0 %v2575
    %3581 = vmatpush.msra.mxu0 %v2572
    %3582 = vmatpush.msra.mxu0 %v2569
    %3583 = vmatpush.msra.mxu0 %v2566
    %3584 = vmatpush.msra.mxu0 %v2563
    %3585 = vmatpush.msra.mxu0 %v2560
    %3586 = vmatpush.msra.mxu0 %v2557
    %3587 = vmatmul.f32.gmra.mxu0 %v3567
    %v3588 = vpop.f32.mrf.mxu0
    %v3589 = vadd.f32 %v2775, %v3588
    %3590 = vdwg.mxu0
    %3591 = vmatpush.msra.mxu0 %v2603
    %3592 = vmatpush.msra.mxu0 %v2600
    %3593 = vmatpush.msra.mxu0 %v2597
    %3594 = vmatpush.msra.mxu0 %v2594
    %3595 = vmatpush.msra.mxu0 %v2591
    %3596 = vmatpush.msra.mxu0 %v2588
    %3597 = vmatpush.msra.mxu0 %v2585
    %3598 = vmatpush.msra.mxu0 %v2582
    %3599 = vmatpush.msra.mxu0 %v2579
    %3600 = vmatpush.msra.mxu0 %v2576
    %3601 = vmatpush.msra.mxu0 %v2573
    %3602 = vmatpush.msra.mxu0 %v2570
    %3603 = vmatpush.msra.mxu0 %v2567
    %3604 = vmatpush.msra.mxu0 %v2564
    %3605 = vmatpush.msra.mxu0 %v2561
    %3606 = vmatpush.msra.mxu0 %v2558
    %3607 = vmatmul.f32.gmra.mxu0 %v3567
    %v3608 = vpop.f32.mrf.mxu0
    %v3609 = vadd.f32 %v2776, %v3608
    %3610 = vdwg.mxu0
    %3611 = vmatpush.msra.mxu0 %v2604
    %3612 = vmatpush.msra.mxu0 %v2601
    %3613 = vmatpush.msra.mxu0 %v2598
    %3614 = vmatpush.msra.mxu0 %v2595
    %3615 = vmatpush.msra.mxu0 %v2592
    %3616 = vmatpush.msra.mxu0 %v2589
    %3617 = vmatpush.msra.mxu0 %v2586
    %3618 = vmatpush.msra.mxu0 %v2583
    %3619 = vmatpush.msra.mxu0 %v2580
    %3620 = vmatpush.msra.mxu0 %v2577
    %3621 = vmatpush.msra.mxu0 %v2574
    %3622 = vmatpush.msra.mxu0 %v2571
    %3623 = vmatpush.msra.mxu0 %v2568
    %3624 = vmatpush.msra.mxu0 %v2565
    %3625 = vmatpush.msra.mxu0 %v2562
    %3626 = vmatpush.msra.mxu0 %v2559
    %3627 = vmatmul.f32.gmra.mxu0 %v3567
    %v3628 = vpop.f32.mrf.mxu0
    %v3629 = vadd.f32 %v2777, %v3628
    %3630 = vdwg.mxu0
    %v3631 = vadd.f32 %v3568, %v3589
    %v3632 = vxor.u32 %v3631, 2147483648
    %v3633 = vmul.f32 %v3632, 1.442695
    %v3634 = vpow.pop %v3633
    %v3635 = vadd.f32 %v3634, 1.0
    %v3636 = vrcp.pop %v3635
    %v3637 = vmul.f32 %v3635, %v3636
    %v3638 = vsub.f32 1.0, %v3637
    %v3639 = vmul.f32 %v3636, %v3638
    %v3640 = vadd.f32 %v3636, %v3639
    %vm3641 = vweird.f32 %v3635
    %vm3642 = vweird.f32 %v3636
    %vm3643 = vmor %vm3641, %vm3642
    %v3644 = vsel %vm3643, %v3636, %v3640
    %v3645 = vand.u32 2147483647, %v3635
    %vm3646 = vcmp.eq.f32.partialorder %v3645, 8.507059e+37
    %v3647 = vand.u32 %v3635, 2147483648
    %v3648 = vor.u32 1.1754944e-38, %v3647
    %v3649 = vsel %vm3646, %v3648, %v3644
    %v3650 = vmul.f32 1.0, %v3649
    %v3651 = vadd.f32 %v3569, %v3609
    %v3652 = vxor.u32 %v3651, 2147483648
    %v3653 = vmul.f32 %v3652, 1.442695
    %v3654 = vpow.pop %v3653
    %v3655 = vadd.f32 %v3654, 1.0
    %v3656 = vrcp.pop %v3655
    %v3657 = vmul.f32 %v3655, %v3656
    %v3658 = vsub.f32 1.0, %v3657
    %v3659 = vmul.f32 %v3656, %v3658
    %v3660 = vadd.f32 %v3656, %v3659
    %vm3661 = vweird.f32 %v3655
    %vm3662 = vweird.f32 %v3656
    %vm3663 = vmor %vm3661, %vm3662
    %v3664 = vsel %vm3663, %v3656, %v3660
    %v3665 = vand.u32 2147483647, %v3655
    %vm3666 = vcmp.eq.f32.partialorder %v3665, 8.507059e+37
    %v3667 = vand.u32 %v3655, 2147483648
    %v3668 = vor.u32 1.1754944e-38, %v3667
    %v3669 = vsel %vm3666, %v3668, %v3664
    %v3670 = vmul.f32 1.0, %v3669
    %v3671 = vmul.f32 %v3650, %v3629
    %v3672 = vadd.f32 %v3570, %v3671
    %v3673 = vtanh.pop %v3672
    %v3674 = vsub.f32 1.0, %v3670
    %v3675 = vmul.f32 %v3674, %v3673
    %v3676 = vmul.f32 %v3670, %v3567
    %v3677 = vadd.f32 %v3675, %v3676
    %v3678 = vsel %vm1318, %v3677, 0.0
    %3679 = vst [vmem:[%s1320] sm:$0xff] %v3678
    %v3680 = vsel %vm1318, %v3677, %v3567
    %s3681 = scalar_lea.vmem [#allocation13], 16
    %3682 = vst [vmem:[%s3681] sm:$0xff] %v3680
    %s3683 = scalar_lea.vmem [#allocation7], 1152
    %v3684 = vld [vmem:[%s3683] sm:$0xff]
    %v3685 = vld [vmem:[%s3683 + $0x8] sm:$0xff]
    %v3686 = vld [vmem:[%s3683 + $0x10] sm:$0xff]
    %v3687 = vld [vmem:[%s3683 + $0x18] sm:$0xff]
    %v3688 = vld [vmem:[%s3683 + $0x20] sm:$0xff]
    %v3689 = vld [vmem:[%s3683 + $0x28] sm:$0xff]
    %v3690 = vld [vmem:[%s3683 + $0x30] sm:$0xff]
    %v3691 = vld [vmem:[%s3683 + $0x38] sm:$0xff]
    %v3692 = vld [vmem:[%s3683 + $0x40] sm:$0xff]
    %v3693 = vld [vmem:[%s3683 + $0x48] sm:$0xff]
    %v3694 = vld [vmem:[%s3683 + $0x50] sm:$0xff]
    %v3695 = vld [vmem:[%s3683 + $0x58] sm:$0xff]
    %v3696 = vld [vmem:[%s3683 + $0x60] sm:$0xff]
    %v3697 = vld [vmem:[%s3683 + $0x68] sm:$0xff]
    %v3698 = vld [vmem:[%s3683 + $0x70] sm:$0xff]
    %v3699 = vld [vmem:[%s3683 + $0x78] sm:$0xff]
    %v3700 = vld [vmem:[%s3683 + $0x80] sm:$0xff]
    %v3701 = vld [vmem:[%s3683 + $0x88] sm:$0xff]
    %v3702 = vld [vmem:[%s3683 + $0x90] sm:$0xff]
    %v3703 = vld [vmem:[%s3683 + $0x98] sm:$0xff]
    %v3704 = vld [vmem:[%s3683 + $0xa0] sm:$0xff]
    %v3705 = vld [vmem:[%s3683 + $0xa8] sm:$0xff]
    %v3706 = vld [vmem:[%s3683 + $0xb0] sm:$0xff]
    %v3707 = vld [vmem:[%s3683 + $0xb8] sm:$0xff]
    %v3708 = vld [vmem:[%s3683 + $0xc0] sm:$0xff]
    %v3709 = vld [vmem:[%s3683 + $0xc8] sm:$0xff]
    %v3710 = vld [vmem:[%s3683 + $0xd0] sm:$0xff]
    %v3711 = vld [vmem:[%s3683 + $0xd8] sm:$0xff]
    %v3712 = vld [vmem:[%s3683 + $0xe0] sm:$0xff]
    %v3713 = vld [vmem:[%s3683 + $0xe8] sm:$0xff]
    %v3714 = vld [vmem:[%s3683 + $0xf0] sm:$0xff]
    %v3715 = vld [vmem:[%s3683 + $0xf8] sm:$0xff]
    %v3716 = vld [vmem:[%s3683 + $0x100] sm:$0xff]
    %v3717 = vld [vmem:[%s3683 + $0x108] sm:$0xff]
    %v3718 = vld [vmem:[%s3683 + $0x110] sm:$0xff]
    %v3719 = vld [vmem:[%s3683 + $0x118] sm:$0xff]
    %v3720 = vld [vmem:[%s3683 + $0x120] sm:$0xff]
    %v3721 = vld [vmem:[%s3683 + $0x128] sm:$0xff]
    %v3722 = vld [vmem:[%s3683 + $0x130] sm:$0xff]
    %v3723 = vld [vmem:[%s3683 + $0x138] sm:$0xff]
    %v3724 = vld [vmem:[%s3683 + $0x140] sm:$0xff]
    %v3725 = vld [vmem:[%s3683 + $0x148] sm:$0xff]
    %v3726 = vld [vmem:[%s3683 + $0x150] sm:$0xff]
    %v3727 = vld [vmem:[%s3683 + $0x158] sm:$0xff]
    %v3728 = vld [vmem:[%s3683 + $0x160] sm:$0xff]
    %v3729 = vld [vmem:[%s3683 + $0x168] sm:$0xff]
    %v3730 = vld [vmem:[%s3683 + $0x170] sm:$0xff]
    %v3731 = vld [vmem:[%s3683 + $0x178] sm:$0xff]
    %s3732 = scalar_lea.vmem [#allocation9], 1152
    %v3733 = vld [vmem:[%s3732] sm:$0xff]
    %v3734 = vld [vmem:[%s3732 + $0x8] sm:$0xff]
    %v3735 = vld [vmem:[%s3732 + $0x10] sm:$0xff]
    %v3736 = vld [vmem:[%s3732 + $0x18] sm:$0xff]
    %v3737 = vld [vmem:[%s3732 + $0x20] sm:$0xff]
    %v3738 = vld [vmem:[%s3732 + $0x28] sm:$0xff]
    %v3739 = vld [vmem:[%s3732 + $0x30] sm:$0xff]
    %v3740 = vld [vmem:[%s3732 + $0x38] sm:$0xff]
    %v3741 = vld [vmem:[%s3732 + $0x40] sm:$0xff]
    %v3742 = vld [vmem:[%s3732 + $0x48] sm:$0xff]
    %v3743 = vld [vmem:[%s3732 + $0x50] sm:$0xff]
    %v3744 = vld [vmem:[%s3732 + $0x58] sm:$0xff]
    %v3745 = vld [vmem:[%s3732 + $0x60] sm:$0xff]
    %v3746 = vld [vmem:[%s3732 + $0x68] sm:$0xff]
    %v3747 = vld [vmem:[%s3732 + $0x70] sm:$0xff]
    %v3748 = vld [vmem:[%s3732 + $0x78] sm:$0xff]
    %v3749 = vld [vmem:[%s3732 + $0x80] sm:$0xff]
    %v3750 = vld [vmem:[%s3732 + $0x88] sm:$0xff]
    %v3751 = vld [vmem:[%s3732 + $0x90] sm:$0xff]
    %v3752 = vld [vmem:[%s3732 + $0x98] sm:$0xff]
    %v3753 = vld [vmem:[%s3732 + $0xa0] sm:$0xff]
    %v3754 = vld [vmem:[%s3732 + $0xa8] sm:$0xff]
    %v3755 = vld [vmem:[%s3732 + $0xb0] sm:$0xff]
    %v3756 = vld [vmem:[%s3732 + $0xb8] sm:$0xff]
    %v3757 = vld [vmem:[%s3732 + $0xc0] sm:$0xff]
    %v3758 = vld [vmem:[%s3732 + $0xc8] sm:$0xff]
    %v3759 = vld [vmem:[%s3732 + $0xd0] sm:$0xff]
    %v3760 = vld [vmem:[%s3732 + $0xd8] sm:$0xff]
    %v3761 = vld [vmem:[%s3732 + $0xe0] sm:$0xff]
    %v3762 = vld [vmem:[%s3732 + $0xe8] sm:$0xff]
    %v3763 = vld [vmem:[%s3732 + $0xf0] sm:$0xff]
    %v3764 = vld [vmem:[%s3732 + $0xf8] sm:$0xff]
    %v3765 = vld [vmem:[%s3732 + $0x100] sm:$0xff]
    %v3766 = vld [vmem:[%s3732 + $0x108] sm:$0xff]
    %v3767 = vld [vmem:[%s3732 + $0x110] sm:$0xff]
    %v3768 = vld [vmem:[%s3732 + $0x118] sm:$0xff]
    %v3769 = vld [vmem:[%s3732 + $0x120] sm:$0xff]
    %v3770 = vld [vmem:[%s3732 + $0x128] sm:$0xff]
    %v3771 = vld [vmem:[%s3732 + $0x130] sm:$0xff]
    %v3772 = vld [vmem:[%s3732 + $0x138] sm:$0xff]
    %v3773 = vld [vmem:[%s3732 + $0x140] sm:$0xff]
    %v3774 = vld [vmem:[%s3732 + $0x148] sm:$0xff]
    %v3775 = vld [vmem:[%s3732 + $0x150] sm:$0xff]
    %v3776 = vld [vmem:[%s3732 + $0x158] sm:$0xff]
    %v3777 = vld [vmem:[%s3732 + $0x160] sm:$0xff]
    %v3778 = vld [vmem:[%s3732 + $0x168] sm:$0xff]
    %v3779 = vld [vmem:[%s3732 + $0x170] sm:$0xff]
    %v3780 = vld [vmem:[%s3732 + $0x178] sm:$0xff]
    %s3781 = scalar_lea.vmem %s4, 9
    %v3782 = vld [vmem:[%s3781] sm:$0x7]
    %s3783 = scalar_lea.vmem [#allocation10], 9
    %v3784 = vld [vmem:[%s3783] sm:$0x7]
    %v3785 = vld [vmem:[#allocation2] sm:$0xff]
    %v3786 = vld [vmem:[#allocation2 + $0x8] sm:$0xff]
    %v3787 = vld [vmem:[#allocation2 + $0x10] sm:$0xff]
    %v3788 = vld [vmem:[#allocation2 + $0x18] sm:$0xff]
    %v3789 = vld [vmem:[#allocation2 + $0x20] sm:$0xff]
    %v3790 = vld [vmem:[#allocation2 + $0x28] sm:$0xff]
    %v3791 = vld [vmem:[#allocation2 + $0x30] sm:$0xff]
    %v3792 = vld [vmem:[#allocation2 + $0x38] sm:$0xff]
    %v3794 = vperm.slane %v3782, 0
    %v3795 = vperm.slane %v3782, 1
    %v3796 = vperm.slane %v3782, 2
    %3800 = vmatpush.msra.mxu0 %v3729
    %3801 = vmatpush.msra.mxu0 %v3726
    %3802 = vmatpush.msra.mxu0 %v3723
    %3803 = vmatpush.msra.mxu0 %v3720
    %3804 = vmatpush.msra.mxu0 %v3717
    %3805 = vmatpush.msra.mxu0 %v3714
    %3806 = vmatpush.msra.mxu0 %v3711
    %3807 = vmatpush.msra.mxu0 %v3708
    %3808 = vmatpush.msra.mxu0 %v3705
    %3809 = vmatpush.msra.mxu0 %v3702
    %3810 = vmatpush.msra.mxu0 %v3699
    %3811 = vmatpush.msra.mxu0 %v3696
    %3812 = vmatpush.msra.mxu0 %v3693
    %3813 = vmatpush.msra.mxu0 %v3690
    %3814 = vmatpush.msra.mxu0 %v3687
    %3815 = vmatpush.msra.mxu0 %v3684
    %3816 = vmatmul.f32.gmra.mxu0 %v3785
    %v3817 = vpop.f32.mrf.mxu0
    %v3818 = vadd.f32 %v3794, %v3817
    %3819 = vmatmul.f32.gmra.mxu0 %v3786
    %v3820 = vpop.f32.mrf.mxu0
    %v3821 = vadd.f32 %v3794, %v3820
    %3822 = vmatmul.f32.gmra.mxu0 %v3787
    %v3823 = vpop.f32.mrf.mxu0
    %v3824 = vadd.f32 %v3794, %v3823
    %3825 = vmatmul.f32.gmra.mxu0 %v3788
    %v3826 = vpop.f32.mrf.mxu0
    %v3827 = vadd.f32 %v3794, %v3826
    %3828 = vmatmul.f32.gmra.mxu0 %v3789
    %v3829 = vpop.f32.mrf.mxu0
    %v3830 = vadd.f32 %v3794, %v3829
    %3831 = vmatmul.f32.gmra.mxu0 %v3790
    %v3832 = vpop.f32.mrf.mxu0
    %v3833 = vadd.f32 %v3794, %v3832
    %3834 = vmatmul.f32.gmra.mxu0 %v3791
    %v3835 = vpop.f32.mrf.mxu0
    %v3836 = vadd.f32 %v3794, %v3835
    %3837 = vmatmul.f32.gmra.mxu0 %v3792
    %v3838 = vpop.f32.mrf.mxu0
    %v3839 = vadd.f32 %v3794, %v3838
    %3840 = vdwg.mxu0
    %3841 = vmatpush.msra.mxu0 %v3730
    %3842 = vmatpush.msra.mxu0 %v3727
    %3843 = vmatpush.msra.mxu0 %v3724
    %3844 = vmatpush.msra.mxu0 %v3721
    %3845 = vmatpush.msra.mxu0 %v3718
    %3846 = vmatpush.msra.mxu0 %v3715
    %3847 = vmatpush.msra.mxu0 %v3712
    %3848 = vmatpush.msra.mxu0 %v3709
    %3849 = vmatpush.msra.mxu0 %v3706
    %3850 = vmatpush.msra.mxu0 %v3703
    %3851 = vmatpush.msra.mxu0 %v3700
    %3852 = vmatpush.msra.mxu0 %v3697
    %3853 = vmatpush.msra.mxu0 %v3694
    %3854 = vmatpush.msra.mxu0 %v3691
    %3855 = vmatpush.msra.mxu0 %v3688
    %3856 = vmatpush.msra.mxu0 %v3685
    %3857 = vmatmul.f32.gmra.mxu0 %v3785
    %v3858 = vpop.f32.mrf.mxu0
    %v3859 = vadd.f32 %v3795, %v3858
    %3860 = vmatmul.f32.gmra.mxu0 %v3786
    %v3861 = vpop.f32.mrf.mxu0
    %v3862 = vadd.f32 %v3795, %v3861
    %3863 = vmatmul.f32.gmra.mxu0 %v3787
    %v3864 = vpop.f32.mrf.mxu0
    %v3865 = vadd.f32 %v3795, %v3864
    %3866 = vmatmul.f32.gmra.mxu0 %v3788
    %v3867 = vpop.f32.mrf.mxu0
    %v3868 = vadd.f32 %v3795, %v3867
    %3869 = vmatmul.f32.gmra.mxu0 %v3789
    %v3870 = vpop.f32.mrf.mxu0
    %v3871 = vadd.f32 %v3795, %v3870
    %3872 = vmatmul.f32.gmra.mxu0 %v3790
    %v3873 = vpop.f32.mrf.mxu0
    %v3874 = vadd.f32 %v3795, %v3873
    %3875 = vmatmul.f32.gmra.mxu0 %v3791
    %v3876 = vpop.f32.mrf.mxu0
    %v3877 = vadd.f32 %v3795, %v3876
    %3878 = vmatmul.f32.gmra.mxu0 %v3792
    %v3879 = vpop.f32.mrf.mxu0
    %v3880 = vadd.f32 %v3795, %v3879
    %3881 = vdwg.mxu0
    %3882 = vmatpush.msra.mxu0 %v3731
    %3883 = vmatpush.msra.mxu0 %v3728
    %3884 = vmatpush.msra.mxu0 %v3725
    %3885 = vmatpush.msra.mxu0 %v3722
    %3886 = vmatpush.msra.mxu0 %v3719
    %3887 = vmatpush.msra.mxu0 %v3716
    %3888 = vmatpush.msra.mxu0 %v3713
    %3889 = vmatpush.msra.mxu0 %v3710
    %3890 = vmatpush.msra.mxu0 %v3707
    %3891 = vmatpush.msra.mxu0 %v3704
    %3892 = vmatpush.msra.mxu0 %v3701
    %3893 = vmatpush.msra.mxu0 %v3698
    %3894 = vmatpush.msra.mxu0 %v3695
    %3895 = vmatpush.msra.mxu0 %v3692
    %3896 = vmatpush.msra.mxu0 %v3689
    %3897 = vmatpush.msra.mxu0 %v3686
    %3898 = vmatmul.f32.gmra.mxu0 %v3785
    %v3899 = vpop.f32.mrf.mxu0
    %v3900 = vadd.f32 %v3796, %v3899
    %3901 = vmatmul.f32.gmra.mxu0 %v3786
    %v3902 = vpop.f32.mrf.mxu0
    %v3903 = vadd.f32 %v3796, %v3902
    %3904 = vmatmul.f32.gmra.mxu0 %v3787
    %v3905 = vpop.f32.mrf.mxu0
    %v3906 = vadd.f32 %v3796, %v3905
    %3907 = vmatmul.f32.gmra.mxu0 %v3788
    %v3908 = vpop.f32.mrf.mxu0
    %v3909 = vadd.f32 %v3796, %v3908
    %3910 = vmatmul.f32.gmra.mxu0 %v3789
    %v3911 = vpop.f32.mrf.mxu0
    %v3912 = vadd.f32 %v3796, %v3911
    %3913 = vmatmul.f32.gmra.mxu0 %v3790
    %v3914 = vpop.f32.mrf.mxu0
    %v3915 = vadd.f32 %v3796, %v3914
    %3916 = vmatmul.f32.gmra.mxu0 %v3791
    %v3917 = vpop.f32.mrf.mxu0
    %v3918 = vadd.f32 %v3796, %v3917
    %3919 = vmatmul.f32.gmra.mxu0 %v3792
    %v3920 = vpop.f32.mrf.mxu0
    %v3921 = vadd.f32 %v3796, %v3920
    %3922 = vdwg.mxu0
    %3923 = vst [vmem:[#allocation3] sm:$0xff] %v3818
    %3924 = vst [vmem:[#allocation3 + $0x8] sm:$0xff] %v3859
    %3925 = vst [vmem:[#allocation3 + $0x10] sm:$0xff] %v3900
    %3926 = vst [vmem:[#allocation3 + $0x18] sm:$0xff] %v3821
    %3927 = vst [vmem:[#allocation3 + $0x20] sm:$0xff] %v3862
    %3928 = vst [vmem:[#allocation3 + $0x28] sm:$0xff] %v3903
    %3929 = vst [vmem:[#allocation3 + $0x30] sm:$0xff] %v3824
    %3930 = vst [vmem:[#allocation3 + $0x38] sm:$0xff] %v3865
    %3931 = vst [vmem:[#allocation3 + $0x40] sm:$0xff] %v3906
    %3932 = vst [vmem:[#allocation3 + $0x48] sm:$0xff] %v3827
    %3933 = vst [vmem:[#allocation3 + $0x50] sm:$0xff] %v3868
    %3934 = vst [vmem:[#allocation3 + $0x58] sm:$0xff] %v3909
    %3935 = vst [vmem:[#allocation3 + $0x60] sm:$0xff] %v3830
    %3936 = vst [vmem:[#allocation3 + $0x68] sm:$0xff] %v3871
    %3937 = vst [vmem:[#allocation3 + $0x70] sm:$0xff] %v3912
    %3938 = vst [vmem:[#allocation3 + $0x78] sm:$0xff] %v3833
    %3939 = vst [vmem:[#allocation3 + $0x80] sm:$0xff] %v3874
    %3940 = vst [vmem:[#allocation3 + $0x88] sm:$0xff] %v3915
    %3941 = vst [vmem:[#allocation3 + $0x90] sm:$0xff] %v3836
    %3942 = vst [vmem:[#allocation3 + $0x98] sm:$0xff] %v3877
    %3943 = vst [vmem:[#allocation3 + $0xa0] sm:$0xff] %v3918
    %3944 = vst [vmem:[#allocation3 + $0xa8] sm:$0xff] %v3839
    %3945 = vst [vmem:[#allocation3 + $0xb0] sm:$0xff] %v3880
    %3946 = vst [vmem:[#allocation3 + $0xb8] sm:$0xff] %v3921
    %v3947 = vld [vmem:[#allocation3] sm:$0xff]
    %v3948 = vld [vmem:[#allocation3 + $0x8] sm:$0xff]
    %v3949 = vld [vmem:[#allocation3 + $0x10] sm:$0xff]
    %v3951 = vperm.slane %v3784, 0
    %v3952 = vperm.slane %v3784, 1
    %v3953 = vperm.slane %v3784, 2
    %3957 = vmatpush.msra.mxu0 %v3778
    %3958 = vmatpush.msra.mxu0 %v3775
    %3959 = vmatpush.msra.mxu0 %v3772
    %3960 = vmatpush.msra.mxu0 %v3769
    %3961 = vmatpush.msra.mxu0 %v3766
    %3962 = vmatpush.msra.mxu0 %v3763
    %3963 = vmatpush.msra.mxu0 %v3760
    %3964 = vmatpush.msra.mxu0 %v3757
    %3965 = vmatpush.msra.mxu0 %v3754
    %3966 = vmatpush.msra.mxu0 %v3751
    %3967 = vmatpush.msra.mxu0 %v3748
    %3968 = vmatpush.msra.mxu0 %v3745
    %3969 = vmatpush.msra.mxu0 %v3742
    %3970 = vmatpush.msra.mxu0 %v3739
    %3971 = vmatpush.msra.mxu0 %v3736
    %3972 = vmatpush.msra.mxu0 %v3733
    %3973 = vmatmul.f32.gmra.mxu0 0.0
    %v3974 = vpop.f32.mrf.mxu0
    %v3975 = vadd.f32 %v3951, %v3974
    %3976 = vdwg.mxu0
    %3977 = vmatpush.msra.mxu0 %v3779
    %3978 = vmatpush.msra.mxu0 %v3776
    %3979 = vmatpush.msra.mxu0 %v3773
    %3980 = vmatpush.msra.mxu0 %v3770
    %3981 = vmatpush.msra.mxu0 %v3767
    %3982 = vmatpush.msra.mxu0 %v3764
    %3983 = vmatpush.msra.mxu0 %v3761
    %3984 = vmatpush.msra.mxu0 %v3758
    %3985 = vmatpush.msra.mxu0 %v3755
    %3986 = vmatpush.msra.mxu0 %v3752
    %3987 = vmatpush.msra.mxu0 %v3749
    %3988 = vmatpush.msra.mxu0 %v3746
    %3989 = vmatpush.msra.mxu0 %v3743
    %3990 = vmatpush.msra.mxu0 %v3740
    %3991 = vmatpush.msra.mxu0 %v3737
    %3992 = vmatpush.msra.mxu0 %v3734
    %3993 = vmatmul.f32.gmra.mxu0 0.0
    %v3994 = vpop.f32.mrf.mxu0
    %v3995 = vadd.f32 %v3952, %v3994
    %3996 = vdwg.mxu0
    %3997 = vmatpush.msra.mxu0 %v3780
    %3998 = vmatpush.msra.mxu0 %v3777
    %3999 = vmatpush.msra.mxu0 %v3774
    %4000 = vmatpush.msra.mxu0 %v3771
    %4001 = vmatpush.msra.mxu0 %v3768
    %4002 = vmatpush.msra.mxu0 %v3765
    %4003 = vmatpush.msra.mxu0 %v3762
    %4004 = vmatpush.msra.mxu0 %v3759
    %4005 = vmatpush.msra.mxu0 %v3756
    %4006 = vmatpush.msra.mxu0 %v3753
    %4007 = vmatpush.msra.mxu0 %v3750
    %4008 = vmatpush.msra.mxu0 %v3747
    %4009 = vmatpush.msra.mxu0 %v3744
    %4010 = vmatpush.msra.mxu0 %v3741
    %4011 = vmatpush.msra.mxu0 %v3738
    %4012 = vmatpush.msra.mxu0 %v3735
    %4013 = vmatmul.f32.gmra.mxu0 0.0
    %v4014 = vpop.f32.mrf.mxu0
    %v4015 = vadd.f32 %v3953, %v4014
    %4016 = vdwg.mxu0
    %v4017 = vadd.f32 %v3947, %v3975
    %v4018 = vxor.u32 %v4017, 2147483648
    %v4019 = vmul.f32 %v4018, 1.442695
    %v4020 = vpow.pop %v4019
    %v4021 = vadd.f32 %v4020, 1.0
    %v4022 = vrcp.pop %v4021
    %v4023 = vmul.f32 %v4021, %v4022
    %v4024 = vsub.f32 1.0, %v4023
    %v4025 = vmul.f32 %v4022, %v4024
    %v4026 = vadd.f32 %v4022, %v4025
    %vm4027 = vweird.f32 %v4021
    %vm4028 = vweird.f32 %v4022
    %vm4029 = vmor %vm4027, %vm4028
    %v4030 = vsel %vm4029, %v4022, %v4026
    %v4031 = vand.u32 2147483647, %v4021
    %vm4032 = vcmp.eq.f32.partialorder %v4031, 8.507059e+37
    %v4033 = vand.u32 %v4021, 2147483648
    %v4034 = vor.u32 1.1754944e-38, %v4033
    %v4035 = vsel %vm4032, %v4034, %v4030
    %v4036 = vmul.f32 1.0, %v4035
    %v4037 = vadd.f32 %v3948, %v3995
    %v4038 = vxor.u32 %v4037, 2147483648
    %v4039 = vmul.f32 %v4038, 1.442695
    %v4040 = vpow.pop %v4039
    %v4041 = vadd.f32 %v4040, 1.0
    %v4042 = vrcp.pop %v4041
    %v4043 = vmul.f32 %v4041, %v4042
    %v4044 = vsub.f32 1.0, %v4043
    %v4045 = vmul.f32 %v4042, %v4044
    %v4046 = vadd.f32 %v4042, %v4045
    %vm4047 = vweird.f32 %v4041
    %vm4048 = vweird.f32 %v4042
    %vm4049 = vmor %vm4047, %vm4048
    %v4050 = vsel %vm4049, %v4042, %v4046
    %v4051 = vand.u32 2147483647, %v4041
    %vm4052 = vcmp.eq.f32.partialorder %v4051, 8.507059e+37
    %v4053 = vand.u32 %v4041, 2147483648
    %v4054 = vor.u32 1.1754944e-38, %v4053
    %v4055 = vsel %vm4052, %v4054, %v4050
    %v4056 = vmul.f32 1.0, %v4055
    %v4057 = vmul.f32 %v4036, %v4015
    %v4058 = vadd.f32 %v3949, %v4057
    %v4059 = vtanh.pop %v4058
    %v4060 = vsub.f32 1.0, %v4056
    %v4061 = vmul.f32 %v4060, %v4059
    %v4062 = vmul.f32 %v4056, 0.0
    %v4063 = vadd.f32 %v4061, %v4062
    %v4064 = vsel %vm473, %v4063, 0.0
    %4065 = vst [vmem:[#allocation12] sm:$0xff] %v4064
    %v4066 = vld [vmem:[%s476] sm:$0xff]
    %v4067 = vld [vmem:[%s476 + $0x8] sm:$0xff]
    %v4068 = vld [vmem:[%s476 + $0x10] sm:$0xff]
    %4069 = vmatpush.msra.mxu0 %v3778
    %4070 = vmatpush.msra.mxu0 %v3775
    %4071 = vmatpush.msra.mxu0 %v3772
    %4072 = vmatpush.msra.mxu0 %v3769
    %4073 = vmatpush.msra.mxu0 %v3766
    %4074 = vmatpush.msra.mxu0 %v3763
    %4075 = vmatpush.msra.mxu0 %v3760
    %4076 = vmatpush.msra.mxu0 %v3757
    %4077 = vmatpush.msra.mxu0 %v3754
    %4078 = vmatpush.msra.mxu0 %v3751
    %4079 = vmatpush.msra.mxu0 %v3748
    %4080 = vmatpush.msra.mxu0 %v3745
    %4081 = vmatpush.msra.mxu0 %v3742
    %4082 = vmatpush.msra.mxu0 %v3739
    %4083 = vmatpush.msra.mxu0 %v3736
    %4084 = vmatpush.msra.mxu0 %v3733
    %4085 = vmatmul.f32.gmra.mxu0 %v4064
    %v4086 = vpop.f32.mrf.mxu0
    %v4087 = vadd.f32 %v3951, %v4086
    %4088 = vdwg.mxu0
    %4089 = vmatpush.msra.mxu0 %v3779
    %4090 = vmatpush.msra.mxu0 %v3776
    %4091 = vmatpush.msra.mxu0 %v3773
    %4092 = vmatpush.msra.mxu0 %v3770
    %4093 = vmatpush.msra.mxu0 %v3767
    %4094 = vmatpush.msra.mxu0 %v3764
    %4095 = vmatpush.msra.mxu0 %v3761
    %4096 = vmatpush.msra.mxu0 %v3758
    %4097 = vmatpush.msra.mxu0 %v3755
    %4098 = vmatpush.msra.mxu0 %v3752
    %4099 = vmatpush.msra.mxu0 %v3749
    %4100 = vmatpush.msra.mxu0 %v3746
    %4101 = vmatpush.msra.mxu0 %v3743
    %4102 = vmatpush.msra.mxu0 %v3740
    %4103 = vmatpush.msra.mxu0 %v3737
    %4104 = vmatpush.msra.mxu0 %v3734
    %4105 = vmatmul.f32.gmra.mxu0 %v4064
    %v4106 = vpop.f32.mrf.mxu0
    %v4107 = vadd.f32 %v3952, %v4106
    %4108 = vdwg.mxu0
    %4109 = vmatpush.msra.mxu0 %v3780
    %4110 = vmatpush.msra.mxu0 %v3777
    %4111 = vmatpush.msra.mxu0 %v3774
    %4112 = vmatpush.msra.mxu0 %v3771
    %4113 = vmatpush.msra.mxu0 %v3768
    %4114 = vmatpush.msra.mxu0 %v3765
    %4115 = vmatpush.msra.mxu0 %v3762
    %4116 = vmatpush.msra.mxu0 %v3759
    %4117 = vmatpush.msra.mxu0 %v3756
    %4118 = vmatpush.msra.mxu0 %v3753
    %4119 = vmatpush.msra.mxu0 %v3750
    %4120 = vmatpush.msra.mxu0 %v3747
    %4121 = vmatpush.msra.mxu0 %v3744
    %4122 = vmatpush.msra.mxu0 %v3741
    %4123 = vmatpush.msra.mxu0 %v3738
    %4124 = vmatpush.msra.mxu0 %v3735
    %4125 = vmatmul.f32.gmra.mxu0 %v4064
    %v4126 = vpop.f32.mrf.mxu0
    %v4127 = vadd.f32 %v3953, %v4126
    %4128 = vdwg.mxu0
    %v4129 = vadd.f32 %v4066, %v4087
    %v4130 = vxor.u32 %v4129, 2147483648
    %v4131 = vmul.f32 %v4130, 1.442695
    %v4132 = vpow.pop %v4131
    %v4133 = vadd.f32 %v4132, 1.0
    %v4134 = vrcp.pop %v4133
    %v4135 = vmul.f32 %v4133, %v4134
    %v4136 = vsub.f32 1.0, %v4135
    %v4137 = vmul.f32 %v4134, %v4136
    %v4138 = vadd.f32 %v4134, %v4137
    %vm4139 = vweird.f32 %v4133
    %vm4140 = vweird.f32 %v4134
    %vm4141 = vmor %vm4139, %vm4140
    %v4142 = vsel %vm4141, %v4134, %v4138
    %v4143 = vand.u32 2147483647, %v4133
    %vm4144 = vcmp.eq.f32.partialorder %v4143, 8.507059e+37
    %v4145 = vand.u32 %v4133, 2147483648
    %v4146 = vor.u32 1.1754944e-38, %v4145
    %v4147 = vsel %vm4144, %v4146, %v4142
    %v4148 = vmul.f32 1.0, %v4147
    %v4149 = vadd.f32 %v4067, %v4107
    %v4150 = vxor.u32 %v4149, 2147483648
    %v4151 = vmul.f32 %v4150, 1.442695
    %v4152 = vpow.pop %v4151
    %v4153 = vadd.f32 %v4152, 1.0
    %v4154 = vrcp.pop %v4153
    %v4155 = vmul.f32 %v4153, %v4154
    %v4156 = vsub.f32 1.0, %v4155
    %v4157 = vmul.f32 %v4154, %v4156
    %v4158 = vadd.f32 %v4154, %v4157
    %vm4159 = vweird.f32 %v4153
    %vm4160 = vweird.f32 %v4154
    %vm4161 = vmor %vm4159, %vm4160
    %v4162 = vsel %vm4161, %v4154, %v4158
    %v4163 = vand.u32 2147483647, %v4153
    %vm4164 = vcmp.eq.f32.partialorder %v4163, 8.507059e+37
    %v4165 = vand.u32 %v4153, 2147483648
    %v4166 = vor.u32 1.1754944e-38, %v4165
    %v4167 = vsel %vm4164, %v4166, %v4162
    %v4168 = vmul.f32 1.0, %v4167
    %v4169 = vmul.f32 %v4148, %v4127
    %v4170 = vadd.f32 %v4068, %v4169
    %v4171 = vtanh.pop %v4170
    %v4172 = vsub.f32 1.0, %v4168
    %v4173 = vmul.f32 %v4172, %v4171
    %v4174 = vmul.f32 %v4168, %v4064
    %v4175 = vadd.f32 %v4173, %v4174
    %v4176 = vsel %vm592, %v4175, 0.0
    %4177 = vst [vmem:[%s1818] sm:$0xff] %v4176
    %v4178 = vsel %vm592, %v4175, %v4064
    %v4179 = vld [vmem:[%s597] sm:$0xff]
    %v4180 = vld [vmem:[%s597 + $0x8] sm:$0xff]
    %v4181 = vld [vmem:[%s597 + $0x10] sm:$0xff]
    %4182 = vmatpush.msra.mxu0 %v3778
    %4183 = vmatpush.msra.mxu0 %v3775
    %4184 = vmatpush.msra.mxu0 %v3772
    %4185 = vmatpush.msra.mxu0 %v3769
    %4186 = vmatpush.msra.mxu0 %v3766
    %4187 = vmatpush.msra.mxu0 %v3763
    %4188 = vmatpush.msra.mxu0 %v3760
    %4189 = vmatpush.msra.mxu0 %v3757
    %4190 = vmatpush.msra.mxu0 %v3754
    %4191 = vmatpush.msra.mxu0 %v3751
    %4192 = vmatpush.msra.mxu0 %v3748
    %4193 = vmatpush.msra.mxu0 %v3745
    %4194 = vmatpush.msra.mxu0 %v3742
    %4195 = vmatpush.msra.mxu0 %v3739
    %4196 = vmatpush.msra.mxu0 %v3736
    %4197 = vmatpush.msra.mxu0 %v3733
    %4198 = vmatmul.f32.gmra.mxu0 %v4178
    %v4199 = vpop.f32.mrf.mxu0
    %v4200 = vadd.f32 %v3951, %v4199
    %4201 = vdwg.mxu0
    %4202 = vmatpush.msra.mxu0 %v3779
    %4203 = vmatpush.msra.mxu0 %v3776
    %4204 = vmatpush.msra.mxu0 %v3773
    %4205 = vmatpush.msra.mxu0 %v3770
    %4206 = vmatpush.msra.mxu0 %v3767
    %4207 = vmatpush.msra.mxu0 %v3764
    %4208 = vmatpush.msra.mxu0 %v3761
    %4209 = vmatpush.msra.mxu0 %v3758
    %4210 = vmatpush.msra.mxu0 %v3755
    %4211 = vmatpush.msra.mxu0 %v3752
    %4212 = vmatpush.msra.mxu0 %v3749
    %4213 = vmatpush.msra.mxu0 %v3746
    %4214 = vmatpush.msra.mxu0 %v3743
    %4215 = vmatpush.msra.mxu0 %v3740
    %4216 = vmatpush.msra.mxu0 %v3737
    %4217 = vmatpush.msra.mxu0 %v3734
    %4218 = vmatmul.f32.gmra.mxu0 %v4178
    %v4219 = vpop.f32.mrf.mxu0
    %v4220 = vadd.f32 %v3952, %v4219
    %4221 = vdwg.mxu0
    %4222 = vmatpush.msra.mxu0 %v3780
    %4223 = vmatpush.msra.mxu0 %v3777
    %4224 = vmatpush.msra.mxu0 %v3774
    %4225 = vmatpush.msra.mxu0 %v3771
    %4226 = vmatpush.msra.mxu0 %v3768
    %4227 = vmatpush.msra.mxu0 %v3765
    %4228 = vmatpush.msra.mxu0 %v3762
    %4229 = vmatpush.msra.mxu0 %v3759
    %4230 = vmatpush.msra.mxu0 %v3756
    %4231 = vmatpush.msra.mxu0 %v3753
    %4232 = vmatpush.msra.mxu0 %v3750
    %4233 = vmatpush.msra.mxu0 %v3747
    %4234 = vmatpush.msra.mxu0 %v3744
    %4235 = vmatpush.msra.mxu0 %v3741
    %4236 = vmatpush.msra.mxu0 %v3738
    %4237 = vmatpush.msra.mxu0 %v3735
    %4238 = vmatmul.f32.gmra.mxu0 %v4178
    %v4239 = vpop.f32.mrf.mxu0
    %v4240 = vadd.f32 %v3953, %v4239
    %4241 = vdwg.mxu0
    %v4242 = vadd.f32 %v4179, %v4200
    %v4243 = vxor.u32 %v4242, 2147483648
    %v4244 = vmul.f32 %v4243, 1.442695
    %v4245 = vpow.pop %v4244
    %v4246 = vadd.f32 %v4245, 1.0
    %v4247 = vrcp.pop %v4246
    %v4248 = vmul.f32 %v4246, %v4247
    %v4249 = vsub.f32 1.0, %v4248
    %v4250 = vmul.f32 %v4247, %v4249
    %v4251 = vadd.f32 %v4247, %v4250
    %vm4252 = vweird.f32 %v4246
    %vm4253 = vweird.f32 %v4247
    %vm4254 = vmor %vm4252, %vm4253
    %v4255 = vsel %vm4254, %v4247, %v4251
    %v4256 = vand.u32 2147483647, %v4246
    %vm4257 = vcmp.eq.f32.partialorder %v4256, 8.507059e+37
    %v4258 = vand.u32 %v4246, 2147483648
    %v4259 = vor.u32 1.1754944e-38, %v4258
    %v4260 = vsel %vm4257, %v4259, %v4255
    %v4261 = vmul.f32 1.0, %v4260
    %v4262 = vadd.f32 %v4180, %v4220
    %v4263 = vxor.u32 %v4262, 2147483648
    %v4264 = vmul.f32 %v4263, 1.442695
    %v4265 = vpow.pop %v4264
    %v4266 = vadd.f32 %v4265, 1.0
    %v4267 = vrcp.pop %v4266
    %v4268 = vmul.f32 %v4266, %v4267
    %v4269 = vsub.f32 1.0, %v4268
    %v4270 = vmul.f32 %v4267, %v4269
    %v4271 = vadd.f32 %v4267, %v4270
    %vm4272 = vweird.f32 %v4266
    %vm4273 = vweird.f32 %v4267
    %vm4274 = vmor %vm4272, %vm4273
    %v4275 = vsel %vm4274, %v4267, %v4271
    %v4276 = vand.u32 2147483647, %v4266
    %vm4277 = vcmp.eq.f32.partialorder %v4276, 8.507059e+37
    %v4278 = vand.u32 %v4266, 2147483648
    %v4279 = vor.u32 1.1754944e-38, %v4278
    %v4280 = vsel %vm4277, %v4279, %v4275
    %v4281 = vmul.f32 1.0, %v4280
    %v4282 = vmul.f32 %v4261, %v4240
    %v4283 = vadd.f32 %v4181, %v4282
    %v4284 = vtanh.pop %v4283
    %v4285 = vsub.f32 1.0, %v4281
    %v4286 = vmul.f32 %v4285, %v4284
    %v4287 = vmul.f32 %v4281, %v4178
    %v4288 = vadd.f32 %v4286, %v4287
    %v4289 = vsel %vm713, %v4288, 0.0
    %4290 = vst [vmem:[%s1932] sm:$0xff] %v4289
    %v4291 = vsel %vm713, %v4288, %v4178
    %v4292 = vld [vmem:[%s718] sm:$0xff]
    %v4293 = vld [vmem:[%s718 + $0x8] sm:$0xff]
    %v4294 = vld [vmem:[%s718 + $0x10] sm:$0xff]
    %4295 = vmatpush.msra.mxu0 %v3778
    %4296 = vmatpush.msra.mxu0 %v3775
    %4297 = vmatpush.msra.mxu0 %v3772
    %4298 = vmatpush.msra.mxu0 %v3769
    %4299 = vmatpush.msra.mxu0 %v3766
    %4300 = vmatpush.msra.mxu0 %v3763
    %4301 = vmatpush.msra.mxu0 %v3760
    %4302 = vmatpush.msra.mxu0 %v3757
    %4303 = vmatpush.msra.mxu0 %v3754
    %4304 = vmatpush.msra.mxu0 %v3751
    %4305 = vmatpush.msra.mxu0 %v3748
    %4306 = vmatpush.msra.mxu0 %v3745
    %4307 = vmatpush.msra.mxu0 %v3742
    %4308 = vmatpush.msra.mxu0 %v3739
    %4309 = vmatpush.msra.mxu0 %v3736
    %4310 = vmatpush.msra.mxu0 %v3733
    %4311 = vmatmul.f32.gmra.mxu0 %v4291
    %v4312 = vpop.f32.mrf.mxu0
    %v4313 = vadd.f32 %v3951, %v4312
    %4314 = vdwg.mxu0
    %4315 = vmatpush.msra.mxu0 %v3779
    %4316 = vmatpush.msra.mxu0 %v3776
    %4317 = vmatpush.msra.mxu0 %v3773
    %4318 = vmatpush.msra.mxu0 %v3770
    %4319 = vmatpush.msra.mxu0 %v3767
    %4320 = vmatpush.msra.mxu0 %v3764
    %4321 = vmatpush.msra.mxu0 %v3761
    %4322 = vmatpush.msra.mxu0 %v3758
    %4323 = vmatpush.msra.mxu0 %v3755
    %4324 = vmatpush.msra.mxu0 %v3752
    %4325 = vmatpush.msra.mxu0 %v3749
    %4326 = vmatpush.msra.mxu0 %v3746
    %4327 = vmatpush.msra.mxu0 %v3743
    %4328 = vmatpush.msra.mxu0 %v3740
    %4329 = vmatpush.msra.mxu0 %v3737
    %4330 = vmatpush.msra.mxu0 %v3734
    %4331 = vmatmul.f32.gmra.mxu0 %v4291
    %v4332 = vpop.f32.mrf.mxu0
    %v4333 = vadd.f32 %v3952, %v4332
    %4334 = vdwg.mxu0
    %4335 = vmatpush.msra.mxu0 %v3780
    %4336 = vmatpush.msra.mxu0 %v3777
    %4337 = vmatpush.msra.mxu0 %v3774
    %4338 = vmatpush.msra.mxu0 %v3771
    %4339 = vmatpush.msra.mxu0 %v3768
    %4340 = vmatpush.msra.mxu0 %v3765
    %4341 = vmatpush.msra.mxu0 %v3762
    %4342 = vmatpush.msra.mxu0 %v3759
    %4343 = vmatpush.msra.mxu0 %v3756
    %4344 = vmatpush.msra.mxu0 %v3753
    %4345 = vmatpush.msra.mxu0 %v3750
    %4346 = vmatpush.msra.mxu0 %v3747
    %4347 = vmatpush.msra.mxu0 %v3744
    %4348 = vmatpush.msra.mxu0 %v3741
    %4349 = vmatpush.msra.mxu0 %v3738
    %4350 = vmatpush.msra.mxu0 %v3735
    %4351 = vmatmul.f32.gmra.mxu0 %v4291
    %v4352 = vpop.f32.mrf.mxu0
    %v4353 = vadd.f32 %v3953, %v4352
    %4354 = vdwg.mxu0
    %v4355 = vadd.f32 %v4292, %v4313
    %v4356 = vxor.u32 %v4355, 2147483648
    %v4357 = vmul.f32 %v4356, 1.442695
    %v4358 = vpow.pop %v4357
    %v4359 = vadd.f32 %v4358, 1.0
    %v4360 = vrcp.pop %v4359
    %v4361 = vmul.f32 %v4359, %v4360
    %v4362 = vsub.f32 1.0, %v4361
    %v4363 = vmul.f32 %v4360, %v4362
    %v4364 = vadd.f32 %v4360, %v4363
    %vm4365 = vweird.f32 %v4359
    %vm4366 = vweird.f32 %v4360
    %vm4367 = vmor %vm4365, %vm4366
    %v4368 = vsel %vm4367, %v4360, %v4364
    %v4369 = vand.u32 2147483647, %v4359
    %vm4370 = vcmp.eq.f32.partialorder %v4369, 8.507059e+37
    %v4371 = vand.u32 %v4359, 2147483648
    %v4372 = vor.u32 1.1754944e-38, %v4371
    %v4373 = vsel %vm4370, %v4372, %v4368
    %v4374 = vmul.f32 1.0, %v4373
    %v4375 = vadd.f32 %v4293, %v4333
    %v4376 = vxor.u32 %v4375, 2147483648
    %v4377 = vmul.f32 %v4376, 1.442695
    %v4378 = vpow.pop %v4377
    %v4379 = vadd.f32 %v4378, 1.0
    %v4380 = vrcp.pop %v4379
    %v4381 = vmul.f32 %v4379, %v4380
    %v4382 = vsub.f32 1.0, %v4381
    %v4383 = vmul.f32 %v4380, %v4382
    %v4384 = vadd.f32 %v4380, %v4383
    %vm4385 = vweird.f32 %v4379
    %vm4386 = vweird.f32 %v4380
    %vm4387 = vmor %vm4385, %vm4386
    %v4388 = vsel %vm4387, %v4380, %v4384
    %v4389 = vand.u32 2147483647, %v4379
    %vm4390 = vcmp.eq.f32.partialorder %v4389, 8.507059e+37
    %v4391 = vand.u32 %v4379, 2147483648
    %v4392 = vor.u32 1.1754944e-38, %v4391
    %v4393 = vsel %vm4390, %v4392, %v4388
    %v4394 = vmul.f32 1.0, %v4393
    %v4395 = vmul.f32 %v4374, %v4353
    %v4396 = vadd.f32 %v4294, %v4395
    %v4397 = vtanh.pop %v4396
    %v4398 = vsub.f32 1.0, %v4394
    %v4399 = vmul.f32 %v4398, %v4397
    %v4400 = vmul.f32 %v4394, %v4291
    %v4401 = vadd.f32 %v4399, %v4400
    %v4402 = vsel %vm834, %v4401, 0.0
    %4403 = vst [vmem:[%s2046] sm:$0xff] %v4402
    %v4404 = vsel %vm834, %v4401, %v4291
    %v4405 = vld [vmem:[%s839] sm:$0xff]
    %v4406 = vld [vmem:[%s839 + $0x8] sm:$0xff]
    %v4407 = vld [vmem:[%s839 + $0x10] sm:$0xff]
    %4408 = vmatpush.msra.mxu0 %v3778
    %4409 = vmatpush.msra.mxu0 %v3775
    %4410 = vmatpush.msra.mxu0 %v3772
    %4411 = vmatpush.msra.mxu0 %v3769
    %4412 = vmatpush.msra.mxu0 %v3766
    %4413 = vmatpush.msra.mxu0 %v3763
    %4414 = vmatpush.msra.mxu0 %v3760
    %4415 = vmatpush.msra.mxu0 %v3757
    %4416 = vmatpush.msra.mxu0 %v3754
    %4417 = vmatpush.msra.mxu0 %v3751
    %4418 = vmatpush.msra.mxu0 %v3748
    %4419 = vmatpush.msra.mxu0 %v3745
    %4420 = vmatpush.msra.mxu0 %v3742
    %4421 = vmatpush.msra.mxu0 %v3739
    %4422 = vmatpush.msra.mxu0 %v3736
    %4423 = vmatpush.msra.mxu0 %v3733
    %4424 = vmatmul.f32.gmra.mxu0 %v4404
    %v4425 = vpop.f32.mrf.mxu0
    %v4426 = vadd.f32 %v3951, %v4425
    %4427 = vdwg.mxu0
    %4428 = vmatpush.msra.mxu0 %v3779
    %4429 = vmatpush.msra.mxu0 %v3776
    %4430 = vmatpush.msra.mxu0 %v3773
    %4431 = vmatpush.msra.mxu0 %v3770
    %4432 = vmatpush.msra.mxu0 %v3767
    %4433 = vmatpush.msra.mxu0 %v3764
    %4434 = vmatpush.msra.mxu0 %v3761
    %4435 = vmatpush.msra.mxu0 %v3758
    %4436 = vmatpush.msra.mxu0 %v3755
    %4437 = vmatpush.msra.mxu0 %v3752
    %4438 = vmatpush.msra.mxu0 %v3749
    %4439 = vmatpush.msra.mxu0 %v3746
    %4440 = vmatpush.msra.mxu0 %v3743
    %4441 = vmatpush.msra.mxu0 %v3740
    %4442 = vmatpush.msra.mxu0 %v3737
    %4443 = vmatpush.msra.mxu0 %v3734
    %4444 = vmatmul.f32.gmra.mxu0 %v4404
    %v4445 = vpop.f32.mrf.mxu0
    %v4446 = vadd.f32 %v3952, %v4445
    %4447 = vdwg.mxu0
    %4448 = vmatpush.msra.mxu0 %v3780
    %4449 = vmatpush.msra.mxu0 %v3777
    %4450 = vmatpush.msra.mxu0 %v3774
    %4451 = vmatpush.msra.mxu0 %v3771
    %4452 = vmatpush.msra.mxu0 %v3768
    %4453 = vmatpush.msra.mxu0 %v3765
    %4454 = vmatpush.msra.mxu0 %v3762
    %4455 = vmatpush.msra.mxu0 %v3759
    %4456 = vmatpush.msra.mxu0 %v3756
    %4457 = vmatpush.msra.mxu0 %v3753
    %4458 = vmatpush.msra.mxu0 %v3750
    %4459 = vmatpush.msra.mxu0 %v3747
    %4460 = vmatpush.msra.mxu0 %v3744
    %4461 = vmatpush.msra.mxu0 %v3741
    %4462 = vmatpush.msra.mxu0 %v3738
    %4463 = vmatpush.msra.mxu0 %v3735
    %4464 = vmatmul.f32.gmra.mxu0 %v4404
    %v4465 = vpop.f32.mrf.mxu0
    %v4466 = vadd.f32 %v3953, %v4465
    %4467 = vdwg.mxu0
    %v4468 = vadd.f32 %v4405, %v4426
    %v4469 = vxor.u32 %v4468, 2147483648
    %v4470 = vmul.f32 %v4469, 1.442695
    %v4471 = vpow.pop %v4470
    %v4472 = vadd.f32 %v4471, 1.0
    %v4473 = vrcp.pop %v4472
    %v4474 = vmul.f32 %v4472, %v4473
    %v4475 = vsub.f32 1.0, %v4474
    %v4476 = vmul.f32 %v4473, %v4475
    %v4477 = vadd.f32 %v4473, %v4476
    %vm4478 = vweird.f32 %v4472
    %vm4479 = vweird.f32 %v4473
    %vm4480 = vmor %vm4478, %vm4479
    %v4481 = vsel %vm4480, %v4473, %v4477
    %v4482 = vand.u32 2147483647, %v4472
    %vm4483 = vcmp.eq.f32.partialorder %v4482, 8.507059e+37
    %v4484 = vand.u32 %v4472, 2147483648
    %v4485 = vor.u32 1.1754944e-38, %v4484
    %v4486 = vsel %vm4483, %v4485, %v4481
    %v4487 = vmul.f32 1.0, %v4486
    %v4488 = vadd.f32 %v4406, %v4446
    %v4489 = vxor.u32 %v4488, 2147483648
    %v4490 = vmul.f32 %v4489, 1.442695
    %v4491 = vpow.pop %v4490
    %v4492 = vadd.f32 %v4491, 1.0
    %v4493 = vrcp.pop %v4492
    %v4494 = vmul.f32 %v4492, %v4493
    %v4495 = vsub.f32 1.0, %v4494
    %v4496 = vmul.f32 %v4493, %v4495
    %v4497 = vadd.f32 %v4493, %v4496
    %vm4498 = vweird.f32 %v4492
    %vm4499 = vweird.f32 %v4493
    %vm4500 = vmor %vm4498, %vm4499
    %v4501 = vsel %vm4500, %v4493, %v4497
    %v4502 = vand.u32 2147483647, %v4492
    %vm4503 = vcmp.eq.f32.partialorder %v4502, 8.507059e+37
    %v4504 = vand.u32 %v4492, 2147483648
    %v4505 = vor.u32 1.1754944e-38, %v4504
    %v4506 = vsel %vm4503, %v4505, %v4501
    %v4507 = vmul.f32 1.0, %v4506
    %v4508 = vmul.f32 %v4487, %v4466
    %v4509 = vadd.f32 %v4407, %v4508
    %v4510 = vtanh.pop %v4509
    %v4511 = vsub.f32 1.0, %v4507
    %v4512 = vmul.f32 %v4511, %v4510
    %v4513 = vmul.f32 %v4507, %v4404
    %v4514 = vadd.f32 %v4512, %v4513
    %v4515 = vsel %vm955, %v4514, 0.0
    %4516 = vst [vmem:[%s2160] sm:$0xff] %v4515
    %v4517 = vsel %vm955, %v4514, %v4404
    %v4518 = vld [vmem:[%s960] sm:$0xff]
    %v4519 = vld [vmem:[%s960 + $0x8] sm:$0xff]
    %v4520 = vld [vmem:[%s960 + $0x10] sm:$0xff]
    %4521 = vmatpush.msra.mxu0 %v3778
    %4522 = vmatpush.msra.mxu0 %v3775
    %4523 = vmatpush.msra.mxu0 %v3772
    %4524 = vmatpush.msra.mxu0 %v3769
    %4525 = vmatpush.msra.mxu0 %v3766
    %4526 = vmatpush.msra.mxu0 %v3763
    %4527 = vmatpush.msra.mxu0 %v3760
    %4528 = vmatpush.msra.mxu0 %v3757
    %4529 = vmatpush.msra.mxu0 %v3754
    %4530 = vmatpush.msra.mxu0 %v3751
    %4531 = vmatpush.msra.mxu0 %v3748
    %4532 = vmatpush.msra.mxu0 %v3745
    %4533 = vmatpush.msra.mxu0 %v3742
    %4534 = vmatpush.msra.mxu0 %v3739
    %4535 = vmatpush.msra.mxu0 %v3736
    %4536 = vmatpush.msra.mxu0 %v3733
    %4537 = vmatmul.f32.gmra.mxu0 %v4517
    %v4538 = vpop.f32.mrf.mxu0
    %v4539 = vadd.f32 %v3951, %v4538
    %4540 = vdwg.mxu0
    %4541 = vmatpush.msra.mxu0 %v3779
    %4542 = vmatpush.msra.mxu0 %v3776
    %4543 = vmatpush.msra.mxu0 %v3773
    %4544 = vmatpush.msra.mxu0 %v3770
    %4545 = vmatpush.msra.mxu0 %v3767
    %4546 = vmatpush.msra.mxu0 %v3764
    %4547 = vmatpush.msra.mxu0 %v3761
    %4548 = vmatpush.msra.mxu0 %v3758
    %4549 = vmatpush.msra.mxu0 %v3755
    %4550 = vmatpush.msra.mxu0 %v3752
    %4551 = vmatpush.msra.mxu0 %v3749
    %4552 = vmatpush.msra.mxu0 %v3746
    %4553 = vmatpush.msra.mxu0 %v3743
    %4554 = vmatpush.msra.mxu0 %v3740
    %4555 = vmatpush.msra.mxu0 %v3737
    %4556 = vmatpush.msra.mxu0 %v3734
    %4557 = vmatmul.f32.gmra.mxu0 %v4517
    %v4558 = vpop.f32.mrf.mxu0
    %v4559 = vadd.f32 %v3952, %v4558
    %4560 = vdwg.mxu0
    %4561 = vmatpush.msra.mxu0 %v3780
    %4562 = vmatpush.msra.mxu0 %v3777
    %4563 = vmatpush.msra.mxu0 %v3774
    %4564 = vmatpush.msra.mxu0 %v3771
    %4565 = vmatpush.msra.mxu0 %v3768
    %4566 = vmatpush.msra.mxu0 %v3765
    %4567 = vmatpush.msra.mxu0 %v3762
    %4568 = vmatpush.msra.mxu0 %v3759
    %4569 = vmatpush.msra.mxu0 %v3756
    %4570 = vmatpush.msra.mxu0 %v3753
    %4571 = vmatpush.msra.mxu0 %v3750
    %4572 = vmatpush.msra.mxu0 %v3747
    %4573 = vmatpush.msra.mxu0 %v3744
    %4574 = vmatpush.msra.mxu0 %v3741
    %4575 = vmatpush.msra.mxu0 %v3738
    %4576 = vmatpush.msra.mxu0 %v3735
    %4577 = vmatmul.f32.gmra.mxu0 %v4517
    %v4578 = vpop.f32.mrf.mxu0
    %v4579 = vadd.f32 %v3953, %v4578
    %4580 = vdwg.mxu0
    %v4581 = vadd.f32 %v4518, %v4539
    %v4582 = vxor.u32 %v4581, 2147483648
    %v4583 = vmul.f32 %v4582, 1.442695
    %v4584 = vpow.pop %v4583
    %v4585 = vadd.f32 %v4584, 1.0
    %v4586 = vrcp.pop %v4585
    %v4587 = vmul.f32 %v4585, %v4586
    %v4588 = vsub.f32 1.0, %v4587
    %v4589 = vmul.f32 %v4586, %v4588
    %v4590 = vadd.f32 %v4586, %v4589
    %vm4591 = vweird.f32 %v4585
    %vm4592 = vweird.f32 %v4586
    %vm4593 = vmor %vm4591, %vm4592
    %v4594 = vsel %vm4593, %v4586, %v4590
    %v4595 = vand.u32 2147483647, %v4585
    %vm4596 = vcmp.eq.f32.partialorder %v4595, 8.507059e+37
    %v4597 = vand.u32 %v4585, 2147483648
    %v4598 = vor.u32 1.1754944e-38, %v4597
    %v4599 = vsel %vm4596, %v4598, %v4594
    %v4600 = vmul.f32 1.0, %v4599
    %v4601 = vadd.f32 %v4519, %v4559
    %v4602 = vxor.u32 %v4601, 2147483648
    %v4603 = vmul.f32 %v4602, 1.442695
    %v4604 = vpow.pop %v4603
    %v4605 = vadd.f32 %v4604, 1.0
    %v4606 = vrcp.pop %v4605
    %v4607 = vmul.f32 %v4605, %v4606
    %v4608 = vsub.f32 1.0, %v4607
    %v4609 = vmul.f32 %v4606, %v4608
    %v4610 = vadd.f32 %v4606, %v4609
    %vm4611 = vweird.f32 %v4605
    %vm4612 = vweird.f32 %v4606
    %vm4613 = vmor %vm4611, %vm4612
    %v4614 = vsel %vm4613, %v4606, %v4610
    %v4615 = vand.u32 2147483647, %v4605
    %vm4616 = vcmp.eq.f32.partialorder %v4615, 8.507059e+37
    %v4617 = vand.u32 %v4605, 2147483648
    %v4618 = vor.u32 1.1754944e-38, %v4617
    %v4619 = vsel %vm4616, %v4618, %v4614
    %v4620 = vmul.f32 1.0, %v4619
    %v4621 = vmul.f32 %v4600, %v4579
    %v4622 = vadd.f32 %v4520, %v4621
    %v4623 = vtanh.pop %v4622
    %v4624 = vsub.f32 1.0, %v4620
    %v4625 = vmul.f32 %v4624, %v4623
    %v4626 = vmul.f32 %v4620, %v4517
    %v4627 = vadd.f32 %v4625, %v4626
    %v4628 = vsel %vm1076, %v4627, 0.0
    %4629 = vst [vmem:[%s2274] sm:$0xff] %v4628
    %v4630 = vsel %vm1076, %v4627, %v4517
    %v4631 = vld [vmem:[%s1081] sm:$0xff]
    %v4632 = vld [vmem:[%s1081 + $0x8] sm:$0xff]
    %v4633 = vld [vmem:[%s1081 + $0x10] sm:$0xff]
    %4634 = vmatpush.msra.mxu0 %v3778
    %4635 = vmatpush.msra.mxu0 %v3775
    %4636 = vmatpush.msra.mxu0 %v3772
    %4637 = vmatpush.msra.mxu0 %v3769
    %4638 = vmatpush.msra.mxu0 %v3766
    %4639 = vmatpush.msra.mxu0 %v3763
    %4640 = vmatpush.msra.mxu0 %v3760
    %4641 = vmatpush.msra.mxu0 %v3757
    %4642 = vmatpush.msra.mxu0 %v3754
    %4643 = vmatpush.msra.mxu0 %v3751
    %4644 = vmatpush.msra.mxu0 %v3748
    %4645 = vmatpush.msra.mxu0 %v3745
    %4646 = vmatpush.msra.mxu0 %v3742
    %4647 = vmatpush.msra.mxu0 %v3739
    %4648 = vmatpush.msra.mxu0 %v3736
    %4649 = vmatpush.msra.mxu0 %v3733
    %4650 = vmatmul.f32.gmra.mxu0 %v4630
    %v4651 = vpop.f32.mrf.mxu0
    %v4652 = vadd.f32 %v3951, %v4651
    %4653 = vdwg.mxu0
    %4654 = vmatpush.msra.mxu0 %v3779
    %4655 = vmatpush.msra.mxu0 %v3776
    %4656 = vmatpush.msra.mxu0 %v3773
    %4657 = vmatpush.msra.mxu0 %v3770
    %4658 = vmatpush.msra.mxu0 %v3767
    %4659 = vmatpush.msra.mxu0 %v3764
    %4660 = vmatpush.msra.mxu0 %v3761
    %4661 = vmatpush.msra.mxu0 %v3758
    %4662 = vmatpush.msra.mxu0 %v3755
    %4663 = vmatpush.msra.mxu0 %v3752
    %4664 = vmatpush.msra.mxu0 %v3749
    %4665 = vmatpush.msra.mxu0 %v3746
    %4666 = vmatpush.msra.mxu0 %v3743
    %4667 = vmatpush.msra.mxu0 %v3740
    %4668 = vmatpush.msra.mxu0 %v3737
    %4669 = vmatpush.msra.mxu0 %v3734
    %4670 = vmatmul.f32.gmra.mxu0 %v4630
    %v4671 = vpop.f32.mrf.mxu0
    %v4672 = vadd.f32 %v3952, %v4671
    %4673 = vdwg.mxu0
    %4674 = vmatpush.msra.mxu0 %v3780
    %4675 = vmatpush.msra.mxu0 %v3777
    %4676 = vmatpush.msra.mxu0 %v3774
    %4677 = vmatpush.msra.mxu0 %v3771
    %4678 = vmatpush.msra.mxu0 %v3768
    %4679 = vmatpush.msra.mxu0 %v3765
    %4680 = vmatpush.msra.mxu0 %v3762
    %4681 = vmatpush.msra.mxu0 %v3759
    %4682 = vmatpush.msra.mxu0 %v3756
    %4683 = vmatpush.msra.mxu0 %v3753
    %4684 = vmatpush.msra.mxu0 %v3750
    %4685 = vmatpush.msra.mxu0 %v3747
    %4686 = vmatpush.msra.mxu0 %v3744
    %4687 = vmatpush.msra.mxu0 %v3741
    %4688 = vmatpush.msra.mxu0 %v3738
    %4689 = vmatpush.msra.mxu0 %v3735
    %4690 = vmatmul.f32.gmra.mxu0 %v4630
    %v4691 = vpop.f32.mrf.mxu0
    %v4692 = vadd.f32 %v3953, %v4691
    %4693 = vdwg.mxu0
    %v4694 = vadd.f32 %v4631, %v4652
    %v4695 = vxor.u32 %v4694, 2147483648
    %v4696 = vmul.f32 %v4695, 1.442695
    %v4697 = vpow.pop %v4696
    %v4698 = vadd.f32 %v4697, 1.0
    %v4699 = vrcp.pop %v4698
    %v4700 = vmul.f32 %v4698, %v4699
    %v4701 = vsub.f32 1.0, %v4700
    %v4702 = vmul.f32 %v4699, %v4701
    %v4703 = vadd.f32 %v4699, %v4702
    %vm4704 = vweird.f32 %v4698
    %vm4705 = vweird.f32 %v4699
    %vm4706 = vmor %vm4704, %vm4705
    %v4707 = vsel %vm4706, %v4699, %v4703
    %v4708 = vand.u32 2147483647, %v4698
    %vm4709 = vcmp.eq.f32.partialorder %v4708, 8.507059e+37
    %v4710 = vand.u32 %v4698, 2147483648
    %v4711 = vor.u32 1.1754944e-38, %v4710
    %v4712 = vsel %vm4709, %v4711, %v4707
    %v4713 = vmul.f32 1.0, %v4712
    %v4714 = vadd.f32 %v4632, %v4672
    %v4715 = vxor.u32 %v4714, 2147483648
    %v4716 = vmul.f32 %v4715, 1.442695
    %v4717 = vpow.pop %v4716
    %v4718 = vadd.f32 %v4717, 1.0
    %v4719 = vrcp.pop %v4718
    %v4720 = vmul.f32 %v4718, %v4719
    %v4721 = vsub.f32 1.0, %v4720
    %v4722 = vmul.f32 %v4719, %v4721
    %v4723 = vadd.f32 %v4719, %v4722
    %vm4724 = vweird.f32 %v4718
    %vm4725 = vweird.f32 %v4719
    %vm4726 = vmor %vm4724, %vm4725
    %v4727 = vsel %vm4726, %v4719, %v4723
    %v4728 = vand.u32 2147483647, %v4718
    %vm4729 = vcmp.eq.f32.partialorder %v4728, 8.507059e+37
    %v4730 = vand.u32 %v4718, 2147483648
    %v4731 = vor.u32 1.1754944e-38, %v4730
    %v4732 = vsel %vm4729, %v4731, %v4727
    %v4733 = vmul.f32 1.0, %v4732
    %v4734 = vmul.f32 %v4713, %v4692
    %v4735 = vadd.f32 %v4633, %v4734
    %v4736 = vtanh.pop %v4735
    %v4737 = vsub.f32 1.0, %v4733
    %v4738 = vmul.f32 %v4737, %v4736
    %v4739 = vmul.f32 %v4733, %v4630
    %v4740 = vadd.f32 %v4738, %v4739
    %v4741 = vsel %vm1197, %v4740, 0.0
    %4742 = vst [vmem:[%s2388] sm:$0xff] %v4741
    %v4743 = vsel %vm1197, %v4740, %v4630
    %v4744 = vld [vmem:[%s1202] sm:$0xff]
    %v4745 = vld [vmem:[%s1202 + $0x8] sm:$0xff]
    %v4746 = vld [vmem:[%s1202 + $0x10] sm:$0xff]
    %4747 = vmatpush.msra.mxu0 %v3778
    %4748 = vmatpush.msra.mxu0 %v3775
    %4749 = vmatpush.msra.mxu0 %v3772
    %4750 = vmatpush.msra.mxu0 %v3769
    %4751 = vmatpush.msra.mxu0 %v3766
    %4752 = vmatpush.msra.mxu0 %v3763
    %4753 = vmatpush.msra.mxu0 %v3760
    %4754 = vmatpush.msra.mxu0 %v3757
    %4755 = vmatpush.msra.mxu0 %v3754
    %4756 = vmatpush.msra.mxu0 %v3751
    %4757 = vmatpush.msra.mxu0 %v3748
    %4758 = vmatpush.msra.mxu0 %v3745
    %4759 = vmatpush.msra.mxu0 %v3742
    %4760 = vmatpush.msra.mxu0 %v3739
    %4761 = vmatpush.msra.mxu0 %v3736
    %4762 = vmatpush.msra.mxu0 %v3733
    %4763 = vmatmul.f32.gmra.mxu0 %v4743
    %v4764 = vpop.f32.mrf.mxu0
    %v4765 = vadd.f32 %v3951, %v4764
    %4766 = vdwg.mxu0
    %4767 = vmatpush.msra.mxu0 %v3779
    %4768 = vmatpush.msra.mxu0 %v3776
    %4769 = vmatpush.msra.mxu0 %v3773
    %4770 = vmatpush.msra.mxu0 %v3770
    %4771 = vmatpush.msra.mxu0 %v3767
    %4772 = vmatpush.msra.mxu0 %v3764
    %4773 = vmatpush.msra.mxu0 %v3761
    %4774 = vmatpush.msra.mxu0 %v3758
    %4775 = vmatpush.msra.mxu0 %v3755
    %4776 = vmatpush.msra.mxu0 %v3752
    %4777 = vmatpush.msra.mxu0 %v3749
    %4778 = vmatpush.msra.mxu0 %v3746
    %4779 = vmatpush.msra.mxu0 %v3743
    %4780 = vmatpush.msra.mxu0 %v3740
    %4781 = vmatpush.msra.mxu0 %v3737
    %4782 = vmatpush.msra.mxu0 %v3734
    %4783 = vmatmul.f32.gmra.mxu0 %v4743
    %v4784 = vpop.f32.mrf.mxu0
    %v4785 = vadd.f32 %v3952, %v4784
    %4786 = vdwg.mxu0
    %4787 = vmatpush.msra.mxu0 %v3780
    %4788 = vmatpush.msra.mxu0 %v3777
    %4789 = vmatpush.msra.mxu0 %v3774
    %4790 = vmatpush.msra.mxu0 %v3771
    %4791 = vmatpush.msra.mxu0 %v3768
    %4792 = vmatpush.msra.mxu0 %v3765
    %4793 = vmatpush.msra.mxu0 %v3762
    %4794 = vmatpush.msra.mxu0 %v3759
    %4795 = vmatpush.msra.mxu0 %v3756
    %4796 = vmatpush.msra.mxu0 %v3753
    %4797 = vmatpush.msra.mxu0 %v3750
    %4798 = vmatpush.msra.mxu0 %v3747
    %4799 = vmatpush.msra.mxu0 %v3744
    %4800 = vmatpush.msra.mxu0 %v3741
    %4801 = vmatpush.msra.mxu0 %v3738
    %4802 = vmatpush.msra.mxu0 %v3735
    %4803 = vmatmul.f32.gmra.mxu0 %v4743
    %v4804 = vpop.f32.mrf.mxu0
    %v4805 = vadd.f32 %v3953, %v4804
    %4806 = vdwg.mxu0
    %v4807 = vadd.f32 %v4744, %v4765
    %v4808 = vxor.u32 %v4807, 2147483648
    %v4809 = vmul.f32 %v4808, 1.442695
    %v4810 = vpow.pop %v4809
    %v4811 = vadd.f32 %v4810, 1.0
    %v4812 = vrcp.pop %v4811
    %v4813 = vmul.f32 %v4811, %v4812
    %v4814 = vsub.f32 1.0, %v4813
    %v4815 = vmul.f32 %v4812, %v4814
    %v4816 = vadd.f32 %v4812, %v4815
    %vm4817 = vweird.f32 %v4811
    %vm4818 = vweird.f32 %v4812
    %vm4819 = vmor %vm4817, %vm4818
    %v4820 = vsel %vm4819, %v4812, %v4816
    %v4821 = vand.u32 2147483647, %v4811
    %vm4822 = vcmp.eq.f32.partialorder %v4821, 8.507059e+37
    %v4823 = vand.u32 %v4811, 2147483648
    %v4824 = vor.u32 1.1754944e-38, %v4823
    %v4825 = vsel %vm4822, %v4824, %v4820
    %v4826 = vmul.f32 1.0, %v4825
    %v4827 = vadd.f32 %v4745, %v4785
    %v4828 = vxor.u32 %v4827, 2147483648
    %v4829 = vmul.f32 %v4828, 1.442695
    %v4830 = vpow.pop %v4829
    %v4831 = vadd.f32 %v4830, 1.0
    %v4832 = vrcp.pop %v4831
    %v4833 = vmul.f32 %v4831, %v4832
    %v4834 = vsub.f32 1.0, %v4833
    %v4835 = vmul.f32 %v4832, %v4834
    %v4836 = vadd.f32 %v4832, %v4835
    %vm4837 = vweird.f32 %v4831
    %vm4838 = vweird.f32 %v4832
    %vm4839 = vmor %vm4837, %vm4838
    %v4840 = vsel %vm4839, %v4832, %v4836
    %v4841 = vand.u32 2147483647, %v4831
    %vm4842 = vcmp.eq.f32.partialorder %v4841, 8.507059e+37
    %v4843 = vand.u32 %v4831, 2147483648
    %v4844 = vor.u32 1.1754944e-38, %v4843
    %v4845 = vsel %vm4842, %v4844, %v4840
    %v4846 = vmul.f32 1.0, %v4845
    %v4847 = vmul.f32 %v4826, %v4805
    %v4848 = vadd.f32 %v4746, %v4847
    %v4849 = vtanh.pop %v4848
    %v4850 = vsub.f32 1.0, %v4846
    %v4851 = vmul.f32 %v4850, %v4849
    %v4852 = vmul.f32 %v4846, %v4743
    %v4853 = vadd.f32 %v4851, %v4852
    %v4854 = vsel %vm1318, %v4853, 0.0
    %4855 = vst [vmem:[%s2502] sm:$0xff] %v4854
    %v4856 = vsel %vm1318, %v4853, %v4743
    %s4857 = scalar_lea.vmem [#allocation13], 24
    %4858 = vst [vmem:[%s4857] sm:$0xff] %v4856
    // Predicated region
    $region42: #{tpu_custom_call.1} parent=1 // pred_check
      _
    $region43: #{tpu_custom_call.1} parent=1 // pred_check_branch
      %4860 = sbr.rel (0) target = $region45
    $region44: #{tpu_custom_call.1} parent=1 // pred_region
      %4862 = vsyncadd [#allocation6], 0
      %s4863 = sshll.u32 [#allocation12], 4
      %s4864 = int_to_ptr.vmem [resolvable:$true] %s4863
      %s4865 = sshll.u32 %s6, 4
      %s4866 = int_to_ptr.hbm [resolvable:$true] %s4865
      %4871 = dma.vmem_to_hbm [thread:$0]  %s4864, 1024, %s4866, [#allocation6], 128, 128, 8
    $region45: #{tpu_custom_call.1} parent=1 // pred_fallthru
      _
    // Predicated region
    $region46: #{tpu_custom_call.1} parent=1 // pred_check
      _
    $region47: #{tpu_custom_call.1} parent=1 // pred_check_branch
      %4873 = sbr.rel (0) target = $region49
    $region48: #{tpu_custom_call.1} parent=1 // pred_region
      %4875 = vsyncadd [#allocation14], 0
      %s4876 = sshll.u32 [#allocation13], 4
      %s4877 = int_to_ptr.vmem [resolvable:$true] %s4876
      %s4878 = sshll.u32 %s7, 4
      %s4879 = int_to_ptr.hbm [resolvable:$true] %s4878
      %4884 = dma.vmem_to_hbm [thread:$0]  %s4877, 512, %s4879, [#allocation14], 128, 128, 8
    $region49: #{tpu_custom_call.1} parent=1 // pred_fallthru
      _
    // Predicated region
    $region50: #{tpu_custom_call.1} parent=1 // pred_check
      _
    $region51: #{tpu_custom_call.1} parent=1 // pred_check_branch
      %4886 = sbr.rel (0) target = $region53
    $region52: #{tpu_custom_call.1} parent=1 // pred_region
      %4888 = dma.done [#allocation6], 1024
    $region53: #{tpu_custom_call.1} parent=1 // pred_fallthru
      _
    // Predicated region
    $region54: #{tpu_custom_call.1} parent=1 // pred_check
      _
    $region55: #{tpu_custom_call.1} parent=1 // pred_check_branch
      %4890 = sbr.rel (0) target = $region57
    $region56: #{tpu_custom_call.1} parent=1 // pred_region
      %4892 = dma.done [#allocation14], 512
    $region57: #{tpu_custom_call.1} parent=1 // pred_fallthru
      _
    %4893 = vsyncpa [#allocation5], 1
    %4894 = vsyncpa [#allocation8], 1
    %4895 = vsyncpa [#allocation11], 1
    %4896 = vsyncpa [#allocation6], 1
    %4897 = vsyncpa [#allocation14], 1

</llo_original>
